<compile_context>
chip_gen: v6e
topology: v6e:2x2x1
jax: 0.10.0
libtpu: 0.0.40
codegen_flags: <defaults>
</compile_context>

<pallas_src>
import jax
import jax.numpy as jnp
from jax.experimental import pallas as pl
from jax.experimental.pallas import tpu as pltpu

BN_EPS = 1e-5

_VMEM_LIMIT = None


def _vmem_limit_bytes():
    """Generation-aware VMEM budget (~3/4 of physical capacity, capped)."""
    global _VMEM_LIMIT
    if _VMEM_LIMIT is None:
        cap = 128 * 1024 * 1024
        try:
            info = pltpu.get_tpu_info()
            cap = int(getattr(info, "vmem_capacity_bytes", 0)) or cap
        except Exception:
            pass
        _VMEM_LIMIT = max(32 * 1024 * 1024, min((cap * 3) // 4, 100 * 1024 * 1024))
    return _VMEM_LIMIT


# --------------------------------------------------------------------------- #
# Kernel A: 3x3 conv (stride=1, pad=1) with in-kernel padding, optional fused  #
# BN+ReLU on its input, bf16 conv output, per-block BN partial statistics.     #
# --------------------------------------------------------------------------- #
def _make_conv_kernel(H, W, C, Cout, ipb, fuse_bn):
    HW = H * W

    def body(inp_ref, sc_ref, sh_ref, w_ref, conv_ref, ssum_ref, ssq_ref,
             pad_ref, cols_ref):
        # Zero the padded scratch once per grid step (cheap vs. the 9x im2col
        # assembly; re-done every step so it stays correct under "parallel"
        # megacore partitioning).  The interior is overwritten below, so only
        # the 1-pixel halo effectively stays zero.
        pad_ref[...] = jnp.zeros_like(pad_ref)

        for i in range(ipb):
            if fuse_bn:
                # Fused BN1 + ReLU on the raw conv1 output (f32 math on VPU).
                h = inp_ref[i].astype(jnp.float32) * sc_ref[...] + sh_ref[...]
                img = jnp.maximum(h, 0.0).reshape(H, W, C)
            else:
                img = inp_ref[i].astype(jnp.float32)
            # In-kernel zero padding: write only the interior of the halo scratch.
            pad_ref[1:H + 1, 1:W + 1, :] = img

            # im2col assembly in VMEM (each activation byte is read from HBM once).
            # TODO(synk): tap stores are 64-lane masked when C < 128; a DMA-
            # assembled or lane-paired im2col would move this off the vst slot.
            for t in range(9):
                dy, dx = t // 3, t % 3
                tap = pad_ref[dy:dy + H, dx:dx + W, :].astype(jnp.bfloat16)
                cols_ref[i * HW:(i + 1) * HW, t * C:(t + 1) * C] = (
                    tap.reshape(HW, C))

        # One MXU matmul with K = 9*C (bf16 operands, f32 accumulation).
        acc = jnp.dot(cols_ref[...], w_ref[...],
                      preferred_element_type=jnp.float32)
        # Raw conv output goes back to HBM in bf16 (halves the writeback);
        # BN statistics are taken from the f32 accumulator.
        conv_ref[...] = acc.reshape(ipb, HW, Cout).astype(conv_ref.dtype)
        ssum_ref[...] = jnp.sum(acc, axis=0, keepdims=True)
        ssq_ref[...] = jnp.sum(acc * acc, axis=0, keepdims=True)

    if fuse_bn:
        return body

    def body_no_bn(inp_ref, w_ref, conv_ref, ssum_ref, ssq_ref, pad_ref, cols_ref):
        body(inp_ref, None, None, w_ref, conv_ref, ssum_ref, ssq_ref,
             pad_ref, cols_ref)

    return body_no_bn


def _conv_stage(inp, w_packed, spatial, scale=None, shift=None, *,
                images_per_step=1):
    """One conv stage.

    inp: (N, H, W, C) bf16 raw NHWC input          when scale is None (stage 1)
         (N, H*W, C)  bf16 raw previous-conv output when scale is given (stage 2,
                           BN+ReLU of the previous stage is fused in here).
    Returns: conv_raw (N, H*W, Cout) bf16, ssum (G, 1, Cout) f32, ssq (G, 1, Cout) f32.
    """
    H, W = spatial
    HW = H * W
    fuse_bn = scale is not None
    if fuse_bn:
        N, hw, C = inp.shape
        assert hw == HW
    else:
        N, h_, w_, C = inp.shape
        assert (h_, w_) == (H, W)
    Cout = w_packed.shape[1]
    ipb = images_per_step
    assert N % ipb == 0, "images_per_step must divide the batch"
    G = N // ipb

    kernel = _make_conv_kernel(H, W, C, Cout, ipb, fuse_bn)

    if fuse_bn:
        in_specs = [
            pl.BlockSpec((ipb, HW, C), lambda n: (n, 0, 0)),
            pl.BlockSpec((1, C), lambda n: (0, 0)),
            pl.BlockSpec((1, C), lambda n: (0, 0)),
            pl.BlockSpec((9 * C, Cout), lambda n: (0, 0)),
        ]
        args = (inp, scale.astype(jnp.float32), shift.astype(jnp.float32), w_packed)
    else:
        in_specs = [
            pl.BlockSpec((ipb, H, W, C), lambda n: (n, 0, 0, 0)),
            pl.BlockSpec((9 * C, Cout), lambda n: (0, 0)),
        ]
        args = (inp, w_packed)

    out_shape = (
        jax.ShapeDtypeStruct((N, HW, Cout), jnp.bfloat16),
        jax.ShapeDtypeStruct((G, 1, Cout), jnp.float32),
        jax.ShapeDtypeStruct((G, 1, Cout), jnp.float32),
    )
    out_specs = (
        pl.BlockSpec((ipb, HW, Cout), lambda n: (n, 0, 0)),
        pl.BlockSpec((None, 1, Cout), lambda n: (n, 0, 0)),
        pl.BlockSpec((None, 1, Cout), lambda n: (n, 0, 0)),
    )
    # TODO(synk): for very large feature maps (e.g. 56x56 @ 256ch) the im2col
    # scratch should be row-tiled (with a 1-row halo) to stay inside VMEM and to
    # give v7x's two TensorCores parallel grid steps even at batch 1.
    scratch_shapes = [
        pltpu.VMEM((H + 2, W + 2, C), jnp.float32),    # zero-padded image (halo)
        pltpu.VMEM((ipb * HW, 9 * C), jnp.bfloat16),   # im2col matrix
    ]
    return pl.pallas_call(
        kernel,
        out_shape=out_shape,
        grid_spec=pltpu.PrefetchScalarGridSpec(
            num_scalar_prefetch=0,
            grid=(G,),
            in_specs=in_specs,
            out_specs=out_specs,
            scratch_shapes=scratch_shapes,
        ),
        compiler_params=pltpu.CompilerParams(
            dimension_semantics=("parallel",),
            vmem_limit_bytes=_vmem_limit_bytes(),
        ),
    )(*args)


# --------------------------------------------------------------------------- #
# Kernel B: folded BN2 (per-channel FMA) + identity residual + ReLU.           #
# --------------------------------------------------------------------------- #
def _bn_add_relu_kernel(conv_ref, scale_ref, shift_ref, res_ref, out_ref):
    y = (conv_ref[...].astype(jnp.float32) * scale_ref[...] + shift_ref[...]
         + res_ref[...].astype(jnp.float32))
    out_ref[...] = jnp.maximum(y, 0.0).astype(out_ref.dtype)


def bn_add_relu(conv_flat, scale, shift, residual, *, out_dtype=jnp.float32,
                row_cap=4096):
    P, C = conv_flat.shape
    # Lane-dense repack: view (P, C) as (P//k, k*C) with k*C >= 128 so stores are
    # unmasked full-lane vst (the wrapper reshape is a free bitcast of row-major data).
    k = 1
    if C < 128 and 128 % C == 0:
        k = 128 // C
        while k > 1 and P % k:
            k //= 2
    R, CW = P // k, k * C

    conv_v = conv_flat.reshape(R, CW)
    res_v = residual.reshape(R, CW)
    scale_v = jnp.tile(scale.astype(jnp.float32), (1, k))
    shift_v = jnp.tile(shift.astype(jnp.float32), (1, k))

    tr = R if R <= row_cap else row_cap            # row_cap is a multiple of 8
    grid = (pl.cdiv(R, tr),)                        # ragged tail handled by Pallas masking

    out = pl.pallas_call(
        _bn_add_relu_kernel,
        out_shape=jax.ShapeDtypeStruct((R, CW), out_dtype),
        grid_spec=pltpu.PrefetchScalarGridSpec(
            num_scalar_prefetch=0,
            grid=grid,
            in_specs=[
                pl.BlockSpec((tr, CW), lambda i: (i, 0)),
                pl.BlockSpec((1, CW), lambda i: (0, 0)),
                pl.BlockSpec((1, CW), lambda i: (0, 0)),
                pl.BlockSpec((tr, CW), lambda i: (i, 0)),
            ],
            out_specs=pl.BlockSpec((tr, CW), lambda i: (i, 0)),
        ),
        compiler_params=pltpu.CompilerParams(
            dimension_semantics=("parallel",),
            vmem_limit_bytes=_vmem_limit_bytes(),
        ),
    )(conv_v, scale_v, shift_v, res_v)
    return out.reshape(P, C)


# --------------------------------------------------------------------------- #
# Glue (tiny JAX ops only).                                                     #
# --------------------------------------------------------------------------- #
def _fold_bn(ssum, ssq, gamma, beta, count):
    """Fold global batch statistics into per-channel scale/shift (f32)."""
    # TODO(synk): E[x^2]-E[x]^2 in f32 can cancel for very large counts; switch to
    # shifted/two-pass statistics if this ever feeds training at scale.
    s1 = jnp.sum(ssum, axis=0)                       # (1, C)
    s2 = jnp.sum(ssq, axis=0)                        # (1, C)
    mean = s1 / count
    var = jnp.maximum(s2 / count - mean * mean, 0.0)   # biased variance
    scale = gamma.astype(jnp.float32) * jax.lax.rsqrt(var + BN_EPS)
    shift = beta.astype(jnp.float32) - mean * scale
    return scale, shift


def pack_conv_weight(w_oihw):
    """PyTorch (Cout, Cin, 3, 3) -> (9*Cin, Cout), tap-major (dy, dx) row-major."""
    c_out, c_in = w_oihw.shape[0], w_oihw.shape[1]
    return jnp.transpose(w_oihw, (2, 3, 1, 0)).reshape(9 * c_in, c_out)


def basic_block_forward(x_nchw, params):
    """BasicBlock.forward with stride=1, downsample=None (module defaults)."""
    # TODO(synk): stride > 1 and a user-supplied `downsample` module are not
    # implemented (identity residual path only); BN uses batch statistics
    # (training-mode forward), not eval-mode running stats.
    N, C, H, W = x_nchw.shape
    planes = params["w1"].shape[1]
    assert planes == C, "identity residual requires in_planes == planes"
    P = N * H * W
    ipb = 2 if (N > 2 and N % 2 == 0) else 1     # larger MXU M when batch allows

    # Single wrapper-side layout pass: NCHW -> NHWC + bf16.  This one tensor
    # feeds conv1 *and* the residual add (no second conversion pass).
    x_bf16 = jnp.transpose(x_nchw, (0, 2, 3, 1)).astype(jnp.bfloat16)

    # ---- conv1 (+ batch statistics) ----------------------------------------
    conv1, s1, q1 = _conv_stage(x_bf16, params["w1"].astype(jnp.bfloat16),
                                (H, W), images_per_step=ipb)
    scale1, shift1 = _fold_bn(s1, q1, params["g1"], params["b1"], float(P))

    # ---- bn1 + relu fused into conv2 (+ batch statistics) -------------------
    conv2, s2, q2 = _conv_stage(conv1, params["w2"].astype(jnp.bfloat16),
                                (H, W), scale=scale1, shift=shift1,
                                images_per_step=ipb)
    scale2, shift2 = _fold_bn(s2, q2, params["g2"], params["b2"], float(P))

    # ---- bn2 + identity + relu ----------------------------------------------
    out = bn_add_relu(conv2.reshape(P, planes), scale2, shift2,
                      residual=x_bf16.reshape(P, C))
    return jnp.transpose(out.reshape(N, H, W, planes), (0, 3, 1, 2))   # NCHW


# --------------------------------------------------------------------------- #
# Pure-JAX reference (f32) for a loose numerical sanity check.                  #
# --------------------------------------------------------------------------- #
def reference_forward(x_nchw, w1_oihw, g1, b1, w2_oihw, g2, b2):
    def conv(x, w):
        return jax.lax.conv_general_dilated(
            x, w, window_strides=(1, 1), padding=((1, 1), (1, 1)),
            dimension_numbers=("NCHW", "OIHW", "NCHW"),
            precision=jax.lax.Precision.HIGHEST)

    def bn(x, g, b):
        mean = jnp.mean(x, axis=(0, 2, 3), keepdims=True)
        var = jnp.mean(jnp.square(x - mean), axis=(0, 2, 3), keepdims=True)
        y = (x - mean) * jax.lax.rsqrt(var + BN_EPS)
        return y * g.reshape(1, -1, 1, 1) + b.reshape(1, -1, 1, 1)

    h = jax.nn.relu(bn(conv(x_nchw, w1_oihw), g1, b1))
    return jax.nn.relu(bn(conv(h, w2_oihw), g2, b2) + x_nchw)


if __name__ == "__main__":
    key = jax.random.PRNGKey(0)
    N, C, H, W = 2, 64, 16, 16        # batch=2, in_planes=planes=64, 16x16 spatial
    planes = C                         # required by the identity residual path

    k1, k2, k3, k4, k5, k6, k7 = jax.random.split(key, 7)
    x = jax.random.normal(k1, (N, C, H, W), jnp.float32)
    w1 = jax.random.normal(k2, (planes, C, 3, 3), jnp.float32) * (2.0 / (C * 9)) ** 0.5
    w2 = jax.random.normal(k3, (planes, planes, 3, 3), jnp.float32) * (2.0 / (planes * 9)) ** 0.5
    g1 = 1.0 + 0.1 * jax.random.normal(k4, (1, planes), jnp.float32)
    b1 = 0.1 * jax.random.normal(k5, (1, planes), jnp.float32)
    g2 = 1.0 + 0.1 * jax.random.normal(k6, (1, planes), jnp.float32)
    b2 = 0.1 * jax.random.normal(k7, (1, planes), jnp.float32)

    params = dict(w1=pack_conv_weight(w1), w2=pack_conv_weight(w2),
                  g1=g1, b1=b1, g2=g2, b2=b2)

    out = jax.jit(basic_block_forward)(x, params)
    jax.block_until_ready(out)
    assert out.shape == (N, planes, H, W)

    # Loose check vs. f32 reference (kernels use bf16 MXU operands / bf16
    # intermediates with f32 accumulation).
    ref = reference_forward(x, w1, g1, b1, w2, g2, b2)
    max_err = float(jnp.max(jnp.abs(out - ref)))
    assert max_err < 0.3, f"max |err| = {max_err}"
    print("KERNEL_OK")
</pallas_src>

<mosaic_0001>
module attributes {stable_mosaic.version = 11 : i64} {
  func.func @body_no_bn(%arg0: i32, %arg1: memref<1x16x16x64xbf16, #tpu.memory_space<vmem>>, %arg2: memref<576x64xbf16, #tpu.memory_space<vmem>>, %arg3: memref<1x256x64xbf16, #tpu.memory_space<vmem>>, %arg4: memref<1x1x64xf32, #tpu.memory_space<vmem>>, %arg5: memref<1x1x64xf32, #tpu.memory_space<vmem>>, %arg6: memref<18x18x64xf32, #tpu.memory_space<vmem>>, %arg7: memref<256x576xbf16, #tpu.memory_space<vmem>>) attributes {dimension_semantics = [#tpu.dimension_semantics<parallel>], iteration_bounds = array<i64: 2>, scalar_prefetch = 0 : i64, scratch_operands = 2 : i64, tpu.core_type = #tpu.core_type<tc>, window_params = [{transform_indices = @transform_0, window_bounds = array<i64: 1, 16, 16, 64>}, {pipeline_mode = #tpu.pipeline_mode<synchronous>, transform_indices = @transform_1, window_bounds = array<i64: 576, 64>}, {transform_indices = @transform_2, window_bounds = array<i64: 1, 256, 64>}, {transform_indices = @transform_3, window_bounds = array<i64: 1, 1, 64>}, {transform_indices = @transform_4, window_bounds = array<i64: 1, 1, 64>}]} {
    %cst = arith.constant 0.000000e+00 : f32
    %0 = vector.broadcast %cst : f32 to vector<18x18x64xf32>
    %c0 = arith.constant 0 : index
    %c0_0 = arith.constant 0 : index
    %c0_1 = arith.constant 0 : index
    %1 = vector.load %arg6[%c0, %c0_0, %c0_1] : memref<18x18x64xf32, #tpu.memory_space<vmem>>, vector<18x18x64xf32>
    tpu.vector_store %arg6[%c0, %c0_0, %c0_1], %0 {strides = array<i32>} : memref<18x18x64xf32, #tpu.memory_space<vmem>>, vector<18x18x64xf32>,
    %c0_2 = arith.constant 0 : index
    %c0_3 = arith.constant 0 : index
    %c0_4 = arith.constant 0 : index
    %c0_5 = arith.constant 0 : index
    %2 = vector.load %arg1[%c0_2, %c0_3, %c0_4, %c0_5] : memref<1x16x16x64xbf16, #tpu.memory_space<vmem>>, vector<1x16x16x64xbf16>
    %3 = vector.shape_cast %2 : vector<1x16x16x64xbf16> to vector<16x16x64xbf16>
    %4 = arith.extf %3 : vector<16x16x64xbf16> to vector<16x16x64xf32>
    %c1 = arith.constant 1 : index
    %c1_6 = arith.constant 1 : index
    %c0_7 = arith.constant 0 : index
    %5 = vector.load %arg6[%c1, %c1_6, %c0_7] : memref<18x18x64xf32, #tpu.memory_space<vmem>>, vector<16x16x64xf32>
    tpu.vector_store %arg6[%c1, %c1_6, %c0_7], %4 {strides = array<i32>} : memref<18x18x64xf32, #tpu.memory_space<vmem>>, vector<16x16x64xf32>,
    %c0_8 = arith.constant 0 : index
    %c0_9 = arith.constant 0 : index
    %c0_10 = arith.constant 0 : index
    %6 = vector.load %arg6[%c0_8, %c0_9, %c0_10] : memref<18x18x64xf32, #tpu.memory_space<vmem>>, vector<16x16x64xf32>
    %7 = arith.truncf %6 : vector<16x16x64xf32> to vector<16x16x64xbf16>
    %8 = vector.shape_cast %7 : vector<16x16x64xbf16> to vector<256x64xbf16>
    %c0_11 = arith.constant 0 : index
    %c0_12 = arith.constant 0 : index
    %9 = vector.load %arg7[%c0_11, %c0_12] : memref<256x576xbf16, #tpu.memory_space<vmem>>, vector<256x64xbf16>
    tpu.vector_store %arg7[%c0_11, %c0_12], %8 {strides = array<i32>} : memref<256x576xbf16, #tpu.memory_space<vmem>>, vector<256x64xbf16>,
    %c0_13 = arith.constant 0 : index
    %c1_14 = arith.constant 1 : index
    %c0_15 = arith.constant 0 : index
    %10 = vector.load %arg6[%c0_13, %c1_14, %c0_15] : memref<18x18x64xf32, #tpu.memory_space<vmem>>, vector<16x16x64xf32>
    %11 = arith.truncf %10 : vector<16x16x64xf32> to vector<16x16x64xbf16>
    %12 = vector.shape_cast %11 : vector<16x16x64xbf16> to vector<256x64xbf16>
    %c0_16 = arith.constant 0 : index
    %c64 = arith.constant 64 : index
    %13 = vector.load %arg7[%c0_16, %c64] : memref<256x576xbf16, #tpu.memory_space<vmem>>, vector<256x64xbf16>
    tpu.vector_store %arg7[%c0_16, %c64], %12 {strides = array<i32>} : memref<256x576xbf16, #tpu.memory_space<vmem>>, vector<256x64xbf16>,
    %c0_17 = arith.constant 0 : index
    %c2 = arith.constant 2 : index
    %c0_18 = arith.constant 0 : index
    %14 = vector.load %arg6[%c0_17, %c2, %c0_18] : memref<18x18x64xf32, #tpu.memory_space<vmem>>, vector<16x16x64xf32>
    %15 = arith.truncf %14 : vector<16x16x64xf32> to vector<16x16x64xbf16>
    %16 = vector.shape_cast %15 : vector<16x16x64xbf16> to vector<256x64xbf16>
    %c0_19 = arith.constant 0 : index
    %c128 = arith.constant 128 : index
    %17 = vector.load %arg7[%c0_19, %c128] : memref<256x576xbf16, #tpu.memory_space<vmem>>, vector<256x64xbf16>
    tpu.vector_store %arg7[%c0_19, %c128], %16 {strides = array<i32>} : memref<256x576xbf16, #tpu.memory_space<vmem>>, vector<256x64xbf16>,
    %c1_20 = arith.constant 1 : index
    %c0_21 = arith.constant 0 : index
    %c0_22 = arith.constant 0 : index
    %18 = vector.load %arg6[%c1_20, %c0_21, %c0_22] : memref<18x18x64xf32, #tpu.memory_space<vmem>>, vector<16x16x64xf32>
    %19 = arith.truncf %18 : vector<16x16x64xf32> to vector<16x16x64xbf16>
    %20 = vector.shape_cast %19 : vector<16x16x64xbf16> to vector<256x64xbf16>
    %c0_23 = arith.constant 0 : index
    %c192 = arith.constant 192 : index
    %21 = vector.load %arg7[%c0_23, %c192] : memref<256x576xbf16, #tpu.memory_space<vmem>>, vector<256x64xbf16>
    tpu.vector_store %arg7[%c0_23, %c192], %20 {strides = array<i32>} : memref<256x576xbf16, #tpu.memory_space<vmem>>, vector<256x64xbf16>,
    %c1_24 = arith.constant 1 : index
    %c1_25 = arith.constant 1 : index
    %c0_26 = arith.constant 0 : index
    %22 = vector.load %arg6[%c1_24, %c1_25, %c0_26] : memref<18x18x64xf32, #tpu.memory_space<vmem>>, vector<16x16x64xf32>
    %23 = arith.truncf %22 : vector<16x16x64xf32> to vector<16x16x64xbf16>
    %24 = vector.shape_cast %23 : vector<16x16x64xbf16> to vector<256x64xbf16>
    %c0_27 = arith.constant 0 : index
    %c256 = arith.constant 256 : index
    %25 = vector.load %arg7[%c0_27, %c256] : memref<256x576xbf16, #tpu.memory_space<vmem>>, vector<256x64xbf16>
    tpu.vector_store %arg7[%c0_27, %c256], %24 {strides = array<i32>} : memref<256x576xbf16, #tpu.memory_space<vmem>>, vector<256x64xbf16>,
    %c1_28 = arith.constant 1 : index
    %c2_29 = arith.constant 2 : index
    %c0_30 = arith.constant 0 : index
    %26 = vector.load %arg6[%c1_28, %c2_29, %c0_30] : memref<18x18x64xf32, #tpu.memory_space<vmem>>, vector<16x16x64xf32>
    %27 = arith.truncf %26 : vector<16x16x64xf32> to vector<16x16x64xbf16>
    %28 = vector.shape_cast %27 : vector<16x16x64xbf16> to vector<256x64xbf16>
    %c0_31 = arith.constant 0 : index
    %c320 = arith.constant 320 : index
    %29 = vector.load %arg7[%c0_31, %c320] : memref<256x576xbf16, #tpu.memory_space<vmem>>, vector<256x64xbf16>
    tpu.vector_store %arg7[%c0_31, %c320], %28 {strides = array<i32>} : memref<256x576xbf16, #tpu.memory_space<vmem>>, vector<256x64xbf16>,
    %c2_32 = arith.constant 2 : index
    %c0_33 = arith.constant 0 : index
    %c0_34 = arith.constant 0 : index
    %30 = vector.load %arg6[%c2_32, %c0_33, %c0_34] : memref<18x18x64xf32, #tpu.memory_space<vmem>>, vector<16x16x64xf32>
    %31 = arith.truncf %30 : vector<16x16x64xf32> to vector<16x16x64xbf16>
    %32 = vector.shape_cast %31 : vector<16x16x64xbf16> to vector<256x64xbf16>
    %c0_35 = arith.constant 0 : index
    %c384 = arith.constant 384 : index
    %33 = vector.load %arg7[%c0_35, %c384] : memref<256x576xbf16, #tpu.memory_space<vmem>>, vector<256x64xbf16>
    tpu.vector_store %arg7[%c0_35, %c384], %32 {strides = array<i32>} : memref<256x576xbf16, #tpu.memory_space<vmem>>, vector<256x64xbf16>,
    %c2_36 = arith.constant 2 : index
    %c1_37 = arith.constant 1 : index
    %c0_38 = arith.constant 0 : index
    %34 = vector.load %arg6[%c2_36, %c1_37, %c0_38] : memref<18x18x64xf32, #tpu.memory_space<vmem>>, vector<16x16x64xf32>
    %35 = arith.truncf %34 : vector<16x16x64xf32> to vector<16x16x64xbf16>
    %36 = vector.shape_cast %35 : vector<16x16x64xbf16> to vector<256x64xbf16>
    %c0_39 = arith.constant 0 : index
    %c448 = arith.constant 448 : index
    %37 = vector.load %arg7[%c0_39, %c448] : memref<256x576xbf16, #tpu.memory_space<vmem>>, vector<256x64xbf16>
    tpu.vector_store %arg7[%c0_39, %c448], %36 {strides = array<i32>} : memref<256x576xbf16, #tpu.memory_space<vmem>>, vector<256x64xbf16>,
    %c2_40 = arith.constant 2 : index
    %c2_41 = arith.constant 2 : index
    %c0_42 = arith.constant 0 : index
    %38 = vector.load %arg6[%c2_40, %c2_41, %c0_42] : memref<18x18x64xf32, #tpu.memory_space<vmem>>, vector<16x16x64xf32>
    %39 = arith.truncf %38 : vector<16x16x64xf32> to vector<16x16x64xbf16>
    %40 = vector.shape_cast %39 : vector<16x16x64xbf16> to vector<256x64xbf16>
    %c0_43 = arith.constant 0 : index
    %c512 = arith.constant 512 : index
    %41 = vector.load %arg7[%c0_43, %c512] : memref<256x576xbf16, #tpu.memory_space<vmem>>, vector<256x64xbf16>
    tpu.vector_store %arg7[%c0_43, %c512], %40 {strides = array<i32>} : memref<256x576xbf16, #tpu.memory_space<vmem>>, vector<256x64xbf16>,
    %c0_44 = arith.constant 0 : index
    %c0_45 = arith.constant 0 : index
    %42 = vector.load %arg7[%c0_44, %c0_45] : memref<256x576xbf16, #tpu.memory_space<vmem>>, vector<256x576xbf16>
    %c0_46 = arith.constant 0 : index
    %c0_47 = arith.constant 0 : index
    %43 = vector.load %arg2[%c0_46, %c0_47] : memref<576x64xbf16, #tpu.memory_space<vmem>>, vector<576x64xbf16>
    %cst_48 = arith.constant dense<0.000000e+00> : vector<256x64xf32>
    %44 = tpu.matmul %42, %43, %cst_48 {dimension_numbers = #tpu.dot_dimension_numbers<[1], [0], [0], [1], [0, 0, 1, 1], [], []>} : vector<256x576xbf16>, vector<576x64xbf16>, vector<256x64xf32> -> vector<256x64xf32>
    %45 = vector.shape_cast %44 : vector<256x64xf32> to vector<1x256x64xf32>
    %46 = arith.truncf %45 : vector<1x256x64xf32> to vector<1x256x64xbf16>
    %c0_49 = arith.constant 0 : index
    %c0_50 = arith.constant 0 : index
    %c0_51 = arith.constant 0 : index
    %47 = vector.load %arg3[%c0_49, %c0_50, %c0_51] : memref<1x256x64xbf16, #tpu.memory_space<vmem>>, vector<1x256x64xbf16>
    tpu.vector_store %arg3[%c0_49, %c0_50, %c0_51], %46 {strides = array<i32>} : memref<1x256x64xbf16, #tpu.memory_space<vmem>>, vector<1x256x64xbf16>,
    %cst_52 = arith.constant dense<0.000000e+00> : vector<64xf32>
    %48 = vector.multi_reduction <add>, %44, %cst_52 [0] : vector<256x64xf32> to vector<64xf32>
    %49 = vector.shape_cast %48 : vector<64xf32> to vector<1x64xf32>
    %c0_53 = arith.constant 0 : index
    %c0_54 = arith.constant 0 : index
    %c0_55 = arith.constant 0 : index
    %50 = vector.load %arg4[%c0_53, %c0_54, %c0_55] : memref<1x1x64xf32, #tpu.memory_space<vmem>>, vector<1x1x64xf32>
    %51 = vector.shape_cast %50 : vector<1x1x64xf32> to vector<1x64xf32>
    %52 = vector.shape_cast %49 : vector<1x64xf32> to vector<1x1x64xf32>
    tpu.vector_store %arg4[%c0_53, %c0_54, %c0_55], %52 {strides = array<i32>} : memref<1x1x64xf32, #tpu.memory_space<vmem>>, vector<1x1x64xf32>,
    %53 = arith.mulf %44, %44 : vector<256x64xf32>
    %cst_56 = arith.constant dense<0.000000e+00> : vector<64xf32>
    %54 = vector.multi_reduction <add>, %53, %cst_56 [0] : vector<256x64xf32> to vector<64xf32>
    %55 = vector.shape_cast %54 : vector<64xf32> to vector<1x64xf32>
    %c0_57 = arith.constant 0 : index
    %c0_58 = arith.constant 0 : index
    %c0_59 = arith.constant 0 : index
    %56 = vector.load %arg5[%c0_57, %c0_58, %c0_59] : memref<1x1x64xf32, #tpu.memory_space<vmem>>, vector<1x1x64xf32>
    %57 = vector.shape_cast %56 : vector<1x1x64xf32> to vector<1x64xf32>
    %58 = vector.shape_cast %55 : vector<1x64xf32> to vector<1x1x64xf32>
    tpu.vector_store %arg5[%c0_57, %c0_58, %c0_59], %58 {strides = array<i32>} : memref<1x1x64xf32, #tpu.memory_space<vmem>>, vector<1x1x64xf32>,
    return
  }
  func.func @transform_0(%arg0: i32) -> (i32, i32, i32, i32) {
    %c0_i32 = arith.constant 0 : i32
    %c0_i32_0 = arith.constant 0 : i32
    %c0_i32_1 = arith.constant 0 : i32
    %c0_i32_2 = arith.constant 0 : i32
    return %arg0, %c0_i32, %c0_i32_0, %c0_i32_1 : i32, i32, i32, i32
  }
  func.func @transform_1(%arg0: i32) -> (i32, i32) {
    %c0_i32 = arith.constant 0 : i32
    %c0_i32_0 = arith.constant 0 : i32
    %c0_i32_1 = arith.constant 0 : i32
    return %c0_i32, %c0_i32_0 : i32, i32
  }
  func.func @transform_2(%arg0: i32) -> (i32, i32, i32) {
    %c0_i32 = arith.constant 0 : i32
    %c0_i32_0 = arith.constant 0 : i32
    %c0_i32_1 = arith.constant 0 : i32
    return %arg0, %c0_i32, %c0_i32_0 : i32, i32, i32
  }
  func.func @transform_3(%arg0: i32) -> (i32, i32, i32) {
    %c0_i32 = arith.constant 0 : i32
    %c0_i32_0 = arith.constant 0 : i32
    %c0_i32_1 = arith.constant 0 : i32
    return %arg0, %c0_i32, %c0_i32_0 : i32, i32, i32
  }
  func.func @transform_4(%arg0: i32) -> (i32, i32, i32) {
    %c0_i32 = arith.constant 0 : i32
    %c0_i32_0 = arith.constant 0 : i32
    %c0_i32_1 = arith.constant 0 : i32
    return %arg0, %c0_i32, %c0_i32_0 : i32, i32, i32
  }
}

module attributes {stable_mosaic.version = 11 : i64} {
  func.func @body(%arg0: i32, %arg1: memref<1x256x64xbf16, #tpu.memory_space<vmem>>, %arg2: memref<1x64xf32, #tpu.memory_space<vmem>>, %arg3: memref<1x64xf32, #tpu.memory_space<vmem>>, %arg4: memref<576x64xbf16, #tpu.memory_space<vmem>>, %arg5: memref<1x256x64xbf16, #tpu.memory_space<vmem>>, %arg6: memref<1x1x64xf32, #tpu.memory_space<vmem>>, %arg7: memref<1x1x64xf32, #tpu.memory_space<vmem>>, %arg8: memref<18x18x64xf32, #tpu.memory_space<vmem>>, %arg9: memref<256x576xbf16, #tpu.memory_space<vmem>>) attributes {dimension_semantics = [#tpu.dimension_semantics<parallel>], iteration_bounds = array<i64: 2>, scalar_prefetch = 0 : i64, scratch_operands = 2 : i64, tpu.core_type = #tpu.core_type<tc>, window_params = [{transform_indices = @transform_0, window_bounds = array<i64: 1, 256, 64>}, {pipeline_mode = #tpu.pipeline_mode<synchronous>, transform_indices = @transform_1, window_bounds = array<i64: 1, 64>}, {pipeline_mode = #tpu.pipeline_mode<synchronous>, transform_indices = @transform_2, window_bounds = array<i64: 1, 64>}, {pipeline_mode = #tpu.pipeline_mode<synchronous>, transform_indices = @transform_3, window_bounds = array<i64: 576, 64>}, {transform_indices = @transform_4, window_bounds = array<i64: 1, 256, 64>}, {transform_indices = @transform_5, window_bounds = array<i64: 1, 1, 64>}, {transform_indices = @transform_6, window_bounds = array<i64: 1, 1, 64>}]} {
    %cst = arith.constant 0.000000e+00 : f32
    %0 = vector.broadcast %cst : f32 to vector<18x18x64xf32>
    %c0 = arith.constant 0 : index
    %c0_0 = arith.constant 0 : index
    %c0_1 = arith.constant 0 : index
    %1 = vector.load %arg8[%c0, %c0_0, %c0_1] : memref<18x18x64xf32, #tpu.memory_space<vmem>>, vector<18x18x64xf32>
    tpu.vector_store %arg8[%c0, %c0_0, %c0_1], %0 {strides = array<i32>} : memref<18x18x64xf32, #tpu.memory_space<vmem>>, vector<18x18x64xf32>,
    %c0_2 = arith.constant 0 : index
    %c0_3 = arith.constant 0 : index
    %c0_4 = arith.constant 0 : index
    %2 = vector.load %arg1[%c0_2, %c0_3, %c0_4] : memref<1x256x64xbf16, #tpu.memory_space<vmem>>, vector<1x256x64xbf16>
    %3 = vector.shape_cast %2 : vector<1x256x64xbf16> to vector<256x64xbf16>
    %4 = arith.extf %3 : vector<256x64xbf16> to vector<256x64xf32>
    %c0_5 = arith.constant 0 : index
    %c0_6 = arith.constant 0 : index
    %5 = vector.load %arg2[%c0_5, %c0_6] : memref<1x64xf32, #tpu.memory_space<vmem>>, vector<1x64xf32>
    %6 = vector.broadcast %5 : vector<1x64xf32> to vector<256x64xf32>
    %7 = arith.mulf %4, %6 : vector<256x64xf32>
    %c0_7 = arith.constant 0 : index
    %c0_8 = arith.constant 0 : index
    %8 = vector.load %arg3[%c0_7, %c0_8] : memref<1x64xf32, #tpu.memory_space<vmem>>, vector<1x64xf32>
    %9 = vector.broadcast %8 : vector<1x64xf32> to vector<256x64xf32>
    %10 = arith.addf %7, %9 : vector<256x64xf32>
    %cst_9 = arith.constant 0.000000e+00 : f32
    %11 = vector.broadcast %cst_9 : f32 to vector<256x64xf32>
    %12 = arith.maximumf %10, %11 : vector<256x64xf32>
    %13 = vector.shape_cast %12 : vector<256x64xf32> to vector<16x16x64xf32>
    %c1 = arith.constant 1 : index
    %c1_10 = arith.constant 1 : index
    %c0_11 = arith.constant 0 : index
    %14 = vector.load %arg8[%c1, %c1_10, %c0_11] : memref<18x18x64xf32, #tpu.memory_space<vmem>>, vector<16x16x64xf32>
    tpu.vector_store %arg8[%c1, %c1_10, %c0_11], %13 {strides = array<i32>} : memref<18x18x64xf32, #tpu.memory_space<vmem>>, vector<16x16x64xf32>,
    %c0_12 = arith.constant 0 : index
    %c0_13 = arith.constant 0 : index
    %c0_14 = arith.constant 0 : index
    %15 = vector.load %arg8[%c0_12, %c0_13, %c0_14] : memref<18x18x64xf32, #tpu.memory_space<vmem>>, vector<16x16x64xf32>
    %16 = arith.truncf %15 : vector<16x16x64xf32> to vector<16x16x64xbf16>
    %17 = vector.shape_cast %16 : vector<16x16x64xbf16> to vector<256x64xbf16>
    %c0_15 = arith.constant 0 : index
    %c0_16 = arith.constant 0 : index
    %18 = vector.load %arg9[%c0_15, %c0_16] : memref<256x576xbf16, #tpu.memory_space<vmem>>, vector<256x64xbf16>
    tpu.vector_store %arg9[%c0_15, %c0_16], %17 {strides = array<i32>} : memref<256x576xbf16, #tpu.memory_space<vmem>>, vector<256x64xbf16>,
    %c0_17 = arith.constant 0 : index
    %c1_18 = arith.constant 1 : index
    %c0_19 = arith.constant 0 : index
    %19 = vector.load %arg8[%c0_17, %c1_18, %c0_19] : memref<18x18x64xf32, #tpu.memory_space<vmem>>, vector<16x16x64xf32>
    %20 = arith.truncf %19 : vector<16x16x64xf32> to vector<16x16x64xbf16>
    %21 = vector.shape_cast %20 : vector<16x16x64xbf16> to vector<256x64xbf16>
    %c0_20 = arith.constant 0 : index
    %c64 = arith.constant 64 : index
    %22 = vector.load %arg9[%c0_20, %c64] : memref<256x576xbf16, #tpu.memory_space<vmem>>, vector<256x64xbf16>
    tpu.vector_store %arg9[%c0_20, %c64], %21 {strides = array<i32>} : memref<256x576xbf16, #tpu.memory_space<vmem>>, vector<256x64xbf16>,
    %c0_21 = arith.constant 0 : index
    %c2 = arith.constant 2 : index
    %c0_22 = arith.constant 0 : index
    %23 = vector.load %arg8[%c0_21, %c2, %c0_22] : memref<18x18x64xf32, #tpu.memory_space<vmem>>, vector<16x16x64xf32>
    %24 = arith.truncf %23 : vector<16x16x64xf32> to vector<16x16x64xbf16>
    %25 = vector.shape_cast %24 : vector<16x16x64xbf16> to vector<256x64xbf16>
    %c0_23 = arith.constant 0 : index
    %c128 = arith.constant 128 : index
    %26 = vector.load %arg9[%c0_23, %c128] : memref<256x576xbf16, #tpu.memory_space<vmem>>, vector<256x64xbf16>
    tpu.vector_store %arg9[%c0_23, %c128], %25 {strides = array<i32>} : memref<256x576xbf16, #tpu.memory_space<vmem>>, vector<256x64xbf16>,
    %c1_24 = arith.constant 1 : index
    %c0_25 = arith.constant 0 : index
    %c0_26 = arith.constant 0 : index
    %27 = vector.load %arg8[%c1_24, %c0_25, %c0_26] : memref<18x18x64xf32, #tpu.memory_space<vmem>>, vector<16x16x64xf32>
    %28 = arith.truncf %27 : vector<16x16x64xf32> to vector<16x16x64xbf16>
    %29 = vector.shape_cast %28 : vector<16x16x64xbf16> to vector<256x64xbf16>
    %c0_27 = arith.constant 0 : index
    %c192 = arith.constant 192 : index
    %30 = vector.load %arg9[%c0_27, %c192] : memref<256x576xbf16, #tpu.memory_space<vmem>>, vector<256x64xbf16>
    tpu.vector_store %arg9[%c0_27, %c192], %29 {strides = array<i32>} : memref<256x576xbf16, #tpu.memory_space<vmem>>, vector<256x64xbf16>,
    %c1_28 = arith.constant 1 : index
    %c1_29 = arith.constant 1 : index
    %c0_30 = arith.constant 0 : index
    %31 = vector.load %arg8[%c1_28, %c1_29, %c0_30] : memref<18x18x64xf32, #tpu.memory_space<vmem>>, vector<16x16x64xf32>
    %32 = arith.truncf %31 : vector<16x16x64xf32> to vector<16x16x64xbf16>
    %33 = vector.shape_cast %32 : vector<16x16x64xbf16> to vector<256x64xbf16>
    %c0_31 = arith.constant 0 : index
    %c256 = arith.constant 256 : index
    %34 = vector.load %arg9[%c0_31, %c256] : memref<256x576xbf16, #tpu.memory_space<vmem>>, vector<256x64xbf16>
    tpu.vector_store %arg9[%c0_31, %c256], %33 {strides = array<i32>} : memref<256x576xbf16, #tpu.memory_space<vmem>>, vector<256x64xbf16>,
    %c1_32 = arith.constant 1 : index
    %c2_33 = arith.constant 2 : index
    %c0_34 = arith.constant 0 : index
    %35 = vector.load %arg8[%c1_32, %c2_33, %c0_34] : memref<18x18x64xf32, #tpu.memory_space<vmem>>, vector<16x16x64xf32>
    %36 = arith.truncf %35 : vector<16x16x64xf32> to vector<16x16x64xbf16>
    %37 = vector.shape_cast %36 : vector<16x16x64xbf16> to vector<256x64xbf16>
    %c0_35 = arith.constant 0 : index
    %c320 = arith.constant 320 : index
    %38 = vector.load %arg9[%c0_35, %c320] : memref<256x576xbf16, #tpu.memory_space<vmem>>, vector<256x64xbf16>
    tpu.vector_store %arg9[%c0_35, %c320], %37 {strides = array<i32>} : memref<256x576xbf16, #tpu.memory_space<vmem>>, vector<256x64xbf16>,
    %c2_36 = arith.constant 2 : index
    %c0_37 = arith.constant 0 : index
    %c0_38 = arith.constant 0 : index
    %39 = vector.load %arg8[%c2_36, %c0_37, %c0_38] : memref<18x18x64xf32, #tpu.memory_space<vmem>>, vector<16x16x64xf32>
    %40 = arith.truncf %39 : vector<16x16x64xf32> to vector<16x16x64xbf16>
    %41 = vector.shape_cast %40 : vector<16x16x64xbf16> to vector<256x64xbf16>
    %c0_39 = arith.constant 0 : index
    %c384 = arith.constant 384 : index
    %42 = vector.load %arg9[%c0_39, %c384] : memref<256x576xbf16, #tpu.memory_space<vmem>>, vector<256x64xbf16>
    tpu.vector_store %arg9[%c0_39, %c384], %41 {strides = array<i32>} : memref<256x576xbf16, #tpu.memory_space<vmem>>, vector<256x64xbf16>,
    %c2_40 = arith.constant 2 : index
    %c1_41 = arith.constant 1 : index
    %c0_42 = arith.constant 0 : index
    %43 = vector.load %arg8[%c2_40, %c1_41, %c0_42] : memref<18x18x64xf32, #tpu.memory_space<vmem>>, vector<16x16x64xf32>
    %44 = arith.truncf %43 : vector<16x16x64xf32> to vector<16x16x64xbf16>
    %45 = vector.shape_cast %44 : vector<16x16x64xbf16> to vector<256x64xbf16>
    %c0_43 = arith.constant 0 : index
    %c448 = arith.constant 448 : index
    %46 = vector.load %arg9[%c0_43, %c448] : memref<256x576xbf16, #tpu.memory_space<vmem>>, vector<256x64xbf16>
    tpu.vector_store %arg9[%c0_43, %c448], %45 {strides = array<i32>} : memref<256x576xbf16, #tpu.memory_space<vmem>>, vector<256x64xbf16>,
    %c2_44 = arith.constant 2 : index
    %c2_45 = arith.constant 2 : index
    %c0_46 = arith.constant 0 : index
    %47 = vector.load %arg8[%c2_44, %c2_45, %c0_46] : memref<18x18x64xf32, #tpu.memory_space<vmem>>, vector<16x16x64xf32>
    %48 = arith.truncf %47 : vector<16x16x64xf32> to vector<16x16x64xbf16>
    %49 = vector.shape_cast %48 : vector<16x16x64xbf16> to vector<256x64xbf16>
    %c0_47 = arith.constant 0 : index
    %c512 = arith.constant 512 : index
    %50 = vector.load %arg9[%c0_47, %c512] : memref<256x576xbf16, #tpu.memory_space<vmem>>, vector<256x64xbf16>
    tpu.vector_store %arg9[%c0_47, %c512], %49 {strides = array<i32>} : memref<256x576xbf16, #tpu.memory_space<vmem>>, vector<256x64xbf16>,
    %c0_48 = arith.constant 0 : index
    %c0_49 = arith.constant 0 : index
    %51 = vector.load %arg9[%c0_48, %c0_49] : memref<256x576xbf16, #tpu.memory_space<vmem>>, vector<256x576xbf16>
    %c0_50 = arith.constant 0 : index
    %c0_51 = arith.constant 0 : index
    %52 = vector.load %arg4[%c0_50, %c0_51] : memref<576x64xbf16, #tpu.memory_space<vmem>>, vector<576x64xbf16>
    %cst_52 = arith.constant dense<0.000000e+00> : vector<256x64xf32>
    %53 = tpu.matmul %51, %52, %cst_52 {dimension_numbers = #tpu.dot_dimension_numbers<[1], [0], [0], [1], [0, 0, 1, 1], [], []>} : vector<256x576xbf16>, vector<576x64xbf16>, vector<256x64xf32> -> vector<256x64xf32>
    %54 = vector.shape_cast %53 : vector<256x64xf32> to vector<1x256x64xf32>
    %55 = arith.truncf %54 : vector<1x256x64xf32> to vector<1x256x64xbf16>
    %c0_53 = arith.constant 0 : index
    %c0_54 = arith.constant 0 : index
    %c0_55 = arith.constant 0 : index
    %56 = vector.load %arg5[%c0_53, %c0_54, %c0_55] : memref<1x256x64xbf16, #tpu.memory_space<vmem>>, vector<1x256x64xbf16>
    tpu.vector_store %arg5[%c0_53, %c0_54, %c0_55], %55 {strides = array<i32>} : memref<1x256x64xbf16, #tpu.memory_space<vmem>>, vector<1x256x64xbf16>,
    %cst_56 = arith.constant dense<0.000000e+00> : vector<64xf32>
    %57 = vector.multi_reduction <add>, %53, %cst_56 [0] : vector<256x64xf32> to vector<64xf32>
    %58 = vector.shape_cast %57 : vector<64xf32> to vector<1x64xf32>
    %c0_57 = arith.constant 0 : index
    %c0_58 = arith.constant 0 : index
    %c0_59 = arith.constant 0 : index
    %59 = vector.load %arg6[%c0_57, %c0_58, %c0_59] : memref<1x1x64xf32, #tpu.memory_space<vmem>>, vector<1x1x64xf32>
    %60 = vector.shape_cast %59 : vector<1x1x64xf32> to vector<1x64xf32>
    %61 = vector.shape_cast %58 : vector<1x64xf32> to vector<1x1x64xf32>
    tpu.vector_store %arg6[%c0_57, %c0_58, %c0_59], %61 {strides = array<i32>} : memref<1x1x64xf32, #tpu.memory_space<vmem>>, vector<1x1x64xf32>,
    %62 = arith.mulf %53, %53 : vector<256x64xf32>
    %cst_60 = arith.constant dense<0.000000e+00> : vector<64xf32>
    %63 = vector.multi_reduction <add>, %62, %cst_60 [0] : vector<256x64xf32> to vector<64xf32>
    %64 = vector.shape_cast %63 : vector<64xf32> to vector<1x64xf32>
    %c0_61 = arith.constant 0 : index
    %c0_62 = arith.constant 0 : index
    %c0_63 = arith.constant 0 : index
    %65 = vector.load %arg7[%c0_61, %c0_62, %c0_63] : memref<1x1x64xf32, #tpu.memory_space<vmem>>, vector<1x1x64xf32>
    %66 = vector.shape_cast %65 : vector<1x1x64xf32> to vector<1x64xf32>
    %67 = vector.shape_cast %64 : vector<1x64xf32> to vector<1x1x64xf32>
    tpu.vector_store %arg7[%c0_61, %c0_62, %c0_63], %67 {strides = array<i32>} : memref<1x1x64xf32, #tpu.memory_space<vmem>>, vector<1x1x64xf32>,
    return
  }
  func.func @transform_0(%arg0: i32) -> (i32, i32, i32) {
    %c0_i32 = arith.constant 0 : i32
    %c0_i32_0 = arith.constant 0 : i32
    %c0_i32_1 = arith.constant 0 : i32
    return %arg0, %c0_i32, %c0_i32_0 : i32, i32, i32
  }
  func.func @transform_1(%arg0: i32) -> (i32, i32) {
    %c0_i32 = arith.constant 0 : i32
    %c0_i32_0 = arith.constant 0 : i32
    %c0_i32_1 = arith.constant 0 : i32
    return %c0_i32, %c0_i32_0 : i32, i32
  }
  func.func @transform_2(%arg0: i32) -> (i32, i32) {
    %c0_i32 = arith.constant 0 : i32
    %c0_i32_0 = arith.constant 0 : i32
    %c0_i32_1 = arith.constant 0 : i32
    return %c0_i32, %c0_i32_0 : i32, i32
  }
  func.func @transform_3(%arg0: i32) -> (i32, i32) {
    %c0_i32 = arith.constant 0 : i32
    %c0_i32_0 = arith.constant 0 : i32
    %c0_i32_1 = arith.constant 0 : i32
    return %c0_i32, %c0_i32_0 : i32, i32
  }
  func.func @transform_4(%arg0: i32) -> (i32, i32, i32) {
    %c0_i32 = arith.constant 0 : i32
    %c0_i32_0 = arith.constant 0 : i32
    %c0_i32_1 = arith.constant 0 : i32
    return %arg0, %c0_i32, %c0_i32_0 : i32, i32, i32
  }
  func.func @transform_5(%arg0: i32) -> (i32, i32, i32) {
    %c0_i32 = arith.constant 0 : i32
    %c0_i32_0 = arith.constant 0 : i32
    %c0_i32_1 = arith.constant 0 : i32
    return %arg0, %c0_i32, %c0_i32_0 : i32, i32, i32
  }
  func.func @transform_6(%arg0: i32) -> (i32, i32, i32) {
    %c0_i32 = arith.constant 0 : i32
    %c0_i32_0 = arith.constant 0 : i32
    %c0_i32_1 = arith.constant 0 : i32
    return %arg0, %c0_i32, %c0_i32_0 : i32, i32, i32
  }
}

module attributes {stable_mosaic.version = 11 : i64} {
  func.func @_bn_add_relu_kernel(%arg0: i32, %arg1: memref<256x128xbf16, #tpu.memory_space<vmem>>, %arg2: memref<1x128xf32, #tpu.memory_space<vmem>>, %arg3: memref<1x128xf32, #tpu.memory_space<vmem>>, %arg4: memref<256x128xbf16, #tpu.memory_space<vmem>>, %arg5: memref<256x128xf32, #tpu.memory_space<vmem>>) attributes {dimension_semantics = [#tpu.dimension_semantics<parallel>], iteration_bounds = array<i64: 1>, scalar_prefetch = 0 : i64, scratch_operands = 0 : i64, tpu.core_type = #tpu.core_type<tc>, window_params = [{transform_indices = @transform_0, window_bounds = array<i64: 256, 128>}, {pipeline_mode = #tpu.pipeline_mode<synchronous>, transform_indices = @transform_1, window_bounds = array<i64: 1, 128>}, {pipeline_mode = #tpu.pipeline_mode<synchronous>, transform_indices = @transform_2, window_bounds = array<i64: 1, 128>}, {transform_indices = @transform_3, window_bounds = array<i64: 256, 128>}, {transform_indices = @transform_4, window_bounds = array<i64: 256, 128>}]} {
    %c0 = arith.constant 0 : index
    %c0_0 = arith.constant 0 : index
    %0 = vector.load %arg1[%c0, %c0_0] : memref<256x128xbf16, #tpu.memory_space<vmem>>, vector<256x128xbf16>
    %1 = arith.extf %0 : vector<256x128xbf16> to vector<256x128xf32>
    %c0_1 = arith.constant 0 : index
    %c0_2 = arith.constant 0 : index
    %2 = vector.load %arg2[%c0_1, %c0_2] : memref<1x128xf32, #tpu.memory_space<vmem>>, vector<1x128xf32>
    %3 = vector.broadcast %2 : vector<1x128xf32> to vector<256x128xf32>
    %4 = arith.mulf %1, %3 : vector<256x128xf32>
    %c0_3 = arith.constant 0 : index
    %c0_4 = arith.constant 0 : index
    %5 = vector.load %arg3[%c0_3, %c0_4] : memref<1x128xf32, #tpu.memory_space<vmem>>, vector<1x128xf32>
    %6 = vector.broadcast %5 : vector<1x128xf32> to vector<256x128xf32>
    %7 = arith.addf %4, %6 : vector<256x128xf32>
    %c0_5 = arith.constant 0 : index
    %c0_6 = arith.constant 0 : index
    %8 = vector.load %arg4[%c0_5, %c0_6] : memref<256x128xbf16, #tpu.memory_space<vmem>>, vector<256x128xbf16>
    %9 = arith.extf %8 : vector<256x128xbf16> to vector<256x128xf32>
    %10 = arith.addf %7, %9 : vector<256x128xf32>
    %cst = arith.constant 0.000000e+00 : f32
    %11 = vector.broadcast %cst : f32 to vector<256x128xf32>
    %12 = arith.maximumf %10, %11 : vector<256x128xf32>
    %c0_7 = arith.constant 0 : index
    %c0_8 = arith.constant 0 : index
    %13 = vector.load %arg5[%c0_7, %c0_8] : memref<256x128xf32, #tpu.memory_space<vmem>>, vector<256x128xf32>
    tpu.vector_store %arg5[%c0_7, %c0_8], %12 {strides = array<i32>} : memref<256x128xf32, #tpu.memory_space<vmem>>, vector<256x128xf32>,
    return
  }
  func.func @transform_0(%arg0: i32) -> (i32, i32) {
    %c0_i32 = arith.constant 0 : i32
    %c0_i32_0 = arith.constant 0 : i32
    return %arg0, %c0_i32 : i32, i32
  }
  func.func @transform_1(%arg0: i32) -> (i32, i32) {
    %c0_i32 = arith.constant 0 : i32
    %c0_i32_0 = arith.constant 0 : i32
    %c0_i32_1 = arith.constant 0 : i32
    return %c0_i32, %c0_i32_0 : i32, i32
  }
  func.func @transform_2(%arg0: i32) -> (i32, i32) {
    %c0_i32 = arith.constant 0 : i32
    %c0_i32_0 = arith.constant 0 : i32
    %c0_i32_1 = arith.constant 0 : i32
    return %c0_i32, %c0_i32_0 : i32, i32
  }
  func.func @transform_3(%arg0: i32) -> (i32, i32) {
    %c0_i32 = arith.constant 0 : i32
    %c0_i32_0 = arith.constant 0 : i32
    return %arg0, %c0_i32 : i32, i32
  }
  func.func @transform_4(%arg0: i32) -> (i32, i32) {
    %c0_i32 = arith.constant 0 : i32
    %c0_i32_0 = arith.constant 0 : i32
    return %arg0, %c0_i32 : i32, i32
  }
}

</mosaic_0001>

<llo_original>
// kernel: basic_block_forward.5
$region0: #{basic_block_forward.5}
  #allocation0 [shape = 'u32[]', space=smem, size = 0x4, offset = 0x4, fixed_abs, tag = 'smem constant byte address 0x4 - core index']
  #allocation1 [shape = 'u32[144,128]{1,0:T(1,128)}', space=vmem, size = 0x12000, scoped, tag = 'internal scratch']
  %s0 = inlined_call_operand.vmem [shape: bf16[256,128], index: 0, kind: input, shape index: {}]
  %s1 = inlined_call_operand.vmem [shape: f32[1,128], index: 1, kind: input, shape index: {}]
  %s2 = inlined_call_operand.vmem [shape: f32[1,128], index: 2, kind: input, shape index: {}]
  %s3 = inlined_call_operand.vmem [shape: bf16[256,128], index: 3, kind: input, shape index: {}]
  %s4 = inlined_call_operand.vmem [shape: f32[256,128], index: 4, kind: output, shape index: {}]
  %s5 = sld [smem:[#allocation0]]
  $region26: #{basic_block_forward.5} parent=0
    _
  %s7 = ssub.s32 1, %s5
  %s8 = scalar_select 0, %s7, %s5
  // Predicated region
  $region2: #{basic_block_forward.5} parent=0 // pred_check
    _
  $region3: #{basic_block_forward.5} parent=0 // pred_check_branch
    %10 = sbr.rel (0) target = $region5
  $region4: #{basic_block_forward.5} parent=0 // pred_region
    _
  $region5: #{basic_block_forward.5} parent=0 // pred_fallthru
    _
  // Predicated region
  $region6: #{basic_block_forward.5} parent=0 // pred_check
    _
  $region7: #{basic_block_forward.5} parent=0 // pred_check_branch
    %12 = sbr.rel (0) target = $region9
  $region8: #{basic_block_forward.5} parent=0 // pred_region
    _
  $region9: #{basic_block_forward.5} parent=0 // pred_fallthru
    _
  // Predicated region
  $region10: #{basic_block_forward.5} parent=0 // pred_check
    _
  $region11: #{basic_block_forward.5} parent=0 // pred_check_branch
    %14 = sbr.rel (0) target = $region13
  $region12: #{basic_block_forward.5} parent=0 // pred_region
    _
  $region13: #{basic_block_forward.5} parent=0 // pred_fallthru
    _
  // Predicated region
  $region14: #{basic_block_forward.5} parent=0 // pred_check
    _
  $region15: #{basic_block_forward.5} parent=0 // pred_check_branch
    %16 = sbr.rel (0) target = $region17
  $region16: #{basic_block_forward.5} parent=0 // pred_region
    _
  $region17: #{basic_block_forward.5} parent=0 // pred_fallthru
    _
  %v17 = vld [vmem:[%s0] sm:$0xf]
  %v18 = vld [vmem:[%s0 + $0x4] sm:$0xf]
  %v19 = vld [vmem:[%s0 + $0x8] sm:$0xf]
  %v20 = vld [vmem:[%s0 + $0xc] sm:$0xf]
  %v21 = vld [vmem:[%s0 + $0x10] sm:$0xf]
  %v22 = vld [vmem:[%s0 + $0x14] sm:$0xf]
  %v23 = vld [vmem:[%s0 + $0x18] sm:$0xf]
  %v24 = vld [vmem:[%s0 + $0x1c] sm:$0xf]
  %v25 = vld [vmem:[%s0 + $0x20] sm:$0xf]
  %v26 = vld [vmem:[%s0 + $0x24] sm:$0xf]
  %v27 = vld [vmem:[%s0 + $0x28] sm:$0xf]
  %v28 = vld [vmem:[%s0 + $0x2c] sm:$0xf]
  %v29 = vld [vmem:[%s0 + $0x30] sm:$0xf]
  %v30 = vld [vmem:[%s0 + $0x34] sm:$0xf]
  %v31 = vld [vmem:[%s0 + $0x38] sm:$0xf]
  %v32 = vld [vmem:[%s0 + $0x3c] sm:$0xf]
  %v33 = vld [vmem:[%s0 + $0x40] sm:$0xf]
  %v34 = vld [vmem:[%s0 + $0x44] sm:$0xf]
  %v35 = vld [vmem:[%s0 + $0x48] sm:$0xf]
  %v36 = vld [vmem:[%s0 + $0x4c] sm:$0xf]
  %v37 = vld [vmem:[%s0 + $0x50] sm:$0xf]
  %v38 = vld [vmem:[%s0 + $0x54] sm:$0xf]
  %v39 = vld [vmem:[%s0 + $0x58] sm:$0xf]
  %v40 = vld [vmem:[%s0 + $0x5c] sm:$0xf]
  %v41 = vld [vmem:[%s0 + $0x60] sm:$0xf]
  %v42 = vld [vmem:[%s0 + $0x64] sm:$0xf]
  %v43 = vld [vmem:[%s0 + $0x68] sm:$0xf]
  %v44 = vld [vmem:[%s0 + $0x6c] sm:$0xf]
  %v45 = vld [vmem:[%s0 + $0x70] sm:$0xf]
  %v46 = vld [vmem:[%s0 + $0x74] sm:$0xf]
  %v47 = vld [vmem:[%s0 + $0x78] sm:$0xf]
  %v48 = vld [vmem:[%s0 + $0x7c] sm:$0xf]
  %v49 = vunpack.c.l.bf16 %v17
  %v50 = vunpack.c.l.bf16 %v18
  %v51 = vunpack.c.l.bf16 %v19
  %v52 = vunpack.c.l.bf16 %v20
  %v53 = vunpack.c.l.bf16 %v21
  %v54 = vunpack.c.l.bf16 %v22
  %v55 = vunpack.c.l.bf16 %v23
  %v56 = vunpack.c.l.bf16 %v24
  %v57 = vunpack.c.l.bf16 %v25
  %v58 = vunpack.c.l.bf16 %v26
  %v59 = vunpack.c.l.bf16 %v27
  %v60 = vunpack.c.l.bf16 %v28
  %v61 = vunpack.c.l.bf16 %v29
  %v62 = vunpack.c.l.bf16 %v30
  %v63 = vunpack.c.l.bf16 %v31
  %v64 = vunpack.c.l.bf16 %v32
  %v65 = vunpack.c.l.bf16 %v33
  %v66 = vunpack.c.l.bf16 %v34
  %v67 = vunpack.c.l.bf16 %v35
  %v68 = vunpack.c.l.bf16 %v36
  %v69 = vunpack.c.l.bf16 %v37
  %v70 = vunpack.c.l.bf16 %v38
  %v71 = vunpack.c.l.bf16 %v39
  %v72 = vunpack.c.l.bf16 %v40
  %v73 = vunpack.c.l.bf16 %v41
  %v74 = vunpack.c.l.bf16 %v42
  %v75 = vunpack.c.l.bf16 %v43
  %v76 = vunpack.c.l.bf16 %v44
  %v77 = vunpack.c.l.bf16 %v45
  %v78 = vunpack.c.l.bf16 %v46
  %v79 = vunpack.c.l.bf16 %v47
  %v80 = vunpack.c.l.bf16 %v48
  %v81 = vld [vmem:[%s1] sm:$0x1]
  %v83 = vlaneseq
  %v84 = vshrl.u32 %v83, 7
  %v85 = vsub.s32 0, %v84
  %v86 = vrot.slane %v81, %v85
  %v88 = vmul.f32 %v49, %v86
  %v89 = vmul.f32 %v50, %v86
  %v90 = vmul.f32 %v51, %v86
  %v91 = vmul.f32 %v52, %v86
  %v92 = vmul.f32 %v53, %v86
  %v93 = vmul.f32 %v54, %v86
  %v94 = vmul.f32 %v55, %v86
  %v95 = vmul.f32 %v56, %v86
  %v96 = vmul.f32 %v57, %v86
  %v97 = vmul.f32 %v58, %v86
  %v98 = vmul.f32 %v59, %v86
  %v99 = vmul.f32 %v60, %v86
  %v100 = vmul.f32 %v61, %v86
  %v101 = vmul.f32 %v62, %v86
  %v102 = vmul.f32 %v63, %v86
  %v103 = vmul.f32 %v64, %v86
  %v104 = vmul.f32 %v65, %v86
  %v105 = vmul.f32 %v66, %v86
  %v106 = vmul.f32 %v67, %v86
  %v107 = vmul.f32 %v68, %v86
  %v108 = vmul.f32 %v69, %v86
  %v109 = vmul.f32 %v70, %v86
  %v110 = vmul.f32 %v71, %v86
  %v111 = vmul.f32 %v72, %v86
  %v112 = vmul.f32 %v73, %v86
  %v113 = vmul.f32 %v74, %v86
  %v114 = vmul.f32 %v75, %v86
  %v115 = vmul.f32 %v76, %v86
  %v116 = vmul.f32 %v77, %v86
  %v117 = vmul.f32 %v78, %v86
  %v118 = vmul.f32 %v79, %v86
  %v119 = vmul.f32 %v80, %v86
  %v120 = vld [vmem:[%s2] sm:$0x1]
  %v122 = vlaneseq
  %v123 = vshrl.u32 %v122, 7
  %v124 = vsub.s32 0, %v123
  %v125 = vrot.slane %v120, %v124
  %v127 = vadd.f32 %v88, %v125
  %v128 = vadd.f32 %v89, %v125
  %v129 = vadd.f32 %v90, %v125
  %v130 = vadd.f32 %v91, %v125
  %v131 = vadd.f32 %v92, %v125
  %v132 = vadd.f32 %v93, %v125
  %v133 = vadd.f32 %v94, %v125
  %v134 = vadd.f32 %v95, %v125
  %v135 = vadd.f32 %v96, %v125
  %v136 = vadd.f32 %v97, %v125
  %v137 = vadd.f32 %v98, %v125
  %v138 = vadd.f32 %v99, %v125
  %v139 = vadd.f32 %v100, %v125
  %v140 = vadd.f32 %v101, %v125
  %v141 = vadd.f32 %v102, %v125
  %v142 = vadd.f32 %v103, %v125
  %v143 = vadd.f32 %v104, %v125
  %v144 = vadd.f32 %v105, %v125
  %v145 = vadd.f32 %v106, %v125
  %v146 = vadd.f32 %v107, %v125
  %v147 = vadd.f32 %v108, %v125
  %v148 = vadd.f32 %v109, %v125
  %v149 = vadd.f32 %v110, %v125
  %v150 = vadd.f32 %v111, %v125
  %v151 = vadd.f32 %v112, %v125
  %v152 = vadd.f32 %v113, %v125
  %v153 = vadd.f32 %v114, %v125
  %v154 = vadd.f32 %v115, %v125
  %v155 = vadd.f32 %v116, %v125
  %v156 = vadd.f32 %v117, %v125
  %v157 = vadd.f32 %v118, %v125
  %v158 = vadd.f32 %v119, %v125
  %v159 = vld [vmem:[%s3] sm:$0xf]
  %v160 = vld [vmem:[%s3 + $0x4] sm:$0xf]
  %v161 = vld [vmem:[%s3 + $0x8] sm:$0xf]
  %v162 = vld [vmem:[%s3 + $0xc] sm:$0xf]
  %v163 = vld [vmem:[%s3 + $0x10] sm:$0xf]
  %v164 = vld [vmem:[%s3 + $0x14] sm:$0xf]
  %v165 = vld [vmem:[%s3 + $0x18] sm:$0xf]
  %v166 = vld [vmem:[%s3 + $0x1c] sm:$0xf]
  %v167 = vld [vmem:[%s3 + $0x20] sm:$0xf]
  %v168 = vld [vmem:[%s3 + $0x24] sm:$0xf]
  %v169 = vld [vmem:[%s3 + $0x28] sm:$0xf]
  %v170 = vld [vmem:[%s3 + $0x2c] sm:$0xf]
  %v171 = vld [vmem:[%s3 + $0x30] sm:$0xf]
  %v172 = vld [vmem:[%s3 + $0x34] sm:$0xf]
  %v173 = vld [vmem:[%s3 + $0x38] sm:$0xf]
  %v174 = vld [vmem:[%s3 + $0x3c] sm:$0xf]
  %v175 = vld [vmem:[%s3 + $0x40] sm:$0xf]
  %v176 = vld [vmem:[%s3 + $0x44] sm:$0xf]
  %v177 = vld [vmem:[%s3 + $0x48] sm:$0xf]
  %v178 = vld [vmem:[%s3 + $0x4c] sm:$0xf]
  %v179 = vld [vmem:[%s3 + $0x50] sm:$0xf]
  %v180 = vld [vmem:[%s3 + $0x54] sm:$0xf]
  %v181 = vld [vmem:[%s3 + $0x58] sm:$0xf]
  %v182 = vld [vmem:[%s3 + $0x5c] sm:$0xf]
  %v183 = vld [vmem:[%s3 + $0x60] sm:$0xf]
  %v184 = vld [vmem:[%s3 + $0x64] sm:$0xf]
  %v185 = vld [vmem:[%s3 + $0x68] sm:$0xf]
  %v186 = vld [vmem:[%s3 + $0x6c] sm:$0xf]
  %v187 = vld [vmem:[%s3 + $0x70] sm:$0xf]
  %v188 = vld [vmem:[%s3 + $0x74] sm:$0xf]
  %v189 = vld [vmem:[%s3 + $0x78] sm:$0xf]
  %v190 = vld [vmem:[%s3 + $0x7c] sm:$0xf]
  %v191 = vunpack.c.l.bf16 %v159
  %v192 = vunpack.c.l.bf16 %v160
  %v193 = vunpack.c.l.bf16 %v161
  %v194 = vunpack.c.l.bf16 %v162
  %v195 = vunpack.c.l.bf16 %v163
  %v196 = vunpack.c.l.bf16 %v164
  %v197 = vunpack.c.l.bf16 %v165
  %v198 = vunpack.c.l.bf16 %v166
  %v199 = vunpack.c.l.bf16 %v167
  %v200 = vunpack.c.l.bf16 %v168
  %v201 = vunpack.c.l.bf16 %v169
  %v202 = vunpack.c.l.bf16 %v170
  %v203 = vunpack.c.l.bf16 %v171
  %v204 = vunpack.c.l.bf16 %v172
  %v205 = vunpack.c.l.bf16 %v173
  %v206 = vunpack.c.l.bf16 %v174
  %v207 = vunpack.c.l.bf16 %v175
  %v208 = vunpack.c.l.bf16 %v176
  %v209 = vunpack.c.l.bf16 %v177
  %v210 = vunpack.c.l.bf16 %v178
  %v211 = vunpack.c.l.bf16 %v179
  %v212 = vunpack.c.l.bf16 %v180
  %v213 = vunpack.c.l.bf16 %v181
  %v214 = vunpack.c.l.bf16 %v182
  %v215 = vunpack.c.l.bf16 %v183
  %v216 = vunpack.c.l.bf16 %v184
  %v217 = vunpack.c.l.bf16 %v185
  %v218 = vunpack.c.l.bf16 %v186
  %v219 = vunpack.c.l.bf16 %v187
  %v220 = vunpack.c.l.bf16 %v188
  %v221 = vunpack.c.l.bf16 %v189
  %v222 = vunpack.c.l.bf16 %v190
  %v223 = vadd.f32 %v127, %v191
  %v224 = vadd.f32 %v128, %v192
  %v225 = vadd.f32 %v129, %v193
  %v226 = vadd.f32 %v130, %v194
  %v227 = vadd.f32 %v131, %v195
  %v228 = vadd.f32 %v132, %v196
  %v229 = vadd.f32 %v133, %v197
  %v230 = vadd.f32 %v134, %v198
  %v231 = vadd.f32 %v135, %v199
  %v232 = vadd.f32 %v136, %v200
  %v233 = vadd.f32 %v137, %v201
  %v234 = vadd.f32 %v138, %v202
  %v235 = vadd.f32 %v139, %v203
  %v236 = vadd.f32 %v140, %v204
  %v237 = vadd.f32 %v141, %v205
  %v238 = vadd.f32 %v142, %v206
  %v239 = vadd.f32 %v143, %v207
  %v240 = vadd.f32 %v144, %v208
  %v241 = vadd.f32 %v145, %v209
  %v242 = vadd.f32 %v146, %v210
  %v243 = vadd.f32 %v147, %v211
  %v244 = vadd.f32 %v148, %v212
  %v245 = vadd.f32 %v149, %v213
  %v246 = vadd.f32 %v150, %v214
  %v247 = vadd.f32 %v151, %v215
  %v248 = vadd.f32 %v152, %v216
  %v249 = vadd.f32 %v153, %v217
  %v250 = vadd.f32 %v154, %v218
  %v251 = vadd.f32 %v155, %v219
  %v252 = vadd.f32 %v156, %v220
  %v253 = vadd.f32 %v157, %v221
  %v254 = vadd.f32 %v158, %v222
  %v255 = vmax.f32 %v223, 0.0
  %v256 = vmax.f32 %v224, 0.0
  %v257 = vmax.f32 %v225, 0.0
  %v258 = vmax.f32 %v226, 0.0
  %v259 = vmax.f32 %v227, 0.0
  %v260 = vmax.f32 %v228, 0.0
  %v261 = vmax.f32 %v229, 0.0
  %v262 = vmax.f32 %v230, 0.0
  %v263 = vmax.f32 %v231, 0.0
  %v264 = vmax.f32 %v232, 0.0
  %v265 = vmax.f32 %v233, 0.0
  %v266 = vmax.f32 %v234, 0.0
  %v267 = vmax.f32 %v235, 0.0
  %v268 = vmax.f32 %v236, 0.0
  %v269 = vmax.f32 %v237, 0.0
  %v270 = vmax.f32 %v238, 0.0
  %v271 = vmax.f32 %v239, 0.0
  %v272 = vmax.f32 %v240, 0.0
  %v273 = vmax.f32 %v241, 0.0
  %v274 = vmax.f32 %v242, 0.0
  %v275 = vmax.f32 %v243, 0.0
  %v276 = vmax.f32 %v244, 0.0
  %v277 = vmax.f32 %v245, 0.0
  %v278 = vmax.f32 %v246, 0.0
  %v279 = vmax.f32 %v247, 0.0
  %v280 = vmax.f32 %v248, 0.0
  %v281 = vmax.f32 %v249, 0.0
  %v282 = vmax.f32 %v250, 0.0
  %v283 = vmax.f32 %v251, 0.0
  %v284 = vmax.f32 %v252, 0.0
  %v285 = vmax.f32 %v253, 0.0
  %v286 = vmax.f32 %v254, 0.0
  %287 = vst [vmem:[%s4] sm:$0xff] %v255
  %288 = vst [vmem:[%s4 + $0x8] sm:$0xff] %v256
  %289 = vst [vmem:[%s4 + $0x10] sm:$0xff] %v257
  %290 = vst [vmem:[%s4 + $0x18] sm:$0xff] %v258
  %291 = vst [vmem:[%s4 + $0x20] sm:$0xff] %v259
  %292 = vst [vmem:[%s4 + $0x28] sm:$0xff] %v260
  %293 = vst [vmem:[%s4 + $0x30] sm:$0xff] %v261
  %294 = vst [vmem:[%s4 + $0x38] sm:$0xff] %v262
  %295 = vst [vmem:[%s4 + $0x40] sm:$0xff] %v263
  %296 = vst [vmem:[%s4 + $0x48] sm:$0xff] %v264
  %297 = vst [vmem:[%s4 + $0x50] sm:$0xff] %v265
  %298 = vst [vmem:[%s4 + $0x58] sm:$0xff] %v266
  %299 = vst [vmem:[%s4 + $0x60] sm:$0xff] %v267
  %300 = vst [vmem:[%s4 + $0x68] sm:$0xff] %v268
  %301 = vst [vmem:[%s4 + $0x70] sm:$0xff] %v269
  %302 = vst [vmem:[%s4 + $0x78] sm:$0xff] %v270
  %303 = vst [vmem:[%s4 + $0x80] sm:$0xff] %v271
  %304 = vst [vmem:[%s4 + $0x88] sm:$0xff] %v272
  %305 = vst [vmem:[%s4 + $0x90] sm:$0xff] %v273
  %306 = vst [vmem:[%s4 + $0x98] sm:$0xff] %v274
  %307 = vst [vmem:[%s4 + $0xa0] sm:$0xff] %v275
  %308 = vst [vmem:[%s4 + $0xa8] sm:$0xff] %v276
  %309 = vst [vmem:[%s4 + $0xb0] sm:$0xff] %v277
  %310 = vst [vmem:[%s4 + $0xb8] sm:$0xff] %v278
  %311 = vst [vmem:[%s4 + $0xc0] sm:$0xff] %v279
  %312 = vst [vmem:[%s4 + $0xc8] sm:$0xff] %v280
  %313 = vst [vmem:[%s4 + $0xd0] sm:$0xff] %v281
  %314 = vst [vmem:[%s4 + $0xd8] sm:$0xff] %v282
  %315 = vst [vmem:[%s4 + $0xe0] sm:$0xff] %v283
  %316 = vst [vmem:[%s4 + $0xe8] sm:$0xff] %v284
  %317 = vst [vmem:[%s4 + $0xf0] sm:$0xff] %v285
  %318 = vst [vmem:[%s4 + $0xf8] sm:$0xff] %v286
  // Predicated region
  $region18: #{basic_block_forward.5} parent=0 // pred_check
    _
  $region19: #{basic_block_forward.5} parent=0 // pred_check_branch
    %320 = sbr.rel (0) target = $region21
  $region20: #{basic_block_forward.5} parent=0 // pred_region
    _
  $region21: #{basic_block_forward.5} parent=0 // pred_fallthru
    _
  // Predicated region
  $region22: #{basic_block_forward.5} parent=0 // pred_check
    _
  $region23: #{basic_block_forward.5} parent=0 // pred_check_branch
    %322 = sbr.rel (0) target = $region25
  $region24: #{basic_block_forward.5} parent=0 // pred_region
    _
  $region25: #{basic_block_forward.5} parent=0 // pred_fallthru
    _

// kernel: basic_block_forward.3
$region0: #{basic_block_forward.3}
  #allocation0 [shape = 'u32[]', space=smem, size = 0x4, offset = 0x4, fixed_abs, tag = 'smem constant byte address 0x4 - core index']
  #allocation1 [shape = 'u32[144,128]{1,0:T(1,128)}', space=vmem, size = 0x12000, scoped, tag = 'internal scratch']
  #allocation2 [shape = 'f32[18,18,64]{2,1,0:T(8,128)}', space=vmem, size = 0x36000, scoped, tag = 'scratch operand']
  #allocation3 [shape = 'bf16[256,576]{1,0:T(8,128)(2,1)}', space=vmem, size = 0x50000, scoped, tag = 'scratch operand']
  %s0 = inlined_call_operand.vmem [shape: bf16[2,16,16,64], index: 0, kind: input, shape index: {}]
  %s1 = inlined_call_operand.vmem [shape: bf16[576,64], index: 1, kind: input, shape index: {}]
  %s2 = inlined_call_operand.vmem [shape: bf16[2,256,64], index: 2, kind: output, shape index: {0}]
  %s3 = inlined_call_operand.vmem [shape: f32[2,1,64], index: 3, kind: output, shape index: {1}]
  %s4 = inlined_call_operand.vmem [shape: f32[2,1,64], index: 4, kind: output, shape index: {2}]
  %5 = xla_tuple %s2, %s3, %s4
  %s6 = sld [smem:[#allocation0]]
  $region57: #{basic_block_forward.3} parent=0
    _
  %s8 = ssub.s32 1, %s6
  %s9 = scalar_select 0, %s8, %s6
  loop: start=0, step=1, limit=4
  $region2: #{basic_block_forward.3} parent=0 // loop_pre_header
    _
  $region3: #{basic_block_forward.3} parent=0 // loop_header
    %s11 = sphi 0, %s15
    %p12 = scmp.ge.s32.totalorder %s11, 4
    %s21 = sphi 0, %s23
    %s24 = sphi 0, %s21
    %s25 = sphi 0, %s24
    %s41 = sphi 0, %s25
    %s45 = sphi 0, %s45
    %s47 = sphi 0, %s45
    %s48 = sphi 0, %s47
    %s62 = sphi 0, %s48
    %s68 = sphi 0, %s70
    %s71 = sphi 0, %s68
    %s72 = sphi 0, %s71
    %s88 = sphi 0, %s72
    %s94 = sphi 0, %s96
    %s97 = sphi 0, %s94
    %s98 = sphi 0, %s97
    %s114 = sphi 0, %s98
    %s120 = sphi 0, %s122
    %s123 = sphi 0, %s120
    %s124 = sphi 0, %s123
    %s140 = sphi 0, %s124
  $region4: #{basic_block_forward.3} parent=0 // loop_header_branch
    %14 = sbr.rel (%p12) target = $region8
  $region5: #{basic_block_forward.3} parent=0 // loop_body
    %s16 = ssub.s32 %s11, 1
    %s17 = ssub.s32 %s11, 2
    %s18 = sadd.s32 %s11, 1
    %s19 = ssub.s32 %s11, %s18
    %p20 = scmp.eq.s32.totalorder %s19, 0
    %s22 = sadd.s32 %s21, 1
    %s23 = scalar_select %p20, %s21, %s22
    %p26 = pneg %p20
    %p27 = scmp.eq.s32.totalorder %s11, 1
    %p28 = por %p26, %p27
    %p29 = scmp.ne.s32.totalorder %s21, %s24
    %p30 = scmp.eq.s32.totalorder %s11, 0
    %p31 = por %p29, %p30
    %p32 = scmp.ne.s32.totalorder %s21, %s24
    %p33 = scmp.eq.s32.totalorder %s16, 1
    %p34 = por %p32, %p33
    %p35 = scmp.ne.s32.totalorder %s24, %s25
    %p36 = scmp.eq.s32.totalorder %s16, 0
    %p37 = por %p35, %p36
    %p38 = scmp.ne.s32.totalorder %s24, %s25
    %p39 = scmp.eq.s32.totalorder %s17, 1
    %p40 = por %p38, %p39
    %p42 = scmp.ne.s32.totalorder %s25, %s41
    %p43 = scmp.eq.s32.totalorder %s17, 0
    %p44 = por %p42, %p43
    %s46 = sadd.s32 %s45, 1
    %p49 = scmp.eq.s32.totalorder %s11, 1
    %p50 = scmp.ne.s32.totalorder %s45, %s47
    %p51 = scmp.eq.s32.totalorder %s11, 0
    %p52 = por %p50, %p51
    %p53 = scmp.ne.s32.totalorder %s45, %s47
    %p54 = scmp.eq.s32.totalorder %s16, 1
    %p55 = por %p53, %p54
    %p56 = scmp.ne.s32.totalorder %s47, %s48
    %p57 = scmp.eq.s32.totalorder %s16, 0
    %p58 = por %p56, %p57
    %p59 = scmp.ne.s32.totalorder %s47, %s48
    %p60 = scmp.eq.s32.totalorder %s17, 1
    %p61 = por %p59, %p60
    %p63 = scmp.ne.s32.totalorder %s48, %s62
    %p64 = scmp.eq.s32.totalorder %s17, 0
    %p65 = por %p63, %p64
    %s66 = ssub.s32 %s11, %s18
    %p67 = scmp.eq.s32.totalorder %s66, 0
    %s69 = sadd.s32 %s68, 1
    %s70 = scalar_select %p67, %s68, %s69
    %p73 = pneg %p67
    %p74 = scmp.eq.s32.totalorder %s11, 1
    %p75 = por %p73, %p74
    %p76 = scmp.ne.s32.totalorder %s68, %s71
    %p77 = scmp.eq.s32.totalorder %s11, 0
    %p78 = por %p76, %p77
    %p79 = scmp.ne.s32.totalorder %s68, %s71
    %p80 = scmp.eq.s32.totalorder %s16, 1
    %p81 = por %p79, %p80
    %p82 = scmp.ne.s32.totalorder %s71, %s72
    %p83 = scmp.eq.s32.totalorder %s16, 0
    %p84 = por %p82, %p83
    %p85 = scmp.ne.s32.totalorder %s71, %s72
    %p86 = scmp.eq.s32.totalorder %s17, 1
    %p87 = por %p85, %p86
    %p89 = scmp.ne.s32.totalorder %s72, %s88
    %p90 = scmp.eq.s32.totalorder %s17, 0
    %p91 = por %p89, %p90
    %s92 = ssub.s32 %s11, %s18
    %p93 = scmp.eq.s32.totalorder %s92, 0
    %s95 = sadd.s32 %s94, 1
    %s96 = scalar_select %p93, %s94, %s95
    %p99 = pneg %p93
    %p100 = scmp.eq.s32.totalorder %s11, 1
    %p101 = por %p99, %p100
    %p102 = scmp.ne.s32.totalorder %s94, %s97
    %p103 = scmp.eq.s32.totalorder %s11, 0
    %p104 = por %p102, %p103
    %p105 = scmp.ne.s32.totalorder %s94, %s97
    %p106 = scmp.eq.s32.totalorder %s16, 1
    %p107 = por %p105, %p106
    %p108 = scmp.ne.s32.totalorder %s97, %s98
    %p109 = scmp.eq.s32.totalorder %s16, 0
    %p110 = por %p108, %p109
    %p111 = scmp.ne.s32.totalorder %s97, %s98
    %p112 = scmp.eq.s32.totalorder %s17, 1
    %p113 = por %p111, %p112
    %p115 = scmp.ne.s32.totalorder %s98, %s114
    %p116 = scmp.eq.s32.totalorder %s17, 0
    %p117 = por %p115, %p116
    %s118 = ssub.s32 %s11, %s18
    %p119 = scmp.eq.s32.totalorder %s118, 0
    %s121 = sadd.s32 %s120, 1
    %s122 = scalar_select %p119, %s120, %s121
    %p125 = pneg %p119
    %p126 = scmp.eq.s32.totalorder %s11, 1
    %p127 = por %p125, %p126
    %p128 = scmp.ne.s32.totalorder %s120, %s123
    %p129 = scmp.eq.s32.totalorder %s11, 0
    %p130 = por %p128, %p129
    %p131 = scmp.ne.s32.totalorder %s120, %s123
    %p132 = scmp.eq.s32.totalorder %s16, 1
    %p133 = por %p131, %p132
    %p134 = scmp.ne.s32.totalorder %s123, %s124
    %p135 = scmp.eq.s32.totalorder %s16, 0
    %p136 = por %p134, %p135
    %p137 = scmp.ne.s32.totalorder %s123, %s124
    %p138 = scmp.eq.s32.totalorder %s17, 1
    %p139 = por %p137, %p138
    %p141 = scmp.ne.s32.totalorder %s124, %s140
    %p142 = scmp.eq.s32.totalorder %s17, 0
    %p143 = por %p141, %p142
    %p144 = scmp.le.s32.totalorder 1, %s11
    %p145 = scmp.lt.s32.totalorder %s11, 3
    %p146 = pnand %p144, %p145
    %p147 = pneg %p146
    // Predicated region
    $region9: #{basic_block_forward.3} parent=5 // pred_check
      _
    $region10: #{basic_block_forward.3} parent=5 // pred_check_branch
      %149 = sbr.rel (%p146) target = $region12
    $region11: #{basic_block_forward.3} parent=5 // pred_region
      %s150 = ssub.s32 %s11, 1
      // Predicated region
      $region13: #{basic_block_forward.3} parent=11 // pred_check
        %p151 = pneg %p58
      $region14: #{basic_block_forward.3} parent=11 // pred_check_branch
        %153 = sbr.rel (%p151) target = $region16
      $region15: #{basic_block_forward.3} parent=11 // pred_region
        _
      $region16: #{basic_block_forward.3} parent=11 // pred_fallthru
        _
    $region12: #{basic_block_forward.3} parent=5 // pred_fallthru
      _
    %p154 = scmp.lt.s32.totalorder %s11, 2
    // Predicated region
    $region17: #{basic_block_forward.3} parent=5 // pred_check
      %p155 = pneg %p154
    $region18: #{basic_block_forward.3} parent=5 // pred_check_branch
      %157 = sbr.rel (%p155) target = $region20
    $region19: #{basic_block_forward.3} parent=5 // pred_region
      // Predicated region
      $region21: #{basic_block_forward.3} parent=19 // pred_check
        %p158 = pneg %p31
      $region22: #{basic_block_forward.3} parent=19 // pred_check_branch
        %160 = sbr.rel (%p158) target = $region24
      $region23: #{basic_block_forward.3} parent=19 // pred_region
        %p161 = scmp.lt.s32.totalorder %s11, 1
        %s162 = scalar_select %p161, %s11, 1
        %s163 = smul.addr %s162, 32
        %s164 = smul.addr %s163, 4
        %s165 = scalar_lea.vmem %s0, %s164
      $region24: #{basic_block_forward.3} parent=19 // pred_fallthru
        _
    $region20: #{basic_block_forward.3} parent=5 // pred_fallthru
      _
    %p166 = scmp.le.s32.totalorder 1, %s11
    %p167 = scmp.lt.s32.totalorder %s11, 3
    %p168 = pnand %p166, %p167
    %p169 = pneg %p168
    // Predicated region
    $region25: #{basic_block_forward.3} parent=5 // pred_check
      _
    $region26: #{basic_block_forward.3} parent=5 // pred_check_branch
      %171 = sbr.rel (%p168) target = $region28
    $region27: #{basic_block_forward.3} parent=5 // pred_region
      %s172 = ssub.s32 %s11, 1
      %p173 = scmp.lt.s32.totalorder %s16, 1
      %s174 = scalar_select %p173, %s16, 1
      %s175 = smul.addr %s174, 32
      %s176 = smul.addr %s175, 4
      %s177 = scalar_lea.vmem %s0, %s176
      %p178 = pneg %p37
      %p179 = pneg %p34
      %p180 = pneg %p58
      %p181 = pneg %p55
      %p182 = pneg %p84
      %p183 = pneg %p81
      %p184 = scmp.lt.s32.totalorder %s16, 1
      %s185 = scalar_select %p184, %s16, 1
      %s186 = smul.addr %s185, 32
      %s187 = smul.addr %s186, 4
      %s188 = scalar_lea.vmem %s2, %s187
      %p189 = pneg %p110
      %p190 = pneg %p107
      %p191 = scmp.lt.s32.totalorder %s16, 1
      %s192 = scalar_select %p191, %s16, 1
      %s193 = scalar_lea.vmem %s3, %s192
      %p194 = pneg %p136
      %p195 = pneg %p133
      %p196 = scmp.lt.s32.totalorder %s16, 1
      %s197 = scalar_select %p196, %s16, 1
      %s198 = scalar_lea.vmem %s4, %s197
      %p199 = scmp.lt.s32.totalorder %s16, 1
      %s200 = scalar_select %p199, %s16, 1
      %s201 = smul.addr %s200, 32
      %s202 = smul.addr %s201, 4
      %s203 = scalar_lea.vmem %s0, %s202
      %p204 = scmp.lt.s32.totalorder %s16, 1
      %s205 = scalar_select %p204, %s16, 1
      %s206 = smul.addr %s205, 32
      %s207 = smul.addr %s206, 4
      %s208 = scalar_lea.vmem %s2, %s207
      %p209 = scmp.lt.s32.totalorder %s16, 1
      %s210 = scalar_select %p209, %s16, 1
      %s211 = scalar_lea.vmem %s3, %s210
      %p212 = scmp.lt.s32.totalorder %s16, 1
      %s213 = scalar_select %p212, %s16, 1
      %s214 = scalar_lea.vmem %s4, %s213
      %vm216 = vcmask 523264
      %217 = vst.msk [vmem:[#allocation2] sm:$0xff] %vm216, 0.0
      %218 = vst.msk [vmem:[#allocation2 + $0x8] sm:$0xff] %vm216, 0.0
      %vm219 = vcmask 517120
      %220 = vst.msk [vmem:[#allocation2 + $0x10] sm:$0x3] %vm219, 0.0
      %221 = vst.msk [vmem:[#allocation2 + $0x18] sm:$0xff] %vm216, 0.0
      %222 = vst.msk [vmem:[#allocation2 + $0x20] sm:$0xff] %vm216, 0.0
      %223 = vst.msk [vmem:[#allocation2 + $0x28] sm:$0x3] %vm219, 0.0
      %224 = vst.msk [vmem:[#allocation2 + $0x30] sm:$0xff] %vm216, 0.0
      %225 = vst.msk [vmem:[#allocation2 + $0x38] sm:$0xff] %vm216, 0.0
      %226 = vst.msk [vmem:[#allocation2 + $0x40] sm:$0x3] %vm219, 0.0
      %227 = vst.msk [vmem:[#allocation2 + $0x48] sm:$0xff] %vm216, 0.0
      %228 = vst.msk [vmem:[#allocation2 + $0x50] sm:$0xff] %vm216, 0.0
      %229 = vst.msk [vmem:[#allocation2 + $0x58] sm:$0x3] %vm219, 0.0
      %230 = vst.msk [vmem:[#allocation2 + $0x60] sm:$0xff] %vm216, 0.0
      %231 = vst.msk [vmem:[#allocation2 + $0x68] sm:$0xff] %vm216, 0.0
      %232 = vst.msk [vmem:[#allocation2 + $0x70] sm:$0x3] %vm219, 0.0
      %233 = vst.msk [vmem:[#allocation2 + $0x78] sm:$0xff] %vm216, 0.0
      %234 = vst.msk [vmem:[#allocation2 + $0x80] sm:$0xff] %vm216, 0.0
      %235 = vst.msk [vmem:[#allocation2 + $0x88] sm:$0x3] %vm219, 0.0
      %236 = vst.msk [vmem:[#allocation2 + $0x90] sm:$0xff] %vm216, 0.0
      %237 = vst.msk [vmem:[#allocation2 + $0x98] sm:$0xff] %vm216, 0.0
      %238 = vst.msk [vmem:[#allocation2 + $0xa0] sm:$0x3] %vm219, 0.0
      %239 = vst.msk [vmem:[#allocation2 + $0xa8] sm:$0xff] %vm216, 0.0
      %240 = vst.msk [vmem:[#allocation2 + $0xb0] sm:$0xff] %vm216, 0.0
      %241 = vst.msk [vmem:[#allocation2 + $0xb8] sm:$0x3] %vm219, 0.0
      %242 = vst.msk [vmem:[#allocation2 + $0xc0] sm:$0xff] %vm216, 0.0
      %243 = vst.msk [vmem:[#allocation2 + $0xc8] sm:$0xff] %vm216, 0.0
      %244 = vst.msk [vmem:[#allocation2 + $0xd0] sm:$0x3] %vm219, 0.0
      %245 = vst.msk [vmem:[#allocation2 + $0xd8] sm:$0xff] %vm216, 0.0
      %246 = vst.msk [vmem:[#allocation2 + $0xe0] sm:$0xff] %vm216, 0.0
      %247 = vst.msk [vmem:[#allocation2 + $0xe8] sm:$0x3] %vm219, 0.0
      %248 = vst.msk [vmem:[#allocation2 + $0xf0] sm:$0xff] %vm216, 0.0
      %249 = vst.msk [vmem:[#allocation2 + $0xf8] sm:$0xff] %vm216, 0.0
      %250 = vst.msk [vmem:[#allocation2 + $0x100] sm:$0x3] %vm219, 0.0
      %251 = vst.msk [vmem:[#allocation2 + $0x108] sm:$0xff] %vm216, 0.0
      %252 = vst.msk [vmem:[#allocation2 + $0x110] sm:$0xff] %vm216, 0.0
      %253 = vst.msk [vmem:[#allocation2 + $0x118] sm:$0x3] %vm219, 0.0
      %254 = vst.msk [vmem:[#allocation2 + $0x120] sm:$0xff] %vm216, 0.0
      %255 = vst.msk [vmem:[#allocation2 + $0x128] sm:$0xff] %vm216, 0.0
      %256 = vst.msk [vmem:[#allocation2 + $0x130] sm:$0x3] %vm219, 0.0
      %257 = vst.msk [vmem:[#allocation2 + $0x138] sm:$0xff] %vm216, 0.0
      %258 = vst.msk [vmem:[#allocation2 + $0x140] sm:$0xff] %vm216, 0.0
      %259 = vst.msk [vmem:[#allocation2 + $0x148] sm:$0x3] %vm219, 0.0
      %260 = vst.msk [vmem:[#allocation2 + $0x150] sm:$0xff] %vm216, 0.0
      %261 = vst.msk [vmem:[#allocation2 + $0x158] sm:$0xff] %vm216, 0.0
      %262 = vst.msk [vmem:[#allocation2 + $0x160] sm:$0x3] %vm219, 0.0
      %263 = vst.msk [vmem:[#allocation2 + $0x168] sm:$0xff] %vm216, 0.0
      %264 = vst.msk [vmem:[#allocation2 + $0x170] sm:$0xff] %vm216, 0.0
      %265 = vst.msk [vmem:[#allocation2 + $0x178] sm:$0x3] %vm219, 0.0
      %266 = vst.msk [vmem:[#allocation2 + $0x180] sm:$0xff] %vm216, 0.0
      %267 = vst.msk [vmem:[#allocation2 + $0x188] sm:$0xff] %vm216, 0.0
      %268 = vst.msk [vmem:[#allocation2 + $0x190] sm:$0x3] %vm219, 0.0
      %269 = vst.msk [vmem:[#allocation2 + $0x198] sm:$0xff] %vm216, 0.0
      %270 = vst.msk [vmem:[#allocation2 + $0x1a0] sm:$0xff] %vm216, 0.0
      %271 = vst.msk [vmem:[#allocation2 + $0x1a8] sm:$0x3] %vm219, 0.0
      %v272 = vld [vmem:[%s203] sm:$0xf]
      %v273 = vld [vmem:[%s203 + $0x4] sm:$0xf]
      %v274 = vld [vmem:[%s203 + $0x8] sm:$0xf]
      %v275 = vld [vmem:[%s203 + $0xc] sm:$0xf]
      %v276 = vld [vmem:[%s203 + $0x10] sm:$0xf]
      %v277 = vld [vmem:[%s203 + $0x14] sm:$0xf]
      %v278 = vld [vmem:[%s203 + $0x18] sm:$0xf]
      %v279 = vld [vmem:[%s203 + $0x1c] sm:$0xf]
      %v280 = vld [vmem:[%s203 + $0x20] sm:$0xf]
      %v281 = vld [vmem:[%s203 + $0x24] sm:$0xf]
      %v282 = vld [vmem:[%s203 + $0x28] sm:$0xf]
      %v283 = vld [vmem:[%s203 + $0x2c] sm:$0xf]
      %v284 = vld [vmem:[%s203 + $0x30] sm:$0xf]
      %v285 = vld [vmem:[%s203 + $0x34] sm:$0xf]
      %v286 = vld [vmem:[%s203 + $0x38] sm:$0xf]
      %v287 = vld [vmem:[%s203 + $0x3c] sm:$0xf]
      %v288 = vld [vmem:[%s203 + $0x40] sm:$0xf]
      %v289 = vld [vmem:[%s203 + $0x44] sm:$0xf]
      %v290 = vld [vmem:[%s203 + $0x48] sm:$0xf]
      %v291 = vld [vmem:[%s203 + $0x4c] sm:$0xf]
      %v292 = vld [vmem:[%s203 + $0x50] sm:$0xf]
      %v293 = vld [vmem:[%s203 + $0x54] sm:$0xf]
      %v294 = vld [vmem:[%s203 + $0x58] sm:$0xf]
      %v295 = vld [vmem:[%s203 + $0x5c] sm:$0xf]
      %v296 = vld [vmem:[%s203 + $0x60] sm:$0xf]
      %v297 = vld [vmem:[%s203 + $0x64] sm:$0xf]
      %v298 = vld [vmem:[%s203 + $0x68] sm:$0xf]
      %v299 = vld [vmem:[%s203 + $0x6c] sm:$0xf]
      %v300 = vld [vmem:[%s203 + $0x70] sm:$0xf]
      %v301 = vld [vmem:[%s203 + $0x74] sm:$0xf]
      %v302 = vld [vmem:[%s203 + $0x78] sm:$0xf]
      %v303 = vld [vmem:[%s203 + $0x7c] sm:$0xf]
      %v304 = vunpack.c.l.bf16 %v272
      %v305 = vunpack.c.l.bf16 %v273
      %v306 = vunpack.c.l.bf16 %v274
      %v307 = vunpack.c.l.bf16 %v275
      %v308 = vunpack.c.l.bf16 %v276
      %v309 = vunpack.c.l.bf16 %v277
      %v310 = vunpack.c.l.bf16 %v278
      %v311 = vunpack.c.l.bf16 %v279
      %v312 = vunpack.c.l.bf16 %v280
      %v313 = vunpack.c.l.bf16 %v281
      %v314 = vunpack.c.l.bf16 %v282
      %v315 = vunpack.c.l.bf16 %v283
      %v316 = vunpack.c.l.bf16 %v284
      %v317 = vunpack.c.l.bf16 %v285
      %v318 = vunpack.c.l.bf16 %v286
      %v319 = vunpack.c.l.bf16 %v287
      %v320 = vunpack.c.l.bf16 %v288
      %v321 = vunpack.c.l.bf16 %v289
      %v322 = vunpack.c.l.bf16 %v290
      %v323 = vunpack.c.l.bf16 %v291
      %v324 = vunpack.c.l.bf16 %v292
      %v325 = vunpack.c.l.bf16 %v293
      %v326 = vunpack.c.l.bf16 %v294
      %v327 = vunpack.c.l.bf16 %v295
      %v328 = vunpack.c.l.bf16 %v296
      %v329 = vunpack.c.l.bf16 %v297
      %v330 = vunpack.c.l.bf16 %v298
      %v331 = vunpack.c.l.bf16 %v299
      %v332 = vunpack.c.l.bf16 %v300
      %v333 = vunpack.c.l.bf16 %v301
      %v334 = vunpack.c.l.bf16 %v302
      %v335 = vunpack.c.l.bf16 %v303
      %s336 = scalar_lea.vmem [#allocation2], 24
      %337 = vst.msk [vmem:[%s336 + $0x1] sm:$0xff] %vm216, %v304
      %338 = vst.msk [vmem:[%s336 + $0x9] sm:$0xff] %vm216, %v305
      %339 = vst.msk [vmem:[%s336 + $0x19] sm:$0xff] %vm216, %v306
      %340 = vst.msk [vmem:[%s336 + $0x21] sm:$0xff] %vm216, %v307
      %341 = vst.msk [vmem:[%s336 + $0x31] sm:$0xff] %vm216, %v308
      %342 = vst.msk [vmem:[%s336 + $0x39] sm:$0xff] %vm216, %v309
      %343 = vst.msk [vmem:[%s336 + $0x49] sm:$0xff] %vm216, %v310
      %344 = vst.msk [vmem:[%s336 + $0x51] sm:$0xff] %vm216, %v311
      %345 = vst.msk [vmem:[%s336 + $0x61] sm:$0xff] %vm216, %v312
      %346 = vst.msk [vmem:[%s336 + $0x69] sm:$0xff] %vm216, %v313
      %347 = vst.msk [vmem:[%s336 + $0x79] sm:$0xff] %vm216, %v314
      %348 = vst.msk [vmem:[%s336 + $0x81] sm:$0xff] %vm216, %v315
      %349 = vst.msk [vmem:[%s336 + $0x91] sm:$0xff] %vm216, %v316
      %350 = vst.msk [vmem:[%s336 + $0x99] sm:$0xff] %vm216, %v317
      %351 = vst.msk [vmem:[%s336 + $0xa9] sm:$0xff] %vm216, %v318
      %352 = vst.msk [vmem:[%s336 + $0xb1] sm:$0xff] %vm216, %v319
      %353 = vst.msk [vmem:[%s336 + $0xc1] sm:$0xff] %vm216, %v320
      %354 = vst.msk [vmem:[%s336 + $0xc9] sm:$0xff] %vm216, %v321
      %355 = vst.msk [vmem:[%s336 + $0xd9] sm:$0xff] %vm216, %v322
      %356 = vst.msk [vmem:[%s336 + $0xe1] sm:$0xff] %vm216, %v323
      %357 = vst.msk [vmem:[%s336 + $0xf1] sm:$0xff] %vm216, %v324
      %358 = vst.msk [vmem:[%s336 + $0xf9] sm:$0xff] %vm216, %v325
      %359 = vst.msk [vmem:[%s336 + $0x109] sm:$0xff] %vm216, %v326
      %360 = vst.msk [vmem:[%s336 + $0x111] sm:$0xff] %vm216, %v327
      %361 = vst.msk [vmem:[%s336 + $0x121] sm:$0xff] %vm216, %v328
      %362 = vst.msk [vmem:[%s336 + $0x129] sm:$0xff] %vm216, %v329
      %363 = vst.msk [vmem:[%s336 + $0x139] sm:$0xff] %vm216, %v330
      %364 = vst.msk [vmem:[%s336 + $0x141] sm:$0xff] %vm216, %v331
      %365 = vst.msk [vmem:[%s336 + $0x151] sm:$0xff] %vm216, %v332
      %366 = vst.msk [vmem:[%s336 + $0x159] sm:$0xff] %vm216, %v333
      %367 = vst.msk [vmem:[%s336 + $0x169] sm:$0xff] %vm216, %v334
      %368 = vst.msk [vmem:[%s336 + $0x171] sm:$0xff] %vm216, %v335
      %v369 = vld [vmem:[#allocation2] sm:$0xff]
      %v370 = vld [vmem:[#allocation2 + $0x8] sm:$0xff]
      %v371 = vld [vmem:[#allocation2 + $0x18] sm:$0xff]
      %v372 = vld [vmem:[#allocation2 + $0x20] sm:$0xff]
      %v373 = vld [vmem:[#allocation2 + $0x30] sm:$0xff]
      %v374 = vld [vmem:[#allocation2 + $0x38] sm:$0xff]
      %v375 = vld [vmem:[#allocation2 + $0x48] sm:$0xff]
      %v376 = vld [vmem:[#allocation2 + $0x50] sm:$0xff]
      %v377 = vld [vmem:[#allocation2 + $0x60] sm:$0xff]
      %v378 = vld [vmem:[#allocation2 + $0x68] sm:$0xff]
      %v379 = vld [vmem:[#allocation2 + $0x78] sm:$0xff]
      %v380 = vld [vmem:[#allocation2 + $0x80] sm:$0xff]
      %v381 = vld [vmem:[#allocation2 + $0x90] sm:$0xff]
      %v382 = vld [vmem:[#allocation2 + $0x98] sm:$0xff]
      %v383 = vld [vmem:[#allocation2 + $0xa8] sm:$0xff]
      %v384 = vld [vmem:[#allocation2 + $0xb0] sm:$0xff]
      %v385 = vld [vmem:[#allocation2 + $0xc0] sm:$0xff]
      %v386 = vld [vmem:[#allocation2 + $0xc8] sm:$0xff]
      %v387 = vld [vmem:[#allocation2 + $0xd8] sm:$0xff]
      %v388 = vld [vmem:[#allocation2 + $0xe0] sm:$0xff]
      %v389 = vld [vmem:[#allocation2 + $0xf0] sm:$0xff]
      %v390 = vld [vmem:[#allocation2 + $0xf8] sm:$0xff]
      %v391 = vld [vmem:[#allocation2 + $0x108] sm:$0xff]
      %v392 = vld [vmem:[#allocation2 + $0x110] sm:$0xff]
      %v393 = vld [vmem:[#allocation2 + $0x120] sm:$0xff]
      %v394 = vld [vmem:[#allocation2 + $0x128] sm:$0xff]
      %v395 = vld [vmem:[#allocation2 + $0x138] sm:$0xff]
      %v396 = vld [vmem:[#allocation2 + $0x140] sm:$0xff]
      %v397 = vld [vmem:[#allocation2 + $0x150] sm:$0xff]
      %v398 = vld [vmem:[#allocation2 + $0x158] sm:$0xff]
      %v399 = vld [vmem:[#allocation2 + $0x168] sm:$0xff]
      %v400 = vld [vmem:[#allocation2 + $0x170] sm:$0xff]
      %v401 = vpack.c.bf16 %v370, %v369
      %v402 = vpack.c.bf16 %v372, %v371
      %v403 = vpack.c.bf16 %v374, %v373
      %v404 = vpack.c.bf16 %v376, %v375
      %v405 = vpack.c.bf16 %v378, %v377
      %v406 = vpack.c.bf16 %v380, %v379
      %v407 = vpack.c.bf16 %v382, %v381
      %v408 = vpack.c.bf16 %v384, %v383
      %v409 = vpack.c.bf16 %v386, %v385
      %v410 = vpack.c.bf16 %v388, %v387
      %v411 = vpack.c.bf16 %v390, %v389
      %v412 = vpack.c.bf16 %v392, %v391
      %v413 = vpack.c.bf16 %v394, %v393
      %v414 = vpack.c.bf16 %v396, %v395
      %v415 = vpack.c.bf16 %v398, %v397
      %v416 = vpack.c.bf16 %v400, %v399
      %v433 = vunpack.c.l.b16 %v401
      %v434 = vunpack.c.h.b16 %v401
      %v435 = vunpack.c.l.b16 %v402
      %v436 = vunpack.c.h.b16 %v402
      %v437 = vunpack.c.l.b16 %v403
      %v438 = vunpack.c.h.b16 %v403
      %v439 = vunpack.c.l.b16 %v404
      %v440 = vunpack.c.h.b16 %v404
      %v441 = vunpack.c.l.b16 %v405
      %v442 = vunpack.c.h.b16 %v405
      %v443 = vunpack.c.l.b16 %v406
      %v444 = vunpack.c.h.b16 %v406
      %v445 = vunpack.c.l.b16 %v407
      %v446 = vunpack.c.h.b16 %v407
      %v447 = vunpack.c.l.b16 %v408
      %v448 = vunpack.c.h.b16 %v408
      %v449 = vunpack.c.l.b16 %v409
      %v450 = vunpack.c.h.b16 %v409
      %v451 = vunpack.c.l.b16 %v410
      %v452 = vunpack.c.h.b16 %v410
      %v453 = vunpack.c.l.b16 %v411
      %v454 = vunpack.c.h.b16 %v411
      %v455 = vunpack.c.l.b16 %v412
      %v456 = vunpack.c.h.b16 %v412
      %v457 = vunpack.c.l.b16 %v413
      %v458 = vunpack.c.h.b16 %v413
      %v459 = vunpack.c.l.b16 %v414
      %v460 = vunpack.c.h.b16 %v414
      %v461 = vunpack.c.l.b16 %v415
      %v462 = vunpack.c.h.b16 %v415
      %v463 = vunpack.c.l.b16 %v416
      %v464 = vunpack.c.h.b16 %v416
      %v465 = vpack.c.b16 %v433, %v433
      %v466 = vpack.c.b16 %v434, %v434
      %v467 = vpack.c.b16 %v435, %v435
      %v468 = vpack.c.b16 %v436, %v436
      %v469 = vpack.c.b16 %v437, %v437
      %v470 = vpack.c.b16 %v438, %v438
      %v471 = vpack.c.b16 %v439, %v439
      %v472 = vpack.c.b16 %v440, %v440
      %v473 = vpack.c.b16 %v441, %v441
      %v474 = vpack.c.b16 %v442, %v442
      %v475 = vpack.c.b16 %v443, %v443
      %v476 = vpack.c.b16 %v444, %v444
      %v477 = vpack.c.b16 %v445, %v445
      %v478 = vpack.c.b16 %v446, %v446
      %v479 = vpack.c.b16 %v447, %v447
      %v480 = vpack.c.b16 %v448, %v448
      %v481 = vpack.c.b16 %v449, %v449
      %v482 = vpack.c.b16 %v450, %v450
      %v483 = vpack.c.b16 %v451, %v451
      %v484 = vpack.c.b16 %v452, %v452
      %v485 = vpack.c.b16 %v453, %v453
      %v486 = vpack.c.b16 %v454, %v454
      %v487 = vpack.c.b16 %v455, %v455
      %v488 = vpack.c.b16 %v456, %v456
      %v489 = vpack.c.b16 %v457, %v457
      %v490 = vpack.c.b16 %v458, %v458
      %v491 = vpack.c.b16 %v459, %v459
      %v492 = vpack.c.b16 %v460, %v460
      %v493 = vpack.c.b16 %v461, %v461
      %v494 = vpack.c.b16 %v462, %v462
      %v495 = vpack.c.b16 %v463, %v463
      %v496 = vpack.c.b16 %v464, %v464
      %vm529 = vcmask 519168
      %530 = vst.msk [vmem:[#allocation3] sm:$0xf] %vm529, %v465
      %531 = vst.msk [vmem:[#allocation3 + $0x14] sm:$0xf] %vm529, %v466
      %532 = vst.msk [vmem:[#allocation3 + $0x28] sm:$0xf] %vm529, %v467
      %533 = vst.msk [vmem:[#allocation3 + $0x3c] sm:$0xf] %vm529, %v468
      %534 = vst.msk [vmem:[#allocation3 + $0x50] sm:$0xf] %vm529, %v469
      %535 = vst.msk [vmem:[#allocation3 + $0x64] sm:$0xf] %vm529, %v470
      %536 = vst.msk [vmem:[#allocation3 + $0x78] sm:$0xf] %vm529, %v471
      %537 = vst.msk [vmem:[#allocation3 + $0x8c] sm:$0xf] %vm529, %v472
      %538 = vst.msk [vmem:[#allocation3 + $0xa0] sm:$0xf] %vm529, %v473
      %539 = vst.msk [vmem:[#allocation3 + $0xb4] sm:$0xf] %vm529, %v474
      %540 = vst.msk [vmem:[#allocation3 + $0xc8] sm:$0xf] %vm529, %v475
      %541 = vst.msk [vmem:[#allocation3 + $0xdc] sm:$0xf] %vm529, %v476
      %542 = vst.msk [vmem:[#allocation3 + $0xf0] sm:$0xf] %vm529, %v477
      %543 = vst.msk [vmem:[#allocation3 + $0x104] sm:$0xf] %vm529, %v478
      %544 = vst.msk [vmem:[#allocation3 + $0x118] sm:$0xf] %vm529, %v479
      %545 = vst.msk [vmem:[#allocation3 + $0x12c] sm:$0xf] %vm529, %v480
      %546 = vst.msk [vmem:[#allocation3 + $0x140] sm:$0xf] %vm529, %v481
      %547 = vst.msk [vmem:[#allocation3 + $0x154] sm:$0xf] %vm529, %v482
      %548 = vst.msk [vmem:[#allocation3 + $0x168] sm:$0xf] %vm529, %v483
      %549 = vst.msk [vmem:[#allocation3 + $0x17c] sm:$0xf] %vm529, %v484
      %550 = vst.msk [vmem:[#allocation3 + $0x190] sm:$0xf] %vm529, %v485
      %551 = vst.msk [vmem:[#allocation3 + $0x1a4] sm:$0xf] %vm529, %v486
      %552 = vst.msk [vmem:[#allocation3 + $0x1b8] sm:$0xf] %vm529, %v487
      %553 = vst.msk [vmem:[#allocation3 + $0x1cc] sm:$0xf] %vm529, %v488
      %554 = vst.msk [vmem:[#allocation3 + $0x1e0] sm:$0xf] %vm529, %v489
      %555 = vst.msk [vmem:[#allocation3 + $0x1f4] sm:$0xf] %vm529, %v490
      %556 = vst.msk [vmem:[#allocation3 + $0x208] sm:$0xf] %vm529, %v491
      %557 = vst.msk [vmem:[#allocation3 + $0x21c] sm:$0xf] %vm529, %v492
      %558 = vst.msk [vmem:[#allocation3 + $0x230] sm:$0xf] %vm529, %v493
      %559 = vst.msk [vmem:[#allocation3 + $0x244] sm:$0xf] %vm529, %v494
      %560 = vst.msk [vmem:[#allocation3 + $0x258] sm:$0xf] %vm529, %v495
      %561 = vst.msk [vmem:[#allocation3 + $0x26c] sm:$0xf] %vm529, %v496
      %v562 = vld [vmem:[#allocation2 + $0x1] sm:$0xff]
      %v563 = vld [vmem:[#allocation2 + $0x9] sm:$0xff]
      %v564 = vld [vmem:[#allocation2 + $0x19] sm:$0xff]
      %v565 = vld [vmem:[#allocation2 + $0x21] sm:$0xff]
      %v566 = vld [vmem:[#allocation2 + $0x31] sm:$0xff]
      %v567 = vld [vmem:[#allocation2 + $0x39] sm:$0xff]
      %v568 = vld [vmem:[#allocation2 + $0x49] sm:$0xff]
      %v569 = vld [vmem:[#allocation2 + $0x51] sm:$0xff]
      %v570 = vld [vmem:[#allocation2 + $0x61] sm:$0xff]
      %v571 = vld [vmem:[#allocation2 + $0x69] sm:$0xff]
      %v572 = vld [vmem:[#allocation2 + $0x79] sm:$0xff]
      %v573 = vld [vmem:[#allocation2 + $0x81] sm:$0xff]
      %v574 = vld [vmem:[#allocation2 + $0x91] sm:$0xff]
      %v575 = vld [vmem:[#allocation2 + $0x99] sm:$0xff]
      %v576 = vld [vmem:[#allocation2 + $0xa9] sm:$0xff]
      %v577 = vld [vmem:[#allocation2 + $0xb1] sm:$0xff]
      %v578 = vld [vmem:[#allocation2 + $0xc1] sm:$0xff]
      %v579 = vld [vmem:[#allocation2 + $0xc9] sm:$0xff]
      %v580 = vld [vmem:[#allocation2 + $0xd9] sm:$0xff]
      %v581 = vld [vmem:[#allocation2 + $0xe1] sm:$0xff]
      %v582 = vld [vmem:[#allocation2 + $0xf1] sm:$0xff]
      %v583 = vld [vmem:[#allocation2 + $0xf9] sm:$0xff]
      %v584 = vld [vmem:[#allocation2 + $0x109] sm:$0xff]
      %v585 = vld [vmem:[#allocation2 + $0x111] sm:$0xff]
      %v586 = vld [vmem:[#allocation2 + $0x121] sm:$0xff]
      %v587 = vld [vmem:[#allocation2 + $0x129] sm:$0xff]
      %v588 = vld [vmem:[#allocation2 + $0x139] sm:$0xff]
      %v589 = vld [vmem:[#allocation2 + $0x141] sm:$0xff]
      %v590 = vld [vmem:[#allocation2 + $0x151] sm:$0xff]
      %v591 = vld [vmem:[#allocation2 + $0x159] sm:$0xff]
      %v592 = vld [vmem:[#allocation2 + $0x169] sm:$0xff]
      %v593 = vld [vmem:[#allocation2 + $0x171] sm:$0xff]
      %v594 = vpack.c.bf16 %v563, %v562
      %v595 = vpack.c.bf16 %v565, %v564
      %v596 = vpack.c.bf16 %v567, %v566
      %v597 = vpack.c.bf16 %v569, %v568
      %v598 = vpack.c.bf16 %v571, %v570
      %v599 = vpack.c.bf16 %v573, %v572
      %v600 = vpack.c.bf16 %v575, %v574
      %v601 = vpack.c.bf16 %v577, %v576
      %v602 = vpack.c.bf16 %v579, %v578
      %v603 = vpack.c.bf16 %v581, %v580
      %v604 = vpack.c.bf16 %v583, %v582
      %v605 = vpack.c.bf16 %v585, %v584
      %v606 = vpack.c.bf16 %v587, %v586
      %v607 = vpack.c.bf16 %v589, %v588
      %v608 = vpack.c.bf16 %v591, %v590
      %v609 = vpack.c.bf16 %v593, %v592
      %v626 = vunpack.c.l.b16 %v594
      %v627 = vunpack.c.h.b16 %v594
      %v628 = vunpack.c.l.b16 %v595
      %v629 = vunpack.c.h.b16 %v595
      %v630 = vunpack.c.l.b16 %v596
      %v631 = vunpack.c.h.b16 %v596
      %v632 = vunpack.c.l.b16 %v597
      %v633 = vunpack.c.h.b16 %v597
      %v634 = vunpack.c.l.b16 %v598
      %v635 = vunpack.c.h.b16 %v598
      %v636 = vunpack.c.l.b16 %v599
      %v637 = vunpack.c.h.b16 %v599
      %v638 = vunpack.c.l.b16 %v600
      %v639 = vunpack.c.h.b16 %v600
      %v640 = vunpack.c.l.b16 %v601
      %v641 = vunpack.c.h.b16 %v601
      %v642 = vunpack.c.l.b16 %v602
      %v643 = vunpack.c.h.b16 %v602
      %v644 = vunpack.c.l.b16 %v603
      %v645 = vunpack.c.h.b16 %v603
      %v646 = vunpack.c.l.b16 %v604
      %v647 = vunpack.c.h.b16 %v604
      %v648 = vunpack.c.l.b16 %v605
      %v649 = vunpack.c.h.b16 %v605
      %v650 = vunpack.c.l.b16 %v606
      %v651 = vunpack.c.h.b16 %v606
      %v652 = vunpack.c.l.b16 %v607
      %v653 = vunpack.c.h.b16 %v607
      %v654 = vunpack.c.l.b16 %v608
      %v655 = vunpack.c.h.b16 %v608
      %v656 = vunpack.c.l.b16 %v609
      %v657 = vunpack.c.h.b16 %v609
      %v658 = vpack.c.b16 %v626, %v626
      %v659 = vpack.c.b16 %v627, %v627
      %v660 = vpack.c.b16 %v628, %v628
      %v661 = vpack.c.b16 %v629, %v629
      %v662 = vpack.c.b16 %v630, %v630
      %v663 = vpack.c.b16 %v631, %v631
      %v664 = vpack.c.b16 %v632, %v632
      %v665 = vpack.c.b16 %v633, %v633
      %v666 = vpack.c.b16 %v634, %v634
      %v667 = vpack.c.b16 %v635, %v635
      %v668 = vpack.c.b16 %v636, %v636
      %v669 = vpack.c.b16 %v637, %v637
      %v670 = vpack.c.b16 %v638, %v638
      %v671 = vpack.c.b16 %v639, %v639
      %v672 = vpack.c.b16 %v640, %v640
      %v673 = vpack.c.b16 %v641, %v641
      %v674 = vpack.c.b16 %v642, %v642
      %v675 = vpack.c.b16 %v643, %v643
      %v676 = vpack.c.b16 %v644, %v644
      %v677 = vpack.c.b16 %v645, %v645
      %v678 = vpack.c.b16 %v646, %v646
      %v679 = vpack.c.b16 %v647, %v647
      %v680 = vpack.c.b16 %v648, %v648
      %v681 = vpack.c.b16 %v649, %v649
      %v682 = vpack.c.b16 %v650, %v650
      %v683 = vpack.c.b16 %v651, %v651
      %v684 = vpack.c.b16 %v652, %v652
      %v685 = vpack.c.b16 %v653, %v653
      %v686 = vpack.c.b16 %v654, %v654
      %v687 = vpack.c.b16 %v655, %v655
      %v688 = vpack.c.b16 %v656, %v656
      %v689 = vpack.c.b16 %v657, %v657
      %690 = vrot.lane.b32.xlu0 %v658, 64
      %v691 = vpop.permute.xlu0 %690
      %692 = vrot.lane.b32.xlu0 %v659, 64
      %v693 = vpop.permute.xlu0 %692
      %694 = vrot.lane.b32.xlu0 %v660, 64
      %v695 = vpop.permute.xlu0 %694
      %696 = vrot.lane.b32.xlu0 %v661, 64
      %v697 = vpop.permute.xlu0 %696
      %698 = vrot.lane.b32.xlu0 %v662, 64
      %v699 = vpop.permute.xlu0 %698
      %700 = vrot.lane.b32.xlu0 %v663, 64
      %v701 = vpop.permute.xlu0 %700
      %702 = vrot.lane.b32.xlu0 %v664, 64
      %v703 = vpop.permute.xlu0 %702
      %704 = vrot.lane.b32.xlu0 %v665, 64
      %v705 = vpop.permute.xlu0 %704
      %706 = vrot.lane.b32.xlu0 %v666, 64
      %v707 = vpop.permute.xlu0 %706
      %708 = vrot.lane.b32.xlu0 %v667, 64
      %v709 = vpop.permute.xlu0 %708
      %710 = vrot.lane.b32.xlu0 %v668, 64
      %v711 = vpop.permute.xlu0 %710
      %712 = vrot.lane.b32.xlu0 %v669, 64
      %v713 = vpop.permute.xlu0 %712
      %714 = vrot.lane.b32.xlu0 %v670, 64
      %v715 = vpop.permute.xlu0 %714
      %716 = vrot.lane.b32.xlu0 %v671, 64
      %v717 = vpop.permute.xlu0 %716
      %718 = vrot.lane.b32.xlu0 %v672, 64
      %v719 = vpop.permute.xlu0 %718
      %720 = vrot.lane.b32.xlu0 %v673, 64
      %v721 = vpop.permute.xlu0 %720
      %722 = vrot.lane.b32.xlu0 %v674, 64
      %v723 = vpop.permute.xlu0 %722
      %724 = vrot.lane.b32.xlu0 %v675, 64
      %v725 = vpop.permute.xlu0 %724
      %726 = vrot.lane.b32.xlu0 %v676, 64
      %v727 = vpop.permute.xlu0 %726
      %728 = vrot.lane.b32.xlu0 %v677, 64
      %v729 = vpop.permute.xlu0 %728
      %730 = vrot.lane.b32.xlu0 %v678, 64
      %v731 = vpop.permute.xlu0 %730
      %732 = vrot.lane.b32.xlu0 %v679, 64
      %v733 = vpop.permute.xlu0 %732
      %734 = vrot.lane.b32.xlu0 %v680, 64
      %v735 = vpop.permute.xlu0 %734
      %736 = vrot.lane.b32.xlu0 %v681, 64
      %v737 = vpop.permute.xlu0 %736
      %738 = vrot.lane.b32.xlu0 %v682, 64
      %v739 = vpop.permute.xlu0 %738
      %740 = vrot.lane.b32.xlu0 %v683, 64
      %v741 = vpop.permute.xlu0 %740
      %742 = vrot.lane.b32.xlu0 %v684, 64
      %v743 = vpop.permute.xlu0 %742
      %744 = vrot.lane.b32.xlu0 %v685, 64
      %v745 = vpop.permute.xlu0 %744
      %746 = vrot.lane.b32.xlu0 %v686, 64
      %v747 = vpop.permute.xlu0 %746
      %748 = vrot.lane.b32.xlu0 %v687, 64
      %v749 = vpop.permute.xlu0 %748
      %750 = vrot.lane.b32.xlu0 %v688, 64
      %v751 = vpop.permute.xlu0 %750
      %752 = vrot.lane.b32.xlu0 %v689, 64
      %v753 = vpop.permute.xlu0 %752
      %vm786 = vcmask 1043968
      %787 = vst.msk [vmem:[#allocation3] sm:$0xf] %vm786, %v691
      %788 = vst.msk [vmem:[#allocation3 + $0x14] sm:$0xf] %vm786, %v693
      %789 = vst.msk [vmem:[#allocation3 + $0x28] sm:$0xf] %vm786, %v695
      %790 = vst.msk [vmem:[#allocation3 + $0x3c] sm:$0xf] %vm786, %v697
      %791 = vst.msk [vmem:[#allocation3 + $0x50] sm:$0xf] %vm786, %v699
      %792 = vst.msk [vmem:[#allocation3 + $0x64] sm:$0xf] %vm786, %v701
      %793 = vst.msk [vmem:[#allocation3 + $0x78] sm:$0xf] %vm786, %v703
      %794 = vst.msk [vmem:[#allocation3 + $0x8c] sm:$0xf] %vm786, %v705
      %795 = vst.msk [vmem:[#allocation3 + $0xa0] sm:$0xf] %vm786, %v707
      %796 = vst.msk [vmem:[#allocation3 + $0xb4] sm:$0xf] %vm786, %v709
      %797 = vst.msk [vmem:[#allocation3 + $0xc8] sm:$0xf] %vm786, %v711
      %798 = vst.msk [vmem:[#allocation3 + $0xdc] sm:$0xf] %vm786, %v713
      %799 = vst.msk [vmem:[#allocation3 + $0xf0] sm:$0xf] %vm786, %v715
      %800 = vst.msk [vmem:[#allocation3 + $0x104] sm:$0xf] %vm786, %v717
      %801 = vst.msk [vmem:[#allocation3 + $0x118] sm:$0xf] %vm786, %v719
      %802 = vst.msk [vmem:[#allocation3 + $0x12c] sm:$0xf] %vm786, %v721
      %803 = vst.msk [vmem:[#allocation3 + $0x140] sm:$0xf] %vm786, %v723
      %804 = vst.msk [vmem:[#allocation3 + $0x154] sm:$0xf] %vm786, %v725
      %805 = vst.msk [vmem:[#allocation3 + $0x168] sm:$0xf] %vm786, %v727
      %806 = vst.msk [vmem:[#allocation3 + $0x17c] sm:$0xf] %vm786, %v729
      %807 = vst.msk [vmem:[#allocation3 + $0x190] sm:$0xf] %vm786, %v731
      %808 = vst.msk [vmem:[#allocation3 + $0x1a4] sm:$0xf] %vm786, %v733
      %809 = vst.msk [vmem:[#allocation3 + $0x1b8] sm:$0xf] %vm786, %v735
      %810 = vst.msk [vmem:[#allocation3 + $0x1cc] sm:$0xf] %vm786, %v737
      %811 = vst.msk [vmem:[#allocation3 + $0x1e0] sm:$0xf] %vm786, %v739
      %812 = vst.msk [vmem:[#allocation3 + $0x1f4] sm:$0xf] %vm786, %v741
      %813 = vst.msk [vmem:[#allocation3 + $0x208] sm:$0xf] %vm786, %v743
      %814 = vst.msk [vmem:[#allocation3 + $0x21c] sm:$0xf] %vm786, %v745
      %815 = vst.msk [vmem:[#allocation3 + $0x230] sm:$0xf] %vm786, %v747
      %816 = vst.msk [vmem:[#allocation3 + $0x244] sm:$0xf] %vm786, %v749
      %817 = vst.msk [vmem:[#allocation3 + $0x258] sm:$0xf] %vm786, %v751
      %818 = vst.msk [vmem:[#allocation3 + $0x26c] sm:$0xf] %vm786, %v753
      %v819 = vld [vmem:[#allocation2 + $0x2] sm:$0xff]
      %v820 = vld [vmem:[#allocation2 + $0xa] sm:$0xff]
      %v821 = vld [vmem:[#allocation2 + $0x1a] sm:$0xff]
      %v822 = vld [vmem:[#allocation2 + $0x22] sm:$0xff]
      %v823 = vld [vmem:[#allocation2 + $0x32] sm:$0xff]
      %v824 = vld [vmem:[#allocation2 + $0x3a] sm:$0xff]
      %v825 = vld [vmem:[#allocation2 + $0x4a] sm:$0xff]
      %v826 = vld [vmem:[#allocation2 + $0x52] sm:$0xff]
      %v827 = vld [vmem:[#allocation2 + $0x62] sm:$0xff]
      %v828 = vld [vmem:[#allocation2 + $0x6a] sm:$0xff]
      %v829 = vld [vmem:[#allocation2 + $0x7a] sm:$0xff]
      %v830 = vld [vmem:[#allocation2 + $0x82] sm:$0xff]
      %v831 = vld [vmem:[#allocation2 + $0x92] sm:$0xff]
      %v832 = vld [vmem:[#allocation2 + $0x9a] sm:$0xff]
      %v833 = vld [vmem:[#allocation2 + $0xaa] sm:$0xff]
      %v834 = vld [vmem:[#allocation2 + $0xb2] sm:$0xff]
      %v835 = vld [vmem:[#allocation2 + $0xc2] sm:$0xff]
      %v836 = vld [vmem:[#allocation2 + $0xca] sm:$0xff]
      %v837 = vld [vmem:[#allocation2 + $0xda] sm:$0xff]
      %v838 = vld [vmem:[#allocation2 + $0xe2] sm:$0xff]
      %v839 = vld [vmem:[#allocation2 + $0xf2] sm:$0xff]
      %v840 = vld [vmem:[#allocation2 + $0xfa] sm:$0xff]
      %v841 = vld [vmem:[#allocation2 + $0x10a] sm:$0xff]
      %v842 = vld [vmem:[#allocation2 + $0x112] sm:$0xff]
      %v843 = vld [vmem:[#allocation2 + $0x122] sm:$0xff]
      %v844 = vld [vmem:[#allocation2 + $0x12a] sm:$0xff]
      %v845 = vld [vmem:[#allocation2 + $0x13a] sm:$0xff]
      %v846 = vld [vmem:[#allocation2 + $0x142] sm:$0xff]
      %v847 = vld [vmem:[#allocation2 + $0x152] sm:$0xff]
      %v848 = vld [vmem:[#allocation2 + $0x15a] sm:$0xff]
      %v849 = vld [vmem:[#allocation2 + $0x16a] sm:$0xff]
      %v850 = vld [vmem:[#allocation2 + $0x172] sm:$0xff]
      %v851 = vpack.c.bf16 %v820, %v819
      %v852 = vpack.c.bf16 %v822, %v821
      %v853 = vpack.c.bf16 %v824, %v823
      %v854 = vpack.c.bf16 %v826, %v825
      %v855 = vpack.c.bf16 %v828, %v827
      %v856 = vpack.c.bf16 %v830, %v829
      %v857 = vpack.c.bf16 %v832, %v831
      %v858 = vpack.c.bf16 %v834, %v833
      %v859 = vpack.c.bf16 %v836, %v835
      %v860 = vpack.c.bf16 %v838, %v837
      %v861 = vpack.c.bf16 %v840, %v839
      %v862 = vpack.c.bf16 %v842, %v841
      %v863 = vpack.c.bf16 %v844, %v843
      %v864 = vpack.c.bf16 %v846, %v845
      %v865 = vpack.c.bf16 %v848, %v847
      %v866 = vpack.c.bf16 %v850, %v849
      %v883 = vunpack.c.l.b16 %v851
      %v884 = vunpack.c.h.b16 %v851
      %v885 = vunpack.c.l.b16 %v852
      %v886 = vunpack.c.h.b16 %v852
      %v887 = vunpack.c.l.b16 %v853
      %v888 = vunpack.c.h.b16 %v853
      %v889 = vunpack.c.l.b16 %v854
      %v890 = vunpack.c.h.b16 %v854
      %v891 = vunpack.c.l.b16 %v855
      %v892 = vunpack.c.h.b16 %v855
      %v893 = vunpack.c.l.b16 %v856
      %v894 = vunpack.c.h.b16 %v856
      %v895 = vunpack.c.l.b16 %v857
      %v896 = vunpack.c.h.b16 %v857
      %v897 = vunpack.c.l.b16 %v858
      %v898 = vunpack.c.h.b16 %v858
      %v899 = vunpack.c.l.b16 %v859
      %v900 = vunpack.c.h.b16 %v859
      %v901 = vunpack.c.l.b16 %v860
      %v902 = vunpack.c.h.b16 %v860
      %v903 = vunpack.c.l.b16 %v861
      %v904 = vunpack.c.h.b16 %v861
      %v905 = vunpack.c.l.b16 %v862
      %v906 = vunpack.c.h.b16 %v862
      %v907 = vunpack.c.l.b16 %v863
      %v908 = vunpack.c.h.b16 %v863
      %v909 = vunpack.c.l.b16 %v864
      %v910 = vunpack.c.h.b16 %v864
      %v911 = vunpack.c.l.b16 %v865
      %v912 = vunpack.c.h.b16 %v865
      %v913 = vunpack.c.l.b16 %v866
      %v914 = vunpack.c.h.b16 %v866
      %v915 = vpack.c.b16 %v883, %v883
      %v916 = vpack.c.b16 %v884, %v884
      %v917 = vpack.c.b16 %v885, %v885
      %v918 = vpack.c.b16 %v886, %v886
      %v919 = vpack.c.b16 %v887, %v887
      %v920 = vpack.c.b16 %v888, %v888
      %v921 = vpack.c.b16 %v889, %v889
      %v922 = vpack.c.b16 %v890, %v890
      %v923 = vpack.c.b16 %v891, %v891
      %v924 = vpack.c.b16 %v892, %v892
      %v925 = vpack.c.b16 %v893, %v893
      %v926 = vpack.c.b16 %v894, %v894
      %v927 = vpack.c.b16 %v895, %v895
      %v928 = vpack.c.b16 %v896, %v896
      %v929 = vpack.c.b16 %v897, %v897
      %v930 = vpack.c.b16 %v898, %v898
      %v931 = vpack.c.b16 %v899, %v899
      %v932 = vpack.c.b16 %v900, %v900
      %v933 = vpack.c.b16 %v901, %v901
      %v934 = vpack.c.b16 %v902, %v902
      %v935 = vpack.c.b16 %v903, %v903
      %v936 = vpack.c.b16 %v904, %v904
      %v937 = vpack.c.b16 %v905, %v905
      %v938 = vpack.c.b16 %v906, %v906
      %v939 = vpack.c.b16 %v907, %v907
      %v940 = vpack.c.b16 %v908, %v908
      %v941 = vpack.c.b16 %v909, %v909
      %v942 = vpack.c.b16 %v910, %v910
      %v943 = vpack.c.b16 %v911, %v911
      %v944 = vpack.c.b16 %v912, %v912
      %v945 = vpack.c.b16 %v913, %v913
      %v946 = vpack.c.b16 %v914, %v914
      %979 = vst.msk [vmem:[#allocation3 + $0x4] sm:$0xf] %vm529, %v915
      %980 = vst.msk [vmem:[#allocation3 + $0x18] sm:$0xf] %vm529, %v916
      %981 = vst.msk [vmem:[#allocation3 + $0x2c] sm:$0xf] %vm529, %v917
      %982 = vst.msk [vmem:[#allocation3 + $0x40] sm:$0xf] %vm529, %v918
      %983 = vst.msk [vmem:[#allocation3 + $0x54] sm:$0xf] %vm529, %v919
      %984 = vst.msk [vmem:[#allocation3 + $0x68] sm:$0xf] %vm529, %v920
      %985 = vst.msk [vmem:[#allocation3 + $0x7c] sm:$0xf] %vm529, %v921
      %986 = vst.msk [vmem:[#allocation3 + $0x90] sm:$0xf] %vm529, %v922
      %987 = vst.msk [vmem:[#allocation3 + $0xa4] sm:$0xf] %vm529, %v923
      %988 = vst.msk [vmem:[#allocation3 + $0xb8] sm:$0xf] %vm529, %v924
      %989 = vst.msk [vmem:[#allocation3 + $0xcc] sm:$0xf] %vm529, %v925
      %990 = vst.msk [vmem:[#allocation3 + $0xe0] sm:$0xf] %vm529, %v926
      %991 = vst.msk [vmem:[#allocation3 + $0xf4] sm:$0xf] %vm529, %v927
      %992 = vst.msk [vmem:[#allocation3 + $0x108] sm:$0xf] %vm529, %v928
      %993 = vst.msk [vmem:[#allocation3 + $0x11c] sm:$0xf] %vm529, %v929
      %994 = vst.msk [vmem:[#allocation3 + $0x130] sm:$0xf] %vm529, %v930
      %995 = vst.msk [vmem:[#allocation3 + $0x144] sm:$0xf] %vm529, %v931
      %996 = vst.msk [vmem:[#allocation3 + $0x158] sm:$0xf] %vm529, %v932
      %997 = vst.msk [vmem:[#allocation3 + $0x16c] sm:$0xf] %vm529, %v933
      %998 = vst.msk [vmem:[#allocation3 + $0x180] sm:$0xf] %vm529, %v934
      %999 = vst.msk [vmem:[#allocation3 + $0x194] sm:$0xf] %vm529, %v935
      %1000 = vst.msk [vmem:[#allocation3 + $0x1a8] sm:$0xf] %vm529, %v936
      %1001 = vst.msk [vmem:[#allocation3 + $0x1bc] sm:$0xf] %vm529, %v937
      %1002 = vst.msk [vmem:[#allocation3 + $0x1d0] sm:$0xf] %vm529, %v938
      %1003 = vst.msk [vmem:[#allocation3 + $0x1e4] sm:$0xf] %vm529, %v939
      %1004 = vst.msk [vmem:[#allocation3 + $0x1f8] sm:$0xf] %vm529, %v940
      %1005 = vst.msk [vmem:[#allocation3 + $0x20c] sm:$0xf] %vm529, %v941
      %1006 = vst.msk [vmem:[#allocation3 + $0x220] sm:$0xf] %vm529, %v942
      %1007 = vst.msk [vmem:[#allocation3 + $0x234] sm:$0xf] %vm529, %v943
      %1008 = vst.msk [vmem:[#allocation3 + $0x248] sm:$0xf] %vm529, %v944
      %1009 = vst.msk [vmem:[#allocation3 + $0x25c] sm:$0xf] %vm529, %v945
      %1010 = vst.msk [vmem:[#allocation3 + $0x270] sm:$0xf] %vm529, %v946
      %v1011 = vld [vmem:[%s336] sm:$0xff]
      %v1012 = vld [vmem:[%s336 + $0x8] sm:$0xff]
      %v1013 = vld [vmem:[%s336 + $0x18] sm:$0xff]
      %v1014 = vld [vmem:[%s336 + $0x20] sm:$0xff]
      %v1015 = vld [vmem:[%s336 + $0x30] sm:$0xff]
      %v1016 = vld [vmem:[%s336 + $0x38] sm:$0xff]
      %v1017 = vld [vmem:[%s336 + $0x48] sm:$0xff]
      %v1018 = vld [vmem:[%s336 + $0x50] sm:$0xff]
      %v1019 = vld [vmem:[%s336 + $0x60] sm:$0xff]
      %v1020 = vld [vmem:[%s336 + $0x68] sm:$0xff]
      %v1021 = vld [vmem:[%s336 + $0x78] sm:$0xff]
      %v1022 = vld [vmem:[%s336 + $0x80] sm:$0xff]
      %v1023 = vld [vmem:[%s336 + $0x90] sm:$0xff]
      %v1024 = vld [vmem:[%s336 + $0x98] sm:$0xff]
      %v1025 = vld [vmem:[%s336 + $0xa8] sm:$0xff]
      %v1026 = vld [vmem:[%s336 + $0xb0] sm:$0xff]
      %v1027 = vld [vmem:[%s336 + $0xc0] sm:$0xff]
      %v1028 = vld [vmem:[%s336 + $0xc8] sm:$0xff]
      %v1029 = vld [vmem:[%s336 + $0xd8] sm:$0xff]
      %v1030 = vld [vmem:[%s336 + $0xe0] sm:$0xff]
      %v1031 = vld [vmem:[%s336 + $0xf0] sm:$0xff]
      %v1032 = vld [vmem:[%s336 + $0xf8] sm:$0xff]
      %v1033 = vld [vmem:[%s336 + $0x108] sm:$0xff]
      %v1034 = vld [vmem:[%s336 + $0x110] sm:$0xff]
      %v1035 = vld [vmem:[%s336 + $0x120] sm:$0xff]
      %v1036 = vld [vmem:[%s336 + $0x128] sm:$0xff]
      %v1037 = vld [vmem:[%s336 + $0x138] sm:$0xff]
      %v1038 = vld [vmem:[%s336 + $0x140] sm:$0xff]
      %v1039 = vld [vmem:[%s336 + $0x150] sm:$0xff]
      %v1040 = vld [vmem:[%s336 + $0x158] sm:$0xff]
      %v1041 = vld [vmem:[%s336 + $0x168] sm:$0xff]
      %v1042 = vld [vmem:[%s336 + $0x170] sm:$0xff]
      %v1043 = vpack.c.bf16 %v1012, %v1011
      %v1044 = vpack.c.bf16 %v1014, %v1013
      %v1045 = vpack.c.bf16 %v1016, %v1015
      %v1046 = vpack.c.bf16 %v1018, %v1017
      %v1047 = vpack.c.bf16 %v1020, %v1019
      %v1048 = vpack.c.bf16 %v1022, %v1021
      %v1049 = vpack.c.bf16 %v1024, %v1023
      %v1050 = vpack.c.bf16 %v1026, %v1025
      %v1051 = vpack.c.bf16 %v1028, %v1027
      %v1052 = vpack.c.bf16 %v1030, %v1029
      %v1053 = vpack.c.bf16 %v1032, %v1031
      %v1054 = vpack.c.bf16 %v1034, %v1033
      %v1055 = vpack.c.bf16 %v1036, %v1035
      %v1056 = vpack.c.bf16 %v1038, %v1037
      %v1057 = vpack.c.bf16 %v1040, %v1039
      %v1058 = vpack.c.bf16 %v1042, %v1041
      %v1075 = vunpack.c.l.b16 %v1043
      %v1076 = vunpack.c.h.b16 %v1043
      %v1077 = vunpack.c.l.b16 %v1044
      %v1078 = vunpack.c.h.b16 %v1044
      %v1079 = vunpack.c.l.b16 %v1045
      %v1080 = vunpack.c.h.b16 %v1045
      %v1081 = vunpack.c.l.b16 %v1046
      %v1082 = vunpack.c.h.b16 %v1046
      %v1083 = vunpack.c.l.b16 %v1047
      %v1084 = vunpack.c.h.b16 %v1047
      %v1085 = vunpack.c.l.b16 %v1048
      %v1086 = vunpack.c.h.b16 %v1048
      %v1087 = vunpack.c.l.b16 %v1049
      %v1088 = vunpack.c.h.b16 %v1049
      %v1089 = vunpack.c.l.b16 %v1050
      %v1090 = vunpack.c.h.b16 %v1050
      %v1091 = vunpack.c.l.b16 %v1051
      %v1092 = vunpack.c.h.b16 %v1051
      %v1093 = vunpack.c.l.b16 %v1052
      %v1094 = vunpack.c.h.b16 %v1052
      %v1095 = vunpack.c.l.b16 %v1053
      %v1096 = vunpack.c.h.b16 %v1053
      %v1097 = vunpack.c.l.b16 %v1054
      %v1098 = vunpack.c.h.b16 %v1054
      %v1099 = vunpack.c.l.b16 %v1055
      %v1100 = vunpack.c.h.b16 %v1055
      %v1101 = vunpack.c.l.b16 %v1056
      %v1102 = vunpack.c.h.b16 %v1056
      %v1103 = vunpack.c.l.b16 %v1057
      %v1104 = vunpack.c.h.b16 %v1057
      %v1105 = vunpack.c.l.b16 %v1058
      %v1106 = vunpack.c.h.b16 %v1058
      %v1107 = vpack.c.b16 %v1075, %v1075
      %v1108 = vpack.c.b16 %v1076, %v1076
      %v1109 = vpack.c.b16 %v1077, %v1077
      %v1110 = vpack.c.b16 %v1078, %v1078
      %v1111 = vpack.c.b16 %v1079, %v1079
      %v1112 = vpack.c.b16 %v1080, %v1080
      %v1113 = vpack.c.b16 %v1081, %v1081
      %v1114 = vpack.c.b16 %v1082, %v1082
      %v1115 = vpack.c.b16 %v1083, %v1083
      %v1116 = vpack.c.b16 %v1084, %v1084
      %v1117 = vpack.c.b16 %v1085, %v1085
      %v1118 = vpack.c.b16 %v1086, %v1086
      %v1119 = vpack.c.b16 %v1087, %v1087
      %v1120 = vpack.c.b16 %v1088, %v1088
      %v1121 = vpack.c.b16 %v1089, %v1089
      %v1122 = vpack.c.b16 %v1090, %v1090
      %v1123 = vpack.c.b16 %v1091, %v1091
      %v1124 = vpack.c.b16 %v1092, %v1092
      %v1125 = vpack.c.b16 %v1093, %v1093
      %v1126 = vpack.c.b16 %v1094, %v1094
      %v1127 = vpack.c.b16 %v1095, %v1095
      %v1128 = vpack.c.b16 %v1096, %v1096
      %v1129 = vpack.c.b16 %v1097, %v1097
      %v1130 = vpack.c.b16 %v1098, %v1098
      %v1131 = vpack.c.b16 %v1099, %v1099
      %v1132 = vpack.c.b16 %v1100, %v1100
      %v1133 = vpack.c.b16 %v1101, %v1101
      %v1134 = vpack.c.b16 %v1102, %v1102
      %v1135 = vpack.c.b16 %v1103, %v1103
      %v1136 = vpack.c.b16 %v1104, %v1104
      %v1137 = vpack.c.b16 %v1105, %v1105
      %v1138 = vpack.c.b16 %v1106, %v1106
      %1139 = vrot.lane.b32.xlu0 %v1107, 64
      %v1140 = vpop.permute.xlu0 %1139
      %1141 = vrot.lane.b32.xlu0 %v1108, 64
      %v1142 = vpop.permute.xlu0 %1141
      %1143 = vrot.lane.b32.xlu0 %v1109, 64
      %v1144 = vpop.permute.xlu0 %1143
      %1145 = vrot.lane.b32.xlu0 %v1110, 64
      %v1146 = vpop.permute.xlu0 %1145
      %1147 = vrot.lane.b32.xlu0 %v1111, 64
      %v1148 = vpop.permute.xlu0 %1147
      %1149 = vrot.lane.b32.xlu0 %v1112, 64
      %v1150 = vpop.permute.xlu0 %1149
      %1151 = vrot.lane.b32.xlu0 %v1113, 64
      %v1152 = vpop.permute.xlu0 %1151
      %1153 = vrot.lane.b32.xlu0 %v1114, 64
      %v1154 = vpop.permute.xlu0 %1153
      %1155 = vrot.lane.b32.xlu0 %v1115, 64
      %v1156 = vpop.permute.xlu0 %1155
      %1157 = vrot.lane.b32.xlu0 %v1116, 64
      %v1158 = vpop.permute.xlu0 %1157
      %1159 = vrot.lane.b32.xlu0 %v1117, 64
      %v1160 = vpop.permute.xlu0 %1159
      %1161 = vrot.lane.b32.xlu0 %v1118, 64
      %v1162 = vpop.permute.xlu0 %1161
      %1163 = vrot.lane.b32.xlu0 %v1119, 64
      %v1164 = vpop.permute.xlu0 %1163
      %1165 = vrot.lane.b32.xlu0 %v1120, 64
      %v1166 = vpop.permute.xlu0 %1165
      %1167 = vrot.lane.b32.xlu0 %v1121, 64
      %v1168 = vpop.permute.xlu0 %1167
      %1169 = vrot.lane.b32.xlu0 %v1122, 64
      %v1170 = vpop.permute.xlu0 %1169
      %1171 = vrot.lane.b32.xlu0 %v1123, 64
      %v1172 = vpop.permute.xlu0 %1171
      %1173 = vrot.lane.b32.xlu0 %v1124, 64
      %v1174 = vpop.permute.xlu0 %1173
      %1175 = vrot.lane.b32.xlu0 %v1125, 64
      %v1176 = vpop.permute.xlu0 %1175
      %1177 = vrot.lane.b32.xlu0 %v1126, 64
      %v1178 = vpop.permute.xlu0 %1177
      %1179 = vrot.lane.b32.xlu0 %v1127, 64
      %v1180 = vpop.permute.xlu0 %1179
      %1181 = vrot.lane.b32.xlu0 %v1128, 64
      %v1182 = vpop.permute.xlu0 %1181
      %1183 = vrot.lane.b32.xlu0 %v1129, 64
      %v1184 = vpop.permute.xlu0 %1183
      %1185 = vrot.lane.b32.xlu0 %v1130, 64
      %v1186 = vpop.permute.xlu0 %1185
      %1187 = vrot.lane.b32.xlu0 %v1131, 64
      %v1188 = vpop.permute.xlu0 %1187
      %1189 = vrot.lane.b32.xlu0 %v1132, 64
      %v1190 = vpop.permute.xlu0 %1189
      %1191 = vrot.lane.b32.xlu0 %v1133, 64
      %v1192 = vpop.permute.xlu0 %1191
      %1193 = vrot.lane.b32.xlu0 %v1134, 64
      %v1194 = vpop.permute.xlu0 %1193
      %1195 = vrot.lane.b32.xlu0 %v1135, 64
      %v1196 = vpop.permute.xlu0 %1195
      %1197 = vrot.lane.b32.xlu0 %v1136, 64
      %v1198 = vpop.permute.xlu0 %1197
      %1199 = vrot.lane.b32.xlu0 %v1137, 64
      %v1200 = vpop.permute.xlu0 %1199
      %1201 = vrot.lane.b32.xlu0 %v1138, 64
      %v1202 = vpop.permute.xlu0 %1201
      %1235 = vst.msk [vmem:[#allocation3 + $0x4] sm:$0xf] %vm786, %v1140
      %1236 = vst.msk [vmem:[#allocation3 + $0x18] sm:$0xf] %vm786, %v1142
      %1237 = vst.msk [vmem:[#allocation3 + $0x2c] sm:$0xf] %vm786, %v1144
      %1238 = vst.msk [vmem:[#allocation3 + $0x40] sm:$0xf] %vm786, %v1146
      %1239 = vst.msk [vmem:[#allocation3 + $0x54] sm:$0xf] %vm786, %v1148
      %1240 = vst.msk [vmem:[#allocation3 + $0x68] sm:$0xf] %vm786, %v1150
      %1241 = vst.msk [vmem:[#allocation3 + $0x7c] sm:$0xf] %vm786, %v1152
      %1242 = vst.msk [vmem:[#allocation3 + $0x90] sm:$0xf] %vm786, %v1154
      %1243 = vst.msk [vmem:[#allocation3 + $0xa4] sm:$0xf] %vm786, %v1156
      %1244 = vst.msk [vmem:[#allocation3 + $0xb8] sm:$0xf] %vm786, %v1158
      %1245 = vst.msk [vmem:[#allocation3 + $0xcc] sm:$0xf] %vm786, %v1160
      %1246 = vst.msk [vmem:[#allocation3 + $0xe0] sm:$0xf] %vm786, %v1162
      %1247 = vst.msk [vmem:[#allocation3 + $0xf4] sm:$0xf] %vm786, %v1164
      %1248 = vst.msk [vmem:[#allocation3 + $0x108] sm:$0xf] %vm786, %v1166
      %1249 = vst.msk [vmem:[#allocation3 + $0x11c] sm:$0xf] %vm786, %v1168
      %1250 = vst.msk [vmem:[#allocation3 + $0x130] sm:$0xf] %vm786, %v1170
      %1251 = vst.msk [vmem:[#allocation3 + $0x144] sm:$0xf] %vm786, %v1172
      %1252 = vst.msk [vmem:[#allocation3 + $0x158] sm:$0xf] %vm786, %v1174
      %1253 = vst.msk [vmem:[#allocation3 + $0x16c] sm:$0xf] %vm786, %v1176
      %1254 = vst.msk [vmem:[#allocation3 + $0x180] sm:$0xf] %vm786, %v1178
      %1255 = vst.msk [vmem:[#allocation3 + $0x194] sm:$0xf] %vm786, %v1180
      %1256 = vst.msk [vmem:[#allocation3 + $0x1a8] sm:$0xf] %vm786, %v1182
      %1257 = vst.msk [vmem:[#allocation3 + $0x1bc] sm:$0xf] %vm786, %v1184
      %1258 = vst.msk [vmem:[#allocation3 + $0x1d0] sm:$0xf] %vm786, %v1186
      %1259 = vst.msk [vmem:[#allocation3 + $0x1e4] sm:$0xf] %vm786, %v1188
      %1260 = vst.msk [vmem:[#allocation3 + $0x1f8] sm:$0xf] %vm786, %v1190
      %1261 = vst.msk [vmem:[#allocation3 + $0x20c] sm:$0xf] %vm786, %v1192
      %1262 = vst.msk [vmem:[#allocation3 + $0x220] sm:$0xf] %vm786, %v1194
      %1263 = vst.msk [vmem:[#allocation3 + $0x234] sm:$0xf] %vm786, %v1196
      %1264 = vst.msk [vmem:[#allocation3 + $0x248] sm:$0xf] %vm786, %v1198
      %1265 = vst.msk [vmem:[#allocation3 + $0x25c] sm:$0xf] %vm786, %v1200
      %1266 = vst.msk [vmem:[#allocation3 + $0x270] sm:$0xf] %vm786, %v1202
      %v1267 = vld [vmem:[%s336 + $0x1] sm:$0xff]
      %v1268 = vld [vmem:[%s336 + $0x9] sm:$0xff]
      %v1269 = vld [vmem:[%s336 + $0x19] sm:$0xff]
      %v1270 = vld [vmem:[%s336 + $0x21] sm:$0xff]
      %v1271 = vld [vmem:[%s336 + $0x31] sm:$0xff]
      %v1272 = vld [vmem:[%s336 + $0x39] sm:$0xff]
      %v1273 = vld [vmem:[%s336 + $0x49] sm:$0xff]
      %v1274 = vld [vmem:[%s336 + $0x51] sm:$0xff]
      %v1275 = vld [vmem:[%s336 + $0x61] sm:$0xff]
      %v1276 = vld [vmem:[%s336 + $0x69] sm:$0xff]
      %v1277 = vld [vmem:[%s336 + $0x79] sm:$0xff]
      %v1278 = vld [vmem:[%s336 + $0x81] sm:$0xff]
      %v1279 = vld [vmem:[%s336 + $0x91] sm:$0xff]
      %v1280 = vld [vmem:[%s336 + $0x99] sm:$0xff]
      %v1281 = vld [vmem:[%s336 + $0xa9] sm:$0xff]
      %v1282 = vld [vmem:[%s336 + $0xb1] sm:$0xff]
      %v1283 = vld [vmem:[%s336 + $0xc1] sm:$0xff]
      %v1284 = vld [vmem:[%s336 + $0xc9] sm:$0xff]
      %v1285 = vld [vmem:[%s336 + $0xd9] sm:$0xff]
      %v1286 = vld [vmem:[%s336 + $0xe1] sm:$0xff]
      %v1287 = vld [vmem:[%s336 + $0xf1] sm:$0xff]
      %v1288 = vld [vmem:[%s336 + $0xf9] sm:$0xff]
      %v1289 = vld [vmem:[%s336 + $0x109] sm:$0xff]
      %v1290 = vld [vmem:[%s336 + $0x111] sm:$0xff]
      %v1291 = vld [vmem:[%s336 + $0x121] sm:$0xff]
      %v1292 = vld [vmem:[%s336 + $0x129] sm:$0xff]
      %v1293 = vld [vmem:[%s336 + $0x139] sm:$0xff]
      %v1294 = vld [vmem:[%s336 + $0x141] sm:$0xff]
      %v1295 = vld [vmem:[%s336 + $0x151] sm:$0xff]
      %v1296 = vld [vmem:[%s336 + $0x159] sm:$0xff]
      %v1297 = vld [vmem:[%s336 + $0x169] sm:$0xff]
      %v1298 = vld [vmem:[%s336 + $0x171] sm:$0xff]
      %v1299 = vpack.c.bf16 %v1268, %v1267
      %v1300 = vpack.c.bf16 %v1270, %v1269
      %v1301 = vpack.c.bf16 %v1272, %v1271
      %v1302 = vpack.c.bf16 %v1274, %v1273
      %v1303 = vpack.c.bf16 %v1276, %v1275
      %v1304 = vpack.c.bf16 %v1278, %v1277
      %v1305 = vpack.c.bf16 %v1280, %v1279
      %v1306 = vpack.c.bf16 %v1282, %v1281
      %v1307 = vpack.c.bf16 %v1284, %v1283
      %v1308 = vpack.c.bf16 %v1286, %v1285
      %v1309 = vpack.c.bf16 %v1288, %v1287
      %v1310 = vpack.c.bf16 %v1290, %v1289
      %v1311 = vpack.c.bf16 %v1292, %v1291
      %v1312 = vpack.c.bf16 %v1294, %v1293
      %v1313 = vpack.c.bf16 %v1296, %v1295
      %v1314 = vpack.c.bf16 %v1298, %v1297
      %v1331 = vunpack.c.l.b16 %v1299
      %v1332 = vunpack.c.h.b16 %v1299
      %v1333 = vunpack.c.l.b16 %v1300
      %v1334 = vunpack.c.h.b16 %v1300
      %v1335 = vunpack.c.l.b16 %v1301
      %v1336 = vunpack.c.h.b16 %v1301
      %v1337 = vunpack.c.l.b16 %v1302
      %v1338 = vunpack.c.h.b16 %v1302
      %v1339 = vunpack.c.l.b16 %v1303
      %v1340 = vunpack.c.h.b16 %v1303
      %v1341 = vunpack.c.l.b16 %v1304
      %v1342 = vunpack.c.h.b16 %v1304
      %v1343 = vunpack.c.l.b16 %v1305
      %v1344 = vunpack.c.h.b16 %v1305
      %v1345 = vunpack.c.l.b16 %v1306
      %v1346 = vunpack.c.h.b16 %v1306
      %v1347 = vunpack.c.l.b16 %v1307
      %v1348 = vunpack.c.h.b16 %v1307
      %v1349 = vunpack.c.l.b16 %v1308
      %v1350 = vunpack.c.h.b16 %v1308
      %v1351 = vunpack.c.l.b16 %v1309
      %v1352 = vunpack.c.h.b16 %v1309
      %v1353 = vunpack.c.l.b16 %v1310
      %v1354 = vunpack.c.h.b16 %v1310
      %v1355 = vunpack.c.l.b16 %v1311
      %v1356 = vunpack.c.h.b16 %v1311
      %v1357 = vunpack.c.l.b16 %v1312
      %v1358 = vunpack.c.h.b16 %v1312
      %v1359 = vunpack.c.l.b16 %v1313
      %v1360 = vunpack.c.h.b16 %v1313
      %v1361 = vunpack.c.l.b16 %v1314
      %v1362 = vunpack.c.h.b16 %v1314
      %v1363 = vpack.c.b16 %v1331, %v1331
      %v1364 = vpack.c.b16 %v1332, %v1332
      %v1365 = vpack.c.b16 %v1333, %v1333
      %v1366 = vpack.c.b16 %v1334, %v1334
      %v1367 = vpack.c.b16 %v1335, %v1335
      %v1368 = vpack.c.b16 %v1336, %v1336
      %v1369 = vpack.c.b16 %v1337, %v1337
      %v1370 = vpack.c.b16 %v1338, %v1338
      %v1371 = vpack.c.b16 %v1339, %v1339
      %v1372 = vpack.c.b16 %v1340, %v1340
      %v1373 = vpack.c.b16 %v1341, %v1341
      %v1374 = vpack.c.b16 %v1342, %v1342
      %v1375 = vpack.c.b16 %v1343, %v1343
      %v1376 = vpack.c.b16 %v1344, %v1344
      %v1377 = vpack.c.b16 %v1345, %v1345
      %v1378 = vpack.c.b16 %v1346, %v1346
      %v1379 = vpack.c.b16 %v1347, %v1347
      %v1380 = vpack.c.b16 %v1348, %v1348
      %v1381 = vpack.c.b16 %v1349, %v1349
      %v1382 = vpack.c.b16 %v1350, %v1350
      %v1383 = vpack.c.b16 %v1351, %v1351
      %v1384 = vpack.c.b16 %v1352, %v1352
      %v1385 = vpack.c.b16 %v1353, %v1353
      %v1386 = vpack.c.b16 %v1354, %v1354
      %v1387 = vpack.c.b16 %v1355, %v1355
      %v1388 = vpack.c.b16 %v1356, %v1356
      %v1389 = vpack.c.b16 %v1357, %v1357
      %v1390 = vpack.c.b16 %v1358, %v1358
      %v1391 = vpack.c.b16 %v1359, %v1359
      %v1392 = vpack.c.b16 %v1360, %v1360
      %v1393 = vpack.c.b16 %v1361, %v1361
      %v1394 = vpack.c.b16 %v1362, %v1362
      %1427 = vst.msk [vmem:[#allocation3 + $0x8] sm:$0xf] %vm529, %v1363
      %1428 = vst.msk [vmem:[#allocation3 + $0x1c] sm:$0xf] %vm529, %v1364
      %1429 = vst.msk [vmem:[#allocation3 + $0x30] sm:$0xf] %vm529, %v1365
      %1430 = vst.msk [vmem:[#allocation3 + $0x44] sm:$0xf] %vm529, %v1366
      %1431 = vst.msk [vmem:[#allocation3 + $0x58] sm:$0xf] %vm529, %v1367
      %1432 = vst.msk [vmem:[#allocation3 + $0x6c] sm:$0xf] %vm529, %v1368
      %1433 = vst.msk [vmem:[#allocation3 + $0x80] sm:$0xf] %vm529, %v1369
      %1434 = vst.msk [vmem:[#allocation3 + $0x94] sm:$0xf] %vm529, %v1370
      %1435 = vst.msk [vmem:[#allocation3 + $0xa8] sm:$0xf] %vm529, %v1371
      %1436 = vst.msk [vmem:[#allocation3 + $0xbc] sm:$0xf] %vm529, %v1372
      %1437 = vst.msk [vmem:[#allocation3 + $0xd0] sm:$0xf] %vm529, %v1373
      %1438 = vst.msk [vmem:[#allocation3 + $0xe4] sm:$0xf] %vm529, %v1374
      %1439 = vst.msk [vmem:[#allocation3 + $0xf8] sm:$0xf] %vm529, %v1375
      %1440 = vst.msk [vmem:[#allocation3 + $0x10c] sm:$0xf] %vm529, %v1376
      %1441 = vst.msk [vmem:[#allocation3 + $0x120] sm:$0xf] %vm529, %v1377
      %1442 = vst.msk [vmem:[#allocation3 + $0x134] sm:$0xf] %vm529, %v1378
      %1443 = vst.msk [vmem:[#allocation3 + $0x148] sm:$0xf] %vm529, %v1379
      %1444 = vst.msk [vmem:[#allocation3 + $0x15c] sm:$0xf] %vm529, %v1380
      %1445 = vst.msk [vmem:[#allocation3 + $0x170] sm:$0xf] %vm529, %v1381
      %1446 = vst.msk [vmem:[#allocation3 + $0x184] sm:$0xf] %vm529, %v1382
      %1447 = vst.msk [vmem:[#allocation3 + $0x198] sm:$0xf] %vm529, %v1383
      %1448 = vst.msk [vmem:[#allocation3 + $0x1ac] sm:$0xf] %vm529, %v1384
      %1449 = vst.msk [vmem:[#allocation3 + $0x1c0] sm:$0xf] %vm529, %v1385
      %1450 = vst.msk [vmem:[#allocation3 + $0x1d4] sm:$0xf] %vm529, %v1386
      %1451 = vst.msk [vmem:[#allocation3 + $0x1e8] sm:$0xf] %vm529, %v1387
      %1452 = vst.msk [vmem:[#allocation3 + $0x1fc] sm:$0xf] %vm529, %v1388
      %1453 = vst.msk [vmem:[#allocation3 + $0x210] sm:$0xf] %vm529, %v1389
      %1454 = vst.msk [vmem:[#allocation3 + $0x224] sm:$0xf] %vm529, %v1390
      %1455 = vst.msk [vmem:[#allocation3 + $0x238] sm:$0xf] %vm529, %v1391
      %1456 = vst.msk [vmem:[#allocation3 + $0x24c] sm:$0xf] %vm529, %v1392
      %1457 = vst.msk [vmem:[#allocation3 + $0x260] sm:$0xf] %vm529, %v1393
      %1458 = vst.msk [vmem:[#allocation3 + $0x274] sm:$0xf] %vm529, %v1394
      %v1459 = vld [vmem:[%s336 + $0x2] sm:$0xff]
      %v1460 = vld [vmem:[%s336 + $0xa] sm:$0xff]
      %v1461 = vld [vmem:[%s336 + $0x1a] sm:$0xff]
      %v1462 = vld [vmem:[%s336 + $0x22] sm:$0xff]
      %v1463 = vld [vmem:[%s336 + $0x32] sm:$0xff]
      %v1464 = vld [vmem:[%s336 + $0x3a] sm:$0xff]
      %v1465 = vld [vmem:[%s336 + $0x4a] sm:$0xff]
      %v1466 = vld [vmem:[%s336 + $0x52] sm:$0xff]
      %v1467 = vld [vmem:[%s336 + $0x62] sm:$0xff]
      %v1468 = vld [vmem:[%s336 + $0x6a] sm:$0xff]
      %v1469 = vld [vmem:[%s336 + $0x7a] sm:$0xff]
      %v1470 = vld [vmem:[%s336 + $0x82] sm:$0xff]
      %v1471 = vld [vmem:[%s336 + $0x92] sm:$0xff]
      %v1472 = vld [vmem:[%s336 + $0x9a] sm:$0xff]
      %v1473 = vld [vmem:[%s336 + $0xaa] sm:$0xff]
      %v1474 = vld [vmem:[%s336 + $0xb2] sm:$0xff]
      %v1475 = vld [vmem:[%s336 + $0xc2] sm:$0xff]
      %v1476 = vld [vmem:[%s336 + $0xca] sm:$0xff]
      %v1477 = vld [vmem:[%s336 + $0xda] sm:$0xff]
      %v1478 = vld [vmem:[%s336 + $0xe2] sm:$0xff]
      %v1479 = vld [vmem:[%s336 + $0xf2] sm:$0xff]
      %v1480 = vld [vmem:[%s336 + $0xfa] sm:$0xff]
      %v1481 = vld [vmem:[%s336 + $0x10a] sm:$0xff]
      %v1482 = vld [vmem:[%s336 + $0x112] sm:$0xff]
      %v1483 = vld [vmem:[%s336 + $0x122] sm:$0xff]
      %v1484 = vld [vmem:[%s336 + $0x12a] sm:$0xff]
      %v1485 = vld [vmem:[%s336 + $0x13a] sm:$0xff]
      %v1486 = vld [vmem:[%s336 + $0x142] sm:$0xff]
      %v1487 = vld [vmem:[%s336 + $0x152] sm:$0xff]
      %v1488 = vld [vmem:[%s336 + $0x15a] sm:$0xff]
      %v1489 = vld [vmem:[%s336 + $0x16a] sm:$0xff]
      %v1490 = vld [vmem:[%s336 + $0x172] sm:$0xff]
      %v1491 = vpack.c.bf16 %v1460, %v1459
      %v1492 = vpack.c.bf16 %v1462, %v1461
      %v1493 = vpack.c.bf16 %v1464, %v1463
      %v1494 = vpack.c.bf16 %v1466, %v1465
      %v1495 = vpack.c.bf16 %v1468, %v1467
      %v1496 = vpack.c.bf16 %v1470, %v1469
      %v1497 = vpack.c.bf16 %v1472, %v1471
      %v1498 = vpack.c.bf16 %v1474, %v1473
      %v1499 = vpack.c.bf16 %v1476, %v1475
      %v1500 = vpack.c.bf16 %v1478, %v1477
      %v1501 = vpack.c.bf16 %v1480, %v1479
      %v1502 = vpack.c.bf16 %v1482, %v1481
      %v1503 = vpack.c.bf16 %v1484, %v1483
      %v1504 = vpack.c.bf16 %v1486, %v1485
      %v1505 = vpack.c.bf16 %v1488, %v1487
      %v1506 = vpack.c.bf16 %v1490, %v1489
      %v1523 = vunpack.c.l.b16 %v1491
      %v1524 = vunpack.c.h.b16 %v1491
      %v1525 = vunpack.c.l.b16 %v1492
      %v1526 = vunpack.c.h.b16 %v1492
      %v1527 = vunpack.c.l.b16 %v1493
      %v1528 = vunpack.c.h.b16 %v1493
      %v1529 = vunpack.c.l.b16 %v1494
      %v1530 = vunpack.c.h.b16 %v1494
      %v1531 = vunpack.c.l.b16 %v1495
      %v1532 = vunpack.c.h.b16 %v1495
      %v1533 = vunpack.c.l.b16 %v1496
      %v1534 = vunpack.c.h.b16 %v1496
      %v1535 = vunpack.c.l.b16 %v1497
      %v1536 = vunpack.c.h.b16 %v1497
      %v1537 = vunpack.c.l.b16 %v1498
      %v1538 = vunpack.c.h.b16 %v1498
      %v1539 = vunpack.c.l.b16 %v1499
      %v1540 = vunpack.c.h.b16 %v1499
      %v1541 = vunpack.c.l.b16 %v1500
      %v1542 = vunpack.c.h.b16 %v1500
      %v1543 = vunpack.c.l.b16 %v1501
      %v1544 = vunpack.c.h.b16 %v1501
      %v1545 = vunpack.c.l.b16 %v1502
      %v1546 = vunpack.c.h.b16 %v1502
      %v1547 = vunpack.c.l.b16 %v1503
      %v1548 = vunpack.c.h.b16 %v1503
      %v1549 = vunpack.c.l.b16 %v1504
      %v1550 = vunpack.c.h.b16 %v1504
      %v1551 = vunpack.c.l.b16 %v1505
      %v1552 = vunpack.c.h.b16 %v1505
      %v1553 = vunpack.c.l.b16 %v1506
      %v1554 = vunpack.c.h.b16 %v1506
      %v1555 = vpack.c.b16 %v1523, %v1523
      %v1556 = vpack.c.b16 %v1524, %v1524
      %v1557 = vpack.c.b16 %v1525, %v1525
      %v1558 = vpack.c.b16 %v1526, %v1526
      %v1559 = vpack.c.b16 %v1527, %v1527
      %v1560 = vpack.c.b16 %v1528, %v1528
      %v1561 = vpack.c.b16 %v1529, %v1529
      %v1562 = vpack.c.b16 %v1530, %v1530
      %v1563 = vpack.c.b16 %v1531, %v1531
      %v1564 = vpack.c.b16 %v1532, %v1532
      %v1565 = vpack.c.b16 %v1533, %v1533
      %v1566 = vpack.c.b16 %v1534, %v1534
      %v1567 = vpack.c.b16 %v1535, %v1535
      %v1568 = vpack.c.b16 %v1536, %v1536
      %v1569 = vpack.c.b16 %v1537, %v1537
      %v1570 = vpack.c.b16 %v1538, %v1538
      %v1571 = vpack.c.b16 %v1539, %v1539
      %v1572 = vpack.c.b16 %v1540, %v1540
      %v1573 = vpack.c.b16 %v1541, %v1541
      %v1574 = vpack.c.b16 %v1542, %v1542
      %v1575 = vpack.c.b16 %v1543, %v1543
      %v1576 = vpack.c.b16 %v1544, %v1544
      %v1577 = vpack.c.b16 %v1545, %v1545
      %v1578 = vpack.c.b16 %v1546, %v1546
      %v1579 = vpack.c.b16 %v1547, %v1547
      %v1580 = vpack.c.b16 %v1548, %v1548
      %v1581 = vpack.c.b16 %v1549, %v1549
      %v1582 = vpack.c.b16 %v1550, %v1550
      %v1583 = vpack.c.b16 %v1551, %v1551
      %v1584 = vpack.c.b16 %v1552, %v1552
      %v1585 = vpack.c.b16 %v1553, %v1553
      %v1586 = vpack.c.b16 %v1554, %v1554
      %1587 = vrot.lane.b32.xlu0 %v1555, 64
      %v1588 = vpop.permute.xlu0 %1587
      %1589 = vrot.lane.b32.xlu0 %v1556, 64
      %v1590 = vpop.permute.xlu0 %1589
      %1591 = vrot.lane.b32.xlu0 %v1557, 64
      %v1592 = vpop.permute.xlu0 %1591
      %1593 = vrot.lane.b32.xlu0 %v1558, 64
      %v1594 = vpop.permute.xlu0 %1593
      %1595 = vrot.lane.b32.xlu0 %v1559, 64
      %v1596 = vpop.permute.xlu0 %1595
      %1597 = vrot.lane.b32.xlu0 %v1560, 64
      %v1598 = vpop.permute.xlu0 %1597
      %1599 = vrot.lane.b32.xlu0 %v1561, 64
      %v1600 = vpop.permute.xlu0 %1599
      %1601 = vrot.lane.b32.xlu0 %v1562, 64
      %v1602 = vpop.permute.xlu0 %1601
      %1603 = vrot.lane.b32.xlu0 %v1563, 64
      %v1604 = vpop.permute.xlu0 %1603
      %1605 = vrot.lane.b32.xlu0 %v1564, 64
      %v1606 = vpop.permute.xlu0 %1605
      %1607 = vrot.lane.b32.xlu0 %v1565, 64
      %v1608 = vpop.permute.xlu0 %1607
      %1609 = vrot.lane.b32.xlu0 %v1566, 64
      %v1610 = vpop.permute.xlu0 %1609
      %1611 = vrot.lane.b32.xlu0 %v1567, 64
      %v1612 = vpop.permute.xlu0 %1611
      %1613 = vrot.lane.b32.xlu0 %v1568, 64
      %v1614 = vpop.permute.xlu0 %1613
      %1615 = vrot.lane.b32.xlu0 %v1569, 64
      %v1616 = vpop.permute.xlu0 %1615
      %1617 = vrot.lane.b32.xlu0 %v1570, 64
      %v1618 = vpop.permute.xlu0 %1617
      %1619 = vrot.lane.b32.xlu0 %v1571, 64
      %v1620 = vpop.permute.xlu0 %1619
      %1621 = vrot.lane.b32.xlu0 %v1572, 64
      %v1622 = vpop.permute.xlu0 %1621
      %1623 = vrot.lane.b32.xlu0 %v1573, 64
      %v1624 = vpop.permute.xlu0 %1623
      %1625 = vrot.lane.b32.xlu0 %v1574, 64
      %v1626 = vpop.permute.xlu0 %1625
      %1627 = vrot.lane.b32.xlu0 %v1575, 64
      %v1628 = vpop.permute.xlu0 %1627
      %1629 = vrot.lane.b32.xlu0 %v1576, 64
      %v1630 = vpop.permute.xlu0 %1629
      %1631 = vrot.lane.b32.xlu0 %v1577, 64
      %v1632 = vpop.permute.xlu0 %1631
      %1633 = vrot.lane.b32.xlu0 %v1578, 64
      %v1634 = vpop.permute.xlu0 %1633
      %1635 = vrot.lane.b32.xlu0 %v1579, 64
      %v1636 = vpop.permute.xlu0 %1635
      %1637 = vrot.lane.b32.xlu0 %v1580, 64
      %v1638 = vpop.permute.xlu0 %1637
      %1639 = vrot.lane.b32.xlu0 %v1581, 64
      %v1640 = vpop.permute.xlu0 %1639
      %1641 = vrot.lane.b32.xlu0 %v1582, 64
      %v1642 = vpop.permute.xlu0 %1641
      %1643 = vrot.lane.b32.xlu0 %v1583, 64
      %v1644 = vpop.permute.xlu0 %1643
      %1645 = vrot.lane.b32.xlu0 %v1584, 64
      %v1646 = vpop.permute.xlu0 %1645
      %1647 = vrot.lane.b32.xlu0 %v1585, 64
      %v1648 = vpop.permute.xlu0 %1647
      %1649 = vrot.lane.b32.xlu0 %v1586, 64
      %v1650 = vpop.permute.xlu0 %1649
      %1683 = vst.msk [vmem:[#allocation3 + $0x8] sm:$0xf] %vm786, %v1588
      %1684 = vst.msk [vmem:[#allocation3 + $0x1c] sm:$0xf] %vm786, %v1590
      %1685 = vst.msk [vmem:[#allocation3 + $0x30] sm:$0xf] %vm786, %v1592
      %1686 = vst.msk [vmem:[#allocation3 + $0x44] sm:$0xf] %vm786, %v1594
      %1687 = vst.msk [vmem:[#allocation3 + $0x58] sm:$0xf] %vm786, %v1596
      %1688 = vst.msk [vmem:[#allocation3 + $0x6c] sm:$0xf] %vm786, %v1598
      %1689 = vst.msk [vmem:[#allocation3 + $0x80] sm:$0xf] %vm786, %v1600
      %1690 = vst.msk [vmem:[#allocation3 + $0x94] sm:$0xf] %vm786, %v1602
      %1691 = vst.msk [vmem:[#allocation3 + $0xa8] sm:$0xf] %vm786, %v1604
      %1692 = vst.msk [vmem:[#allocation3 + $0xbc] sm:$0xf] %vm786, %v1606
      %1693 = vst.msk [vmem:[#allocation3 + $0xd0] sm:$0xf] %vm786, %v1608
      %1694 = vst.msk [vmem:[#allocation3 + $0xe4] sm:$0xf] %vm786, %v1610
      %1695 = vst.msk [vmem:[#allocation3 + $0xf8] sm:$0xf] %vm786, %v1612
      %1696 = vst.msk [vmem:[#allocation3 + $0x10c] sm:$0xf] %vm786, %v1614
      %1697 = vst.msk [vmem:[#allocation3 + $0x120] sm:$0xf] %vm786, %v1616
      %1698 = vst.msk [vmem:[#allocation3 + $0x134] sm:$0xf] %vm786, %v1618
      %1699 = vst.msk [vmem:[#allocation3 + $0x148] sm:$0xf] %vm786, %v1620
      %1700 = vst.msk [vmem:[#allocation3 + $0x15c] sm:$0xf] %vm786, %v1622
      %1701 = vst.msk [vmem:[#allocation3 + $0x170] sm:$0xf] %vm786, %v1624
      %1702 = vst.msk [vmem:[#allocation3 + $0x184] sm:$0xf] %vm786, %v1626
      %1703 = vst.msk [vmem:[#allocation3 + $0x198] sm:$0xf] %vm786, %v1628
      %1704 = vst.msk [vmem:[#allocation3 + $0x1ac] sm:$0xf] %vm786, %v1630
      %1705 = vst.msk [vmem:[#allocation3 + $0x1c0] sm:$0xf] %vm786, %v1632
      %1706 = vst.msk [vmem:[#allocation3 + $0x1d4] sm:$0xf] %vm786, %v1634
      %1707 = vst.msk [vmem:[#allocation3 + $0x1e8] sm:$0xf] %vm786, %v1636
      %1708 = vst.msk [vmem:[#allocation3 + $0x1fc] sm:$0xf] %vm786, %v1638
      %1709 = vst.msk [vmem:[#allocation3 + $0x210] sm:$0xf] %vm786, %v1640
      %1710 = vst.msk [vmem:[#allocation3 + $0x224] sm:$0xf] %vm786, %v1642
      %1711 = vst.msk [vmem:[#allocation3 + $0x238] sm:$0xf] %vm786, %v1644
      %1712 = vst.msk [vmem:[#allocation3 + $0x24c] sm:$0xf] %vm786, %v1646
      %1713 = vst.msk [vmem:[#allocation3 + $0x260] sm:$0xf] %vm786, %v1648
      %1714 = vst.msk [vmem:[#allocation3 + $0x274] sm:$0xf] %vm786, %v1650
      %s1715 = scalar_lea.vmem [#allocation2], 48
      %v1716 = vld [vmem:[%s1715] sm:$0xff]
      %v1717 = vld [vmem:[%s1715 + $0x8] sm:$0xff]
      %v1718 = vld [vmem:[%s1715 + $0x18] sm:$0xff]
      %v1719 = vld [vmem:[%s1715 + $0x20] sm:$0xff]
      %v1720 = vld [vmem:[%s1715 + $0x30] sm:$0xff]
      %v1721 = vld [vmem:[%s1715 + $0x38] sm:$0xff]
      %v1722 = vld [vmem:[%s1715 + $0x48] sm:$0xff]
      %v1723 = vld [vmem:[%s1715 + $0x50] sm:$0xff]
      %v1724 = vld [vmem:[%s1715 + $0x60] sm:$0xff]
      %v1725 = vld [vmem:[%s1715 + $0x68] sm:$0xff]
      %v1726 = vld [vmem:[%s1715 + $0x78] sm:$0xff]
      %v1727 = vld [vmem:[%s1715 + $0x80] sm:$0xff]
      %v1728 = vld [vmem:[%s1715 + $0x90] sm:$0xff]
      %v1729 = vld [vmem:[%s1715 + $0x98] sm:$0xff]
      %v1730 = vld [vmem:[%s1715 + $0xa8] sm:$0xff]
      %v1731 = vld [vmem:[%s1715 + $0xb0] sm:$0xff]
      %v1732 = vld [vmem:[%s1715 + $0xc0] sm:$0xff]
      %v1733 = vld [vmem:[%s1715 + $0xc8] sm:$0xff]
      %v1734 = vld [vmem:[%s1715 + $0xd8] sm:$0xff]
      %v1735 = vld [vmem:[%s1715 + $0xe0] sm:$0xff]
      %v1736 = vld [vmem:[%s1715 + $0xf0] sm:$0xff]
      %v1737 = vld [vmem:[%s1715 + $0xf8] sm:$0xff]
      %v1738 = vld [vmem:[%s1715 + $0x108] sm:$0xff]
      %v1739 = vld [vmem:[%s1715 + $0x110] sm:$0xff]
      %v1740 = vld [vmem:[%s1715 + $0x120] sm:$0xff]
      %v1741 = vld [vmem:[%s1715 + $0x128] sm:$0xff]
      %v1742 = vld [vmem:[%s1715 + $0x138] sm:$0xff]
      %v1743 = vld [vmem:[%s1715 + $0x140] sm:$0xff]
      %v1744 = vld [vmem:[%s1715 + $0x150] sm:$0xff]
      %v1745 = vld [vmem:[%s1715 + $0x158] sm:$0xff]
      %v1746 = vld [vmem:[%s1715 + $0x168] sm:$0xff]
      %v1747 = vld [vmem:[%s1715 + $0x170] sm:$0xff]
      %v1748 = vpack.c.bf16 %v1717, %v1716
      %v1749 = vpack.c.bf16 %v1719, %v1718
      %v1750 = vpack.c.bf16 %v1721, %v1720
      %v1751 = vpack.c.bf16 %v1723, %v1722
      %v1752 = vpack.c.bf16 %v1725, %v1724
      %v1753 = vpack.c.bf16 %v1727, %v1726
      %v1754 = vpack.c.bf16 %v1729, %v1728
      %v1755 = vpack.c.bf16 %v1731, %v1730
      %v1756 = vpack.c.bf16 %v1733, %v1732
      %v1757 = vpack.c.bf16 %v1735, %v1734
      %v1758 = vpack.c.bf16 %v1737, %v1736
      %v1759 = vpack.c.bf16 %v1739, %v1738
      %v1760 = vpack.c.bf16 %v1741, %v1740
      %v1761 = vpack.c.bf16 %v1743, %v1742
      %v1762 = vpack.c.bf16 %v1745, %v1744
      %v1763 = vpack.c.bf16 %v1747, %v1746
      %v1780 = vunpack.c.l.b16 %v1748
      %v1781 = vunpack.c.h.b16 %v1748
      %v1782 = vunpack.c.l.b16 %v1749
      %v1783 = vunpack.c.h.b16 %v1749
      %v1784 = vunpack.c.l.b16 %v1750
      %v1785 = vunpack.c.h.b16 %v1750
      %v1786 = vunpack.c.l.b16 %v1751
      %v1787 = vunpack.c.h.b16 %v1751
      %v1788 = vunpack.c.l.b16 %v1752
      %v1789 = vunpack.c.h.b16 %v1752
      %v1790 = vunpack.c.l.b16 %v1753
      %v1791 = vunpack.c.h.b16 %v1753
      %v1792 = vunpack.c.l.b16 %v1754
      %v1793 = vunpack.c.h.b16 %v1754
      %v1794 = vunpack.c.l.b16 %v1755
      %v1795 = vunpack.c.h.b16 %v1755
      %v1796 = vunpack.c.l.b16 %v1756
      %v1797 = vunpack.c.h.b16 %v1756
      %v1798 = vunpack.c.l.b16 %v1757
      %v1799 = vunpack.c.h.b16 %v1757
      %v1800 = vunpack.c.l.b16 %v1758
      %v1801 = vunpack.c.h.b16 %v1758
      %v1802 = vunpack.c.l.b16 %v1759
      %v1803 = vunpack.c.h.b16 %v1759
      %v1804 = vunpack.c.l.b16 %v1760
      %v1805 = vunpack.c.h.b16 %v1760
      %v1806 = vunpack.c.l.b16 %v1761
      %v1807 = vunpack.c.h.b16 %v1761
      %v1808 = vunpack.c.l.b16 %v1762
      %v1809 = vunpack.c.h.b16 %v1762
      %v1810 = vunpack.c.l.b16 %v1763
      %v1811 = vunpack.c.h.b16 %v1763
      %v1812 = vpack.c.b16 %v1780, %v1780
      %v1813 = vpack.c.b16 %v1781, %v1781
      %v1814 = vpack.c.b16 %v1782, %v1782
      %v1815 = vpack.c.b16 %v1783, %v1783
      %v1816 = vpack.c.b16 %v1784, %v1784
      %v1817 = vpack.c.b16 %v1785, %v1785
      %v1818 = vpack.c.b16 %v1786, %v1786
      %v1819 = vpack.c.b16 %v1787, %v1787
      %v1820 = vpack.c.b16 %v1788, %v1788
      %v1821 = vpack.c.b16 %v1789, %v1789
      %v1822 = vpack.c.b16 %v1790, %v1790
      %v1823 = vpack.c.b16 %v1791, %v1791
      %v1824 = vpack.c.b16 %v1792, %v1792
      %v1825 = vpack.c.b16 %v1793, %v1793
      %v1826 = vpack.c.b16 %v1794, %v1794
      %v1827 = vpack.c.b16 %v1795, %v1795
      %v1828 = vpack.c.b16 %v1796, %v1796
      %v1829 = vpack.c.b16 %v1797, %v1797
      %v1830 = vpack.c.b16 %v1798, %v1798
      %v1831 = vpack.c.b16 %v1799, %v1799
      %v1832 = vpack.c.b16 %v1800, %v1800
      %v1833 = vpack.c.b16 %v1801, %v1801
      %v1834 = vpack.c.b16 %v1802, %v1802
      %v1835 = vpack.c.b16 %v1803, %v1803
      %v1836 = vpack.c.b16 %v1804, %v1804
      %v1837 = vpack.c.b16 %v1805, %v1805
      %v1838 = vpack.c.b16 %v1806, %v1806
      %v1839 = vpack.c.b16 %v1807, %v1807
      %v1840 = vpack.c.b16 %v1808, %v1808
      %v1841 = vpack.c.b16 %v1809, %v1809
      %v1842 = vpack.c.b16 %v1810, %v1810
      %v1843 = vpack.c.b16 %v1811, %v1811
      %1876 = vst.msk [vmem:[#allocation3 + $0xc] sm:$0xf] %vm529, %v1812
      %1877 = vst.msk [vmem:[#allocation3 + $0x20] sm:$0xf] %vm529, %v1813
      %1878 = vst.msk [vmem:[#allocation3 + $0x34] sm:$0xf] %vm529, %v1814
      %1879 = vst.msk [vmem:[#allocation3 + $0x48] sm:$0xf] %vm529, %v1815
      %1880 = vst.msk [vmem:[#allocation3 + $0x5c] sm:$0xf] %vm529, %v1816
      %1881 = vst.msk [vmem:[#allocation3 + $0x70] sm:$0xf] %vm529, %v1817
      %1882 = vst.msk [vmem:[#allocation3 + $0x84] sm:$0xf] %vm529, %v1818
      %1883 = vst.msk [vmem:[#allocation3 + $0x98] sm:$0xf] %vm529, %v1819
      %1884 = vst.msk [vmem:[#allocation3 + $0xac] sm:$0xf] %vm529, %v1820
      %1885 = vst.msk [vmem:[#allocation3 + $0xc0] sm:$0xf] %vm529, %v1821
      %1886 = vst.msk [vmem:[#allocation3 + $0xd4] sm:$0xf] %vm529, %v1822
      %1887 = vst.msk [vmem:[#allocation3 + $0xe8] sm:$0xf] %vm529, %v1823
      %1888 = vst.msk [vmem:[#allocation3 + $0xfc] sm:$0xf] %vm529, %v1824
      %1889 = vst.msk [vmem:[#allocation3 + $0x110] sm:$0xf] %vm529, %v1825
      %1890 = vst.msk [vmem:[#allocation3 + $0x124] sm:$0xf] %vm529, %v1826
      %1891 = vst.msk [vmem:[#allocation3 + $0x138] sm:$0xf] %vm529, %v1827
      %1892 = vst.msk [vmem:[#allocation3 + $0x14c] sm:$0xf] %vm529, %v1828
      %1893 = vst.msk [vmem:[#allocation3 + $0x160] sm:$0xf] %vm529, %v1829
      %1894 = vst.msk [vmem:[#allocation3 + $0x174] sm:$0xf] %vm529, %v1830
      %1895 = vst.msk [vmem:[#allocation3 + $0x188] sm:$0xf] %vm529, %v1831
      %1896 = vst.msk [vmem:[#allocation3 + $0x19c] sm:$0xf] %vm529, %v1832
      %1897 = vst.msk [vmem:[#allocation3 + $0x1b0] sm:$0xf] %vm529, %v1833
      %1898 = vst.msk [vmem:[#allocation3 + $0x1c4] sm:$0xf] %vm529, %v1834
      %1899 = vst.msk [vmem:[#allocation3 + $0x1d8] sm:$0xf] %vm529, %v1835
      %1900 = vst.msk [vmem:[#allocation3 + $0x1ec] sm:$0xf] %vm529, %v1836
      %1901 = vst.msk [vmem:[#allocation3 + $0x200] sm:$0xf] %vm529, %v1837
      %1902 = vst.msk [vmem:[#allocation3 + $0x214] sm:$0xf] %vm529, %v1838
      %1903 = vst.msk [vmem:[#allocation3 + $0x228] sm:$0xf] %vm529, %v1839
      %1904 = vst.msk [vmem:[#allocation3 + $0x23c] sm:$0xf] %vm529, %v1840
      %1905 = vst.msk [vmem:[#allocation3 + $0x250] sm:$0xf] %vm529, %v1841
      %1906 = vst.msk [vmem:[#allocation3 + $0x264] sm:$0xf] %vm529, %v1842
      %1907 = vst.msk [vmem:[#allocation3 + $0x278] sm:$0xf] %vm529, %v1843
      %v1908 = vld [vmem:[%s1715 + $0x1] sm:$0xff]
      %v1909 = vld [vmem:[%s1715 + $0x9] sm:$0xff]
      %v1910 = vld [vmem:[%s1715 + $0x19] sm:$0xff]
      %v1911 = vld [vmem:[%s1715 + $0x21] sm:$0xff]
      %v1912 = vld [vmem:[%s1715 + $0x31] sm:$0xff]
      %v1913 = vld [vmem:[%s1715 + $0x39] sm:$0xff]
      %v1914 = vld [vmem:[%s1715 + $0x49] sm:$0xff]
      %v1915 = vld [vmem:[%s1715 + $0x51] sm:$0xff]
      %v1916 = vld [vmem:[%s1715 + $0x61] sm:$0xff]
      %v1917 = vld [vmem:[%s1715 + $0x69] sm:$0xff]
      %v1918 = vld [vmem:[%s1715 + $0x79] sm:$0xff]
      %v1919 = vld [vmem:[%s1715 + $0x81] sm:$0xff]
      %v1920 = vld [vmem:[%s1715 + $0x91] sm:$0xff]
      %v1921 = vld [vmem:[%s1715 + $0x99] sm:$0xff]
      %v1922 = vld [vmem:[%s1715 + $0xa9] sm:$0xff]
      %v1923 = vld [vmem:[%s1715 + $0xb1] sm:$0xff]
      %v1924 = vld [vmem:[%s1715 + $0xc1] sm:$0xff]
      %v1925 = vld [vmem:[%s1715 + $0xc9] sm:$0xff]
      %v1926 = vld [vmem:[%s1715 + $0xd9] sm:$0xff]
      %v1927 = vld [vmem:[%s1715 + $0xe1] sm:$0xff]
      %v1928 = vld [vmem:[%s1715 + $0xf1] sm:$0xff]
      %v1929 = vld [vmem:[%s1715 + $0xf9] sm:$0xff]
      %v1930 = vld [vmem:[%s1715 + $0x109] sm:$0xff]
      %v1931 = vld [vmem:[%s1715 + $0x111] sm:$0xff]
      %v1932 = vld [vmem:[%s1715 + $0x121] sm:$0xff]
      %v1933 = vld [vmem:[%s1715 + $0x129] sm:$0xff]
      %v1934 = vld [vmem:[%s1715 + $0x139] sm:$0xff]
      %v1935 = vld [vmem:[%s1715 + $0x141] sm:$0xff]
      %v1936 = vld [vmem:[%s1715 + $0x151] sm:$0xff]
      %v1937 = vld [vmem:[%s1715 + $0x159] sm:$0xff]
      %v1938 = vld [vmem:[%s1715 + $0x169] sm:$0xff]
      %v1939 = vld [vmem:[%s1715 + $0x171] sm:$0xff]
      %v1940 = vpack.c.bf16 %v1909, %v1908
      %v1941 = vpack.c.bf16 %v1911, %v1910
      %v1942 = vpack.c.bf16 %v1913, %v1912
      %v1943 = vpack.c.bf16 %v1915, %v1914
      %v1944 = vpack.c.bf16 %v1917, %v1916
      %v1945 = vpack.c.bf16 %v1919, %v1918
      %v1946 = vpack.c.bf16 %v1921, %v1920
      %v1947 = vpack.c.bf16 %v1923, %v1922
      %v1948 = vpack.c.bf16 %v1925, %v1924
      %v1949 = vpack.c.bf16 %v1927, %v1926
      %v1950 = vpack.c.bf16 %v1929, %v1928
      %v1951 = vpack.c.bf16 %v1931, %v1930
      %v1952 = vpack.c.bf16 %v1933, %v1932
      %v1953 = vpack.c.bf16 %v1935, %v1934
      %v1954 = vpack.c.bf16 %v1937, %v1936
      %v1955 = vpack.c.bf16 %v1939, %v1938
      %v1972 = vunpack.c.l.b16 %v1940
      %v1973 = vunpack.c.h.b16 %v1940
      %v1974 = vunpack.c.l.b16 %v1941
      %v1975 = vunpack.c.h.b16 %v1941
      %v1976 = vunpack.c.l.b16 %v1942
      %v1977 = vunpack.c.h.b16 %v1942
      %v1978 = vunpack.c.l.b16 %v1943
      %v1979 = vunpack.c.h.b16 %v1943
      %v1980 = vunpack.c.l.b16 %v1944
      %v1981 = vunpack.c.h.b16 %v1944
      %v1982 = vunpack.c.l.b16 %v1945
      %v1983 = vunpack.c.h.b16 %v1945
      %v1984 = vunpack.c.l.b16 %v1946
      %v1985 = vunpack.c.h.b16 %v1946
      %v1986 = vunpack.c.l.b16 %v1947
      %v1987 = vunpack.c.h.b16 %v1947
      %v1988 = vunpack.c.l.b16 %v1948
      %v1989 = vunpack.c.h.b16 %v1948
      %v1990 = vunpack.c.l.b16 %v1949
      %v1991 = vunpack.c.h.b16 %v1949
      %v1992 = vunpack.c.l.b16 %v1950
      %v1993 = vunpack.c.h.b16 %v1950
      %v1994 = vunpack.c.l.b16 %v1951
      %v1995 = vunpack.c.h.b16 %v1951
      %v1996 = vunpack.c.l.b16 %v1952
      %v1997 = vunpack.c.h.b16 %v1952
      %v1998 = vunpack.c.l.b16 %v1953
      %v1999 = vunpack.c.h.b16 %v1953
      %v2000 = vunpack.c.l.b16 %v1954
      %v2001 = vunpack.c.h.b16 %v1954
      %v2002 = vunpack.c.l.b16 %v1955
      %v2003 = vunpack.c.h.b16 %v1955
      %v2004 = vpack.c.b16 %v1972, %v1972
      %v2005 = vpack.c.b16 %v1973, %v1973
      %v2006 = vpack.c.b16 %v1974, %v1974
      %v2007 = vpack.c.b16 %v1975, %v1975
      %v2008 = vpack.c.b16 %v1976, %v1976
      %v2009 = vpack.c.b16 %v1977, %v1977
      %v2010 = vpack.c.b16 %v1978, %v1978
      %v2011 = vpack.c.b16 %v1979, %v1979
      %v2012 = vpack.c.b16 %v1980, %v1980
      %v2013 = vpack.c.b16 %v1981, %v1981
      %v2014 = vpack.c.b16 %v1982, %v1982
      %v2015 = vpack.c.b16 %v1983, %v1983
      %v2016 = vpack.c.b16 %v1984, %v1984
      %v2017 = vpack.c.b16 %v1985, %v1985
      %v2018 = vpack.c.b16 %v1986, %v1986
      %v2019 = vpack.c.b16 %v1987, %v1987
      %v2020 = vpack.c.b16 %v1988, %v1988
      %v2021 = vpack.c.b16 %v1989, %v1989
      %v2022 = vpack.c.b16 %v1990, %v1990
      %v2023 = vpack.c.b16 %v1991, %v1991
      %v2024 = vpack.c.b16 %v1992, %v1992
      %v2025 = vpack.c.b16 %v1993, %v1993
      %v2026 = vpack.c.b16 %v1994, %v1994
      %v2027 = vpack.c.b16 %v1995, %v1995
      %v2028 = vpack.c.b16 %v1996, %v1996
      %v2029 = vpack.c.b16 %v1997, %v1997
      %v2030 = vpack.c.b16 %v1998, %v1998
      %v2031 = vpack.c.b16 %v1999, %v1999
      %v2032 = vpack.c.b16 %v2000, %v2000
      %v2033 = vpack.c.b16 %v2001, %v2001
      %v2034 = vpack.c.b16 %v2002, %v2002
      %v2035 = vpack.c.b16 %v2003, %v2003
      %2036 = vrot.lane.b32.xlu0 %v2004, 64
      %v2037 = vpop.permute.xlu0 %2036
      %2038 = vrot.lane.b32.xlu0 %v2005, 64
      %v2039 = vpop.permute.xlu0 %2038
      %2040 = vrot.lane.b32.xlu0 %v2006, 64
      %v2041 = vpop.permute.xlu0 %2040
      %2042 = vrot.lane.b32.xlu0 %v2007, 64
      %v2043 = vpop.permute.xlu0 %2042
      %2044 = vrot.lane.b32.xlu0 %v2008, 64
      %v2045 = vpop.permute.xlu0 %2044
      %2046 = vrot.lane.b32.xlu0 %v2009, 64
      %v2047 = vpop.permute.xlu0 %2046
      %2048 = vrot.lane.b32.xlu0 %v2010, 64
      %v2049 = vpop.permute.xlu0 %2048
      %2050 = vrot.lane.b32.xlu0 %v2011, 64
      %v2051 = vpop.permute.xlu0 %2050
      %2052 = vrot.lane.b32.xlu0 %v2012, 64
      %v2053 = vpop.permute.xlu0 %2052
      %2054 = vrot.lane.b32.xlu0 %v2013, 64
      %v2055 = vpop.permute.xlu0 %2054
      %2056 = vrot.lane.b32.xlu0 %v2014, 64
      %v2057 = vpop.permute.xlu0 %2056
      %2058 = vrot.lane.b32.xlu0 %v2015, 64
      %v2059 = vpop.permute.xlu0 %2058
      %2060 = vrot.lane.b32.xlu0 %v2016, 64
      %v2061 = vpop.permute.xlu0 %2060
      %2062 = vrot.lane.b32.xlu0 %v2017, 64
      %v2063 = vpop.permute.xlu0 %2062
      %2064 = vrot.lane.b32.xlu0 %v2018, 64
      %v2065 = vpop.permute.xlu0 %2064
      %2066 = vrot.lane.b32.xlu0 %v2019, 64
      %v2067 = vpop.permute.xlu0 %2066
      %2068 = vrot.lane.b32.xlu0 %v2020, 64
      %v2069 = vpop.permute.xlu0 %2068
      %2070 = vrot.lane.b32.xlu0 %v2021, 64
      %v2071 = vpop.permute.xlu0 %2070
      %2072 = vrot.lane.b32.xlu0 %v2022, 64
      %v2073 = vpop.permute.xlu0 %2072
      %2074 = vrot.lane.b32.xlu0 %v2023, 64
      %v2075 = vpop.permute.xlu0 %2074
      %2076 = vrot.lane.b32.xlu0 %v2024, 64
      %v2077 = vpop.permute.xlu0 %2076
      %2078 = vrot.lane.b32.xlu0 %v2025, 64
      %v2079 = vpop.permute.xlu0 %2078
      %2080 = vrot.lane.b32.xlu0 %v2026, 64
      %v2081 = vpop.permute.xlu0 %2080
      %2082 = vrot.lane.b32.xlu0 %v2027, 64
      %v2083 = vpop.permute.xlu0 %2082
      %2084 = vrot.lane.b32.xlu0 %v2028, 64
      %v2085 = vpop.permute.xlu0 %2084
      %2086 = vrot.lane.b32.xlu0 %v2029, 64
      %v2087 = vpop.permute.xlu0 %2086
      %2088 = vrot.lane.b32.xlu0 %v2030, 64
      %v2089 = vpop.permute.xlu0 %2088
      %2090 = vrot.lane.b32.xlu0 %v2031, 64
      %v2091 = vpop.permute.xlu0 %2090
      %2092 = vrot.lane.b32.xlu0 %v2032, 64
      %v2093 = vpop.permute.xlu0 %2092
      %2094 = vrot.lane.b32.xlu0 %v2033, 64
      %v2095 = vpop.permute.xlu0 %2094
      %2096 = vrot.lane.b32.xlu0 %v2034, 64
      %v2097 = vpop.permute.xlu0 %2096
      %2098 = vrot.lane.b32.xlu0 %v2035, 64
      %v2099 = vpop.permute.xlu0 %2098
      %2132 = vst.msk [vmem:[#allocation3 + $0xc] sm:$0xf] %vm786, %v2037
      %2133 = vst.msk [vmem:[#allocation3 + $0x20] sm:$0xf] %vm786, %v2039
      %2134 = vst.msk [vmem:[#allocation3 + $0x34] sm:$0xf] %vm786, %v2041
      %2135 = vst.msk [vmem:[#allocation3 + $0x48] sm:$0xf] %vm786, %v2043
      %2136 = vst.msk [vmem:[#allocation3 + $0x5c] sm:$0xf] %vm786, %v2045
      %2137 = vst.msk [vmem:[#allocation3 + $0x70] sm:$0xf] %vm786, %v2047
      %2138 = vst.msk [vmem:[#allocation3 + $0x84] sm:$0xf] %vm786, %v2049
      %2139 = vst.msk [vmem:[#allocation3 + $0x98] sm:$0xf] %vm786, %v2051
      %2140 = vst.msk [vmem:[#allocation3 + $0xac] sm:$0xf] %vm786, %v2053
      %2141 = vst.msk [vmem:[#allocation3 + $0xc0] sm:$0xf] %vm786, %v2055
      %2142 = vst.msk [vmem:[#allocation3 + $0xd4] sm:$0xf] %vm786, %v2057
      %2143 = vst.msk [vmem:[#allocation3 + $0xe8] sm:$0xf] %vm786, %v2059
      %2144 = vst.msk [vmem:[#allocation3 + $0xfc] sm:$0xf] %vm786, %v2061
      %2145 = vst.msk [vmem:[#allocation3 + $0x110] sm:$0xf] %vm786, %v2063
      %2146 = vst.msk [vmem:[#allocation3 + $0x124] sm:$0xf] %vm786, %v2065
      %2147 = vst.msk [vmem:[#allocation3 + $0x138] sm:$0xf] %vm786, %v2067
      %2148 = vst.msk [vmem:[#allocation3 + $0x14c] sm:$0xf] %vm786, %v2069
      %2149 = vst.msk [vmem:[#allocation3 + $0x160] sm:$0xf] %vm786, %v2071
      %2150 = vst.msk [vmem:[#allocation3 + $0x174] sm:$0xf] %vm786, %v2073
      %2151 = vst.msk [vmem:[#allocation3 + $0x188] sm:$0xf] %vm786, %v2075
      %2152 = vst.msk [vmem:[#allocation3 + $0x19c] sm:$0xf] %vm786, %v2077
      %2153 = vst.msk [vmem:[#allocation3 + $0x1b0] sm:$0xf] %vm786, %v2079
      %2154 = vst.msk [vmem:[#allocation3 + $0x1c4] sm:$0xf] %vm786, %v2081
      %2155 = vst.msk [vmem:[#allocation3 + $0x1d8] sm:$0xf] %vm786, %v2083
      %2156 = vst.msk [vmem:[#allocation3 + $0x1ec] sm:$0xf] %vm786, %v2085
      %2157 = vst.msk [vmem:[#allocation3 + $0x200] sm:$0xf] %vm786, %v2087
      %2158 = vst.msk [vmem:[#allocation3 + $0x214] sm:$0xf] %vm786, %v2089
      %2159 = vst.msk [vmem:[#allocation3 + $0x228] sm:$0xf] %vm786, %v2091
      %2160 = vst.msk [vmem:[#allocation3 + $0x23c] sm:$0xf] %vm786, %v2093
      %2161 = vst.msk [vmem:[#allocation3 + $0x250] sm:$0xf] %vm786, %v2095
      %2162 = vst.msk [vmem:[#allocation3 + $0x264] sm:$0xf] %vm786, %v2097
      %2163 = vst.msk [vmem:[#allocation3 + $0x278] sm:$0xf] %vm786, %v2099
      %v2164 = vld [vmem:[%s1715 + $0x2] sm:$0xff]
      %v2165 = vld [vmem:[%s1715 + $0xa] sm:$0xff]
      %v2166 = vld [vmem:[%s1715 + $0x1a] sm:$0xff]
      %v2167 = vld [vmem:[%s1715 + $0x22] sm:$0xff]
      %v2168 = vld [vmem:[%s1715 + $0x32] sm:$0xff]
      %v2169 = vld [vmem:[%s1715 + $0x3a] sm:$0xff]
      %v2170 = vld [vmem:[%s1715 + $0x4a] sm:$0xff]
      %v2171 = vld [vmem:[%s1715 + $0x52] sm:$0xff]
      %v2172 = vld [vmem:[%s1715 + $0x62] sm:$0xff]
      %v2173 = vld [vmem:[%s1715 + $0x6a] sm:$0xff]
      %v2174 = vld [vmem:[%s1715 + $0x7a] sm:$0xff]
      %v2175 = vld [vmem:[%s1715 + $0x82] sm:$0xff]
      %v2176 = vld [vmem:[%s1715 + $0x92] sm:$0xff]
      %v2177 = vld [vmem:[%s1715 + $0x9a] sm:$0xff]
      %v2178 = vld [vmem:[%s1715 + $0xaa] sm:$0xff]
      %v2179 = vld [vmem:[%s1715 + $0xb2] sm:$0xff]
      %v2180 = vld [vmem:[%s1715 + $0xc2] sm:$0xff]
      %v2181 = vld [vmem:[%s1715 + $0xca] sm:$0xff]
      %v2182 = vld [vmem:[%s1715 + $0xda] sm:$0xff]
      %v2183 = vld [vmem:[%s1715 + $0xe2] sm:$0xff]
      %v2184 = vld [vmem:[%s1715 + $0xf2] sm:$0xff]
      %v2185 = vld [vmem:[%s1715 + $0xfa] sm:$0xff]
      %v2186 = vld [vmem:[%s1715 + $0x10a] sm:$0xff]
      %v2187 = vld [vmem:[%s1715 + $0x112] sm:$0xff]
      %v2188 = vld [vmem:[%s1715 + $0x122] sm:$0xff]
      %v2189 = vld [vmem:[%s1715 + $0x12a] sm:$0xff]
      %v2190 = vld [vmem:[%s1715 + $0x13a] sm:$0xff]
      %v2191 = vld [vmem:[%s1715 + $0x142] sm:$0xff]
      %v2192 = vld [vmem:[%s1715 + $0x152] sm:$0xff]
      %v2193 = vld [vmem:[%s1715 + $0x15a] sm:$0xff]
      %v2194 = vld [vmem:[%s1715 + $0x16a] sm:$0xff]
      %v2195 = vld [vmem:[%s1715 + $0x172] sm:$0xff]
      %v2196 = vpack.c.bf16 %v2165, %v2164
      %v2197 = vpack.c.bf16 %v2167, %v2166
      %v2198 = vpack.c.bf16 %v2169, %v2168
      %v2199 = vpack.c.bf16 %v2171, %v2170
      %v2200 = vpack.c.bf16 %v2173, %v2172
      %v2201 = vpack.c.bf16 %v2175, %v2174
      %v2202 = vpack.c.bf16 %v2177, %v2176
      %v2203 = vpack.c.bf16 %v2179, %v2178
      %v2204 = vpack.c.bf16 %v2181, %v2180
      %v2205 = vpack.c.bf16 %v2183, %v2182
      %v2206 = vpack.c.bf16 %v2185, %v2184
      %v2207 = vpack.c.bf16 %v2187, %v2186
      %v2208 = vpack.c.bf16 %v2189, %v2188
      %v2209 = vpack.c.bf16 %v2191, %v2190
      %v2210 = vpack.c.bf16 %v2193, %v2192
      %v2211 = vpack.c.bf16 %v2195, %v2194
      %v2228 = vunpack.c.l.b16 %v2196
      %v2229 = vunpack.c.h.b16 %v2196
      %v2230 = vunpack.c.l.b16 %v2197
      %v2231 = vunpack.c.h.b16 %v2197
      %v2232 = vunpack.c.l.b16 %v2198
      %v2233 = vunpack.c.h.b16 %v2198
      %v2234 = vunpack.c.l.b16 %v2199
      %v2235 = vunpack.c.h.b16 %v2199
      %v2236 = vunpack.c.l.b16 %v2200
      %v2237 = vunpack.c.h.b16 %v2200
      %v2238 = vunpack.c.l.b16 %v2201
      %v2239 = vunpack.c.h.b16 %v2201
      %v2240 = vunpack.c.l.b16 %v2202
      %v2241 = vunpack.c.h.b16 %v2202
      %v2242 = vunpack.c.l.b16 %v2203
      %v2243 = vunpack.c.h.b16 %v2203
      %v2244 = vunpack.c.l.b16 %v2204
      %v2245 = vunpack.c.h.b16 %v2204
      %v2246 = vunpack.c.l.b16 %v2205
      %v2247 = vunpack.c.h.b16 %v2205
      %v2248 = vunpack.c.l.b16 %v2206
      %v2249 = vunpack.c.h.b16 %v2206
      %v2250 = vunpack.c.l.b16 %v2207
      %v2251 = vunpack.c.h.b16 %v2207
      %v2252 = vunpack.c.l.b16 %v2208
      %v2253 = vunpack.c.h.b16 %v2208
      %v2254 = vunpack.c.l.b16 %v2209
      %v2255 = vunpack.c.h.b16 %v2209
      %v2256 = vunpack.c.l.b16 %v2210
      %v2257 = vunpack.c.h.b16 %v2210
      %v2258 = vunpack.c.l.b16 %v2211
      %v2259 = vunpack.c.h.b16 %v2211
      %v2260 = vpack.c.b16 %v2228, %v2228
      %v2261 = vpack.c.b16 %v2229, %v2229
      %v2262 = vpack.c.b16 %v2230, %v2230
      %v2263 = vpack.c.b16 %v2231, %v2231
      %v2264 = vpack.c.b16 %v2232, %v2232
      %v2265 = vpack.c.b16 %v2233, %v2233
      %v2266 = vpack.c.b16 %v2234, %v2234
      %v2267 = vpack.c.b16 %v2235, %v2235
      %v2268 = vpack.c.b16 %v2236, %v2236
      %v2269 = vpack.c.b16 %v2237, %v2237
      %v2270 = vpack.c.b16 %v2238, %v2238
      %v2271 = vpack.c.b16 %v2239, %v2239
      %v2272 = vpack.c.b16 %v2240, %v2240
      %v2273 = vpack.c.b16 %v2241, %v2241
      %v2274 = vpack.c.b16 %v2242, %v2242
      %v2275 = vpack.c.b16 %v2243, %v2243
      %v2276 = vpack.c.b16 %v2244, %v2244
      %v2277 = vpack.c.b16 %v2245, %v2245
      %v2278 = vpack.c.b16 %v2246, %v2246
      %v2279 = vpack.c.b16 %v2247, %v2247
      %v2280 = vpack.c.b16 %v2248, %v2248
      %v2281 = vpack.c.b16 %v2249, %v2249
      %v2282 = vpack.c.b16 %v2250, %v2250
      %v2283 = vpack.c.b16 %v2251, %v2251
      %v2284 = vpack.c.b16 %v2252, %v2252
      %v2285 = vpack.c.b16 %v2253, %v2253
      %v2286 = vpack.c.b16 %v2254, %v2254
      %v2287 = vpack.c.b16 %v2255, %v2255
      %v2288 = vpack.c.b16 %v2256, %v2256
      %v2289 = vpack.c.b16 %v2257, %v2257
      %v2290 = vpack.c.b16 %v2258, %v2258
      %v2291 = vpack.c.b16 %v2259, %v2259
      %2324 = vst.msk [vmem:[#allocation3 + $0x10] sm:$0xf] %vm529, %v2260
      %2325 = vst.msk [vmem:[#allocation3 + $0x24] sm:$0xf] %vm529, %v2261
      %2326 = vst.msk [vmem:[#allocation3 + $0x38] sm:$0xf] %vm529, %v2262
      %2327 = vst.msk [vmem:[#allocation3 + $0x4c] sm:$0xf] %vm529, %v2263
      %2328 = vst.msk [vmem:[#allocation3 + $0x60] sm:$0xf] %vm529, %v2264
      %2329 = vst.msk [vmem:[#allocation3 + $0x74] sm:$0xf] %vm529, %v2265
      %2330 = vst.msk [vmem:[#allocation3 + $0x88] sm:$0xf] %vm529, %v2266
      %2331 = vst.msk [vmem:[#allocation3 + $0x9c] sm:$0xf] %vm529, %v2267
      %2332 = vst.msk [vmem:[#allocation3 + $0xb0] sm:$0xf] %vm529, %v2268
      %2333 = vst.msk [vmem:[#allocation3 + $0xc4] sm:$0xf] %vm529, %v2269
      %2334 = vst.msk [vmem:[#allocation3 + $0xd8] sm:$0xf] %vm529, %v2270
      %2335 = vst.msk [vmem:[#allocation3 + $0xec] sm:$0xf] %vm529, %v2271
      %2336 = vst.msk [vmem:[#allocation3 + $0x100] sm:$0xf] %vm529, %v2272
      %2337 = vst.msk [vmem:[#allocation3 + $0x114] sm:$0xf] %vm529, %v2273
      %2338 = vst.msk [vmem:[#allocation3 + $0x128] sm:$0xf] %vm529, %v2274
      %2339 = vst.msk [vmem:[#allocation3 + $0x13c] sm:$0xf] %vm529, %v2275
      %2340 = vst.msk [vmem:[#allocation3 + $0x150] sm:$0xf] %vm529, %v2276
      %2341 = vst.msk [vmem:[#allocation3 + $0x164] sm:$0xf] %vm529, %v2277
      %2342 = vst.msk [vmem:[#allocation3 + $0x178] sm:$0xf] %vm529, %v2278
      %2343 = vst.msk [vmem:[#allocation3 + $0x18c] sm:$0xf] %vm529, %v2279
      %2344 = vst.msk [vmem:[#allocation3 + $0x1a0] sm:$0xf] %vm529, %v2280
      %2345 = vst.msk [vmem:[#allocation3 + $0x1b4] sm:$0xf] %vm529, %v2281
      %2346 = vst.msk [vmem:[#allocation3 + $0x1c8] sm:$0xf] %vm529, %v2282
      %2347 = vst.msk [vmem:[#allocation3 + $0x1dc] sm:$0xf] %vm529, %v2283
      %2348 = vst.msk [vmem:[#allocation3 + $0x1f0] sm:$0xf] %vm529, %v2284
      %2349 = vst.msk [vmem:[#allocation3 + $0x204] sm:$0xf] %vm529, %v2285
      %2350 = vst.msk [vmem:[#allocation3 + $0x218] sm:$0xf] %vm529, %v2286
      %2351 = vst.msk [vmem:[#allocation3 + $0x22c] sm:$0xf] %vm529, %v2287
      %2352 = vst.msk [vmem:[#allocation3 + $0x240] sm:$0xf] %vm529, %v2288
      %2353 = vst.msk [vmem:[#allocation3 + $0x254] sm:$0xf] %vm529, %v2289
      %2354 = vst.msk [vmem:[#allocation3 + $0x268] sm:$0xf] %vm529, %v2290
      %2355 = vst.msk [vmem:[#allocation3 + $0x27c] sm:$0xf] %vm529, %v2291
      %v2356 = vld [vmem:[#allocation3] sm:$0xff]
      %v2357 = vld [vmem:[#allocation3 + $0x8] sm:$0xff]
      %v2358 = vld [vmem:[#allocation3 + $0x10] sm:$0xf]
      %v2359 = vld [vmem:[#allocation3 + $0x14] sm:$0xff]
      %v2360 = vld [vmem:[#allocation3 + $0x1c] sm:$0xff]
      %v2361 = vld [vmem:[#allocation3 + $0x24] sm:$0xf]
      %v2362 = vld [vmem:[#allocation3 + $0x28] sm:$0xff]
      %v2363 = vld [vmem:[#allocation3 + $0x30] sm:$0xff]
      %v2364 = vld [vmem:[#allocation3 + $0x38] sm:$0xf]
      %v2365 = vld [vmem:[#allocation3 + $0x3c] sm:$0xff]
      %v2366 = vld [vmem:[#allocation3 + $0x44] sm:$0xff]
      %v2367 = vld [vmem:[#allocation3 + $0x4c] sm:$0xf]
      %v2368 = vld [vmem:[#allocation3 + $0x50] sm:$0xff]
      %v2369 = vld [vmem:[#allocation3 + $0x58] sm:$0xff]
      %v2370 = vld [vmem:[#allocation3 + $0x60] sm:$0xf]
      %v2371 = vld [vmem:[#allocation3 + $0x64] sm:$0xff]
      %v2372 = vld [vmem:[#allocation3 + $0x6c] sm:$0xff]
      %v2373 = vld [vmem:[#allocation3 + $0x74] sm:$0xf]
      %v2374 = vld [vmem:[#allocation3 + $0x78] sm:$0xff]
      %v2375 = vld [vmem:[#allocation3 + $0x80] sm:$0xff]
      %v2376 = vld [vmem:[#allocation3 + $0x88] sm:$0xf]
      %v2377 = vld [vmem:[#allocation3 + $0x8c] sm:$0xff]
      %v2378 = vld [vmem:[#allocation3 + $0x94] sm:$0xff]
      %v2379 = vld [vmem:[#allocation3 + $0x9c] sm:$0xf]
      %v2380 = vld [vmem:[#allocation3 + $0xa0] sm:$0xff]
      %v2381 = vld [vmem:[#allocation3 + $0xa8] sm:$0xff]
      %v2382 = vld [vmem:[#allocation3 + $0xb0] sm:$0xf]
      %v2383 = vld [vmem:[#allocation3 + $0xb4] sm:$0xff]
      %v2384 = vld [vmem:[#allocation3 + $0xbc] sm:$0xff]
      %v2385 = vld [vmem:[#allocation3 + $0xc4] sm:$0xf]
      %v2386 = vld [vmem:[#allocation3 + $0xc8] sm:$0xff]
      %v2387 = vld [vmem:[#allocation3 + $0xd0] sm:$0xff]
      %v2388 = vld [vmem:[#allocation3 + $0xd8] sm:$0xf]
      %v2389 = vld [vmem:[#allocation3 + $0xdc] sm:$0xff]
      %v2390 = vld [vmem:[#allocation3 + $0xe4] sm:$0xff]
      %v2391 = vld [vmem:[#allocation3 + $0xec] sm:$0xf]
      %v2392 = vld [vmem:[#allocation3 + $0xf0] sm:$0xff]
      %v2393 = vld [vmem:[#allocation3 + $0xf8] sm:$0xff]
      %v2394 = vld [vmem:[#allocation3 + $0x100] sm:$0xf]
      %v2395 = vld [vmem:[#allocation3 + $0x104] sm:$0xff]
      %v2396 = vld [vmem:[#allocation3 + $0x10c] sm:$0xff]
      %v2397 = vld [vmem:[#allocation3 + $0x114] sm:$0xf]
      %v2398 = vld [vmem:[#allocation3 + $0x118] sm:$0xff]
      %v2399 = vld [vmem:[#allocation3 + $0x120] sm:$0xff]
      %v2400 = vld [vmem:[#allocation3 + $0x128] sm:$0xf]
      %v2401 = vld [vmem:[#allocation3 + $0x12c] sm:$0xff]
      %v2402 = vld [vmem:[#allocation3 + $0x134] sm:$0xff]
      %v2403 = vld [vmem:[#allocation3 + $0x13c] sm:$0xf]
      %v2404 = vld [vmem:[#allocation3 + $0x140] sm:$0xff]
      %v2405 = vld [vmem:[#allocation3 + $0x148] sm:$0xff]
      %v2406 = vld [vmem:[#allocation3 + $0x150] sm:$0xf]
      %v2407 = vld [vmem:[#allocation3 + $0x154] sm:$0xff]
      %v2408 = vld [vmem:[#allocation3 + $0x15c] sm:$0xff]
      %v2409 = vld [vmem:[#allocation3 + $0x164] sm:$0xf]
      %v2410 = vld [vmem:[#allocation3 + $0x168] sm:$0xff]
      %v2411 = vld [vmem:[#allocation3 + $0x170] sm:$0xff]
      %v2412 = vld [vmem:[#allocation3 + $0x178] sm:$0xf]
      %v2413 = vld [vmem:[#allocation3 + $0x17c] sm:$0xff]
      %v2414 = vld [vmem:[#allocation3 + $0x184] sm:$0xff]
      %v2415 = vld [vmem:[#allocation3 + $0x18c] sm:$0xf]
      %v2416 = vld [vmem:[#allocation3 + $0x190] sm:$0xff]
      %v2417 = vld [vmem:[#allocation3 + $0x198] sm:$0xff]
      %v2418 = vld [vmem:[#allocation3 + $0x1a0] sm:$0xf]
      %v2419 = vld [vmem:[#allocation3 + $0x1a4] sm:$0xff]
      %v2420 = vld [vmem:[#allocation3 + $0x1ac] sm:$0xff]
      %v2421 = vld [vmem:[#allocation3 + $0x1b4] sm:$0xf]
      %v2422 = vld [vmem:[#allocation3 + $0x1b8] sm:$0xff]
      %v2423 = vld [vmem:[#allocation3 + $0x1c0] sm:$0xff]
      %v2424 = vld [vmem:[#allocation3 + $0x1c8] sm:$0xf]
      %v2425 = vld [vmem:[#allocation3 + $0x1cc] sm:$0xff]
      %v2426 = vld [vmem:[#allocation3 + $0x1d4] sm:$0xff]
      %v2427 = vld [vmem:[#allocation3 + $0x1dc] sm:$0xf]
      %v2428 = vld [vmem:[#allocation3 + $0x1e0] sm:$0xff]
      %v2429 = vld [vmem:[#allocation3 + $0x1e8] sm:$0xff]
      %v2430 = vld [vmem:[#allocation3 + $0x1f0] sm:$0xf]
      %v2431 = vld [vmem:[#allocation3 + $0x1f4] sm:$0xff]
      %v2432 = vld [vmem:[#allocation3 + $0x1fc] sm:$0xff]
      %v2433 = vld [vmem:[#allocation3 + $0x204] sm:$0xf]
      %v2434 = vld [vmem:[#allocation3 + $0x208] sm:$0xff]
      %v2435 = vld [vmem:[#allocation3 + $0x210] sm:$0xff]
      %v2436 = vld [vmem:[#allocation3 + $0x218] sm:$0xf]
      %v2437 = vld [vmem:[#allocation3 + $0x21c] sm:$0xff]
      %v2438 = vld [vmem:[#allocation3 + $0x224] sm:$0xff]
      %v2439 = vld [vmem:[#allocation3 + $0x22c] sm:$0xf]
      %v2440 = vld [vmem:[#allocation3 + $0x230] sm:$0xff]
      %v2441 = vld [vmem:[#allocation3 + $0x238] sm:$0xff]
      %v2442 = vld [vmem:[#allocation3 + $0x240] sm:$0xf]
      %v2443 = vld [vmem:[#allocation3 + $0x244] sm:$0xff]
      %v2444 = vld [vmem:[#allocation3 + $0x24c] sm:$0xff]
      %v2445 = vld [vmem:[#allocation3 + $0x254] sm:$0xf]
      %v2446 = vld [vmem:[#allocation3 + $0x258] sm:$0xff]
      %v2447 = vld [vmem:[#allocation3 + $0x260] sm:$0xff]
      %v2448 = vld [vmem:[#allocation3 + $0x268] sm:$0xf]
      %v2449 = vld [vmem:[#allocation3 + $0x26c] sm:$0xff]
      %v2450 = vld [vmem:[#allocation3 + $0x274] sm:$0xff]
      %v2451 = vld [vmem:[#allocation3 + $0x27c] sm:$0xf]
      %v2452 = vld [vmem:[%s1] sm:$0xf]
      %v2453 = vld [vmem:[%s1 + $0x4] sm:$0xf]
      %v2454 = vld [vmem:[%s1 + $0x8] sm:$0xf]
      %v2455 = vld [vmem:[%s1 + $0xc] sm:$0xf]
      %v2456 = vld [vmem:[%s1 + $0x10] sm:$0xf]
      %v2457 = vld [vmem:[%s1 + $0x14] sm:$0xf]
      %v2458 = vld [vmem:[%s1 + $0x18] sm:$0xf]
      %v2459 = vld [vmem:[%s1 + $0x1c] sm:$0xf]
      %v2460 = vld [vmem:[%s1 + $0x20] sm:$0xf]
      %v2461 = vld [vmem:[%s1 + $0x24] sm:$0xf]
      %v2462 = vld [vmem:[%s1 + $0x28] sm:$0xf]
      %v2463 = vld [vmem:[%s1 + $0x2c] sm:$0xf]
      %v2464 = vld [vmem:[%s1 + $0x30] sm:$0xf]
      %v2465 = vld [vmem:[%s1 + $0x34] sm:$0xf]
      %v2466 = vld [vmem:[%s1 + $0x38] sm:$0xf]
      %v2467 = vld [vmem:[%s1 + $0x3c] sm:$0xf]
      %v2468 = vld [vmem:[%s1 + $0x40] sm:$0xf]
      %v2469 = vld [vmem:[%s1 + $0x44] sm:$0xf]
      %v2470 = vld [vmem:[%s1 + $0x48] sm:$0xf]
      %v2471 = vld [vmem:[%s1 + $0x4c] sm:$0xf]
      %v2472 = vld [vmem:[%s1 + $0x50] sm:$0xf]
      %v2473 = vld [vmem:[%s1 + $0x54] sm:$0xf]
      %v2474 = vld [vmem:[%s1 + $0x58] sm:$0xf]
      %v2475 = vld [vmem:[%s1 + $0x5c] sm:$0xf]
      %v2476 = vld [vmem:[%s1 + $0x60] sm:$0xf]
      %v2477 = vld [vmem:[%s1 + $0x64] sm:$0xf]
      %v2478 = vld [vmem:[%s1 + $0x68] sm:$0xf]
      %v2479 = vld [vmem:[%s1 + $0x6c] sm:$0xf]
      %v2480 = vld [vmem:[%s1 + $0x70] sm:$0xf]
      %v2481 = vld [vmem:[%s1 + $0x74] sm:$0xf]
      %v2482 = vld [vmem:[%s1 + $0x78] sm:$0xf]
      %v2483 = vld [vmem:[%s1 + $0x7c] sm:$0xf]
      %v2484 = vld [vmem:[%s1 + $0x80] sm:$0xf]
      %v2485 = vld [vmem:[%s1 + $0x84] sm:$0xf]
      %v2486 = vld [vmem:[%s1 + $0x88] sm:$0xf]
      %v2487 = vld [vmem:[%s1 + $0x8c] sm:$0xf]
      %v2488 = vld [vmem:[%s1 + $0x90] sm:$0xf]
      %v2489 = vld [vmem:[%s1 + $0x94] sm:$0xf]
      %v2490 = vld [vmem:[%s1 + $0x98] sm:$0xf]
      %v2491 = vld [vmem:[%s1 + $0x9c] sm:$0xf]
      %v2492 = vld [vmem:[%s1 + $0xa0] sm:$0xf]
      %v2493 = vld [vmem:[%s1 + $0xa4] sm:$0xf]
      %v2494 = vld [vmem:[%s1 + $0xa8] sm:$0xf]
      %v2495 = vld [vmem:[%s1 + $0xac] sm:$0xf]
      %v2496 = vld [vmem:[%s1 + $0xb0] sm:$0xf]
      %v2497 = vld [vmem:[%s1 + $0xb4] sm:$0xf]
      %v2498 = vld [vmem:[%s1 + $0xb8] sm:$0xf]
      %v2499 = vld [vmem:[%s1 + $0xbc] sm:$0xf]
      %v2500 = vld [vmem:[%s1 + $0xc0] sm:$0xf]
      %v2501 = vld [vmem:[%s1 + $0xc4] sm:$0xf]
      %v2502 = vld [vmem:[%s1 + $0xc8] sm:$0xf]
      %v2503 = vld [vmem:[%s1 + $0xcc] sm:$0xf]
      %v2504 = vld [vmem:[%s1 + $0xd0] sm:$0xf]
      %v2505 = vld [vmem:[%s1 + $0xd4] sm:$0xf]
      %v2506 = vld [vmem:[%s1 + $0xd8] sm:$0xf]
      %v2507 = vld [vmem:[%s1 + $0xdc] sm:$0xf]
      %v2508 = vld [vmem:[%s1 + $0xe0] sm:$0xf]
      %v2509 = vld [vmem:[%s1 + $0xe4] sm:$0xf]
      %v2510 = vld [vmem:[%s1 + $0xe8] sm:$0xf]
      %v2511 = vld [vmem:[%s1 + $0xec] sm:$0xf]
      %v2512 = vld [vmem:[%s1 + $0xf0] sm:$0xf]
      %v2513 = vld [vmem:[%s1 + $0xf4] sm:$0xf]
      %v2514 = vld [vmem:[%s1 + $0xf8] sm:$0xf]
      %v2515 = vld [vmem:[%s1 + $0xfc] sm:$0xf]
      %v2516 = vld [vmem:[%s1 + $0x100] sm:$0xf]
      %v2517 = vld [vmem:[%s1 + $0x104] sm:$0xf]
      %v2518 = vld [vmem:[%s1 + $0x108] sm:$0xf]
      %v2519 = vld [vmem:[%s1 + $0x10c] sm:$0xf]
      %v2520 = vld [vmem:[%s1 + $0x110] sm:$0xf]
      %v2521 = vld [vmem:[%s1 + $0x114] sm:$0xf]
      %v2522 = vld [vmem:[%s1 + $0x118] sm:$0xf]
      %v2523 = vld [vmem:[%s1 + $0x11c] sm:$0xf]
      %v2620 = vunpack.c.l.b16 %v2356
      %v2621 = vunpack.c.h.b16 %v2356
      %v2622 = vunpack.c.l.b16 %v2357
      %v2623 = vunpack.c.h.b16 %v2357
      %v2624 = vunpack.c.l.b16 %v2358
      %v2625 = vunpack.c.l.b16 %v2359
      %v2626 = vunpack.c.h.b16 %v2359
      %v2627 = vunpack.c.l.b16 %v2360
      %v2628 = vunpack.c.h.b16 %v2360
      %v2629 = vunpack.c.l.b16 %v2361
      %v2630 = vunpack.c.l.b16 %v2362
      %v2631 = vunpack.c.h.b16 %v2362
      %v2632 = vunpack.c.l.b16 %v2363
      %v2633 = vunpack.c.h.b16 %v2363
      %v2634 = vunpack.c.l.b16 %v2364
      %v2635 = vunpack.c.l.b16 %v2365
      %v2636 = vunpack.c.h.b16 %v2365
      %v2637 = vunpack.c.l.b16 %v2366
      %v2638 = vunpack.c.h.b16 %v2366
      %v2639 = vunpack.c.l.b16 %v2367
      %v2640 = vunpack.c.l.b16 %v2368
      %v2641 = vunpack.c.h.b16 %v2368
      %v2642 = vunpack.c.l.b16 %v2369
      %v2643 = vunpack.c.h.b16 %v2369
      %v2644 = vunpack.c.l.b16 %v2370
      %v2645 = vunpack.c.l.b16 %v2371
      %v2646 = vunpack.c.h.b16 %v2371
      %v2647 = vunpack.c.l.b16 %v2372
      %v2648 = vunpack.c.h.b16 %v2372
      %v2649 = vunpack.c.l.b16 %v2373
      %v2650 = vunpack.c.l.b16 %v2374
      %v2651 = vunpack.c.h.b16 %v2374
      %v2652 = vunpack.c.l.b16 %v2375
      %v2653 = vunpack.c.h.b16 %v2375
      %v2654 = vunpack.c.l.b16 %v2376
      %v2655 = vunpack.c.l.b16 %v2377
      %v2656 = vunpack.c.h.b16 %v2377
      %v2657 = vunpack.c.l.b16 %v2378
      %v2658 = vunpack.c.h.b16 %v2378
      %v2659 = vunpack.c.l.b16 %v2379
      %v2660 = vunpack.c.l.b16 %v2380
      %v2661 = vunpack.c.h.b16 %v2380
      %v2662 = vunpack.c.l.b16 %v2381
      %v2663 = vunpack.c.h.b16 %v2381
      %v2664 = vunpack.c.l.b16 %v2382
      %v2665 = vunpack.c.l.b16 %v2383
      %v2666 = vunpack.c.h.b16 %v2383
      %v2667 = vunpack.c.l.b16 %v2384
      %v2668 = vunpack.c.h.b16 %v2384
      %v2669 = vunpack.c.l.b16 %v2385
      %v2670 = vunpack.c.l.b16 %v2386
      %v2671 = vunpack.c.h.b16 %v2386
      %v2672 = vunpack.c.l.b16 %v2387
      %v2673 = vunpack.c.h.b16 %v2387
      %v2674 = vunpack.c.l.b16 %v2388
      %v2675 = vunpack.c.l.b16 %v2389
      %v2676 = vunpack.c.h.b16 %v2389
      %v2677 = vunpack.c.l.b16 %v2390
      %v2678 = vunpack.c.h.b16 %v2390
      %v2679 = vunpack.c.l.b16 %v2391
      %v2680 = vunpack.c.l.b16 %v2392
      %v2681 = vunpack.c.h.b16 %v2392
      %v2682 = vunpack.c.l.b16 %v2393
      %v2683 = vunpack.c.h.b16 %v2393
      %v2684 = vunpack.c.l.b16 %v2394
      %v2685 = vunpack.c.l.b16 %v2395
      %v2686 = vunpack.c.h.b16 %v2395
      %v2687 = vunpack.c.l.b16 %v2396
      %v2688 = vunpack.c.h.b16 %v2396
      %v2689 = vunpack.c.l.b16 %v2397
      %v2690 = vunpack.c.l.b16 %v2398
      %v2691 = vunpack.c.h.b16 %v2398
      %v2692 = vunpack.c.l.b16 %v2399
      %v2693 = vunpack.c.h.b16 %v2399
      %v2694 = vunpack.c.l.b16 %v2400
      %v2695 = vunpack.c.l.b16 %v2401
      %v2696 = vunpack.c.h.b16 %v2401
      %v2697 = vunpack.c.l.b16 %v2402
      %v2698 = vunpack.c.h.b16 %v2402
      %v2699 = vunpack.c.l.b16 %v2403
      %v2700 = vunpack.c.l.b16 %v2404
      %v2701 = vunpack.c.h.b16 %v2404
      %v2702 = vunpack.c.l.b16 %v2405
      %v2703 = vunpack.c.h.b16 %v2405
      %v2704 = vunpack.c.l.b16 %v2406
      %v2705 = vunpack.c.l.b16 %v2407
      %v2706 = vunpack.c.h.b16 %v2407
      %v2707 = vunpack.c.l.b16 %v2408
      %v2708 = vunpack.c.h.b16 %v2408
      %v2709 = vunpack.c.l.b16 %v2409
      %v2710 = vunpack.c.l.b16 %v2410
      %v2711 = vunpack.c.h.b16 %v2410
      %v2712 = vunpack.c.l.b16 %v2411
      %v2713 = vunpack.c.h.b16 %v2411
      %v2714 = vunpack.c.l.b16 %v2412
      %v2715 = vunpack.c.l.b16 %v2413
      %v2716 = vunpack.c.h.b16 %v2413
      %v2717 = vunpack.c.l.b16 %v2414
      %v2718 = vunpack.c.h.b16 %v2414
      %v2719 = vunpack.c.l.b16 %v2415
      %v2720 = vunpack.c.l.b16 %v2416
      %v2721 = vunpack.c.h.b16 %v2416
      %v2722 = vunpack.c.l.b16 %v2417
      %v2723 = vunpack.c.h.b16 %v2417
      %v2724 = vunpack.c.l.b16 %v2418
      %v2725 = vunpack.c.l.b16 %v2419
      %v2726 = vunpack.c.h.b16 %v2419
      %v2727 = vunpack.c.l.b16 %v2420
      %v2728 = vunpack.c.h.b16 %v2420
      %v2729 = vunpack.c.l.b16 %v2421
      %v2730 = vunpack.c.l.b16 %v2422
      %v2731 = vunpack.c.h.b16 %v2422
      %v2732 = vunpack.c.l.b16 %v2423
      %v2733 = vunpack.c.h.b16 %v2423
      %v2734 = vunpack.c.l.b16 %v2424
      %v2735 = vunpack.c.l.b16 %v2425
      %v2736 = vunpack.c.h.b16 %v2425
      %v2737 = vunpack.c.l.b16 %v2426
      %v2738 = vunpack.c.h.b16 %v2426
      %v2739 = vunpack.c.l.b16 %v2427
      %v2740 = vunpack.c.l.b16 %v2428
      %v2741 = vunpack.c.h.b16 %v2428
      %v2742 = vunpack.c.l.b16 %v2429
      %v2743 = vunpack.c.h.b16 %v2429
      %v2744 = vunpack.c.l.b16 %v2430
      %v2745 = vunpack.c.l.b16 %v2431
      %v2746 = vunpack.c.h.b16 %v2431
      %v2747 = vunpack.c.l.b16 %v2432
      %v2748 = vunpack.c.h.b16 %v2432
      %v2749 = vunpack.c.l.b16 %v2433
      %v2750 = vunpack.c.l.b16 %v2434
      %v2751 = vunpack.c.h.b16 %v2434
      %v2752 = vunpack.c.l.b16 %v2435
      %v2753 = vunpack.c.h.b16 %v2435
      %v2754 = vunpack.c.l.b16 %v2436
      %v2755 = vunpack.c.l.b16 %v2437
      %v2756 = vunpack.c.h.b16 %v2437
      %v2757 = vunpack.c.l.b16 %v2438
      %v2758 = vunpack.c.h.b16 %v2438
      %v2759 = vunpack.c.l.b16 %v2439
      %v2760 = vunpack.c.l.b16 %v2440
      %v2761 = vunpack.c.h.b16 %v2440
      %v2762 = vunpack.c.l.b16 %v2441
      %v2763 = vunpack.c.h.b16 %v2441
      %v2764 = vunpack.c.l.b16 %v2442
      %v2765 = vunpack.c.l.b16 %v2443
      %v2766 = vunpack.c.h.b16 %v2443
      %v2767 = vunpack.c.l.b16 %v2444
      %v2768 = vunpack.c.h.b16 %v2444
      %v2769 = vunpack.c.l.b16 %v2445
      %v2770 = vunpack.c.l.b16 %v2446
      %v2771 = vunpack.c.h.b16 %v2446
      %v2772 = vunpack.c.l.b16 %v2447
      %v2773 = vunpack.c.h.b16 %v2447
      %v2774 = vunpack.c.l.b16 %v2448
      %v2775 = vunpack.c.l.b16 %v2449
      %v2776 = vunpack.c.h.b16 %v2449
      %v2777 = vunpack.c.l.b16 %v2450
      %v2778 = vunpack.c.h.b16 %v2450
      %v2779 = vunpack.c.l.b16 %v2451
      %v2780 = vpack.c.b16 %v2625, %v2620
      %v2781 = vpack.c.b16 %v2626, %v2621
      %v2782 = vpack.c.b16 %v2627, %v2622
      %v2783 = vpack.c.b16 %v2628, %v2623
      %v2784 = vpack.c.b16 %v2629, %v2624
      %v2785 = vpack.c.b16 %v2635, %v2630
      %v2786 = vpack.c.b16 %v2636, %v2631
      %v2787 = vpack.c.b16 %v2637, %v2632
      %v2788 = vpack.c.b16 %v2638, %v2633
      %v2789 = vpack.c.b16 %v2639, %v2634
      %v2790 = vpack.c.b16 %v2645, %v2640
      %v2791 = vpack.c.b16 %v2646, %v2641
      %v2792 = vpack.c.b16 %v2647, %v2642
      %v2793 = vpack.c.b16 %v2648, %v2643
      %v2794 = vpack.c.b16 %v2649, %v2644
      %v2795 = vpack.c.b16 %v2655, %v2650
      %v2796 = vpack.c.b16 %v2656, %v2651
      %v2797 = vpack.c.b16 %v2657, %v2652
      %v2798 = vpack.c.b16 %v2658, %v2653
      %v2799 = vpack.c.b16 %v2659, %v2654
      %v2800 = vpack.c.b16 %v2665, %v2660
      %v2801 = vpack.c.b16 %v2666, %v2661
      %v2802 = vpack.c.b16 %v2667, %v2662
      %v2803 = vpack.c.b16 %v2668, %v2663
      %v2804 = vpack.c.b16 %v2669, %v2664
      %v2805 = vpack.c.b16 %v2675, %v2670
      %v2806 = vpack.c.b16 %v2676, %v2671
      %v2807 = vpack.c.b16 %v2677, %v2672
      %v2808 = vpack.c.b16 %v2678, %v2673
      %v2809 = vpack.c.b16 %v2679, %v2674
      %v2810 = vpack.c.b16 %v2685, %v2680
      %v2811 = vpack.c.b16 %v2686, %v2681
      %v2812 = vpack.c.b16 %v2687, %v2682
      %v2813 = vpack.c.b16 %v2688, %v2683
      %v2814 = vpack.c.b16 %v2689, %v2684
      %v2815 = vpack.c.b16 %v2695, %v2690
      %v2816 = vpack.c.b16 %v2696, %v2691
      %v2817 = vpack.c.b16 %v2697, %v2692
      %v2818 = vpack.c.b16 %v2698, %v2693
      %v2819 = vpack.c.b16 %v2699, %v2694
      %v2820 = vpack.c.b16 %v2705, %v2700
      %v2821 = vpack.c.b16 %v2706, %v2701
      %v2822 = vpack.c.b16 %v2707, %v2702
      %v2823 = vpack.c.b16 %v2708, %v2703
      %v2824 = vpack.c.b16 %v2709, %v2704
      %v2825 = vpack.c.b16 %v2715, %v2710
      %v2826 = vpack.c.b16 %v2716, %v2711
      %v2827 = vpack.c.b16 %v2717, %v2712
      %v2828 = vpack.c.b16 %v2718, %v2713
      %v2829 = vpack.c.b16 %v2719, %v2714
      %v2830 = vpack.c.b16 %v2725, %v2720
      %v2831 = vpack.c.b16 %v2726, %v2721
      %v2832 = vpack.c.b16 %v2727, %v2722
      %v2833 = vpack.c.b16 %v2728, %v2723
      %v2834 = vpack.c.b16 %v2729, %v2724
      %v2835 = vpack.c.b16 %v2735, %v2730
      %v2836 = vpack.c.b16 %v2736, %v2731
      %v2837 = vpack.c.b16 %v2737, %v2732
      %v2838 = vpack.c.b16 %v2738, %v2733
      %v2839 = vpack.c.b16 %v2739, %v2734
      %v2840 = vpack.c.b16 %v2745, %v2740
      %v2841 = vpack.c.b16 %v2746, %v2741
      %v2842 = vpack.c.b16 %v2747, %v2742
      %v2843 = vpack.c.b16 %v2748, %v2743
      %v2844 = vpack.c.b16 %v2749, %v2744
      %v2845 = vpack.c.b16 %v2755, %v2750
      %v2846 = vpack.c.b16 %v2756, %v2751
      %v2847 = vpack.c.b16 %v2757, %v2752
      %v2848 = vpack.c.b16 %v2758, %v2753
      %v2849 = vpack.c.b16 %v2759, %v2754
      %v2850 = vpack.c.b16 %v2765, %v2760
      %v2851 = vpack.c.b16 %v2766, %v2761
      %v2852 = vpack.c.b16 %v2767, %v2762
      %v2853 = vpack.c.b16 %v2768, %v2763
      %v2854 = vpack.c.b16 %v2769, %v2764
      %v2855 = vpack.c.b16 %v2775, %v2770
      %v2856 = vpack.c.b16 %v2776, %v2771
      %v2857 = vpack.c.b16 %v2777, %v2772
      %v2858 = vpack.c.b16 %v2778, %v2773
      %v2859 = vpack.c.b16 %v2779, %v2774
      %v2996 = vunpack.c.l.b16 %v2452
      %v2997 = vunpack.c.l.b16 %v2453
      %v2998 = vunpack.c.l.b16 %v2454
      %v2999 = vunpack.c.l.b16 %v2455
      %v3000 = vunpack.c.l.b16 %v2456
      %v3001 = vunpack.c.l.b16 %v2457
      %v3002 = vunpack.c.l.b16 %v2458
      %v3003 = vunpack.c.l.b16 %v2459
      %v3004 = vunpack.c.l.b16 %v2460
      %v3005 = vunpack.c.l.b16 %v2461
      %v3006 = vunpack.c.l.b16 %v2462
      %v3007 = vunpack.c.l.b16 %v2463
      %v3008 = vunpack.c.l.b16 %v2464
      %v3009 = vunpack.c.l.b16 %v2465
      %v3010 = vunpack.c.l.b16 %v2466
      %v3011 = vunpack.c.l.b16 %v2467
      %v3012 = vunpack.c.l.b16 %v2468
      %v3013 = vunpack.c.l.b16 %v2469
      %v3014 = vunpack.c.l.b16 %v2470
      %v3015 = vunpack.c.l.b16 %v2471
      %v3016 = vunpack.c.l.b16 %v2472
      %v3017 = vunpack.c.l.b16 %v2473
      %v3018 = vunpack.c.l.b16 %v2474
      %v3019 = vunpack.c.l.b16 %v2475
      %v3020 = vunpack.c.l.b16 %v2476
      %v3021 = vunpack.c.l.b16 %v2477
      %v3022 = vunpack.c.l.b16 %v2478
      %v3023 = vunpack.c.l.b16 %v2479
      %v3024 = vunpack.c.l.b16 %v2480
      %v3025 = vunpack.c.l.b16 %v2481
      %v3026 = vunpack.c.l.b16 %v2482
      %v3027 = vunpack.c.l.b16 %v2483
      %v3028 = vunpack.c.l.b16 %v2484
      %v3029 = vunpack.c.l.b16 %v2485
      %v3030 = vunpack.c.l.b16 %v2486
      %v3031 = vunpack.c.l.b16 %v2487
      %v3032 = vunpack.c.l.b16 %v2488
      %v3033 = vunpack.c.l.b16 %v2489
      %v3034 = vunpack.c.l.b16 %v2490
      %v3035 = vunpack.c.l.b16 %v2491
      %v3036 = vunpack.c.l.b16 %v2492
      %v3037 = vunpack.c.l.b16 %v2493
      %v3038 = vunpack.c.l.b16 %v2494
      %v3039 = vunpack.c.l.b16 %v2495
      %v3040 = vunpack.c.l.b16 %v2496
      %v3041 = vunpack.c.l.b16 %v2497
      %v3042 = vunpack.c.l.b16 %v2498
      %v3043 = vunpack.c.l.b16 %v2499
      %v3044 = vunpack.c.l.b16 %v2500
      %v3045 = vunpack.c.l.b16 %v2501
      %v3046 = vunpack.c.l.b16 %v2502
      %v3047 = vunpack.c.l.b16 %v2503
      %v3048 = vunpack.c.l.b16 %v2504
      %v3049 = vunpack.c.l.b16 %v2505
      %v3050 = vunpack.c.l.b16 %v2506
      %v3051 = vunpack.c.l.b16 %v2507
      %v3052 = vunpack.c.l.b16 %v2508
      %v3053 = vunpack.c.l.b16 %v2509
      %v3054 = vunpack.c.l.b16 %v2510
      %v3055 = vunpack.c.l.b16 %v2511
      %v3056 = vunpack.c.l.b16 %v2512
      %v3057 = vunpack.c.l.b16 %v2513
      %v3058 = vunpack.c.l.b16 %v2514
      %v3059 = vunpack.c.l.b16 %v2515
      %v3060 = vunpack.c.l.b16 %v2516
      %v3061 = vunpack.c.l.b16 %v2517
      %v3062 = vunpack.c.l.b16 %v2518
      %v3063 = vunpack.c.l.b16 %v2519
      %v3064 = vunpack.c.l.b16 %v2520
      %v3065 = vunpack.c.l.b16 %v2521
      %v3066 = vunpack.c.l.b16 %v2522
      %v3067 = vunpack.c.l.b16 %v2523
      %v3068 = vpack.c.b16 %v2997, %v2996
      %v3069 = vpack.c.b16 %v2999, %v2998
      %v3070 = vpack.c.b16 %v3001, %v3000
      %v3071 = vpack.c.b16 %v3003, %v3002
      %v3072 = vpack.c.b16 %v3005, %v3004
      %v3073 = vpack.c.b16 %v3007, %v3006
      %v3074 = vpack.c.b16 %v3009, %v3008
      %v3075 = vpack.c.b16 %v3011, %v3010
      %v3076 = vpack.c.b16 %v3013, %v3012
      %v3077 = vpack.c.b16 %v3015, %v3014
      %v3078 = vpack.c.b16 %v3017, %v3016
      %v3079 = vpack.c.b16 %v3019, %v3018
      %v3080 = vpack.c.b16 %v3021, %v3020
      %v3081 = vpack.c.b16 %v3023, %v3022
      %v3082 = vpack.c.b16 %v3025, %v3024
      %v3083 = vpack.c.b16 %v3027, %v3026
      %v3084 = vpack.c.b16 %v3029, %v3028
      %v3085 = vpack.c.b16 %v3031, %v3030
      %v3086 = vpack.c.b16 %v3033, %v3032
      %v3087 = vpack.c.b16 %v3035, %v3034
      %v3088 = vpack.c.b16 %v3037, %v3036
      %v3089 = vpack.c.b16 %v3039, %v3038
      %v3090 = vpack.c.b16 %v3041, %v3040
      %v3091 = vpack.c.b16 %v3043, %v3042
      %v3092 = vpack.c.b16 %v3045, %v3044
      %v3093 = vpack.c.b16 %v3047, %v3046
      %v3094 = vpack.c.b16 %v3049, %v3048
      %v3095 = vpack.c.b16 %v3051, %v3050
      %v3096 = vpack.c.b16 %v3053, %v3052
      %v3097 = vpack.c.b16 %v3055, %v3054
      %v3098 = vpack.c.b16 %v3057, %v3056
      %v3099 = vpack.c.b16 %v3059, %v3058
      %v3100 = vpack.c.b16 %v3061, %v3060
      %v3101 = vpack.c.b16 %v3063, %v3062
      %v3102 = vpack.c.b16 %v3065, %v3064
      %v3103 = vpack.c.b16 %v3067, %v3066
      %v3141 = vsel %vm216, %v2784, 0
      %v3144 = vsel %vm216, %v2789, 0
      %v3147 = vsel %vm216, %v2794, 0
      %v3150 = vsel %vm216, %v2799, 0
      %v3153 = vsel %vm216, %v2804, 0
      %v3156 = vsel %vm216, %v2809, 0
      %v3159 = vsel %vm216, %v2814, 0
      %v3162 = vsel %vm216, %v2819, 0
      %v3165 = vsel %vm216, %v2824, 0
      %v3168 = vsel %vm216, %v2829, 0
      %v3171 = vsel %vm216, %v2834, 0
      %v3174 = vsel %vm216, %v2839, 0
      %v3177 = vsel %vm216, %v2844, 0
      %v3180 = vsel %vm216, %v2849, 0
      %v3183 = vsel %vm216, %v2854, 0
      %v3186 = vsel %vm216, %v2859, 0
      %3188 = vmatprep.subr.bf16.mxu0 0
      %3189 = vmatpush1.bf16.msra.mxu0 %v3075
      %3190 = vmatprep.subr.bf16.mxu0 0
      %3191 = vmatpush1.bf16.msra.mxu0 %v3074
      %3192 = vmatprep.subr.bf16.mxu0 0
      %3193 = vmatpush1.bf16.msra.mxu0 %v3073
      %3194 = vmatprep.subr.bf16.mxu0 0
      %3195 = vmatpush1.bf16.msra.mxu0 %v3072
      %3196 = vmatprep.subr.bf16.mxu0 0
      %3197 = vmatpush1.bf16.msra.mxu0 %v3071
      %3198 = vmatprep.subr.bf16.mxu0 0
      %3199 = vmatpush1.bf16.msra.mxu0 %v3070
      %3200 = vmatprep.subr.bf16.mxu0 0
      %3201 = vmatpush1.bf16.msra.mxu0 %v3069
      %3202 = vmatprep.subr.bf16.mxu0 0
      %3203 = vmatpush1.bf16.msra.mxu0 %v3068
      %3204 = vmatprep.subr.bf16.mxu0 0
      %3205 = vmatpush2.bf16.msra.mxu0 %v3083
      %3206 = vmatprep.subr.bf16.mxu0 0
      %3207 = vmatpush2.bf16.msra.mxu0 %v3082
      %3208 = vmatprep.subr.bf16.mxu0 0
      %3209 = vmatpush2.bf16.msra.mxu0 %v3081
      %3210 = vmatprep.subr.bf16.mxu0 0
      %3211 = vmatpush2.bf16.msra.mxu0 %v3080
      %3212 = vmatprep.subr.bf16.mxu0 0
      %3213 = vmatpush2.bf16.msra.mxu0 %v3079
      %3214 = vmatprep.subr.bf16.mxu0 0
      %3215 = vmatpush2.bf16.msra.mxu0 %v3078
      %3216 = vmatprep.subr.bf16.mxu0 0
      %3217 = vmatpush2.bf16.msra.mxu0 %v3077
      %3218 = vmatprep.subr.bf16.mxu0 0
      %3219 = vmatpush2.bf16.msra.mxu0 %v3076
      %3220 = vmatprep.mubr.bf16.mxu0 %v2781
      %3221 = vmatmul.mubr.bf16.gmra.mxu0 %v2780
      %v3222 = vpop.f32.mrf.mxu0
      %v3223 = vadd.f32 0.0, %v3222
      %v3224 = vpop.f32.mrf.mxu0
      %v3225 = vpop.f32.mrf.mxu0
      %v3226 = vadd.f32 0.0, %v3225
      %v3227 = vpop.f32.mrf.mxu0
      %3228 = vmatprep.mubr.bf16.mxu0 %v2786
      %3229 = vmatmul.mubr.bf16.gmra.mxu0 %v2785
      %v3230 = vpop.f32.mrf.mxu0
      %v3231 = vadd.f32 0.0, %v3230
      %v3232 = vpop.f32.mrf.mxu0
      %v3233 = vpop.f32.mrf.mxu0
      %v3234 = vadd.f32 0.0, %v3233
      %v3235 = vpop.f32.mrf.mxu0
      %3236 = vmatprep.mubr.bf16.mxu0 %v2791
      %3237 = vmatmul.mubr.bf16.gmra.mxu0 %v2790
      %v3238 = vpop.f32.mrf.mxu0
      %v3239 = vadd.f32 0.0, %v3238
      %v3240 = vpop.f32.mrf.mxu0
      %v3241 = vpop.f32.mrf.mxu0
      %v3242 = vadd.f32 0.0, %v3241
      %v3243 = vpop.f32.mrf.mxu0
      %3244 = vmatprep.mubr.bf16.mxu0 %v2796
      %3245 = vmatmul.mubr.bf16.gmra.mxu0 %v2795
      %v3246 = vpop.f32.mrf.mxu0
      %v3247 = vadd.f32 0.0, %v3246
      %v3248 = vpop.f32.mrf.mxu0
      %v3249 = vpop.f32.mrf.mxu0
      %v3250 = vadd.f32 0.0, %v3249
      %v3251 = vpop.f32.mrf.mxu0
      %3252 = vmatprep.mubr.bf16.mxu0 %v2801
      %3253 = vmatmul.mubr.bf16.gmra.mxu0 %v2800
      %v3254 = vpop.f32.mrf.mxu0
      %v3255 = vadd.f32 0.0, %v3254
      %v3256 = vpop.f32.mrf.mxu0
      %v3257 = vpop.f32.mrf.mxu0
      %v3258 = vadd.f32 0.0, %v3257
      %v3259 = vpop.f32.mrf.mxu0
      %3260 = vmatprep.mubr.bf16.mxu0 %v2806
      %3261 = vmatmul.mubr.bf16.gmra.mxu0 %v2805
      %v3262 = vpop.f32.mrf.mxu0
      %v3263 = vadd.f32 0.0, %v3262
      %v3264 = vpop.f32.mrf.mxu0
      %v3265 = vpop.f32.mrf.mxu0
      %v3266 = vadd.f32 0.0, %v3265
      %v3267 = vpop.f32.mrf.mxu0
      %3268 = vmatprep.mubr.bf16.mxu0 %v2811
      %3269 = vmatmul.mubr.bf16.gmra.mxu0 %v2810
      %v3270 = vpop.f32.mrf.mxu0
      %v3271 = vadd.f32 0.0, %v3270
      %v3272 = vpop.f32.mrf.mxu0
      %v3273 = vpop.f32.mrf.mxu0
      %v3274 = vadd.f32 0.0, %v3273
      %v3275 = vpop.f32.mrf.mxu0
      %3276 = vmatprep.mubr.bf16.mxu0 %v2816
      %3277 = vmatmul.mubr.bf16.gmra.mxu0 %v2815
      %v3278 = vpop.f32.mrf.mxu0
      %v3279 = vadd.f32 0.0, %v3278
      %v3280 = vpop.f32.mrf.mxu0
      %v3281 = vpop.f32.mrf.mxu0
      %v3282 = vadd.f32 0.0, %v3281
      %v3283 = vpop.f32.mrf.mxu0
      %3284 = vmatprep.mubr.bf16.mxu0 %v2821
      %3285 = vmatmul.mubr.bf16.gmra.mxu0 %v2820
      %v3286 = vpop.f32.mrf.mxu0
      %v3287 = vadd.f32 0.0, %v3286
      %v3288 = vpop.f32.mrf.mxu0
      %v3289 = vpop.f32.mrf.mxu0
      %v3290 = vadd.f32 0.0, %v3289
      %v3291 = vpop.f32.mrf.mxu0
      %3292 = vmatprep.mubr.bf16.mxu0 %v2826
      %3293 = vmatmul.mubr.bf16.gmra.mxu0 %v2825
      %v3294 = vpop.f32.mrf.mxu0
      %v3295 = vadd.f32 0.0, %v3294
      %v3296 = vpop.f32.mrf.mxu0
      %v3297 = vpop.f32.mrf.mxu0
      %v3298 = vadd.f32 0.0, %v3297
      %v3299 = vpop.f32.mrf.mxu0
      %3300 = vmatprep.mubr.bf16.mxu0 %v2831
      %3301 = vmatmul.mubr.bf16.gmra.mxu0 %v2830
      %v3302 = vpop.f32.mrf.mxu0
      %v3303 = vadd.f32 0.0, %v3302
      %v3304 = vpop.f32.mrf.mxu0
      %v3305 = vpop.f32.mrf.mxu0
      %v3306 = vadd.f32 0.0, %v3305
      %v3307 = vpop.f32.mrf.mxu0
      %3308 = vmatprep.mubr.bf16.mxu0 %v2836
      %3309 = vmatmul.mubr.bf16.gmra.mxu0 %v2835
      %v3310 = vpop.f32.mrf.mxu0
      %v3311 = vadd.f32 0.0, %v3310
      %v3312 = vpop.f32.mrf.mxu0
      %v3313 = vpop.f32.mrf.mxu0
      %v3314 = vadd.f32 0.0, %v3313
      %v3315 = vpop.f32.mrf.mxu0
      %3316 = vmatprep.mubr.bf16.mxu0 %v2841
      %3317 = vmatmul.mubr.bf16.gmra.mxu0 %v2840
      %v3318 = vpop.f32.mrf.mxu0
      %v3319 = vadd.f32 0.0, %v3318
      %v3320 = vpop.f32.mrf.mxu0
      %v3321 = vpop.f32.mrf.mxu0
      %v3322 = vadd.f32 0.0, %v3321
      %v3323 = vpop.f32.mrf.mxu0
      %3324 = vmatprep.mubr.bf16.mxu0 %v2846
      %3325 = vmatmul.mubr.bf16.gmra.mxu0 %v2845
      %v3326 = vpop.f32.mrf.mxu0
      %v3327 = vadd.f32 0.0, %v3326
      %v3328 = vpop.f32.mrf.mxu0
      %v3329 = vpop.f32.mrf.mxu0
      %v3330 = vadd.f32 0.0, %v3329
      %v3331 = vpop.f32.mrf.mxu0
      %3332 = vmatprep.mubr.bf16.mxu0 %v2851
      %3333 = vmatmul.mubr.bf16.gmra.mxu0 %v2850
      %v3334 = vpop.f32.mrf.mxu0
      %v3335 = vadd.f32 0.0, %v3334
      %v3336 = vpop.f32.mrf.mxu0
      %v3337 = vpop.f32.mrf.mxu0
      %v3338 = vadd.f32 0.0, %v3337
      %v3339 = vpop.f32.mrf.mxu0
      %3340 = vmatprep.mubr.bf16.mxu0 %v2856
      %3341 = vmatmul.mubr.bf16.gmra.mxu0 %v2855
      %v3342 = vpop.f32.mrf.mxu0
      %v3343 = vadd.f32 0.0, %v3342
      %v3344 = vpop.f32.mrf.mxu0
      %v3345 = vpop.f32.mrf.mxu0
      %v3346 = vadd.f32 0.0, %v3345
      %v3347 = vpop.f32.mrf.mxu0
      %3348 = vdwg.mxu0
      %3349 = vmatprep.subr.bf16.mxu0 0
      %3350 = vmatpush1.bf16.msra.mxu0 %v3091
      %3351 = vmatprep.subr.bf16.mxu0 0
      %3352 = vmatpush1.bf16.msra.mxu0 %v3090
      %3353 = vmatprep.subr.bf16.mxu0 0
      %3354 = vmatpush1.bf16.msra.mxu0 %v3089
      %3355 = vmatprep.subr.bf16.mxu0 0
      %3356 = vmatpush1.bf16.msra.mxu0 %v3088
      %3357 = vmatprep.subr.bf16.mxu0 0
      %3358 = vmatpush1.bf16.msra.mxu0 %v3087
      %3359 = vmatprep.subr.bf16.mxu0 0
      %3360 = vmatpush1.bf16.msra.mxu0 %v3086
      %3361 = vmatprep.subr.bf16.mxu0 0
      %3362 = vmatpush1.bf16.msra.mxu0 %v3085
      %3363 = vmatprep.subr.bf16.mxu0 0
      %3364 = vmatpush1.bf16.msra.mxu0 %v3084
      %3365 = vmatprep.subr.bf16.mxu0 0
      %3366 = vmatpush2.bf16.msra.mxu0 %v3099
      %3367 = vmatprep.subr.bf16.mxu0 0
      %3368 = vmatpush2.bf16.msra.mxu0 %v3098
      %3369 = vmatprep.subr.bf16.mxu0 0
      %3370 = vmatpush2.bf16.msra.mxu0 %v3097
      %3371 = vmatprep.subr.bf16.mxu0 0
      %3372 = vmatpush2.bf16.msra.mxu0 %v3096
      %3373 = vmatprep.subr.bf16.mxu0 0
      %3374 = vmatpush2.bf16.msra.mxu0 %v3095
      %3375 = vmatprep.subr.bf16.mxu0 0
      %3376 = vmatpush2.bf16.msra.mxu0 %v3094
      %3377 = vmatprep.subr.bf16.mxu0 0
      %3378 = vmatpush2.bf16.msra.mxu0 %v3093
      %3379 = vmatprep.subr.bf16.mxu0 0
      %3380 = vmatpush2.bf16.msra.mxu0 %v3092
      %3381 = vmatprep.mubr.bf16.mxu0 %v2783
      %3382 = vmatmul.mubr.bf16.gmra.mxu0 %v2782
      %v3383 = vpop.f32.mrf.mxu0
      %v3384 = vadd.f32 %v3223, %v3383
      %v3385 = vpop.f32.mrf.mxu0
      %v3386 = vpop.f32.mrf.mxu0
      %v3387 = vadd.f32 %v3226, %v3386
      %v3388 = vpop.f32.mrf.mxu0
      %3389 = vmatprep.mubr.bf16.mxu0 %v2788
      %3390 = vmatmul.mubr.bf16.gmra.mxu0 %v2787
      %v3391 = vpop.f32.mrf.mxu0
      %v3392 = vadd.f32 %v3231, %v3391
      %v3393 = vpop.f32.mrf.mxu0
      %v3394 = vpop.f32.mrf.mxu0
      %v3395 = vadd.f32 %v3234, %v3394
      %v3396 = vpop.f32.mrf.mxu0
      %3397 = vmatprep.mubr.bf16.mxu0 %v2793
      %3398 = vmatmul.mubr.bf16.gmra.mxu0 %v2792
      %v3399 = vpop.f32.mrf.mxu0
      %v3400 = vadd.f32 %v3239, %v3399
      %v3401 = vpop.f32.mrf.mxu0
      %v3402 = vpop.f32.mrf.mxu0
      %v3403 = vadd.f32 %v3242, %v3402
      %v3404 = vpop.f32.mrf.mxu0
      %3405 = vmatprep.mubr.bf16.mxu0 %v2798
      %3406 = vmatmul.mubr.bf16.gmra.mxu0 %v2797
      %v3407 = vpop.f32.mrf.mxu0
      %v3408 = vadd.f32 %v3247, %v3407
      %v3409 = vpop.f32.mrf.mxu0
      %v3410 = vpop.f32.mrf.mxu0
      %v3411 = vadd.f32 %v3250, %v3410
      %v3412 = vpop.f32.mrf.mxu0
      %3413 = vmatprep.mubr.bf16.mxu0 %v2803
      %3414 = vmatmul.mubr.bf16.gmra.mxu0 %v2802
      %v3415 = vpop.f32.mrf.mxu0
      %v3416 = vadd.f32 %v3255, %v3415
      %v3417 = vpop.f32.mrf.mxu0
      %v3418 = vpop.f32.mrf.mxu0
      %v3419 = vadd.f32 %v3258, %v3418
      %v3420 = vpop.f32.mrf.mxu0
      %3421 = vmatprep.mubr.bf16.mxu0 %v2808
      %3422 = vmatmul.mubr.bf16.gmra.mxu0 %v2807
      %v3423 = vpop.f32.mrf.mxu0
      %v3424 = vadd.f32 %v3263, %v3423
      %v3425 = vpop.f32.mrf.mxu0
      %v3426 = vpop.f32.mrf.mxu0
      %v3427 = vadd.f32 %v3266, %v3426
      %v3428 = vpop.f32.mrf.mxu0
      %3429 = vmatprep.mubr.bf16.mxu0 %v2813
      %3430 = vmatmul.mubr.bf16.gmra.mxu0 %v2812
      %v3431 = vpop.f32.mrf.mxu0
      %v3432 = vadd.f32 %v3271, %v3431
      %v3433 = vpop.f32.mrf.mxu0
      %v3434 = vpop.f32.mrf.mxu0
      %v3435 = vadd.f32 %v3274, %v3434
      %v3436 = vpop.f32.mrf.mxu0
      %3437 = vmatprep.mubr.bf16.mxu0 %v2818
      %3438 = vmatmul.mubr.bf16.gmra.mxu0 %v2817
      %v3439 = vpop.f32.mrf.mxu0
      %v3440 = vadd.f32 %v3279, %v3439
      %v3441 = vpop.f32.mrf.mxu0
      %v3442 = vpop.f32.mrf.mxu0
      %v3443 = vadd.f32 %v3282, %v3442
      %v3444 = vpop.f32.mrf.mxu0
      %3445 = vmatprep.mubr.bf16.mxu0 %v2823
      %3446 = vmatmul.mubr.bf16.gmra.mxu0 %v2822
      %v3447 = vpop.f32.mrf.mxu0
      %v3448 = vadd.f32 %v3287, %v3447
      %v3449 = vpop.f32.mrf.mxu0
      %v3450 = vpop.f32.mrf.mxu0
      %v3451 = vadd.f32 %v3290, %v3450
      %v3452 = vpop.f32.mrf.mxu0
      %3453 = vmatprep.mubr.bf16.mxu0 %v2828
      %3454 = vmatmul.mubr.bf16.gmra.mxu0 %v2827
      %v3455 = vpop.f32.mrf.mxu0
      %v3456 = vadd.f32 %v3295, %v3455
      %v3457 = vpop.f32.mrf.mxu0
      %v3458 = vpop.f32.mrf.mxu0
      %v3459 = vadd.f32 %v3298, %v3458
      %v3460 = vpop.f32.mrf.mxu0
      %3461 = vmatprep.mubr.bf16.mxu0 %v2833
      %3462 = vmatmul.mubr.bf16.gmra.mxu0 %v2832
      %v3463 = vpop.f32.mrf.mxu0
      %v3464 = vadd.f32 %v3303, %v3463
      %v3465 = vpop.f32.mrf.mxu0
      %v3466 = vpop.f32.mrf.mxu0
      %v3467 = vadd.f32 %v3306, %v3466
      %v3468 = vpop.f32.mrf.mxu0
      %3469 = vmatprep.mubr.bf16.mxu0 %v2838
      %3470 = vmatmul.mubr.bf16.gmra.mxu0 %v2837
      %v3471 = vpop.f32.mrf.mxu0
      %v3472 = vadd.f32 %v3311, %v3471
      %v3473 = vpop.f32.mrf.mxu0
      %v3474 = vpop.f32.mrf.mxu0
      %v3475 = vadd.f32 %v3314, %v3474
      %v3476 = vpop.f32.mrf.mxu0
      %3477 = vmatprep.mubr.bf16.mxu0 %v2843
      %3478 = vmatmul.mubr.bf16.gmra.mxu0 %v2842
      %v3479 = vpop.f32.mrf.mxu0
      %v3480 = vadd.f32 %v3319, %v3479
      %v3481 = vpop.f32.mrf.mxu0
      %v3482 = vpop.f32.mrf.mxu0
      %v3483 = vadd.f32 %v3322, %v3482
      %v3484 = vpop.f32.mrf.mxu0
      %3485 = vmatprep.mubr.bf16.mxu0 %v2848
      %3486 = vmatmul.mubr.bf16.gmra.mxu0 %v2847
      %v3487 = vpop.f32.mrf.mxu0
      %v3488 = vadd.f32 %v3327, %v3487
      %v3489 = vpop.f32.mrf.mxu0
      %v3490 = vpop.f32.mrf.mxu0
      %v3491 = vadd.f32 %v3330, %v3490
      %v3492 = vpop.f32.mrf.mxu0
      %3493 = vmatprep.mubr.bf16.mxu0 %v2853
      %3494 = vmatmul.mubr.bf16.gmra.mxu0 %v2852
      %v3495 = vpop.f32.mrf.mxu0
      %v3496 = vadd.f32 %v3335, %v3495
      %v3497 = vpop.f32.mrf.mxu0
      %v3498 = vpop.f32.mrf.mxu0
      %v3499 = vadd.f32 %v3338, %v3498
      %v3500 = vpop.f32.mrf.mxu0
      %3501 = vmatprep.mubr.bf16.mxu0 %v2858
      %3502 = vmatmul.mubr.bf16.gmra.mxu0 %v2857
      %v3503 = vpop.f32.mrf.mxu0
      %v3504 = vadd.f32 %v3343, %v3503
      %v3505 = vpop.f32.mrf.mxu0
      %v3506 = vpop.f32.mrf.mxu0
      %v3507 = vadd.f32 %v3346, %v3506
      %v3508 = vpop.f32.mrf.mxu0
      %3509 = vdwg.mxu0
      %3510 = vmatprep.subr.bf16.mxu0 0
      %3511 = vmatpush1.bf16.msra.mxu0 0
      %3512 = vmatprep.subr.bf16.mxu0 0
      %3513 = vmatpush1.bf16.msra.mxu0 0
      %3514 = vmatprep.subr.bf16.mxu0 0
      %3515 = vmatpush1.bf16.msra.mxu0 0
      %3516 = vmatprep.subr.bf16.mxu0 0
      %3517 = vmatpush1.bf16.msra.mxu0 0
      %3518 = vmatprep.subr.bf16.mxu0 0
      %3519 = vmatpush1.bf16.msra.mxu0 %v3103
      %3520 = vmatprep.subr.bf16.mxu0 0
      %3521 = vmatpush1.bf16.msra.mxu0 %v3102
      %3522 = vmatprep.subr.bf16.mxu0 0
      %3523 = vmatpush1.bf16.msra.mxu0 %v3101
      %3524 = vmatprep.subr.bf16.mxu0 0
      %3525 = vmatpush1.bf16.msra.mxu0 %v3100
      %3526 = vmatprep.subr.bf16.mxu0 0
      %3527 = vmatpush2.bf16.msra.mxu0 0
      %3528 = vmatprep.subr.bf16.mxu0 0
      %3529 = vmatpush2.bf16.msra.mxu0 0
      %3530 = vmatprep.subr.bf16.mxu0 0
      %3531 = vmatpush2.bf16.msra.mxu0 0
      %3532 = vmatprep.subr.bf16.mxu0 0
      %3533 = vmatpush2.bf16.msra.mxu0 0
      %3534 = vmatprep.subr.bf16.mxu0 0
      %3535 = vmatpush2.bf16.msra.mxu0 0
      %3536 = vmatprep.subr.bf16.mxu0 0
      %3537 = vmatpush2.bf16.msra.mxu0 0
      %3538 = vmatprep.subr.bf16.mxu0 0
      %3539 = vmatpush2.bf16.msra.mxu0 0
      %3540 = vmatprep.subr.bf16.mxu0 0
      %3541 = vmatpush2.bf16.msra.mxu0 0
      %3542 = vmatprep.mubr.bf16.mxu0 0
      %3543 = vmatmul.mubr.bf16.gmra.mxu0 %v3141
      %v3544 = vpop.f32.mrf.mxu0
      %v3545 = vadd.f32 %v3384, %v3544
      %v3546 = vpop.f32.mrf.mxu0
      %v3547 = vpop.f32.mrf.mxu0
      %v3548 = vadd.f32 %v3387, %v3547
      %v3549 = vpop.f32.mrf.mxu0
      %3550 = vmatprep.mubr.bf16.mxu0 0
      %3551 = vmatmul.mubr.bf16.gmra.mxu0 %v3144
      %v3552 = vpop.f32.mrf.mxu0
      %v3553 = vadd.f32 %v3392, %v3552
      %v3554 = vpop.f32.mrf.mxu0
      %v3555 = vpop.f32.mrf.mxu0
      %v3556 = vadd.f32 %v3395, %v3555
      %v3557 = vpop.f32.mrf.mxu0
      %3558 = vmatprep.mubr.bf16.mxu0 0
      %3559 = vmatmul.mubr.bf16.gmra.mxu0 %v3147
      %v3560 = vpop.f32.mrf.mxu0
      %v3561 = vadd.f32 %v3400, %v3560
      %v3562 = vpop.f32.mrf.mxu0
      %v3563 = vpop.f32.mrf.mxu0
      %v3564 = vadd.f32 %v3403, %v3563
      %v3565 = vpop.f32.mrf.mxu0
      %3566 = vmatprep.mubr.bf16.mxu0 0
      %3567 = vmatmul.mubr.bf16.gmra.mxu0 %v3150
      %v3568 = vpop.f32.mrf.mxu0
      %v3569 = vadd.f32 %v3408, %v3568
      %v3570 = vpop.f32.mrf.mxu0
      %v3571 = vpop.f32.mrf.mxu0
      %v3572 = vadd.f32 %v3411, %v3571
      %v3573 = vpop.f32.mrf.mxu0
      %3574 = vmatprep.mubr.bf16.mxu0 0
      %3575 = vmatmul.mubr.bf16.gmra.mxu0 %v3153
      %v3576 = vpop.f32.mrf.mxu0
      %v3577 = vadd.f32 %v3416, %v3576
      %v3578 = vpop.f32.mrf.mxu0
      %v3579 = vpop.f32.mrf.mxu0
      %v3580 = vadd.f32 %v3419, %v3579
      %v3581 = vpop.f32.mrf.mxu0
      %3582 = vmatprep.mubr.bf16.mxu0 0
      %3583 = vmatmul.mubr.bf16.gmra.mxu0 %v3156
      %v3584 = vpop.f32.mrf.mxu0
      %v3585 = vadd.f32 %v3424, %v3584
      %v3586 = vpop.f32.mrf.mxu0
      %v3587 = vpop.f32.mrf.mxu0
      %v3588 = vadd.f32 %v3427, %v3587
      %v3589 = vpop.f32.mrf.mxu0
      %3590 = vmatprep.mubr.bf16.mxu0 0
      %3591 = vmatmul.mubr.bf16.gmra.mxu0 %v3159
      %v3592 = vpop.f32.mrf.mxu0
      %v3593 = vadd.f32 %v3432, %v3592
      %v3594 = vpop.f32.mrf.mxu0
      %v3595 = vpop.f32.mrf.mxu0
      %v3596 = vadd.f32 %v3435, %v3595
      %v3597 = vpop.f32.mrf.mxu0
      %3598 = vmatprep.mubr.bf16.mxu0 0
      %3599 = vmatmul.mubr.bf16.gmra.mxu0 %v3162
      %v3600 = vpop.f32.mrf.mxu0
      %v3601 = vadd.f32 %v3440, %v3600
      %v3602 = vpop.f32.mrf.mxu0
      %v3603 = vpop.f32.mrf.mxu0
      %v3604 = vadd.f32 %v3443, %v3603
      %v3605 = vpop.f32.mrf.mxu0
      %3606 = vmatprep.mubr.bf16.mxu0 0
      %3607 = vmatmul.mubr.bf16.gmra.mxu0 %v3165
      %v3608 = vpop.f32.mrf.mxu0
      %v3609 = vadd.f32 %v3448, %v3608
      %v3610 = vpop.f32.mrf.mxu0
      %v3611 = vpop.f32.mrf.mxu0
      %v3612 = vadd.f32 %v3451, %v3611
      %v3613 = vpop.f32.mrf.mxu0
      %3614 = vmatprep.mubr.bf16.mxu0 0
      %3615 = vmatmul.mubr.bf16.gmra.mxu0 %v3168
      %v3616 = vpop.f32.mrf.mxu0
      %v3617 = vadd.f32 %v3456, %v3616
      %v3618 = vpop.f32.mrf.mxu0
      %v3619 = vpop.f32.mrf.mxu0
      %v3620 = vadd.f32 %v3459, %v3619
      %v3621 = vpop.f32.mrf.mxu0
      %3622 = vmatprep.mubr.bf16.mxu0 0
      %3623 = vmatmul.mubr.bf16.gmra.mxu0 %v3171
      %v3624 = vpop.f32.mrf.mxu0
      %v3625 = vadd.f32 %v3464, %v3624
      %v3626 = vpop.f32.mrf.mxu0
      %v3627 = vpop.f32.mrf.mxu0
      %v3628 = vadd.f32 %v3467, %v3627
      %v3629 = vpop.f32.mrf.mxu0
      %3630 = vmatprep.mubr.bf16.mxu0 0
      %3631 = vmatmul.mubr.bf16.gmra.mxu0 %v3174
      %v3632 = vpop.f32.mrf.mxu0
      %v3633 = vadd.f32 %v3472, %v3632
      %v3634 = vpop.f32.mrf.mxu0
      %v3635 = vpop.f32.mrf.mxu0
      %v3636 = vadd.f32 %v3475, %v3635
      %v3637 = vpop.f32.mrf.mxu0
      %3638 = vmatprep.mubr.bf16.mxu0 0
      %3639 = vmatmul.mubr.bf16.gmra.mxu0 %v3177
      %v3640 = vpop.f32.mrf.mxu0
      %v3641 = vadd.f32 %v3480, %v3640
      %v3642 = vpop.f32.mrf.mxu0
      %v3643 = vpop.f32.mrf.mxu0
      %v3644 = vadd.f32 %v3483, %v3643
      %v3645 = vpop.f32.mrf.mxu0
      %3646 = vmatprep.mubr.bf16.mxu0 0
      %3647 = vmatmul.mubr.bf16.gmra.mxu0 %v3180
      %v3648 = vpop.f32.mrf.mxu0
      %v3649 = vadd.f32 %v3488, %v3648
      %v3650 = vpop.f32.mrf.mxu0
      %v3651 = vpop.f32.mrf.mxu0
      %v3652 = vadd.f32 %v3491, %v3651
      %v3653 = vpop.f32.mrf.mxu0
      %3654 = vmatprep.mubr.bf16.mxu0 0
      %3655 = vmatmul.mubr.bf16.gmra.mxu0 %v3183
      %v3656 = vpop.f32.mrf.mxu0
      %v3657 = vadd.f32 %v3496, %v3656
      %v3658 = vpop.f32.mrf.mxu0
      %v3659 = vpop.f32.mrf.mxu0
      %v3660 = vadd.f32 %v3499, %v3659
      %v3661 = vpop.f32.mrf.mxu0
      %3662 = vmatprep.mubr.bf16.mxu0 0
      %3663 = vmatmul.mubr.bf16.gmra.mxu0 %v3186
      %v3664 = vpop.f32.mrf.mxu0
      %v3665 = vadd.f32 %v3504, %v3664
      %v3666 = vpop.f32.mrf.mxu0
      %v3667 = vpop.f32.mrf.mxu0
      %v3668 = vadd.f32 %v3507, %v3667
      %v3669 = vpop.f32.mrf.mxu0
      %3670 = vdwg.mxu0
      %v3671 = vpack.c.bf16 %v3548, %v3545
      %v3672 = vpack.c.bf16 %v3556, %v3553
      %v3673 = vpack.c.bf16 %v3564, %v3561
      %v3674 = vpack.c.bf16 %v3572, %v3569
      %v3675 = vpack.c.bf16 %v3580, %v3577
      %v3676 = vpack.c.bf16 %v3588, %v3585
      %v3677 = vpack.c.bf16 %v3596, %v3593
      %v3678 = vpack.c.bf16 %v3604, %v3601
      %v3679 = vpack.c.bf16 %v3612, %v3609
      %v3680 = vpack.c.bf16 %v3620, %v3617
      %v3681 = vpack.c.bf16 %v3628, %v3625
      %v3682 = vpack.c.bf16 %v3636, %v3633
      %v3683 = vpack.c.bf16 %v3644, %v3641
      %v3684 = vpack.c.bf16 %v3652, %v3649
      %v3685 = vpack.c.bf16 %v3660, %v3657
      %v3686 = vpack.c.bf16 %v3668, %v3665
      %v3703 = vunpack.c.l.b16 %v3671
      %v3704 = vunpack.c.h.b16 %v3671
      %v3705 = vunpack.c.l.b16 %v3672
      %v3706 = vunpack.c.h.b16 %v3672
      %v3707 = vunpack.c.l.b16 %v3673
      %v3708 = vunpack.c.h.b16 %v3673
      %v3709 = vunpack.c.l.b16 %v3674
      %v3710 = vunpack.c.h.b16 %v3674
      %v3711 = vunpack.c.l.b16 %v3675
      %v3712 = vunpack.c.h.b16 %v3675
      %v3713 = vunpack.c.l.b16 %v3676
      %v3714 = vunpack.c.h.b16 %v3676
      %v3715 = vunpack.c.l.b16 %v3677
      %v3716 = vunpack.c.h.b16 %v3677
      %v3717 = vunpack.c.l.b16 %v3678
      %v3718 = vunpack.c.h.b16 %v3678
      %v3719 = vunpack.c.l.b16 %v3679
      %v3720 = vunpack.c.h.b16 %v3679
      %v3721 = vunpack.c.l.b16 %v3680
      %v3722 = vunpack.c.h.b16 %v3680
      %v3723 = vunpack.c.l.b16 %v3681
      %v3724 = vunpack.c.h.b16 %v3681
      %v3725 = vunpack.c.l.b16 %v3682
      %v3726 = vunpack.c.h.b16 %v3682
      %v3727 = vunpack.c.l.b16 %v3683
      %v3728 = vunpack.c.h.b16 %v3683
      %v3729 = vunpack.c.l.b16 %v3684
      %v3730 = vunpack.c.h.b16 %v3684
      %v3731 = vunpack.c.l.b16 %v3685
      %v3732 = vunpack.c.h.b16 %v3685
      %v3733 = vunpack.c.l.b16 %v3686
      %v3734 = vunpack.c.h.b16 %v3686
      %v3735 = vpack.c.b16 %v3703, %v3703
      %v3736 = vpack.c.b16 %v3704, %v3704
      %v3737 = vpack.c.b16 %v3705, %v3705
      %v3738 = vpack.c.b16 %v3706, %v3706
      %v3739 = vpack.c.b16 %v3707, %v3707
      %v3740 = vpack.c.b16 %v3708, %v3708
      %v3741 = vpack.c.b16 %v3709, %v3709
      %v3742 = vpack.c.b16 %v3710, %v3710
      %v3743 = vpack.c.b16 %v3711, %v3711
      %v3744 = vpack.c.b16 %v3712, %v3712
      %v3745 = vpack.c.b16 %v3713, %v3713
      %v3746 = vpack.c.b16 %v3714, %v3714
      %v3747 = vpack.c.b16 %v3715, %v3715
      %v3748 = vpack.c.b16 %v3716, %v3716
      %v3749 = vpack.c.b16 %v3717, %v3717
      %v3750 = vpack.c.b16 %v3718, %v3718
      %v3751 = vpack.c.b16 %v3719, %v3719
      %v3752 = vpack.c.b16 %v3720, %v3720
      %v3753 = vpack.c.b16 %v3721, %v3721
      %v3754 = vpack.c.b16 %v3722, %v3722
      %v3755 = vpack.c.b16 %v3723, %v3723
      %v3756 = vpack.c.b16 %v3724, %v3724
      %v3757 = vpack.c.b16 %v3725, %v3725
      %v3758 = vpack.c.b16 %v3726, %v3726
      %v3759 = vpack.c.b16 %v3727, %v3727
      %v3760 = vpack.c.b16 %v3728, %v3728
      %v3761 = vpack.c.b16 %v3729, %v3729
      %v3762 = vpack.c.b16 %v3730, %v3730
      %v3763 = vpack.c.b16 %v3731, %v3731
      %v3764 = vpack.c.b16 %v3732, %v3732
      %v3765 = vpack.c.b16 %v3733, %v3733
      %v3766 = vpack.c.b16 %v3734, %v3734
      %3799 = vst.msk [vmem:[%s208] sm:$0xf] %vm529, %v3735
      %3800 = vst.msk [vmem:[%s208 + $0x4] sm:$0xf] %vm529, %v3736
      %3801 = vst.msk [vmem:[%s208 + $0x8] sm:$0xf] %vm529, %v3737
      %3802 = vst.msk [vmem:[%s208 + $0xc] sm:$0xf] %vm529, %v3738
      %3803 = vst.msk [vmem:[%s208 + $0x10] sm:$0xf] %vm529, %v3739
      %3804 = vst.msk [vmem:[%s208 + $0x14] sm:$0xf] %vm529, %v3740
      %3805 = vst.msk [vmem:[%s208 + $0x18] sm:$0xf] %vm529, %v3741
      %3806 = vst.msk [vmem:[%s208 + $0x1c] sm:$0xf] %vm529, %v3742
      %3807 = vst.msk [vmem:[%s208 + $0x20] sm:$0xf] %vm529, %v3743
      %3808 = vst.msk [vmem:[%s208 + $0x24] sm:$0xf] %vm529, %v3744
      %3809 = vst.msk [vmem:[%s208 + $0x28] sm:$0xf] %vm529, %v3745
      %3810 = vst.msk [vmem:[%s208 + $0x2c] sm:$0xf] %vm529, %v3746
      %3811 = vst.msk [vmem:[%s208 + $0x30] sm:$0xf] %vm529, %v3747
      %3812 = vst.msk [vmem:[%s208 + $0x34] sm:$0xf] %vm529, %v3748
      %3813 = vst.msk [vmem:[%s208 + $0x38] sm:$0xf] %vm529, %v3749
      %3814 = vst.msk [vmem:[%s208 + $0x3c] sm:$0xf] %vm529, %v3750
      %3815 = vst.msk [vmem:[%s208 + $0x40] sm:$0xf] %vm529, %v3751
      %3816 = vst.msk [vmem:[%s208 + $0x44] sm:$0xf] %vm529, %v3752
      %3817 = vst.msk [vmem:[%s208 + $0x48] sm:$0xf] %vm529, %v3753
      %3818 = vst.msk [vmem:[%s208 + $0x4c] sm:$0xf] %vm529, %v3754
      %3819 = vst.msk [vmem:[%s208 + $0x50] sm:$0xf] %vm529, %v3755
      %3820 = vst.msk [vmem:[%s208 + $0x54] sm:$0xf] %vm529, %v3756
      %3821 = vst.msk [vmem:[%s208 + $0x58] sm:$0xf] %vm529, %v3757
      %3822 = vst.msk [vmem:[%s208 + $0x5c] sm:$0xf] %vm529, %v3758
      %3823 = vst.msk [vmem:[%s208 + $0x60] sm:$0xf] %vm529, %v3759
      %3824 = vst.msk [vmem:[%s208 + $0x64] sm:$0xf] %vm529, %v3760
      %3825 = vst.msk [vmem:[%s208 + $0x68] sm:$0xf] %vm529, %v3761
      %3826 = vst.msk [vmem:[%s208 + $0x6c] sm:$0xf] %vm529, %v3762
      %3827 = vst.msk [vmem:[%s208 + $0x70] sm:$0xf] %vm529, %v3763
      %3828 = vst.msk [vmem:[%s208 + $0x74] sm:$0xf] %vm529, %v3764
      %3829 = vst.msk [vmem:[%s208 + $0x78] sm:$0xf] %vm529, %v3765
      %3830 = vst.msk [vmem:[%s208 + $0x7c] sm:$0xf] %vm529, %v3766
      %v3831 = vsel %vm216, %v3545, 0.0
      %v3832 = vsel %vm216, %v3548, 0.0
      %v3833 = vadd.f32 %v3831, %v3832
      %v3834 = vsel %vm216, %v3553, 0.0
      %v3835 = vadd.f32 %v3833, %v3834
      %v3836 = vsel %vm216, %v3556, 0.0
      %v3837 = vadd.f32 %v3835, %v3836
      %v3838 = vsel %vm216, %v3561, 0.0
      %v3839 = vadd.f32 %v3837, %v3838
      %v3840 = vsel %vm216, %v3564, 0.0
      %v3841 = vadd.f32 %v3839, %v3840
      %v3842 = vsel %vm216, %v3569, 0.0
      %v3843 = vadd.f32 %v3841, %v3842
      %v3844 = vsel %vm216, %v3572, 0.0
      %v3845 = vadd.f32 %v3843, %v3844
      %v3846 = vsel %vm216, %v3577, 0.0
      %v3847 = vadd.f32 %v3845, %v3846
      %v3848 = vsel %vm216, %v3580, 0.0
      %v3849 = vadd.f32 %v3847, %v3848
      %v3850 = vsel %vm216, %v3585, 0.0
      %v3851 = vadd.f32 %v3849, %v3850
      %v3852 = vsel %vm216, %v3588, 0.0
      %v3853 = vadd.f32 %v3851, %v3852
      %v3854 = vsel %vm216, %v3593, 0.0
      %v3855 = vadd.f32 %v3853, %v3854
      %v3856 = vsel %vm216, %v3596, 0.0
      %v3857 = vadd.f32 %v3855, %v3856
      %v3858 = vsel %vm216, %v3601, 0.0
      %v3859 = vadd.f32 %v3857, %v3858
      %v3860 = vsel %vm216, %v3604, 0.0
      %v3861 = vadd.f32 %v3859, %v3860
      %v3862 = vsel %vm216, %v3609, 0.0
      %v3863 = vadd.f32 %v3861, %v3862
      %v3864 = vsel %vm216, %v3612, 0.0
      %v3865 = vadd.f32 %v3863, %v3864
      %v3866 = vsel %vm216, %v3617, 0.0
      %v3867 = vadd.f32 %v3865, %v3866
      %v3868 = vsel %vm216, %v3620, 0.0
      %v3869 = vadd.f32 %v3867, %v3868
      %v3870 = vsel %vm216, %v3625, 0.0
      %v3871 = vadd.f32 %v3869, %v3870
      %v3872 = vsel %vm216, %v3628, 0.0
      %v3873 = vadd.f32 %v3871, %v3872
      %v3874 = vsel %vm216, %v3633, 0.0
      %v3875 = vadd.f32 %v3873, %v3874
      %v3876 = vsel %vm216, %v3636, 0.0
      %v3877 = vadd.f32 %v3875, %v3876
      %v3878 = vsel %vm216, %v3641, 0.0
      %v3879 = vadd.f32 %v3877, %v3878
      %v3880 = vsel %vm216, %v3644, 0.0
      %v3881 = vadd.f32 %v3879, %v3880
      %v3882 = vsel %vm216, %v3649, 0.0
      %v3883 = vadd.f32 %v3881, %v3882
      %v3884 = vsel %vm216, %v3652, 0.0
      %v3885 = vadd.f32 %v3883, %v3884
      %v3886 = vsel %vm216, %v3657, 0.0
      %v3887 = vadd.f32 %v3885, %v3886
      %v3888 = vsel %vm216, %v3660, 0.0
      %v3889 = vadd.f32 %v3887, %v3888
      %v3890 = vsel %vm216, %v3665, 0.0
      %v3891 = vadd.f32 %v3889, %v3890
      %v3892 = vsel %vm216, %v3668, 0.0
      %v3893 = vadd.f32 %v3891, %v3892
      %v3894 = vrot.slane %v3893, 4
      %v3895 = vadd.f32 %v3893, %v3894
      %v3896 = vrot.slane %v3895, 2
      %v3897 = vadd.f32 %v3895, %v3896
      %v3898 = vrot.slane %v3897, 1
      %v3899 = vadd.f32 %v3897, %v3898
      %vm3900 = vcmask 516096
      %3901 = vst.msk [vmem:[%s211] sm:$0x1] %vm3900, %v3899
      %v3902 = vmul.f32 %v3545, %v3545
      %v3903 = vmul.f32 %v3548, %v3548
      %v3904 = vmul.f32 %v3553, %v3553
      %v3905 = vmul.f32 %v3556, %v3556
      %v3906 = vmul.f32 %v3561, %v3561
      %v3907 = vmul.f32 %v3564, %v3564
      %v3908 = vmul.f32 %v3569, %v3569
      %v3909 = vmul.f32 %v3572, %v3572
      %v3910 = vmul.f32 %v3577, %v3577
      %v3911 = vmul.f32 %v3580, %v3580
      %v3912 = vmul.f32 %v3585, %v3585
      %v3913 = vmul.f32 %v3588, %v3588
      %v3914 = vmul.f32 %v3593, %v3593
      %v3915 = vmul.f32 %v3596, %v3596
      %v3916 = vmul.f32 %v3601, %v3601
      %v3917 = vmul.f32 %v3604, %v3604
      %v3918 = vmul.f32 %v3609, %v3609
      %v3919 = vmul.f32 %v3612, %v3612
      %v3920 = vmul.f32 %v3617, %v3617
      %v3921 = vmul.f32 %v3620, %v3620
      %v3922 = vmul.f32 %v3625, %v3625
      %v3923 = vmul.f32 %v3628, %v3628
      %v3924 = vmul.f32 %v3633, %v3633
      %v3925 = vmul.f32 %v3636, %v3636
      %v3926 = vmul.f32 %v3641, %v3641
      %v3927 = vmul.f32 %v3644, %v3644
      %v3928 = vmul.f32 %v3649, %v3649
      %v3929 = vmul.f32 %v3652, %v3652
      %v3930 = vmul.f32 %v3657, %v3657
      %v3931 = vmul.f32 %v3660, %v3660
      %v3932 = vmul.f32 %v3665, %v3665
      %v3933 = vmul.f32 %v3668, %v3668
      %v3934 = vsel %vm216, %v3902, 0.0
      %v3935 = vsel %vm216, %v3903, 0.0
      %v3936 = vadd.f32 %v3934, %v3935
      %v3937 = vsel %vm216, %v3904, 0.0
      %v3938 = vadd.f32 %v3936, %v3937
      %v3939 = vsel %vm216, %v3905, 0.0
      %v3940 = vadd.f32 %v3938, %v3939
      %v3941 = vsel %vm216, %v3906, 0.0
      %v3942 = vadd.f32 %v3940, %v3941
      %v3943 = vsel %vm216, %v3907, 0.0
      %v3944 = vadd.f32 %v3942, %v3943
      %v3945 = vsel %vm216, %v3908, 0.0
      %v3946 = vadd.f32 %v3944, %v3945
      %v3947 = vsel %vm216, %v3909, 0.0
      %v3948 = vadd.f32 %v3946, %v3947
      %v3949 = vsel %vm216, %v3910, 0.0
      %v3950 = vadd.f32 %v3948, %v3949
      %v3951 = vsel %vm216, %v3911, 0.0
      %v3952 = vadd.f32 %v3950, %v3951
      %v3953 = vsel %vm216, %v3912, 0.0
      %v3954 = vadd.f32 %v3952, %v3953
      %v3955 = vsel %vm216, %v3913, 0.0
      %v3956 = vadd.f32 %v3954, %v3955
      %v3957 = vsel %vm216, %v3914, 0.0
      %v3958 = vadd.f32 %v3956, %v3957
      %v3959 = vsel %vm216, %v3915, 0.0
      %v3960 = vadd.f32 %v3958, %v3959
      %v3961 = vsel %vm216, %v3916, 0.0
      %v3962 = vadd.f32 %v3960, %v3961
      %v3963 = vsel %vm216, %v3917, 0.0
      %v3964 = vadd.f32 %v3962, %v3963
      %v3965 = vsel %vm216, %v3918, 0.0
      %v3966 = vadd.f32 %v3964, %v3965
      %v3967 = vsel %vm216, %v3919, 0.0
      %v3968 = vadd.f32 %v3966, %v3967
      %v3969 = vsel %vm216, %v3920, 0.0
      %v3970 = vadd.f32 %v3968, %v3969
      %v3971 = vsel %vm216, %v3921, 0.0
      %v3972 = vadd.f32 %v3970, %v3971
      %v3973 = vsel %vm216, %v3922, 0.0
      %v3974 = vadd.f32 %v3972, %v3973
      %v3975 = vsel %vm216, %v3923, 0.0
      %v3976 = vadd.f32 %v3974, %v3975
      %v3977 = vsel %vm216, %v3924, 0.0
      %v3978 = vadd.f32 %v3976, %v3977
      %v3979 = vsel %vm216, %v3925, 0.0
      %v3980 = vadd.f32 %v3978, %v3979
      %v3981 = vsel %vm216, %v3926, 0.0
      %v3982 = vadd.f32 %v3980, %v3981
      %v3983 = vsel %vm216, %v3927, 0.0
      %v3984 = vadd.f32 %v3982, %v3983
      %v3985 = vsel %vm216, %v3928, 0.0
      %v3986 = vadd.f32 %v3984, %v3985
      %v3987 = vsel %vm216, %v3929, 0.0
      %v3988 = vadd.f32 %v3986, %v3987
      %v3989 = vsel %vm216, %v3930, 0.0
      %v3990 = vadd.f32 %v3988, %v3989
      %v3991 = vsel %vm216, %v3931, 0.0
      %v3992 = vadd.f32 %v3990, %v3991
      %v3993 = vsel %vm216, %v3932, 0.0
      %v3994 = vadd.f32 %v3992, %v3993
      %v3995 = vsel %vm216, %v3933, 0.0
      %v3996 = vadd.f32 %v3994, %v3995
      %v3997 = vrot.slane %v3996, 4
      %v3998 = vadd.f32 %v3996, %v3997
      %v3999 = vrot.slane %v3998, 2
      %v4000 = vadd.f32 %v3998, %v3999
      %v4001 = vrot.slane %v4000, 1
      %v4002 = vadd.f32 %v4000, %v4001
      %4003 = vst.msk [vmem:[%s214] sm:$0x1] %vm3900, %v4002
      %p4004 = scmp.lt.s32.totalorder %s16, 1
      %s4005 = scalar_select %p4004, %s16, 1
      %s4006 = smul.addr %s4005, 32
      %s4007 = smul.addr %s4006, 4
      %s4008 = scalar_lea.vmem %s2, %s4007
      %p4009 = scmp.lt.s32.totalorder %s16, 1
      %s4010 = scalar_select %p4009, %s16, 1
      %s4011 = scalar_lea.vmem %s3, %s4010
      %p4012 = scmp.lt.s32.totalorder %s16, 1
      %s4013 = scalar_select %p4012, %s16, 1
      %s4014 = scalar_lea.vmem %s4, %s4013
      // Predicated region
      $region29: #{basic_block_forward.3} parent=27 // pred_check
        %p4015 = pneg %p81
      $region30: #{basic_block_forward.3} parent=27 // pred_check_branch
        %4017 = sbr.rel (%p4015) target = $region32
      $region31: #{basic_block_forward.3} parent=27 // pred_region
        _
      $region32: #{basic_block_forward.3} parent=27 // pred_fallthru
        _
      // Predicated region
      $region33: #{basic_block_forward.3} parent=27 // pred_check
        %p4018 = pneg %p107
      $region34: #{basic_block_forward.3} parent=27 // pred_check_branch
        %4020 = sbr.rel (%p4018) target = $region36
      $region35: #{basic_block_forward.3} parent=27 // pred_region
        _
      $region36: #{basic_block_forward.3} parent=27 // pred_fallthru
        _
      // Predicated region
      $region37: #{basic_block_forward.3} parent=27 // pred_check
        %p4021 = pneg %p133
      $region38: #{basic_block_forward.3} parent=27 // pred_check_branch
        %4023 = sbr.rel (%p4021) target = $region40
      $region39: #{basic_block_forward.3} parent=27 // pred_region
        _
      $region40: #{basic_block_forward.3} parent=27 // pred_fallthru
        _
    $region28: #{basic_block_forward.3} parent=5 // pred_fallthru
      _
    %p4024 = scmp.le.s32.totalorder 2, %s11
    // Predicated region
    $region41: #{basic_block_forward.3} parent=5 // pred_check
      %p4025 = pneg %p4024
    $region42: #{basic_block_forward.3} parent=5 // pred_check_branch
      %4027 = sbr.rel (%p4025) target = $region44
    $region43: #{basic_block_forward.3} parent=5 // pred_region
      %s4028 = ssub.s32 %s11, 2
      // Predicated region
      $region45: #{basic_block_forward.3} parent=43 // pred_check
        %p4029 = pneg %p87
      $region46: #{basic_block_forward.3} parent=43 // pred_check_branch
        %4031 = sbr.rel (%p4029) target = $region48
      $region47: #{basic_block_forward.3} parent=43 // pred_region
        %p4032 = scmp.lt.s32.totalorder %s17, 1
        %s4033 = scalar_select %p4032, %s17, 1
        %s4034 = smul.addr %s4033, 32
        %s4035 = smul.addr %s4034, 4
        %s4036 = scalar_lea.vmem %s2, %s4035
      $region48: #{basic_block_forward.3} parent=43 // pred_fallthru
        _
      // Predicated region
      $region49: #{basic_block_forward.3} parent=43 // pred_check
        %p4037 = pneg %p113
      $region50: #{basic_block_forward.3} parent=43 // pred_check_branch
        %4039 = sbr.rel (%p4037) target = $region52
      $region51: #{basic_block_forward.3} parent=43 // pred_region
        %p4040 = scmp.lt.s32.totalorder %s17, 1
        %s4041 = scalar_select %p4040, %s17, 1
        %s4042 = scalar_lea.vmem %s3, %s4041
      $region52: #{basic_block_forward.3} parent=43 // pred_fallthru
        _
      // Predicated region
      $region53: #{basic_block_forward.3} parent=43 // pred_check
        %p4043 = pneg %p139
      $region54: #{basic_block_forward.3} parent=43 // pred_check_branch
        %4045 = sbr.rel (%p4043) target = $region56
      $region55: #{basic_block_forward.3} parent=43 // pred_region
        %p4046 = scmp.lt.s32.totalorder %s17, 1
        %s4047 = scalar_select %p4046, %s17, 1
        %s4048 = scalar_lea.vmem %s4, %s4047
      $region56: #{basic_block_forward.3} parent=43 // pred_fallthru
        _
    $region44: #{basic_block_forward.3} parent=5 // pred_fallthru
      _
  $region6: #{basic_block_forward.3} parent=0 // loop_footer
    %s15 = sadd.s32 1, %s11
  $region7: #{basic_block_forward.3} parent=0 // loop_footer_branch
    %10 = sbr.rel target = $region3
  $region8: #{basic_block_forward.3} parent=0 // loop_exit
    _

// kernel: basic_block_forward.4
$region0: #{basic_block_forward.4}
  #allocation0 [shape = 'u32[]', space=smem, size = 0x4, offset = 0x4, fixed_abs, tag = 'smem constant byte address 0x4 - core index']
  #allocation1 [shape = 'u32[144,128]{1,0:T(1,128)}', space=vmem, size = 0x12000, scoped, tag = 'internal scratch']
  #allocation2 [shape = 'f32[18,18,64]{2,1,0:T(8,128)}', space=vmem, size = 0x36000, scoped, tag = 'scratch operand']
  #allocation3 [shape = 'bf16[256,576]{1,0:T(8,128)(2,1)}', space=vmem, size = 0x50000, scoped, tag = 'scratch operand']
  %s0 = inlined_call_operand.vmem [shape: bf16[2,256,64], index: 0, kind: input, shape index: {}]
  %s1 = inlined_call_operand.vmem [shape: f32[1,64], index: 1, kind: input, shape index: {}]
  %s2 = inlined_call_operand.vmem [shape: f32[1,64], index: 2, kind: input, shape index: {}]
  %s3 = inlined_call_operand.vmem [shape: bf16[576,64], index: 3, kind: input, shape index: {}]
  %s4 = inlined_call_operand.vmem [shape: bf16[2,256,64], index: 4, kind: output, shape index: {0}]
  %s5 = inlined_call_operand.vmem [shape: f32[2,1,64], index: 5, kind: output, shape index: {1}]
  %s6 = inlined_call_operand.vmem [shape: f32[2,1,64], index: 6, kind: output, shape index: {2}]
  %7 = xla_tuple %s4, %s5, %s6
  %s8 = sld [smem:[#allocation0]]
  $region65: #{basic_block_forward.4} parent=0
    _
  %s10 = ssub.s32 1, %s8
  %s11 = scalar_select 0, %s10, %s8
  loop: start=0, step=1, limit=4
  $region2: #{basic_block_forward.4} parent=0 // loop_pre_header
    _
  $region3: #{basic_block_forward.4} parent=0 // loop_header
    %s13 = sphi 0, %s17
    %p14 = scmp.ge.s32.totalorder %s13, 4
    %s23 = sphi 0, %s25
    %s26 = sphi 0, %s23
    %s27 = sphi 0, %s26
    %s43 = sphi 0, %s27
    %s47 = sphi 0, %s47
    %s49 = sphi 0, %s47
    %s50 = sphi 0, %s49
    %s64 = sphi 0, %s50
    %s68 = sphi 0, %s68
    %s70 = sphi 0, %s68
    %s71 = sphi 0, %s70
    %s85 = sphi 0, %s71
    %s89 = sphi 0, %s89
    %s91 = sphi 0, %s89
    %s92 = sphi 0, %s91
    %s106 = sphi 0, %s92
    %s112 = sphi 0, %s114
    %s115 = sphi 0, %s112
    %s116 = sphi 0, %s115
    %s132 = sphi 0, %s116
    %s138 = sphi 0, %s140
    %s141 = sphi 0, %s138
    %s142 = sphi 0, %s141
    %s158 = sphi 0, %s142
    %s164 = sphi 0, %s166
    %s167 = sphi 0, %s164
    %s168 = sphi 0, %s167
    %s184 = sphi 0, %s168
  $region4: #{basic_block_forward.4} parent=0 // loop_header_branch
    %16 = sbr.rel (%p14) target = $region8
  $region5: #{basic_block_forward.4} parent=0 // loop_body
    %s18 = ssub.s32 %s13, 1
    %s19 = ssub.s32 %s13, 2
    %s20 = sadd.s32 %s13, 1
    %s21 = ssub.s32 %s13, %s20
    %p22 = scmp.eq.s32.totalorder %s21, 0
    %s24 = sadd.s32 %s23, 1
    %s25 = scalar_select %p22, %s23, %s24
    %p28 = pneg %p22
    %p29 = scmp.eq.s32.totalorder %s13, 1
    %p30 = por %p28, %p29
    %p31 = scmp.ne.s32.totalorder %s23, %s26
    %p32 = scmp.eq.s32.totalorder %s13, 0
    %p33 = por %p31, %p32
    %p34 = scmp.ne.s32.totalorder %s23, %s26
    %p35 = scmp.eq.s32.totalorder %s18, 1
    %p36 = por %p34, %p35
    %p37 = scmp.ne.s32.totalorder %s26, %s27
    %p38 = scmp.eq.s32.totalorder %s18, 0
    %p39 = por %p37, %p38
    %p40 = scmp.ne.s32.totalorder %s26, %s27
    %p41 = scmp.eq.s32.totalorder %s19, 1
    %p42 = por %p40, %p41
    %p44 = scmp.ne.s32.totalorder %s27, %s43
    %p45 = scmp.eq.s32.totalorder %s19, 0
    %p46 = por %p44, %p45
    %s48 = sadd.s32 %s47, 1
    %p51 = scmp.eq.s32.totalorder %s13, 1
    %p52 = scmp.ne.s32.totalorder %s47, %s49
    %p53 = scmp.eq.s32.totalorder %s13, 0
    %p54 = por %p52, %p53
    %p55 = scmp.ne.s32.totalorder %s47, %s49
    %p56 = scmp.eq.s32.totalorder %s18, 1
    %p57 = por %p55, %p56
    %p58 = scmp.ne.s32.totalorder %s49, %s50
    %p59 = scmp.eq.s32.totalorder %s18, 0
    %p60 = por %p58, %p59
    %p61 = scmp.ne.s32.totalorder %s49, %s50
    %p62 = scmp.eq.s32.totalorder %s19, 1
    %p63 = por %p61, %p62
    %p65 = scmp.ne.s32.totalorder %s50, %s64
    %p66 = scmp.eq.s32.totalorder %s19, 0
    %p67 = por %p65, %p66
    %s69 = sadd.s32 %s68, 1
    %p72 = scmp.eq.s32.totalorder %s13, 1
    %p73 = scmp.ne.s32.totalorder %s68, %s70
    %p74 = scmp.eq.s32.totalorder %s13, 0
    %p75 = por %p73, %p74
    %p76 = scmp.ne.s32.totalorder %s68, %s70
    %p77 = scmp.eq.s32.totalorder %s18, 1
    %p78 = por %p76, %p77
    %p79 = scmp.ne.s32.totalorder %s70, %s71
    %p80 = scmp.eq.s32.totalorder %s18, 0
    %p81 = por %p79, %p80
    %p82 = scmp.ne.s32.totalorder %s70, %s71
    %p83 = scmp.eq.s32.totalorder %s19, 1
    %p84 = por %p82, %p83
    %p86 = scmp.ne.s32.totalorder %s71, %s85
    %p87 = scmp.eq.s32.totalorder %s19, 0
    %p88 = por %p86, %p87
    %s90 = sadd.s32 %s89, 1
    %p93 = scmp.eq.s32.totalorder %s13, 1
    %p94 = scmp.ne.s32.totalorder %s89, %s91
    %p95 = scmp.eq.s32.totalorder %s13, 0
    %p96 = por %p94, %p95
    %p97 = scmp.ne.s32.totalorder %s89, %s91
    %p98 = scmp.eq.s32.totalorder %s18, 1
    %p99 = por %p97, %p98
    %p100 = scmp.ne.s32.totalorder %s91, %s92
    %p101 = scmp.eq.s32.totalorder %s18, 0
    %p102 = por %p100, %p101
    %p103 = scmp.ne.s32.totalorder %s91, %s92
    %p104 = scmp.eq.s32.totalorder %s19, 1
    %p105 = por %p103, %p104
    %p107 = scmp.ne.s32.totalorder %s92, %s106
    %p108 = scmp.eq.s32.totalorder %s19, 0
    %p109 = por %p107, %p108
    %s110 = ssub.s32 %s13, %s20
    %p111 = scmp.eq.s32.totalorder %s110, 0
    %s113 = sadd.s32 %s112, 1
    %s114 = scalar_select %p111, %s112, %s113
    %p117 = pneg %p111
    %p118 = scmp.eq.s32.totalorder %s13, 1
    %p119 = por %p117, %p118
    %p120 = scmp.ne.s32.totalorder %s112, %s115
    %p121 = scmp.eq.s32.totalorder %s13, 0
    %p122 = por %p120, %p121
    %p123 = scmp.ne.s32.totalorder %s112, %s115
    %p124 = scmp.eq.s32.totalorder %s18, 1
    %p125 = por %p123, %p124
    %p126 = scmp.ne.s32.totalorder %s115, %s116
    %p127 = scmp.eq.s32.totalorder %s18, 0
    %p128 = por %p126, %p127
    %p129 = scmp.ne.s32.totalorder %s115, %s116
    %p130 = scmp.eq.s32.totalorder %s19, 1
    %p131 = por %p129, %p130
    %p133 = scmp.ne.s32.totalorder %s116, %s132
    %p134 = scmp.eq.s32.totalorder %s19, 0
    %p135 = por %p133, %p134
    %s136 = ssub.s32 %s13, %s20
    %p137 = scmp.eq.s32.totalorder %s136, 0
    %s139 = sadd.s32 %s138, 1
    %s140 = scalar_select %p137, %s138, %s139
    %p143 = pneg %p137
    %p144 = scmp.eq.s32.totalorder %s13, 1
    %p145 = por %p143, %p144
    %p146 = scmp.ne.s32.totalorder %s138, %s141
    %p147 = scmp.eq.s32.totalorder %s13, 0
    %p148 = por %p146, %p147
    %p149 = scmp.ne.s32.totalorder %s138, %s141
    %p150 = scmp.eq.s32.totalorder %s18, 1
    %p151 = por %p149, %p150
    %p152 = scmp.ne.s32.totalorder %s141, %s142
    %p153 = scmp.eq.s32.totalorder %s18, 0
    %p154 = por %p152, %p153
    %p155 = scmp.ne.s32.totalorder %s141, %s142
    %p156 = scmp.eq.s32.totalorder %s19, 1
    %p157 = por %p155, %p156
    %p159 = scmp.ne.s32.totalorder %s142, %s158
    %p160 = scmp.eq.s32.totalorder %s19, 0
    %p161 = por %p159, %p160
    %s162 = ssub.s32 %s13, %s20
    %p163 = scmp.eq.s32.totalorder %s162, 0
    %s165 = sadd.s32 %s164, 1
    %s166 = scalar_select %p163, %s164, %s165
    %p169 = pneg %p163
    %p170 = scmp.eq.s32.totalorder %s13, 1
    %p171 = por %p169, %p170
    %p172 = scmp.ne.s32.totalorder %s164, %s167
    %p173 = scmp.eq.s32.totalorder %s13, 0
    %p174 = por %p172, %p173
    %p175 = scmp.ne.s32.totalorder %s164, %s167
    %p176 = scmp.eq.s32.totalorder %s18, 1
    %p177 = por %p175, %p176
    %p178 = scmp.ne.s32.totalorder %s167, %s168
    %p179 = scmp.eq.s32.totalorder %s18, 0
    %p180 = por %p178, %p179
    %p181 = scmp.ne.s32.totalorder %s167, %s168
    %p182 = scmp.eq.s32.totalorder %s19, 1
    %p183 = por %p181, %p182
    %p185 = scmp.ne.s32.totalorder %s168, %s184
    %p186 = scmp.eq.s32.totalorder %s19, 0
    %p187 = por %p185, %p186
    %p188 = scmp.le.s32.totalorder 1, %s13
    %p189 = scmp.lt.s32.totalorder %s13, 3
    %p190 = pnand %p188, %p189
    %p191 = pneg %p190
    // Predicated region
    $region9: #{basic_block_forward.4} parent=5 // pred_check
      _
    $region10: #{basic_block_forward.4} parent=5 // pred_check_branch
      %193 = sbr.rel (%p190) target = $region12
    $region11: #{basic_block_forward.4} parent=5 // pred_region
      %s194 = ssub.s32 %s13, 1
      // Predicated region
      $region13: #{basic_block_forward.4} parent=11 // pred_check
        %p195 = pneg %p60
      $region14: #{basic_block_forward.4} parent=11 // pred_check_branch
        %197 = sbr.rel (%p195) target = $region16
      $region15: #{basic_block_forward.4} parent=11 // pred_region
        _
      $region16: #{basic_block_forward.4} parent=11 // pred_fallthru
        _
      // Predicated region
      $region17: #{basic_block_forward.4} parent=11 // pred_check
        %p198 = pneg %p81
      $region18: #{basic_block_forward.4} parent=11 // pred_check_branch
        %200 = sbr.rel (%p198) target = $region20
      $region19: #{basic_block_forward.4} parent=11 // pred_region
        _
      $region20: #{basic_block_forward.4} parent=11 // pred_fallthru
        _
      // Predicated region
      $region21: #{basic_block_forward.4} parent=11 // pred_check
        %p201 = pneg %p102
      $region22: #{basic_block_forward.4} parent=11 // pred_check_branch
        %203 = sbr.rel (%p201) target = $region24
      $region23: #{basic_block_forward.4} parent=11 // pred_region
        _
      $region24: #{basic_block_forward.4} parent=11 // pred_fallthru
        _
    $region12: #{basic_block_forward.4} parent=5 // pred_fallthru
      _
    %p204 = scmp.lt.s32.totalorder %s13, 2
    // Predicated region
    $region25: #{basic_block_forward.4} parent=5 // pred_check
      %p205 = pneg %p204
    $region26: #{basic_block_forward.4} parent=5 // pred_check_branch
      %207 = sbr.rel (%p205) target = $region28
    $region27: #{basic_block_forward.4} parent=5 // pred_region
      // Predicated region
      $region29: #{basic_block_forward.4} parent=27 // pred_check
        %p208 = pneg %p33
      $region30: #{basic_block_forward.4} parent=27 // pred_check_branch
        %210 = sbr.rel (%p208) target = $region32
      $region31: #{basic_block_forward.4} parent=27 // pred_region
        %p211 = scmp.lt.s32.totalorder %s13, 1
        %s212 = scalar_select %p211, %s13, 1
        %s213 = smul.addr %s212, 32
        %s214 = smul.addr %s213, 4
        %s215 = scalar_lea.vmem %s0, %s214
      $region32: #{basic_block_forward.4} parent=27 // pred_fallthru
        _
    $region28: #{basic_block_forward.4} parent=5 // pred_fallthru
      _
    %p216 = scmp.le.s32.totalorder 1, %s13
    %p217 = scmp.lt.s32.totalorder %s13, 3
    %p218 = pnand %p216, %p217
    %p219 = pneg %p218
    // Predicated region
    $region33: #{basic_block_forward.4} parent=5 // pred_check
      _
    $region34: #{basic_block_forward.4} parent=5 // pred_check_branch
      %221 = sbr.rel (%p218) target = $region36
    $region35: #{basic_block_forward.4} parent=5 // pred_region
      %s222 = ssub.s32 %s13, 1
      %p223 = scmp.lt.s32.totalorder %s18, 1
      %s224 = scalar_select %p223, %s18, 1
      %s225 = smul.addr %s224, 32
      %s226 = smul.addr %s225, 4
      %s227 = scalar_lea.vmem %s0, %s226
      %p228 = pneg %p39
      %p229 = pneg %p36
      %p230 = pneg %p60
      %p231 = pneg %p57
      %p232 = pneg %p81
      %p233 = pneg %p78
      %p234 = pneg %p102
      %p235 = pneg %p99
      %p236 = pneg %p128
      %p237 = pneg %p125
      %p238 = scmp.lt.s32.totalorder %s18, 1
      %s239 = scalar_select %p238, %s18, 1
      %s240 = smul.addr %s239, 32
      %s241 = smul.addr %s240, 4
      %s242 = scalar_lea.vmem %s4, %s241
      %p243 = pneg %p154
      %p244 = pneg %p151
      %p245 = scmp.lt.s32.totalorder %s18, 1
      %s246 = scalar_select %p245, %s18, 1
      %s247 = scalar_lea.vmem %s5, %s246
      %p248 = pneg %p180
      %p249 = pneg %p177
      %p250 = scmp.lt.s32.totalorder %s18, 1
      %s251 = scalar_select %p250, %s18, 1
      %s252 = scalar_lea.vmem %s6, %s251
      %p253 = scmp.lt.s32.totalorder %s18, 1
      %s254 = scalar_select %p253, %s18, 1
      %s255 = smul.addr %s254, 32
      %s256 = smul.addr %s255, 4
      %s257 = scalar_lea.vmem %s0, %s256
      %p258 = scmp.lt.s32.totalorder %s18, 1
      %s259 = scalar_select %p258, %s18, 1
      %s260 = smul.addr %s259, 32
      %s261 = smul.addr %s260, 4
      %s262 = scalar_lea.vmem %s4, %s261
      %p263 = scmp.lt.s32.totalorder %s18, 1
      %s264 = scalar_select %p263, %s18, 1
      %s265 = scalar_lea.vmem %s5, %s264
      %p266 = scmp.lt.s32.totalorder %s18, 1
      %s267 = scalar_select %p266, %s18, 1
      %s268 = scalar_lea.vmem %s6, %s267
      %vm270 = vcmask 523264
      %271 = vst.msk [vmem:[#allocation2] sm:$0xff] %vm270, 0.0
      %272 = vst.msk [vmem:[#allocation2 + $0x8] sm:$0xff] %vm270, 0.0
      %vm273 = vcmask 517120
      %274 = vst.msk [vmem:[#allocation2 + $0x10] sm:$0x3] %vm273, 0.0
      %275 = vst.msk [vmem:[#allocation2 + $0x18] sm:$0xff] %vm270, 0.0
      %276 = vst.msk [vmem:[#allocation2 + $0x20] sm:$0xff] %vm270, 0.0
      %277 = vst.msk [vmem:[#allocation2 + $0x28] sm:$0x3] %vm273, 0.0
      %278 = vst.msk [vmem:[#allocation2 + $0x30] sm:$0xff] %vm270, 0.0
      %279 = vst.msk [vmem:[#allocation2 + $0x38] sm:$0xff] %vm270, 0.0
      %280 = vst.msk [vmem:[#allocation2 + $0x40] sm:$0x3] %vm273, 0.0
      %281 = vst.msk [vmem:[#allocation2 + $0x48] sm:$0xff] %vm270, 0.0
      %282 = vst.msk [vmem:[#allocation2 + $0x50] sm:$0xff] %vm270, 0.0
      %283 = vst.msk [vmem:[#allocation2 + $0x58] sm:$0x3] %vm273, 0.0
      %284 = vst.msk [vmem:[#allocation2 + $0x60] sm:$0xff] %vm270, 0.0
      %285 = vst.msk [vmem:[#allocation2 + $0x68] sm:$0xff] %vm270, 0.0
      %286 = vst.msk [vmem:[#allocation2 + $0x70] sm:$0x3] %vm273, 0.0
      %287 = vst.msk [vmem:[#allocation2 + $0x78] sm:$0xff] %vm270, 0.0
      %288 = vst.msk [vmem:[#allocation2 + $0x80] sm:$0xff] %vm270, 0.0
      %289 = vst.msk [vmem:[#allocation2 + $0x88] sm:$0x3] %vm273, 0.0
      %290 = vst.msk [vmem:[#allocation2 + $0x90] sm:$0xff] %vm270, 0.0
      %291 = vst.msk [vmem:[#allocation2 + $0x98] sm:$0xff] %vm270, 0.0
      %292 = vst.msk [vmem:[#allocation2 + $0xa0] sm:$0x3] %vm273, 0.0
      %293 = vst.msk [vmem:[#allocation2 + $0xa8] sm:$0xff] %vm270, 0.0
      %294 = vst.msk [vmem:[#allocation2 + $0xb0] sm:$0xff] %vm270, 0.0
      %295 = vst.msk [vmem:[#allocation2 + $0xb8] sm:$0x3] %vm273, 0.0
      %296 = vst.msk [vmem:[#allocation2 + $0xc0] sm:$0xff] %vm270, 0.0
      %297 = vst.msk [vmem:[#allocation2 + $0xc8] sm:$0xff] %vm270, 0.0
      %298 = vst.msk [vmem:[#allocation2 + $0xd0] sm:$0x3] %vm273, 0.0
      %299 = vst.msk [vmem:[#allocation2 + $0xd8] sm:$0xff] %vm270, 0.0
      %300 = vst.msk [vmem:[#allocation2 + $0xe0] sm:$0xff] %vm270, 0.0
      %301 = vst.msk [vmem:[#allocation2 + $0xe8] sm:$0x3] %vm273, 0.0
      %302 = vst.msk [vmem:[#allocation2 + $0xf0] sm:$0xff] %vm270, 0.0
      %303 = vst.msk [vmem:[#allocation2 + $0xf8] sm:$0xff] %vm270, 0.0
      %304 = vst.msk [vmem:[#allocation2 + $0x100] sm:$0x3] %vm273, 0.0
      %305 = vst.msk [vmem:[#allocation2 + $0x108] sm:$0xff] %vm270, 0.0
      %306 = vst.msk [vmem:[#allocation2 + $0x110] sm:$0xff] %vm270, 0.0
      %307 = vst.msk [vmem:[#allocation2 + $0x118] sm:$0x3] %vm273, 0.0
      %308 = vst.msk [vmem:[#allocation2 + $0x120] sm:$0xff] %vm270, 0.0
      %309 = vst.msk [vmem:[#allocation2 + $0x128] sm:$0xff] %vm270, 0.0
      %310 = vst.msk [vmem:[#allocation2 + $0x130] sm:$0x3] %vm273, 0.0
      %311 = vst.msk [vmem:[#allocation2 + $0x138] sm:$0xff] %vm270, 0.0
      %312 = vst.msk [vmem:[#allocation2 + $0x140] sm:$0xff] %vm270, 0.0
      %313 = vst.msk [vmem:[#allocation2 + $0x148] sm:$0x3] %vm273, 0.0
      %314 = vst.msk [vmem:[#allocation2 + $0x150] sm:$0xff] %vm270, 0.0
      %315 = vst.msk [vmem:[#allocation2 + $0x158] sm:$0xff] %vm270, 0.0
      %316 = vst.msk [vmem:[#allocation2 + $0x160] sm:$0x3] %vm273, 0.0
      %317 = vst.msk [vmem:[#allocation2 + $0x168] sm:$0xff] %vm270, 0.0
      %318 = vst.msk [vmem:[#allocation2 + $0x170] sm:$0xff] %vm270, 0.0
      %319 = vst.msk [vmem:[#allocation2 + $0x178] sm:$0x3] %vm273, 0.0
      %320 = vst.msk [vmem:[#allocation2 + $0x180] sm:$0xff] %vm270, 0.0
      %321 = vst.msk [vmem:[#allocation2 + $0x188] sm:$0xff] %vm270, 0.0
      %322 = vst.msk [vmem:[#allocation2 + $0x190] sm:$0x3] %vm273, 0.0
      %323 = vst.msk [vmem:[#allocation2 + $0x198] sm:$0xff] %vm270, 0.0
      %324 = vst.msk [vmem:[#allocation2 + $0x1a0] sm:$0xff] %vm270, 0.0
      %325 = vst.msk [vmem:[#allocation2 + $0x1a8] sm:$0x3] %vm273, 0.0
      %v326 = vld [vmem:[%s257] sm:$0xf]
      %v327 = vld [vmem:[%s257 + $0x4] sm:$0xf]
      %v328 = vld [vmem:[%s257 + $0x8] sm:$0xf]
      %v329 = vld [vmem:[%s257 + $0xc] sm:$0xf]
      %v330 = vld [vmem:[%s257 + $0x10] sm:$0xf]
      %v331 = vld [vmem:[%s257 + $0x14] sm:$0xf]
      %v332 = vld [vmem:[%s257 + $0x18] sm:$0xf]
      %v333 = vld [vmem:[%s257 + $0x1c] sm:$0xf]
      %v334 = vld [vmem:[%s257 + $0x20] sm:$0xf]
      %v335 = vld [vmem:[%s257 + $0x24] sm:$0xf]
      %v336 = vld [vmem:[%s257 + $0x28] sm:$0xf]
      %v337 = vld [vmem:[%s257 + $0x2c] sm:$0xf]
      %v338 = vld [vmem:[%s257 + $0x30] sm:$0xf]
      %v339 = vld [vmem:[%s257 + $0x34] sm:$0xf]
      %v340 = vld [vmem:[%s257 + $0x38] sm:$0xf]
      %v341 = vld [vmem:[%s257 + $0x3c] sm:$0xf]
      %v342 = vld [vmem:[%s257 + $0x40] sm:$0xf]
      %v343 = vld [vmem:[%s257 + $0x44] sm:$0xf]
      %v344 = vld [vmem:[%s257 + $0x48] sm:$0xf]
      %v345 = vld [vmem:[%s257 + $0x4c] sm:$0xf]
      %v346 = vld [vmem:[%s257 + $0x50] sm:$0xf]
      %v347 = vld [vmem:[%s257 + $0x54] sm:$0xf]
      %v348 = vld [vmem:[%s257 + $0x58] sm:$0xf]
      %v349 = vld [vmem:[%s257 + $0x5c] sm:$0xf]
      %v350 = vld [vmem:[%s257 + $0x60] sm:$0xf]
      %v351 = vld [vmem:[%s257 + $0x64] sm:$0xf]
      %v352 = vld [vmem:[%s257 + $0x68] sm:$0xf]
      %v353 = vld [vmem:[%s257 + $0x6c] sm:$0xf]
      %v354 = vld [vmem:[%s257 + $0x70] sm:$0xf]
      %v355 = vld [vmem:[%s257 + $0x74] sm:$0xf]
      %v356 = vld [vmem:[%s257 + $0x78] sm:$0xf]
      %v357 = vld [vmem:[%s257 + $0x7c] sm:$0xf]
      %v358 = vunpack.c.l.bf16 %v326
      %v359 = vunpack.c.l.bf16 %v327
      %v360 = vunpack.c.l.bf16 %v328
      %v361 = vunpack.c.l.bf16 %v329
      %v362 = vunpack.c.l.bf16 %v330
      %v363 = vunpack.c.l.bf16 %v331
      %v364 = vunpack.c.l.bf16 %v332
      %v365 = vunpack.c.l.bf16 %v333
      %v366 = vunpack.c.l.bf16 %v334
      %v367 = vunpack.c.l.bf16 %v335
      %v368 = vunpack.c.l.bf16 %v336
      %v369 = vunpack.c.l.bf16 %v337
      %v370 = vunpack.c.l.bf16 %v338
      %v371 = vunpack.c.l.bf16 %v339
      %v372 = vunpack.c.l.bf16 %v340
      %v373 = vunpack.c.l.bf16 %v341
      %v374 = vunpack.c.l.bf16 %v342
      %v375 = vunpack.c.l.bf16 %v343
      %v376 = vunpack.c.l.bf16 %v344
      %v377 = vunpack.c.l.bf16 %v345
      %v378 = vunpack.c.l.bf16 %v346
      %v379 = vunpack.c.l.bf16 %v347
      %v380 = vunpack.c.l.bf16 %v348
      %v381 = vunpack.c.l.bf16 %v349
      %v382 = vunpack.c.l.bf16 %v350
      %v383 = vunpack.c.l.bf16 %v351
      %v384 = vunpack.c.l.bf16 %v352
      %v385 = vunpack.c.l.bf16 %v353
      %v386 = vunpack.c.l.bf16 %v354
      %v387 = vunpack.c.l.bf16 %v355
      %v388 = vunpack.c.l.bf16 %v356
      %v389 = vunpack.c.l.bf16 %v357
      %v390 = vld [vmem:[%s1] sm:$0x1]
      %v392 = vlaneseq
      %v393 = vshrl.u32 %v392, 7
      %v394 = vsub.s32 0, %v393
      %v395 = vrot.slane %v390, %v394
      %v397 = vmul.f32 %v358, %v395
      %v398 = vmul.f32 %v359, %v395
      %v399 = vmul.f32 %v360, %v395
      %v400 = vmul.f32 %v361, %v395
      %v401 = vmul.f32 %v362, %v395
      %v402 = vmul.f32 %v363, %v395
      %v403 = vmul.f32 %v364, %v395
      %v404 = vmul.f32 %v365, %v395
      %v405 = vmul.f32 %v366, %v395
      %v406 = vmul.f32 %v367, %v395
      %v407 = vmul.f32 %v368, %v395
      %v408 = vmul.f32 %v369, %v395
      %v409 = vmul.f32 %v370, %v395
      %v410 = vmul.f32 %v371, %v395
      %v411 = vmul.f32 %v372, %v395
      %v412 = vmul.f32 %v373, %v395
      %v413 = vmul.f32 %v374, %v395
      %v414 = vmul.f32 %v375, %v395
      %v415 = vmul.f32 %v376, %v395
      %v416 = vmul.f32 %v377, %v395
      %v417 = vmul.f32 %v378, %v395
      %v418 = vmul.f32 %v379, %v395
      %v419 = vmul.f32 %v380, %v395
      %v420 = vmul.f32 %v381, %v395
      %v421 = vmul.f32 %v382, %v395
      %v422 = vmul.f32 %v383, %v395
      %v423 = vmul.f32 %v384, %v395
      %v424 = vmul.f32 %v385, %v395
      %v425 = vmul.f32 %v386, %v395
      %v426 = vmul.f32 %v387, %v395
      %v427 = vmul.f32 %v388, %v395
      %v428 = vmul.f32 %v389, %v395
      %v429 = vld [vmem:[%s2] sm:$0x1]
      %v431 = vlaneseq
      %v432 = vshrl.u32 %v431, 7
      %v433 = vsub.s32 0, %v432
      %v434 = vrot.slane %v429, %v433
      %v436 = vadd.f32 %v397, %v434
      %v437 = vadd.f32 %v398, %v434
      %v438 = vadd.f32 %v399, %v434
      %v439 = vadd.f32 %v400, %v434
      %v440 = vadd.f32 %v401, %v434
      %v441 = vadd.f32 %v402, %v434
      %v442 = vadd.f32 %v403, %v434
      %v443 = vadd.f32 %v404, %v434
      %v444 = vadd.f32 %v405, %v434
      %v445 = vadd.f32 %v406, %v434
      %v446 = vadd.f32 %v407, %v434
      %v447 = vadd.f32 %v408, %v434
      %v448 = vadd.f32 %v409, %v434
      %v449 = vadd.f32 %v410, %v434
      %v450 = vadd.f32 %v411, %v434
      %v451 = vadd.f32 %v412, %v434
      %v452 = vadd.f32 %v413, %v434
      %v453 = vadd.f32 %v414, %v434
      %v454 = vadd.f32 %v415, %v434
      %v455 = vadd.f32 %v416, %v434
      %v456 = vadd.f32 %v417, %v434
      %v457 = vadd.f32 %v418, %v434
      %v458 = vadd.f32 %v419, %v434
      %v459 = vadd.f32 %v420, %v434
      %v460 = vadd.f32 %v421, %v434
      %v461 = vadd.f32 %v422, %v434
      %v462 = vadd.f32 %v423, %v434
      %v463 = vadd.f32 %v424, %v434
      %v464 = vadd.f32 %v425, %v434
      %v465 = vadd.f32 %v426, %v434
      %v466 = vadd.f32 %v427, %v434
      %v467 = vadd.f32 %v428, %v434
      %v468 = vmax.f32 %v436, 0.0
      %v469 = vmax.f32 %v437, 0.0
      %v470 = vmax.f32 %v438, 0.0
      %v471 = vmax.f32 %v439, 0.0
      %v472 = vmax.f32 %v440, 0.0
      %v473 = vmax.f32 %v441, 0.0
      %v474 = vmax.f32 %v442, 0.0
      %v475 = vmax.f32 %v443, 0.0
      %v476 = vmax.f32 %v444, 0.0
      %v477 = vmax.f32 %v445, 0.0
      %v478 = vmax.f32 %v446, 0.0
      %v479 = vmax.f32 %v447, 0.0
      %v480 = vmax.f32 %v448, 0.0
      %v481 = vmax.f32 %v449, 0.0
      %v482 = vmax.f32 %v450, 0.0
      %v483 = vmax.f32 %v451, 0.0
      %v484 = vmax.f32 %v452, 0.0
      %v485 = vmax.f32 %v453, 0.0
      %v486 = vmax.f32 %v454, 0.0
      %v487 = vmax.f32 %v455, 0.0
      %v488 = vmax.f32 %v456, 0.0
      %v489 = vmax.f32 %v457, 0.0
      %v490 = vmax.f32 %v458, 0.0
      %v491 = vmax.f32 %v459, 0.0
      %v492 = vmax.f32 %v460, 0.0
      %v493 = vmax.f32 %v461, 0.0
      %v494 = vmax.f32 %v462, 0.0
      %v495 = vmax.f32 %v463, 0.0
      %v496 = vmax.f32 %v464, 0.0
      %v497 = vmax.f32 %v465, 0.0
      %v498 = vmax.f32 %v466, 0.0
      %v499 = vmax.f32 %v467, 0.0
      %s500 = scalar_lea.vmem [#allocation2], 24
      %501 = vst.msk [vmem:[%s500 + $0x1] sm:$0xff] %vm270, %v468
      %502 = vst.msk [vmem:[%s500 + $0x9] sm:$0xff] %vm270, %v469
      %503 = vst.msk [vmem:[%s500 + $0x19] sm:$0xff] %vm270, %v470
      %504 = vst.msk [vmem:[%s500 + $0x21] sm:$0xff] %vm270, %v471
      %505 = vst.msk [vmem:[%s500 + $0x31] sm:$0xff] %vm270, %v472
      %506 = vst.msk [vmem:[%s500 + $0x39] sm:$0xff] %vm270, %v473
      %507 = vst.msk [vmem:[%s500 + $0x49] sm:$0xff] %vm270, %v474
      %508 = vst.msk [vmem:[%s500 + $0x51] sm:$0xff] %vm270, %v475
      %509 = vst.msk [vmem:[%s500 + $0x61] sm:$0xff] %vm270, %v476
      %510 = vst.msk [vmem:[%s500 + $0x69] sm:$0xff] %vm270, %v477
      %511 = vst.msk [vmem:[%s500 + $0x79] sm:$0xff] %vm270, %v478
      %512 = vst.msk [vmem:[%s500 + $0x81] sm:$0xff] %vm270, %v479
      %513 = vst.msk [vmem:[%s500 + $0x91] sm:$0xff] %vm270, %v480
      %514 = vst.msk [vmem:[%s500 + $0x99] sm:$0xff] %vm270, %v481
      %515 = vst.msk [vmem:[%s500 + $0xa9] sm:$0xff] %vm270, %v482
      %516 = vst.msk [vmem:[%s500 + $0xb1] sm:$0xff] %vm270, %v483
      %517 = vst.msk [vmem:[%s500 + $0xc1] sm:$0xff] %vm270, %v484
      %518 = vst.msk [vmem:[%s500 + $0xc9] sm:$0xff] %vm270, %v485
      %519 = vst.msk [vmem:[%s500 + $0xd9] sm:$0xff] %vm270, %v486
      %520 = vst.msk [vmem:[%s500 + $0xe1] sm:$0xff] %vm270, %v487
      %521 = vst.msk [vmem:[%s500 + $0xf1] sm:$0xff] %vm270, %v488
      %522 = vst.msk [vmem:[%s500 + $0xf9] sm:$0xff] %vm270, %v489
      %523 = vst.msk [vmem:[%s500 + $0x109] sm:$0xff] %vm270, %v490
      %524 = vst.msk [vmem:[%s500 + $0x111] sm:$0xff] %vm270, %v491
      %525 = vst.msk [vmem:[%s500 + $0x121] sm:$0xff] %vm270, %v492
      %526 = vst.msk [vmem:[%s500 + $0x129] sm:$0xff] %vm270, %v493
      %527 = vst.msk [vmem:[%s500 + $0x139] sm:$0xff] %vm270, %v494
      %528 = vst.msk [vmem:[%s500 + $0x141] sm:$0xff] %vm270, %v495
      %529 = vst.msk [vmem:[%s500 + $0x151] sm:$0xff] %vm270, %v496
      %530 = vst.msk [vmem:[%s500 + $0x159] sm:$0xff] %vm270, %v497
      %531 = vst.msk [vmem:[%s500 + $0x169] sm:$0xff] %vm270, %v498
      %532 = vst.msk [vmem:[%s500 + $0x171] sm:$0xff] %vm270, %v499
      %v533 = vld [vmem:[#allocation2] sm:$0xff]
      %v534 = vld [vmem:[#allocation2 + $0x8] sm:$0xff]
      %v535 = vld [vmem:[#allocation2 + $0x18] sm:$0xff]
      %v536 = vld [vmem:[#allocation2 + $0x20] sm:$0xff]
      %v537 = vld [vmem:[#allocation2 + $0x30] sm:$0xff]
      %v538 = vld [vmem:[#allocation2 + $0x38] sm:$0xff]
      %v539 = vld [vmem:[#allocation2 + $0x48] sm:$0xff]
      %v540 = vld [vmem:[#allocation2 + $0x50] sm:$0xff]
      %v541 = vld [vmem:[#allocation2 + $0x60] sm:$0xff]
      %v542 = vld [vmem:[#allocation2 + $0x68] sm:$0xff]
      %v543 = vld [vmem:[#allocation2 + $0x78] sm:$0xff]
      %v544 = vld [vmem:[#allocation2 + $0x80] sm:$0xff]
      %v545 = vld [vmem:[#allocation2 + $0x90] sm:$0xff]
      %v546 = vld [vmem:[#allocation2 + $0x98] sm:$0xff]
      %v547 = vld [vmem:[#allocation2 + $0xa8] sm:$0xff]
      %v548 = vld [vmem:[#allocation2 + $0xb0] sm:$0xff]
      %v549 = vld [vmem:[#allocation2 + $0xc0] sm:$0xff]
      %v550 = vld [vmem:[#allocation2 + $0xc8] sm:$0xff]
      %v551 = vld [vmem:[#allocation2 + $0xd8] sm:$0xff]
      %v552 = vld [vmem:[#allocation2 + $0xe0] sm:$0xff]
      %v553 = vld [vmem:[#allocation2 + $0xf0] sm:$0xff]
      %v554 = vld [vmem:[#allocation2 + $0xf8] sm:$0xff]
      %v555 = vld [vmem:[#allocation2 + $0x108] sm:$0xff]
      %v556 = vld [vmem:[#allocation2 + $0x110] sm:$0xff]
      %v557 = vld [vmem:[#allocation2 + $0x120] sm:$0xff]
      %v558 = vld [vmem:[#allocation2 + $0x128] sm:$0xff]
      %v559 = vld [vmem:[#allocation2 + $0x138] sm:$0xff]
      %v560 = vld [vmem:[#allocation2 + $0x140] sm:$0xff]
      %v561 = vld [vmem:[#allocation2 + $0x150] sm:$0xff]
      %v562 = vld [vmem:[#allocation2 + $0x158] sm:$0xff]
      %v563 = vld [vmem:[#allocation2 + $0x168] sm:$0xff]
      %v564 = vld [vmem:[#allocation2 + $0x170] sm:$0xff]
      %v565 = vpack.c.bf16 %v534, %v533
      %v566 = vpack.c.bf16 %v536, %v535
      %v567 = vpack.c.bf16 %v538, %v537
      %v568 = vpack.c.bf16 %v540, %v539
      %v569 = vpack.c.bf16 %v542, %v541
      %v570 = vpack.c.bf16 %v544, %v543
      %v571 = vpack.c.bf16 %v546, %v545
      %v572 = vpack.c.bf16 %v548, %v547
      %v573 = vpack.c.bf16 %v550, %v549
      %v574 = vpack.c.bf16 %v552, %v551
      %v575 = vpack.c.bf16 %v554, %v553
      %v576 = vpack.c.bf16 %v556, %v555
      %v577 = vpack.c.bf16 %v558, %v557
      %v578 = vpack.c.bf16 %v560, %v559
      %v579 = vpack.c.bf16 %v562, %v561
      %v580 = vpack.c.bf16 %v564, %v563
      %v597 = vunpack.c.l.b16 %v565
      %v598 = vunpack.c.h.b16 %v565
      %v599 = vunpack.c.l.b16 %v566
      %v600 = vunpack.c.h.b16 %v566
      %v601 = vunpack.c.l.b16 %v567
      %v602 = vunpack.c.h.b16 %v567
      %v603 = vunpack.c.l.b16 %v568
      %v604 = vunpack.c.h.b16 %v568
      %v605 = vunpack.c.l.b16 %v569
      %v606 = vunpack.c.h.b16 %v569
      %v607 = vunpack.c.l.b16 %v570
      %v608 = vunpack.c.h.b16 %v570
      %v609 = vunpack.c.l.b16 %v571
      %v610 = vunpack.c.h.b16 %v571
      %v611 = vunpack.c.l.b16 %v572
      %v612 = vunpack.c.h.b16 %v572
      %v613 = vunpack.c.l.b16 %v573
      %v614 = vunpack.c.h.b16 %v573
      %v615 = vunpack.c.l.b16 %v574
      %v616 = vunpack.c.h.b16 %v574
      %v617 = vunpack.c.l.b16 %v575
      %v618 = vunpack.c.h.b16 %v575
      %v619 = vunpack.c.l.b16 %v576
      %v620 = vunpack.c.h.b16 %v576
      %v621 = vunpack.c.l.b16 %v577
      %v622 = vunpack.c.h.b16 %v577
      %v623 = vunpack.c.l.b16 %v578
      %v624 = vunpack.c.h.b16 %v578
      %v625 = vunpack.c.l.b16 %v579
      %v626 = vunpack.c.h.b16 %v579
      %v627 = vunpack.c.l.b16 %v580
      %v628 = vunpack.c.h.b16 %v580
      %v629 = vpack.c.b16 %v597, %v597
      %v630 = vpack.c.b16 %v598, %v598
      %v631 = vpack.c.b16 %v599, %v599
      %v632 = vpack.c.b16 %v600, %v600
      %v633 = vpack.c.b16 %v601, %v601
      %v634 = vpack.c.b16 %v602, %v602
      %v635 = vpack.c.b16 %v603, %v603
      %v636 = vpack.c.b16 %v604, %v604
      %v637 = vpack.c.b16 %v605, %v605
      %v638 = vpack.c.b16 %v606, %v606
      %v639 = vpack.c.b16 %v607, %v607
      %v640 = vpack.c.b16 %v608, %v608
      %v641 = vpack.c.b16 %v609, %v609
      %v642 = vpack.c.b16 %v610, %v610
      %v643 = vpack.c.b16 %v611, %v611
      %v644 = vpack.c.b16 %v612, %v612
      %v645 = vpack.c.b16 %v613, %v613
      %v646 = vpack.c.b16 %v614, %v614
      %v647 = vpack.c.b16 %v615, %v615
      %v648 = vpack.c.b16 %v616, %v616
      %v649 = vpack.c.b16 %v617, %v617
      %v650 = vpack.c.b16 %v618, %v618
      %v651 = vpack.c.b16 %v619, %v619
      %v652 = vpack.c.b16 %v620, %v620
      %v653 = vpack.c.b16 %v621, %v621
      %v654 = vpack.c.b16 %v622, %v622
      %v655 = vpack.c.b16 %v623, %v623
      %v656 = vpack.c.b16 %v624, %v624
      %v657 = vpack.c.b16 %v625, %v625
      %v658 = vpack.c.b16 %v626, %v626
      %v659 = vpack.c.b16 %v627, %v627
      %v660 = vpack.c.b16 %v628, %v628
      %vm693 = vcmask 519168
      %694 = vst.msk [vmem:[#allocation3] sm:$0xf] %vm693, %v629
      %695 = vst.msk [vmem:[#allocation3 + $0x14] sm:$0xf] %vm693, %v630
      %696 = vst.msk [vmem:[#allocation3 + $0x28] sm:$0xf] %vm693, %v631
      %697 = vst.msk [vmem:[#allocation3 + $0x3c] sm:$0xf] %vm693, %v632
      %698 = vst.msk [vmem:[#allocation3 + $0x50] sm:$0xf] %vm693, %v633
      %699 = vst.msk [vmem:[#allocation3 + $0x64] sm:$0xf] %vm693, %v634
      %700 = vst.msk [vmem:[#allocation3 + $0x78] sm:$0xf] %vm693, %v635
      %701 = vst.msk [vmem:[#allocation3 + $0x8c] sm:$0xf] %vm693, %v636
      %702 = vst.msk [vmem:[#allocation3 + $0xa0] sm:$0xf] %vm693, %v637
      %703 = vst.msk [vmem:[#allocation3 + $0xb4] sm:$0xf] %vm693, %v638
      %704 = vst.msk [vmem:[#allocation3 + $0xc8] sm:$0xf] %vm693, %v639
      %705 = vst.msk [vmem:[#allocation3 + $0xdc] sm:$0xf] %vm693, %v640
      %706 = vst.msk [vmem:[#allocation3 + $0xf0] sm:$0xf] %vm693, %v641
      %707 = vst.msk [vmem:[#allocation3 + $0x104] sm:$0xf] %vm693, %v642
      %708 = vst.msk [vmem:[#allocation3 + $0x118] sm:$0xf] %vm693, %v643
      %709 = vst.msk [vmem:[#allocation3 + $0x12c] sm:$0xf] %vm693, %v644
      %710 = vst.msk [vmem:[#allocation3 + $0x140] sm:$0xf] %vm693, %v645
      %711 = vst.msk [vmem:[#allocation3 + $0x154] sm:$0xf] %vm693, %v646
      %712 = vst.msk [vmem:[#allocation3 + $0x168] sm:$0xf] %vm693, %v647
      %713 = vst.msk [vmem:[#allocation3 + $0x17c] sm:$0xf] %vm693, %v648
      %714 = vst.msk [vmem:[#allocation3 + $0x190] sm:$0xf] %vm693, %v649
      %715 = vst.msk [vmem:[#allocation3 + $0x1a4] sm:$0xf] %vm693, %v650
      %716 = vst.msk [vmem:[#allocation3 + $0x1b8] sm:$0xf] %vm693, %v651
      %717 = vst.msk [vmem:[#allocation3 + $0x1cc] sm:$0xf] %vm693, %v652
      %718 = vst.msk [vmem:[#allocation3 + $0x1e0] sm:$0xf] %vm693, %v653
      %719 = vst.msk [vmem:[#allocation3 + $0x1f4] sm:$0xf] %vm693, %v654
      %720 = vst.msk [vmem:[#allocation3 + $0x208] sm:$0xf] %vm693, %v655
      %721 = vst.msk [vmem:[#allocation3 + $0x21c] sm:$0xf] %vm693, %v656
      %722 = vst.msk [vmem:[#allocation3 + $0x230] sm:$0xf] %vm693, %v657
      %723 = vst.msk [vmem:[#allocation3 + $0x244] sm:$0xf] %vm693, %v658
      %724 = vst.msk [vmem:[#allocation3 + $0x258] sm:$0xf] %vm693, %v659
      %725 = vst.msk [vmem:[#allocation3 + $0x26c] sm:$0xf] %vm693, %v660
      %v726 = vld [vmem:[#allocation2 + $0x1] sm:$0xff]
      %v727 = vld [vmem:[#allocation2 + $0x9] sm:$0xff]
      %v728 = vld [vmem:[#allocation2 + $0x19] sm:$0xff]
      %v729 = vld [vmem:[#allocation2 + $0x21] sm:$0xff]
      %v730 = vld [vmem:[#allocation2 + $0x31] sm:$0xff]
      %v731 = vld [vmem:[#allocation2 + $0x39] sm:$0xff]
      %v732 = vld [vmem:[#allocation2 + $0x49] sm:$0xff]
      %v733 = vld [vmem:[#allocation2 + $0x51] sm:$0xff]
      %v734 = vld [vmem:[#allocation2 + $0x61] sm:$0xff]
      %v735 = vld [vmem:[#allocation2 + $0x69] sm:$0xff]
      %v736 = vld [vmem:[#allocation2 + $0x79] sm:$0xff]
      %v737 = vld [vmem:[#allocation2 + $0x81] sm:$0xff]
      %v738 = vld [vmem:[#allocation2 + $0x91] sm:$0xff]
      %v739 = vld [vmem:[#allocation2 + $0x99] sm:$0xff]
      %v740 = vld [vmem:[#allocation2 + $0xa9] sm:$0xff]
      %v741 = vld [vmem:[#allocation2 + $0xb1] sm:$0xff]
      %v742 = vld [vmem:[#allocation2 + $0xc1] sm:$0xff]
      %v743 = vld [vmem:[#allocation2 + $0xc9] sm:$0xff]
      %v744 = vld [vmem:[#allocation2 + $0xd9] sm:$0xff]
      %v745 = vld [vmem:[#allocation2 + $0xe1] sm:$0xff]
      %v746 = vld [vmem:[#allocation2 + $0xf1] sm:$0xff]
      %v747 = vld [vmem:[#allocation2 + $0xf9] sm:$0xff]
      %v748 = vld [vmem:[#allocation2 + $0x109] sm:$0xff]
      %v749 = vld [vmem:[#allocation2 + $0x111] sm:$0xff]
      %v750 = vld [vmem:[#allocation2 + $0x121] sm:$0xff]
      %v751 = vld [vmem:[#allocation2 + $0x129] sm:$0xff]
      %v752 = vld [vmem:[#allocation2 + $0x139] sm:$0xff]
      %v753 = vld [vmem:[#allocation2 + $0x141] sm:$0xff]
      %v754 = vld [vmem:[#allocation2 + $0x151] sm:$0xff]
      %v755 = vld [vmem:[#allocation2 + $0x159] sm:$0xff]
      %v756 = vld [vmem:[#allocation2 + $0x169] sm:$0xff]
      %v757 = vld [vmem:[#allocation2 + $0x171] sm:$0xff]
      %v758 = vpack.c.bf16 %v727, %v726
      %v759 = vpack.c.bf16 %v729, %v728
      %v760 = vpack.c.bf16 %v731, %v730
      %v761 = vpack.c.bf16 %v733, %v732
      %v762 = vpack.c.bf16 %v735, %v734
      %v763 = vpack.c.bf16 %v737, %v736
      %v764 = vpack.c.bf16 %v739, %v738
      %v765 = vpack.c.bf16 %v741, %v740
      %v766 = vpack.c.bf16 %v743, %v742
      %v767 = vpack.c.bf16 %v745, %v744
      %v768 = vpack.c.bf16 %v747, %v746
      %v769 = vpack.c.bf16 %v749, %v748
      %v770 = vpack.c.bf16 %v751, %v750
      %v771 = vpack.c.bf16 %v753, %v752
      %v772 = vpack.c.bf16 %v755, %v754
      %v773 = vpack.c.bf16 %v757, %v756
      %v790 = vunpack.c.l.b16 %v758
      %v791 = vunpack.c.h.b16 %v758
      %v792 = vunpack.c.l.b16 %v759
      %v793 = vunpack.c.h.b16 %v759
      %v794 = vunpack.c.l.b16 %v760
      %v795 = vunpack.c.h.b16 %v760
      %v796 = vunpack.c.l.b16 %v761
      %v797 = vunpack.c.h.b16 %v761
      %v798 = vunpack.c.l.b16 %v762
      %v799 = vunpack.c.h.b16 %v762
      %v800 = vunpack.c.l.b16 %v763
      %v801 = vunpack.c.h.b16 %v763
      %v802 = vunpack.c.l.b16 %v764
      %v803 = vunpack.c.h.b16 %v764
      %v804 = vunpack.c.l.b16 %v765
      %v805 = vunpack.c.h.b16 %v765
      %v806 = vunpack.c.l.b16 %v766
      %v807 = vunpack.c.h.b16 %v766
      %v808 = vunpack.c.l.b16 %v767
      %v809 = vunpack.c.h.b16 %v767
      %v810 = vunpack.c.l.b16 %v768
      %v811 = vunpack.c.h.b16 %v768
      %v812 = vunpack.c.l.b16 %v769
      %v813 = vunpack.c.h.b16 %v769
      %v814 = vunpack.c.l.b16 %v770
      %v815 = vunpack.c.h.b16 %v770
      %v816 = vunpack.c.l.b16 %v771
      %v817 = vunpack.c.h.b16 %v771
      %v818 = vunpack.c.l.b16 %v772
      %v819 = vunpack.c.h.b16 %v772
      %v820 = vunpack.c.l.b16 %v773
      %v821 = vunpack.c.h.b16 %v773
      %v822 = vpack.c.b16 %v790, %v790
      %v823 = vpack.c.b16 %v791, %v791
      %v824 = vpack.c.b16 %v792, %v792
      %v825 = vpack.c.b16 %v793, %v793
      %v826 = vpack.c.b16 %v794, %v794
      %v827 = vpack.c.b16 %v795, %v795
      %v828 = vpack.c.b16 %v796, %v796
      %v829 = vpack.c.b16 %v797, %v797
      %v830 = vpack.c.b16 %v798, %v798
      %v831 = vpack.c.b16 %v799, %v799
      %v832 = vpack.c.b16 %v800, %v800
      %v833 = vpack.c.b16 %v801, %v801
      %v834 = vpack.c.b16 %v802, %v802
      %v835 = vpack.c.b16 %v803, %v803
      %v836 = vpack.c.b16 %v804, %v804
      %v837 = vpack.c.b16 %v805, %v805
      %v838 = vpack.c.b16 %v806, %v806
      %v839 = vpack.c.b16 %v807, %v807
      %v840 = vpack.c.b16 %v808, %v808
      %v841 = vpack.c.b16 %v809, %v809
      %v842 = vpack.c.b16 %v810, %v810
      %v843 = vpack.c.b16 %v811, %v811
      %v844 = vpack.c.b16 %v812, %v812
      %v845 = vpack.c.b16 %v813, %v813
      %v846 = vpack.c.b16 %v814, %v814
      %v847 = vpack.c.b16 %v815, %v815
      %v848 = vpack.c.b16 %v816, %v816
      %v849 = vpack.c.b16 %v817, %v817
      %v850 = vpack.c.b16 %v818, %v818
      %v851 = vpack.c.b16 %v819, %v819
      %v852 = vpack.c.b16 %v820, %v820
      %v853 = vpack.c.b16 %v821, %v821
      %854 = vrot.lane.b32.xlu0 %v822, 64
      %v855 = vpop.permute.xlu0 %854
      %856 = vrot.lane.b32.xlu0 %v823, 64
      %v857 = vpop.permute.xlu0 %856
      %858 = vrot.lane.b32.xlu0 %v824, 64
      %v859 = vpop.permute.xlu0 %858
      %860 = vrot.lane.b32.xlu0 %v825, 64
      %v861 = vpop.permute.xlu0 %860
      %862 = vrot.lane.b32.xlu0 %v826, 64
      %v863 = vpop.permute.xlu0 %862
      %864 = vrot.lane.b32.xlu0 %v827, 64
      %v865 = vpop.permute.xlu0 %864
      %866 = vrot.lane.b32.xlu0 %v828, 64
      %v867 = vpop.permute.xlu0 %866
      %868 = vrot.lane.b32.xlu0 %v829, 64
      %v869 = vpop.permute.xlu0 %868
      %870 = vrot.lane.b32.xlu0 %v830, 64
      %v871 = vpop.permute.xlu0 %870
      %872 = vrot.lane.b32.xlu0 %v831, 64
      %v873 = vpop.permute.xlu0 %872
      %874 = vrot.lane.b32.xlu0 %v832, 64
      %v875 = vpop.permute.xlu0 %874
      %876 = vrot.lane.b32.xlu0 %v833, 64
      %v877 = vpop.permute.xlu0 %876
      %878 = vrot.lane.b32.xlu0 %v834, 64
      %v879 = vpop.permute.xlu0 %878
      %880 = vrot.lane.b32.xlu0 %v835, 64
      %v881 = vpop.permute.xlu0 %880
      %882 = vrot.lane.b32.xlu0 %v836, 64
      %v883 = vpop.permute.xlu0 %882
      %884 = vrot.lane.b32.xlu0 %v837, 64
      %v885 = vpop.permute.xlu0 %884
      %886 = vrot.lane.b32.xlu0 %v838, 64
      %v887 = vpop.permute.xlu0 %886
      %888 = vrot.lane.b32.xlu0 %v839, 64
      %v889 = vpop.permute.xlu0 %888
      %890 = vrot.lane.b32.xlu0 %v840, 64
      %v891 = vpop.permute.xlu0 %890
      %892 = vrot.lane.b32.xlu0 %v841, 64
      %v893 = vpop.permute.xlu0 %892
      %894 = vrot.lane.b32.xlu0 %v842, 64
      %v895 = vpop.permute.xlu0 %894
      %896 = vrot.lane.b32.xlu0 %v843, 64
      %v897 = vpop.permute.xlu0 %896
      %898 = vrot.lane.b32.xlu0 %v844, 64
      %v899 = vpop.permute.xlu0 %898
      %900 = vrot.lane.b32.xlu0 %v845, 64
      %v901 = vpop.permute.xlu0 %900
      %902 = vrot.lane.b32.xlu0 %v846, 64
      %v903 = vpop.permute.xlu0 %902
      %904 = vrot.lane.b32.xlu0 %v847, 64
      %v905 = vpop.permute.xlu0 %904
      %906 = vrot.lane.b32.xlu0 %v848, 64
      %v907 = vpop.permute.xlu0 %906
      %908 = vrot.lane.b32.xlu0 %v849, 64
      %v909 = vpop.permute.xlu0 %908
      %910 = vrot.lane.b32.xlu0 %v850, 64
      %v911 = vpop.permute.xlu0 %910
      %912 = vrot.lane.b32.xlu0 %v851, 64
      %v913 = vpop.permute.xlu0 %912
      %914 = vrot.lane.b32.xlu0 %v852, 64
      %v915 = vpop.permute.xlu0 %914
      %916 = vrot.lane.b32.xlu0 %v853, 64
      %v917 = vpop.permute.xlu0 %916
      %vm950 = vcmask 1043968
      %951 = vst.msk [vmem:[#allocation3] sm:$0xf] %vm950, %v855
      %952 = vst.msk [vmem:[#allocation3 + $0x14] sm:$0xf] %vm950, %v857
      %953 = vst.msk [vmem:[#allocation3 + $0x28] sm:$0xf] %vm950, %v859
      %954 = vst.msk [vmem:[#allocation3 + $0x3c] sm:$0xf] %vm950, %v861
      %955 = vst.msk [vmem:[#allocation3 + $0x50] sm:$0xf] %vm950, %v863
      %956 = vst.msk [vmem:[#allocation3 + $0x64] sm:$0xf] %vm950, %v865
      %957 = vst.msk [vmem:[#allocation3 + $0x78] sm:$0xf] %vm950, %v867
      %958 = vst.msk [vmem:[#allocation3 + $0x8c] sm:$0xf] %vm950, %v869
      %959 = vst.msk [vmem:[#allocation3 + $0xa0] sm:$0xf] %vm950, %v871
      %960 = vst.msk [vmem:[#allocation3 + $0xb4] sm:$0xf] %vm950, %v873
      %961 = vst.msk [vmem:[#allocation3 + $0xc8] sm:$0xf] %vm950, %v875
      %962 = vst.msk [vmem:[#allocation3 + $0xdc] sm:$0xf] %vm950, %v877
      %963 = vst.msk [vmem:[#allocation3 + $0xf0] sm:$0xf] %vm950, %v879
      %964 = vst.msk [vmem:[#allocation3 + $0x104] sm:$0xf] %vm950, %v881
      %965 = vst.msk [vmem:[#allocation3 + $0x118] sm:$0xf] %vm950, %v883
      %966 = vst.msk [vmem:[#allocation3 + $0x12c] sm:$0xf] %vm950, %v885
      %967 = vst.msk [vmem:[#allocation3 + $0x140] sm:$0xf] %vm950, %v887
      %968 = vst.msk [vmem:[#allocation3 + $0x154] sm:$0xf] %vm950, %v889
      %969 = vst.msk [vmem:[#allocation3 + $0x168] sm:$0xf] %vm950, %v891
      %970 = vst.msk [vmem:[#allocation3 + $0x17c] sm:$0xf] %vm950, %v893
      %971 = vst.msk [vmem:[#allocation3 + $0x190] sm:$0xf] %vm950, %v895
      %972 = vst.msk [vmem:[#allocation3 + $0x1a4] sm:$0xf] %vm950, %v897
      %973 = vst.msk [vmem:[#allocation3 + $0x1b8] sm:$0xf] %vm950, %v899
      %974 = vst.msk [vmem:[#allocation3 + $0x1cc] sm:$0xf] %vm950, %v901
      %975 = vst.msk [vmem:[#allocation3 + $0x1e0] sm:$0xf] %vm950, %v903
      %976 = vst.msk [vmem:[#allocation3 + $0x1f4] sm:$0xf] %vm950, %v905
      %977 = vst.msk [vmem:[#allocation3 + $0x208] sm:$0xf] %vm950, %v907
      %978 = vst.msk [vmem:[#allocation3 + $0x21c] sm:$0xf] %vm950, %v909
      %979 = vst.msk [vmem:[#allocation3 + $0x230] sm:$0xf] %vm950, %v911
      %980 = vst.msk [vmem:[#allocation3 + $0x244] sm:$0xf] %vm950, %v913
      %981 = vst.msk [vmem:[#allocation3 + $0x258] sm:$0xf] %vm950, %v915
      %982 = vst.msk [vmem:[#allocation3 + $0x26c] sm:$0xf] %vm950, %v917
      %v983 = vld [vmem:[#allocation2 + $0x2] sm:$0xff]
      %v984 = vld [vmem:[#allocation2 + $0xa] sm:$0xff]
      %v985 = vld [vmem:[#allocation2 + $0x1a] sm:$0xff]
      %v986 = vld [vmem:[#allocation2 + $0x22] sm:$0xff]
      %v987 = vld [vmem:[#allocation2 + $0x32] sm:$0xff]
      %v988 = vld [vmem:[#allocation2 + $0x3a] sm:$0xff]
      %v989 = vld [vmem:[#allocation2 + $0x4a] sm:$0xff]
      %v990 = vld [vmem:[#allocation2 + $0x52] sm:$0xff]
      %v991 = vld [vmem:[#allocation2 + $0x62] sm:$0xff]
      %v992 = vld [vmem:[#allocation2 + $0x6a] sm:$0xff]
      %v993 = vld [vmem:[#allocation2 + $0x7a] sm:$0xff]
      %v994 = vld [vmem:[#allocation2 + $0x82] sm:$0xff]
      %v995 = vld [vmem:[#allocation2 + $0x92] sm:$0xff]
      %v996 = vld [vmem:[#allocation2 + $0x9a] sm:$0xff]
      %v997 = vld [vmem:[#allocation2 + $0xaa] sm:$0xff]
      %v998 = vld [vmem:[#allocation2 + $0xb2] sm:$0xff]
      %v999 = vld [vmem:[#allocation2 + $0xc2] sm:$0xff]
      %v1000 = vld [vmem:[#allocation2 + $0xca] sm:$0xff]
      %v1001 = vld [vmem:[#allocation2 + $0xda] sm:$0xff]
      %v1002 = vld [vmem:[#allocation2 + $0xe2] sm:$0xff]
      %v1003 = vld [vmem:[#allocation2 + $0xf2] sm:$0xff]
      %v1004 = vld [vmem:[#allocation2 + $0xfa] sm:$0xff]
      %v1005 = vld [vmem:[#allocation2 + $0x10a] sm:$0xff]
      %v1006 = vld [vmem:[#allocation2 + $0x112] sm:$0xff]
      %v1007 = vld [vmem:[#allocation2 + $0x122] sm:$0xff]
      %v1008 = vld [vmem:[#allocation2 + $0x12a] sm:$0xff]
      %v1009 = vld [vmem:[#allocation2 + $0x13a] sm:$0xff]
      %v1010 = vld [vmem:[#allocation2 + $0x142] sm:$0xff]
      %v1011 = vld [vmem:[#allocation2 + $0x152] sm:$0xff]
      %v1012 = vld [vmem:[#allocation2 + $0x15a] sm:$0xff]
      %v1013 = vld [vmem:[#allocation2 + $0x16a] sm:$0xff]
      %v1014 = vld [vmem:[#allocation2 + $0x172] sm:$0xff]
      %v1015 = vpack.c.bf16 %v984, %v983
      %v1016 = vpack.c.bf16 %v986, %v985
      %v1017 = vpack.c.bf16 %v988, %v987
      %v1018 = vpack.c.bf16 %v990, %v989
      %v1019 = vpack.c.bf16 %v992, %v991
      %v1020 = vpack.c.bf16 %v994, %v993
      %v1021 = vpack.c.bf16 %v996, %v995
      %v1022 = vpack.c.bf16 %v998, %v997
      %v1023 = vpack.c.bf16 %v1000, %v999
      %v1024 = vpack.c.bf16 %v1002, %v1001
      %v1025 = vpack.c.bf16 %v1004, %v1003
      %v1026 = vpack.c.bf16 %v1006, %v1005
      %v1027 = vpack.c.bf16 %v1008, %v1007
      %v1028 = vpack.c.bf16 %v1010, %v1009
      %v1029 = vpack.c.bf16 %v1012, %v1011
      %v1030 = vpack.c.bf16 %v1014, %v1013
      %v1047 = vunpack.c.l.b16 %v1015
      %v1048 = vunpack.c.h.b16 %v1015
      %v1049 = vunpack.c.l.b16 %v1016
      %v1050 = vunpack.c.h.b16 %v1016
      %v1051 = vunpack.c.l.b16 %v1017
      %v1052 = vunpack.c.h.b16 %v1017
      %v1053 = vunpack.c.l.b16 %v1018
      %v1054 = vunpack.c.h.b16 %v1018
      %v1055 = vunpack.c.l.b16 %v1019
      %v1056 = vunpack.c.h.b16 %v1019
      %v1057 = vunpack.c.l.b16 %v1020
      %v1058 = vunpack.c.h.b16 %v1020
      %v1059 = vunpack.c.l.b16 %v1021
      %v1060 = vunpack.c.h.b16 %v1021
      %v1061 = vunpack.c.l.b16 %v1022
      %v1062 = vunpack.c.h.b16 %v1022
      %v1063 = vunpack.c.l.b16 %v1023
      %v1064 = vunpack.c.h.b16 %v1023
      %v1065 = vunpack.c.l.b16 %v1024
      %v1066 = vunpack.c.h.b16 %v1024
      %v1067 = vunpack.c.l.b16 %v1025
      %v1068 = vunpack.c.h.b16 %v1025
      %v1069 = vunpack.c.l.b16 %v1026
      %v1070 = vunpack.c.h.b16 %v1026
      %v1071 = vunpack.c.l.b16 %v1027
      %v1072 = vunpack.c.h.b16 %v1027
      %v1073 = vunpack.c.l.b16 %v1028
      %v1074 = vunpack.c.h.b16 %v1028
      %v1075 = vunpack.c.l.b16 %v1029
      %v1076 = vunpack.c.h.b16 %v1029
      %v1077 = vunpack.c.l.b16 %v1030
      %v1078 = vunpack.c.h.b16 %v1030
      %v1079 = vpack.c.b16 %v1047, %v1047
      %v1080 = vpack.c.b16 %v1048, %v1048
      %v1081 = vpack.c.b16 %v1049, %v1049
      %v1082 = vpack.c.b16 %v1050, %v1050
      %v1083 = vpack.c.b16 %v1051, %v1051
      %v1084 = vpack.c.b16 %v1052, %v1052
      %v1085 = vpack.c.b16 %v1053, %v1053
      %v1086 = vpack.c.b16 %v1054, %v1054
      %v1087 = vpack.c.b16 %v1055, %v1055
      %v1088 = vpack.c.b16 %v1056, %v1056
      %v1089 = vpack.c.b16 %v1057, %v1057
      %v1090 = vpack.c.b16 %v1058, %v1058
      %v1091 = vpack.c.b16 %v1059, %v1059
      %v1092 = vpack.c.b16 %v1060, %v1060
      %v1093 = vpack.c.b16 %v1061, %v1061
      %v1094 = vpack.c.b16 %v1062, %v1062
      %v1095 = vpack.c.b16 %v1063, %v1063
      %v1096 = vpack.c.b16 %v1064, %v1064
      %v1097 = vpack.c.b16 %v1065, %v1065
      %v1098 = vpack.c.b16 %v1066, %v1066
      %v1099 = vpack.c.b16 %v1067, %v1067
      %v1100 = vpack.c.b16 %v1068, %v1068
      %v1101 = vpack.c.b16 %v1069, %v1069
      %v1102 = vpack.c.b16 %v1070, %v1070
      %v1103 = vpack.c.b16 %v1071, %v1071
      %v1104 = vpack.c.b16 %v1072, %v1072
      %v1105 = vpack.c.b16 %v1073, %v1073
      %v1106 = vpack.c.b16 %v1074, %v1074
      %v1107 = vpack.c.b16 %v1075, %v1075
      %v1108 = vpack.c.b16 %v1076, %v1076
      %v1109 = vpack.c.b16 %v1077, %v1077
      %v1110 = vpack.c.b16 %v1078, %v1078
      %1143 = vst.msk [vmem:[#allocation3 + $0x4] sm:$0xf] %vm693, %v1079
      %1144 = vst.msk [vmem:[#allocation3 + $0x18] sm:$0xf] %vm693, %v1080
      %1145 = vst.msk [vmem:[#allocation3 + $0x2c] sm:$0xf] %vm693, %v1081
      %1146 = vst.msk [vmem:[#allocation3 + $0x40] sm:$0xf] %vm693, %v1082
      %1147 = vst.msk [vmem:[#allocation3 + $0x54] sm:$0xf] %vm693, %v1083
      %1148 = vst.msk [vmem:[#allocation3 + $0x68] sm:$0xf] %vm693, %v1084
      %1149 = vst.msk [vmem:[#allocation3 + $0x7c] sm:$0xf] %vm693, %v1085
      %1150 = vst.msk [vmem:[#allocation3 + $0x90] sm:$0xf] %vm693, %v1086
      %1151 = vst.msk [vmem:[#allocation3 + $0xa4] sm:$0xf] %vm693, %v1087
      %1152 = vst.msk [vmem:[#allocation3 + $0xb8] sm:$0xf] %vm693, %v1088
      %1153 = vst.msk [vmem:[#allocation3 + $0xcc] sm:$0xf] %vm693, %v1089
      %1154 = vst.msk [vmem:[#allocation3 + $0xe0] sm:$0xf] %vm693, %v1090
      %1155 = vst.msk [vmem:[#allocation3 + $0xf4] sm:$0xf] %vm693, %v1091
      %1156 = vst.msk [vmem:[#allocation3 + $0x108] sm:$0xf] %vm693, %v1092
      %1157 = vst.msk [vmem:[#allocation3 + $0x11c] sm:$0xf] %vm693, %v1093
      %1158 = vst.msk [vmem:[#allocation3 + $0x130] sm:$0xf] %vm693, %v1094
      %1159 = vst.msk [vmem:[#allocation3 + $0x144] sm:$0xf] %vm693, %v1095
      %1160 = vst.msk [vmem:[#allocation3 + $0x158] sm:$0xf] %vm693, %v1096
      %1161 = vst.msk [vmem:[#allocation3 + $0x16c] sm:$0xf] %vm693, %v1097
      %1162 = vst.msk [vmem:[#allocation3 + $0x180] sm:$0xf] %vm693, %v1098
      %1163 = vst.msk [vmem:[#allocation3 + $0x194] sm:$0xf] %vm693, %v1099
      %1164 = vst.msk [vmem:[#allocation3 + $0x1a8] sm:$0xf] %vm693, %v1100
      %1165 = vst.msk [vmem:[#allocation3 + $0x1bc] sm:$0xf] %vm693, %v1101
      %1166 = vst.msk [vmem:[#allocation3 + $0x1d0] sm:$0xf] %vm693, %v1102
      %1167 = vst.msk [vmem:[#allocation3 + $0x1e4] sm:$0xf] %vm693, %v1103
      %1168 = vst.msk [vmem:[#allocation3 + $0x1f8] sm:$0xf] %vm693, %v1104
      %1169 = vst.msk [vmem:[#allocation3 + $0x20c] sm:$0xf] %vm693, %v1105
      %1170 = vst.msk [vmem:[#allocation3 + $0x220] sm:$0xf] %vm693, %v1106
      %1171 = vst.msk [vmem:[#allocation3 + $0x234] sm:$0xf] %vm693, %v1107
      %1172 = vst.msk [vmem:[#allocation3 + $0x248] sm:$0xf] %vm693, %v1108
      %1173 = vst.msk [vmem:[#allocation3 + $0x25c] sm:$0xf] %vm693, %v1109
      %1174 = vst.msk [vmem:[#allocation3 + $0x270] sm:$0xf] %vm693, %v1110
      %v1175 = vld [vmem:[%s500] sm:$0xff]
      %v1176 = vld [vmem:[%s500 + $0x8] sm:$0xff]
      %v1177 = vld [vmem:[%s500 + $0x18] sm:$0xff]
      %v1178 = vld [vmem:[%s500 + $0x20] sm:$0xff]
      %v1179 = vld [vmem:[%s500 + $0x30] sm:$0xff]
      %v1180 = vld [vmem:[%s500 + $0x38] sm:$0xff]
      %v1181 = vld [vmem:[%s500 + $0x48] sm:$0xff]
      %v1182 = vld [vmem:[%s500 + $0x50] sm:$0xff]
      %v1183 = vld [vmem:[%s500 + $0x60] sm:$0xff]
      %v1184 = vld [vmem:[%s500 + $0x68] sm:$0xff]
      %v1185 = vld [vmem:[%s500 + $0x78] sm:$0xff]
      %v1186 = vld [vmem:[%s500 + $0x80] sm:$0xff]
      %v1187 = vld [vmem:[%s500 + $0x90] sm:$0xff]
      %v1188 = vld [vmem:[%s500 + $0x98] sm:$0xff]
      %v1189 = vld [vmem:[%s500 + $0xa8] sm:$0xff]
      %v1190 = vld [vmem:[%s500 + $0xb0] sm:$0xff]
      %v1191 = vld [vmem:[%s500 + $0xc0] sm:$0xff]
      %v1192 = vld [vmem:[%s500 + $0xc8] sm:$0xff]
      %v1193 = vld [vmem:[%s500 + $0xd8] sm:$0xff]
      %v1194 = vld [vmem:[%s500 + $0xe0] sm:$0xff]
      %v1195 = vld [vmem:[%s500 + $0xf0] sm:$0xff]
      %v1196 = vld [vmem:[%s500 + $0xf8] sm:$0xff]
      %v1197 = vld [vmem:[%s500 + $0x108] sm:$0xff]
      %v1198 = vld [vmem:[%s500 + $0x110] sm:$0xff]
      %v1199 = vld [vmem:[%s500 + $0x120] sm:$0xff]
      %v1200 = vld [vmem:[%s500 + $0x128] sm:$0xff]
      %v1201 = vld [vmem:[%s500 + $0x138] sm:$0xff]
      %v1202 = vld [vmem:[%s500 + $0x140] sm:$0xff]
      %v1203 = vld [vmem:[%s500 + $0x150] sm:$0xff]
      %v1204 = vld [vmem:[%s500 + $0x158] sm:$0xff]
      %v1205 = vld [vmem:[%s500 + $0x168] sm:$0xff]
      %v1206 = vld [vmem:[%s500 + $0x170] sm:$0xff]
      %v1207 = vpack.c.bf16 %v1176, %v1175
      %v1208 = vpack.c.bf16 %v1178, %v1177
      %v1209 = vpack.c.bf16 %v1180, %v1179
      %v1210 = vpack.c.bf16 %v1182, %v1181
      %v1211 = vpack.c.bf16 %v1184, %v1183
      %v1212 = vpack.c.bf16 %v1186, %v1185
      %v1213 = vpack.c.bf16 %v1188, %v1187
      %v1214 = vpack.c.bf16 %v1190, %v1189
      %v1215 = vpack.c.bf16 %v1192, %v1191
      %v1216 = vpack.c.bf16 %v1194, %v1193
      %v1217 = vpack.c.bf16 %v1196, %v1195
      %v1218 = vpack.c.bf16 %v1198, %v1197
      %v1219 = vpack.c.bf16 %v1200, %v1199
      %v1220 = vpack.c.bf16 %v1202, %v1201
      %v1221 = vpack.c.bf16 %v1204, %v1203
      %v1222 = vpack.c.bf16 %v1206, %v1205
      %v1239 = vunpack.c.l.b16 %v1207
      %v1240 = vunpack.c.h.b16 %v1207
      %v1241 = vunpack.c.l.b16 %v1208
      %v1242 = vunpack.c.h.b16 %v1208
      %v1243 = vunpack.c.l.b16 %v1209
      %v1244 = vunpack.c.h.b16 %v1209
      %v1245 = vunpack.c.l.b16 %v1210
      %v1246 = vunpack.c.h.b16 %v1210
      %v1247 = vunpack.c.l.b16 %v1211
      %v1248 = vunpack.c.h.b16 %v1211
      %v1249 = vunpack.c.l.b16 %v1212
      %v1250 = vunpack.c.h.b16 %v1212
      %v1251 = vunpack.c.l.b16 %v1213
      %v1252 = vunpack.c.h.b16 %v1213
      %v1253 = vunpack.c.l.b16 %v1214
      %v1254 = vunpack.c.h.b16 %v1214
      %v1255 = vunpack.c.l.b16 %v1215
      %v1256 = vunpack.c.h.b16 %v1215
      %v1257 = vunpack.c.l.b16 %v1216
      %v1258 = vunpack.c.h.b16 %v1216
      %v1259 = vunpack.c.l.b16 %v1217
      %v1260 = vunpack.c.h.b16 %v1217
      %v1261 = vunpack.c.l.b16 %v1218
      %v1262 = vunpack.c.h.b16 %v1218
      %v1263 = vunpack.c.l.b16 %v1219
      %v1264 = vunpack.c.h.b16 %v1219
      %v1265 = vunpack.c.l.b16 %v1220
      %v1266 = vunpack.c.h.b16 %v1220
      %v1267 = vunpack.c.l.b16 %v1221
      %v1268 = vunpack.c.h.b16 %v1221
      %v1269 = vunpack.c.l.b16 %v1222
      %v1270 = vunpack.c.h.b16 %v1222
      %v1271 = vpack.c.b16 %v1239, %v1239
      %v1272 = vpack.c.b16 %v1240, %v1240
      %v1273 = vpack.c.b16 %v1241, %v1241
      %v1274 = vpack.c.b16 %v1242, %v1242
      %v1275 = vpack.c.b16 %v1243, %v1243
      %v1276 = vpack.c.b16 %v1244, %v1244
      %v1277 = vpack.c.b16 %v1245, %v1245
      %v1278 = vpack.c.b16 %v1246, %v1246
      %v1279 = vpack.c.b16 %v1247, %v1247
      %v1280 = vpack.c.b16 %v1248, %v1248
      %v1281 = vpack.c.b16 %v1249, %v1249
      %v1282 = vpack.c.b16 %v1250, %v1250
      %v1283 = vpack.c.b16 %v1251, %v1251
      %v1284 = vpack.c.b16 %v1252, %v1252
      %v1285 = vpack.c.b16 %v1253, %v1253
      %v1286 = vpack.c.b16 %v1254, %v1254
      %v1287 = vpack.c.b16 %v1255, %v1255
      %v1288 = vpack.c.b16 %v1256, %v1256
      %v1289 = vpack.c.b16 %v1257, %v1257
      %v1290 = vpack.c.b16 %v1258, %v1258
      %v1291 = vpack.c.b16 %v1259, %v1259
      %v1292 = vpack.c.b16 %v1260, %v1260
      %v1293 = vpack.c.b16 %v1261, %v1261
      %v1294 = vpack.c.b16 %v1262, %v1262
      %v1295 = vpack.c.b16 %v1263, %v1263
      %v1296 = vpack.c.b16 %v1264, %v1264
      %v1297 = vpack.c.b16 %v1265, %v1265
      %v1298 = vpack.c.b16 %v1266, %v1266
      %v1299 = vpack.c.b16 %v1267, %v1267
      %v1300 = vpack.c.b16 %v1268, %v1268
      %v1301 = vpack.c.b16 %v1269, %v1269
      %v1302 = vpack.c.b16 %v1270, %v1270
      %1303 = vrot.lane.b32.xlu0 %v1271, 64
      %v1304 = vpop.permute.xlu0 %1303
      %1305 = vrot.lane.b32.xlu0 %v1272, 64
      %v1306 = vpop.permute.xlu0 %1305
      %1307 = vrot.lane.b32.xlu0 %v1273, 64
      %v1308 = vpop.permute.xlu0 %1307
      %1309 = vrot.lane.b32.xlu0 %v1274, 64
      %v1310 = vpop.permute.xlu0 %1309
      %1311 = vrot.lane.b32.xlu0 %v1275, 64
      %v1312 = vpop.permute.xlu0 %1311
      %1313 = vrot.lane.b32.xlu0 %v1276, 64
      %v1314 = vpop.permute.xlu0 %1313
      %1315 = vrot.lane.b32.xlu0 %v1277, 64
      %v1316 = vpop.permute.xlu0 %1315
      %1317 = vrot.lane.b32.xlu0 %v1278, 64
      %v1318 = vpop.permute.xlu0 %1317
      %1319 = vrot.lane.b32.xlu0 %v1279, 64
      %v1320 = vpop.permute.xlu0 %1319
      %1321 = vrot.lane.b32.xlu0 %v1280, 64
      %v1322 = vpop.permute.xlu0 %1321
      %1323 = vrot.lane.b32.xlu0 %v1281, 64
      %v1324 = vpop.permute.xlu0 %1323
      %1325 = vrot.lane.b32.xlu0 %v1282, 64
      %v1326 = vpop.permute.xlu0 %1325
      %1327 = vrot.lane.b32.xlu0 %v1283, 64
      %v1328 = vpop.permute.xlu0 %1327
      %1329 = vrot.lane.b32.xlu0 %v1284, 64
      %v1330 = vpop.permute.xlu0 %1329
      %1331 = vrot.lane.b32.xlu0 %v1285, 64
      %v1332 = vpop.permute.xlu0 %1331
      %1333 = vrot.lane.b32.xlu0 %v1286, 64
      %v1334 = vpop.permute.xlu0 %1333
      %1335 = vrot.lane.b32.xlu0 %v1287, 64
      %v1336 = vpop.permute.xlu0 %1335
      %1337 = vrot.lane.b32.xlu0 %v1288, 64
      %v1338 = vpop.permute.xlu0 %1337
      %1339 = vrot.lane.b32.xlu0 %v1289, 64
      %v1340 = vpop.permute.xlu0 %1339
      %1341 = vrot.lane.b32.xlu0 %v1290, 64
      %v1342 = vpop.permute.xlu0 %1341
      %1343 = vrot.lane.b32.xlu0 %v1291, 64
      %v1344 = vpop.permute.xlu0 %1343
      %1345 = vrot.lane.b32.xlu0 %v1292, 64
      %v1346 = vpop.permute.xlu0 %1345
      %1347 = vrot.lane.b32.xlu0 %v1293, 64
      %v1348 = vpop.permute.xlu0 %1347
      %1349 = vrot.lane.b32.xlu0 %v1294, 64
      %v1350 = vpop.permute.xlu0 %1349
      %1351 = vrot.lane.b32.xlu0 %v1295, 64
      %v1352 = vpop.permute.xlu0 %1351
      %1353 = vrot.lane.b32.xlu0 %v1296, 64
      %v1354 = vpop.permute.xlu0 %1353
      %1355 = vrot.lane.b32.xlu0 %v1297, 64
      %v1356 = vpop.permute.xlu0 %1355
      %1357 = vrot.lane.b32.xlu0 %v1298, 64
      %v1358 = vpop.permute.xlu0 %1357
      %1359 = vrot.lane.b32.xlu0 %v1299, 64
      %v1360 = vpop.permute.xlu0 %1359
      %1361 = vrot.lane.b32.xlu0 %v1300, 64
      %v1362 = vpop.permute.xlu0 %1361
      %1363 = vrot.lane.b32.xlu0 %v1301, 64
      %v1364 = vpop.permute.xlu0 %1363
      %1365 = vrot.lane.b32.xlu0 %v1302, 64
      %v1366 = vpop.permute.xlu0 %1365
      %1399 = vst.msk [vmem:[#allocation3 + $0x4] sm:$0xf] %vm950, %v1304
      %1400 = vst.msk [vmem:[#allocation3 + $0x18] sm:$0xf] %vm950, %v1306
      %1401 = vst.msk [vmem:[#allocation3 + $0x2c] sm:$0xf] %vm950, %v1308
      %1402 = vst.msk [vmem:[#allocation3 + $0x40] sm:$0xf] %vm950, %v1310
      %1403 = vst.msk [vmem:[#allocation3 + $0x54] sm:$0xf] %vm950, %v1312
      %1404 = vst.msk [vmem:[#allocation3 + $0x68] sm:$0xf] %vm950, %v1314
      %1405 = vst.msk [vmem:[#allocation3 + $0x7c] sm:$0xf] %vm950, %v1316
      %1406 = vst.msk [vmem:[#allocation3 + $0x90] sm:$0xf] %vm950, %v1318
      %1407 = vst.msk [vmem:[#allocation3 + $0xa4] sm:$0xf] %vm950, %v1320
      %1408 = vst.msk [vmem:[#allocation3 + $0xb8] sm:$0xf] %vm950, %v1322
      %1409 = vst.msk [vmem:[#allocation3 + $0xcc] sm:$0xf] %vm950, %v1324
      %1410 = vst.msk [vmem:[#allocation3 + $0xe0] sm:$0xf] %vm950, %v1326
      %1411 = vst.msk [vmem:[#allocation3 + $0xf4] sm:$0xf] %vm950, %v1328
      %1412 = vst.msk [vmem:[#allocation3 + $0x108] sm:$0xf] %vm950, %v1330
      %1413 = vst.msk [vmem:[#allocation3 + $0x11c] sm:$0xf] %vm950, %v1332
      %1414 = vst.msk [vmem:[#allocation3 + $0x130] sm:$0xf] %vm950, %v1334
      %1415 = vst.msk [vmem:[#allocation3 + $0x144] sm:$0xf] %vm950, %v1336
      %1416 = vst.msk [vmem:[#allocation3 + $0x158] sm:$0xf] %vm950, %v1338
      %1417 = vst.msk [vmem:[#allocation3 + $0x16c] sm:$0xf] %vm950, %v1340
      %1418 = vst.msk [vmem:[#allocation3 + $0x180] sm:$0xf] %vm950, %v1342
      %1419 = vst.msk [vmem:[#allocation3 + $0x194] sm:$0xf] %vm950, %v1344
      %1420 = vst.msk [vmem:[#allocation3 + $0x1a8] sm:$0xf] %vm950, %v1346
      %1421 = vst.msk [vmem:[#allocation3 + $0x1bc] sm:$0xf] %vm950, %v1348
      %1422 = vst.msk [vmem:[#allocation3 + $0x1d0] sm:$0xf] %vm950, %v1350
      %1423 = vst.msk [vmem:[#allocation3 + $0x1e4] sm:$0xf] %vm950, %v1352
      %1424 = vst.msk [vmem:[#allocation3 + $0x1f8] sm:$0xf] %vm950, %v1354
      %1425 = vst.msk [vmem:[#allocation3 + $0x20c] sm:$0xf] %vm950, %v1356
      %1426 = vst.msk [vmem:[#allocation3 + $0x220] sm:$0xf] %vm950, %v1358
      %1427 = vst.msk [vmem:[#allocation3 + $0x234] sm:$0xf] %vm950, %v1360
      %1428 = vst.msk [vmem:[#allocation3 + $0x248] sm:$0xf] %vm950, %v1362
      %1429 = vst.msk [vmem:[#allocation3 + $0x25c] sm:$0xf] %vm950, %v1364
      %1430 = vst.msk [vmem:[#allocation3 + $0x270] sm:$0xf] %vm950, %v1366
      %v1431 = vld [vmem:[%s500 + $0x1] sm:$0xff]
      %v1432 = vld [vmem:[%s500 + $0x9] sm:$0xff]
      %v1433 = vld [vmem:[%s500 + $0x19] sm:$0xff]
      %v1434 = vld [vmem:[%s500 + $0x21] sm:$0xff]
      %v1435 = vld [vmem:[%s500 + $0x31] sm:$0xff]
      %v1436 = vld [vmem:[%s500 + $0x39] sm:$0xff]
      %v1437 = vld [vmem:[%s500 + $0x49] sm:$0xff]
      %v1438 = vld [vmem:[%s500 + $0x51] sm:$0xff]
      %v1439 = vld [vmem:[%s500 + $0x61] sm:$0xff]
      %v1440 = vld [vmem:[%s500 + $0x69] sm:$0xff]
      %v1441 = vld [vmem:[%s500 + $0x79] sm:$0xff]
      %v1442 = vld [vmem:[%s500 + $0x81] sm:$0xff]
      %v1443 = vld [vmem:[%s500 + $0x91] sm:$0xff]
      %v1444 = vld [vmem:[%s500 + $0x99] sm:$0xff]
      %v1445 = vld [vmem:[%s500 + $0xa9] sm:$0xff]
      %v1446 = vld [vmem:[%s500 + $0xb1] sm:$0xff]
      %v1447 = vld [vmem:[%s500 + $0xc1] sm:$0xff]
      %v1448 = vld [vmem:[%s500 + $0xc9] sm:$0xff]
      %v1449 = vld [vmem:[%s500 + $0xd9] sm:$0xff]
      %v1450 = vld [vmem:[%s500 + $0xe1] sm:$0xff]
      %v1451 = vld [vmem:[%s500 + $0xf1] sm:$0xff]
      %v1452 = vld [vmem:[%s500 + $0xf9] sm:$0xff]
      %v1453 = vld [vmem:[%s500 + $0x109] sm:$0xff]
      %v1454 = vld [vmem:[%s500 + $0x111] sm:$0xff]
      %v1455 = vld [vmem:[%s500 + $0x121] sm:$0xff]
      %v1456 = vld [vmem:[%s500 + $0x129] sm:$0xff]
      %v1457 = vld [vmem:[%s500 + $0x139] sm:$0xff]
      %v1458 = vld [vmem:[%s500 + $0x141] sm:$0xff]
      %v1459 = vld [vmem:[%s500 + $0x151] sm:$0xff]
      %v1460 = vld [vmem:[%s500 + $0x159] sm:$0xff]
      %v1461 = vld [vmem:[%s500 + $0x169] sm:$0xff]
      %v1462 = vld [vmem:[%s500 + $0x171] sm:$0xff]
      %v1463 = vpack.c.bf16 %v1432, %v1431
      %v1464 = vpack.c.bf16 %v1434, %v1433
      %v1465 = vpack.c.bf16 %v1436, %v1435
      %v1466 = vpack.c.bf16 %v1438, %v1437
      %v1467 = vpack.c.bf16 %v1440, %v1439
      %v1468 = vpack.c.bf16 %v1442, %v1441
      %v1469 = vpack.c.bf16 %v1444, %v1443
      %v1470 = vpack.c.bf16 %v1446, %v1445
      %v1471 = vpack.c.bf16 %v1448, %v1447
      %v1472 = vpack.c.bf16 %v1450, %v1449
      %v1473 = vpack.c.bf16 %v1452, %v1451
      %v1474 = vpack.c.bf16 %v1454, %v1453
      %v1475 = vpack.c.bf16 %v1456, %v1455
      %v1476 = vpack.c.bf16 %v1458, %v1457
      %v1477 = vpack.c.bf16 %v1460, %v1459
      %v1478 = vpack.c.bf16 %v1462, %v1461
      %v1495 = vunpack.c.l.b16 %v1463
      %v1496 = vunpack.c.h.b16 %v1463
      %v1497 = vunpack.c.l.b16 %v1464
      %v1498 = vunpack.c.h.b16 %v1464
      %v1499 = vunpack.c.l.b16 %v1465
      %v1500 = vunpack.c.h.b16 %v1465
      %v1501 = vunpack.c.l.b16 %v1466
      %v1502 = vunpack.c.h.b16 %v1466
      %v1503 = vunpack.c.l.b16 %v1467
      %v1504 = vunpack.c.h.b16 %v1467
      %v1505 = vunpack.c.l.b16 %v1468
      %v1506 = vunpack.c.h.b16 %v1468
      %v1507 = vunpack.c.l.b16 %v1469
      %v1508 = vunpack.c.h.b16 %v1469
      %v1509 = vunpack.c.l.b16 %v1470
      %v1510 = vunpack.c.h.b16 %v1470
      %v1511 = vunpack.c.l.b16 %v1471
      %v1512 = vunpack.c.h.b16 %v1471
      %v1513 = vunpack.c.l.b16 %v1472
      %v1514 = vunpack.c.h.b16 %v1472
      %v1515 = vunpack.c.l.b16 %v1473
      %v1516 = vunpack.c.h.b16 %v1473
      %v1517 = vunpack.c.l.b16 %v1474
      %v1518 = vunpack.c.h.b16 %v1474
      %v1519 = vunpack.c.l.b16 %v1475
      %v1520 = vunpack.c.h.b16 %v1475
      %v1521 = vunpack.c.l.b16 %v1476
      %v1522 = vunpack.c.h.b16 %v1476
      %v1523 = vunpack.c.l.b16 %v1477
      %v1524 = vunpack.c.h.b16 %v1477
      %v1525 = vunpack.c.l.b16 %v1478
      %v1526 = vunpack.c.h.b16 %v1478
      %v1527 = vpack.c.b16 %v1495, %v1495
      %v1528 = vpack.c.b16 %v1496, %v1496
      %v1529 = vpack.c.b16 %v1497, %v1497
      %v1530 = vpack.c.b16 %v1498, %v1498
      %v1531 = vpack.c.b16 %v1499, %v1499
      %v1532 = vpack.c.b16 %v1500, %v1500
      %v1533 = vpack.c.b16 %v1501, %v1501
      %v1534 = vpack.c.b16 %v1502, %v1502
      %v1535 = vpack.c.b16 %v1503, %v1503
      %v1536 = vpack.c.b16 %v1504, %v1504
      %v1537 = vpack.c.b16 %v1505, %v1505
      %v1538 = vpack.c.b16 %v1506, %v1506
      %v1539 = vpack.c.b16 %v1507, %v1507
      %v1540 = vpack.c.b16 %v1508, %v1508
      %v1541 = vpack.c.b16 %v1509, %v1509
      %v1542 = vpack.c.b16 %v1510, %v1510
      %v1543 = vpack.c.b16 %v1511, %v1511
      %v1544 = vpack.c.b16 %v1512, %v1512
      %v1545 = vpack.c.b16 %v1513, %v1513
      %v1546 = vpack.c.b16 %v1514, %v1514
      %v1547 = vpack.c.b16 %v1515, %v1515
      %v1548 = vpack.c.b16 %v1516, %v1516
      %v1549 = vpack.c.b16 %v1517, %v1517
      %v1550 = vpack.c.b16 %v1518, %v1518
      %v1551 = vpack.c.b16 %v1519, %v1519
      %v1552 = vpack.c.b16 %v1520, %v1520
      %v1553 = vpack.c.b16 %v1521, %v1521
      %v1554 = vpack.c.b16 %v1522, %v1522
      %v1555 = vpack.c.b16 %v1523, %v1523
      %v1556 = vpack.c.b16 %v1524, %v1524
      %v1557 = vpack.c.b16 %v1525, %v1525
      %v1558 = vpack.c.b16 %v1526, %v1526
      %1591 = vst.msk [vmem:[#allocation3 + $0x8] sm:$0xf] %vm693, %v1527
      %1592 = vst.msk [vmem:[#allocation3 + $0x1c] sm:$0xf] %vm693, %v1528
      %1593 = vst.msk [vmem:[#allocation3 + $0x30] sm:$0xf] %vm693, %v1529
      %1594 = vst.msk [vmem:[#allocation3 + $0x44] sm:$0xf] %vm693, %v1530
      %1595 = vst.msk [vmem:[#allocation3 + $0x58] sm:$0xf] %vm693, %v1531
      %1596 = vst.msk [vmem:[#allocation3 + $0x6c] sm:$0xf] %vm693, %v1532
      %1597 = vst.msk [vmem:[#allocation3 + $0x80] sm:$0xf] %vm693, %v1533
      %1598 = vst.msk [vmem:[#allocation3 + $0x94] sm:$0xf] %vm693, %v1534
      %1599 = vst.msk [vmem:[#allocation3 + $0xa8] sm:$0xf] %vm693, %v1535
      %1600 = vst.msk [vmem:[#allocation3 + $0xbc] sm:$0xf] %vm693, %v1536
      %1601 = vst.msk [vmem:[#allocation3 + $0xd0] sm:$0xf] %vm693, %v1537
      %1602 = vst.msk [vmem:[#allocation3 + $0xe4] sm:$0xf] %vm693, %v1538
      %1603 = vst.msk [vmem:[#allocation3 + $0xf8] sm:$0xf] %vm693, %v1539
      %1604 = vst.msk [vmem:[#allocation3 + $0x10c] sm:$0xf] %vm693, %v1540
      %1605 = vst.msk [vmem:[#allocation3 + $0x120] sm:$0xf] %vm693, %v1541
      %1606 = vst.msk [vmem:[#allocation3 + $0x134] sm:$0xf] %vm693, %v1542
      %1607 = vst.msk [vmem:[#allocation3 + $0x148] sm:$0xf] %vm693, %v1543
      %1608 = vst.msk [vmem:[#allocation3 + $0x15c] sm:$0xf] %vm693, %v1544
      %1609 = vst.msk [vmem:[#allocation3 + $0x170] sm:$0xf] %vm693, %v1545
      %1610 = vst.msk [vmem:[#allocation3 + $0x184] sm:$0xf] %vm693, %v1546
      %1611 = vst.msk [vmem:[#allocation3 + $0x198] sm:$0xf] %vm693, %v1547
      %1612 = vst.msk [vmem:[#allocation3 + $0x1ac] sm:$0xf] %vm693, %v1548
      %1613 = vst.msk [vmem:[#allocation3 + $0x1c0] sm:$0xf] %vm693, %v1549
      %1614 = vst.msk [vmem:[#allocation3 + $0x1d4] sm:$0xf] %vm693, %v1550
      %1615 = vst.msk [vmem:[#allocation3 + $0x1e8] sm:$0xf] %vm693, %v1551
      %1616 = vst.msk [vmem:[#allocation3 + $0x1fc] sm:$0xf] %vm693, %v1552
      %1617 = vst.msk [vmem:[#allocation3 + $0x210] sm:$0xf] %vm693, %v1553
      %1618 = vst.msk [vmem:[#allocation3 + $0x224] sm:$0xf] %vm693, %v1554
      %1619 = vst.msk [vmem:[#allocation3 + $0x238] sm:$0xf] %vm693, %v1555
      %1620 = vst.msk [vmem:[#allocation3 + $0x24c] sm:$0xf] %vm693, %v1556
      %1621 = vst.msk [vmem:[#allocation3 + $0x260] sm:$0xf] %vm693, %v1557
      %1622 = vst.msk [vmem:[#allocation3 + $0x274] sm:$0xf] %vm693, %v1558
      %v1623 = vld [vmem:[%s500 + $0x2] sm:$0xff]
      %v1624 = vld [vmem:[%s500 + $0xa] sm:$0xff]
      %v1625 = vld [vmem:[%s500 + $0x1a] sm:$0xff]
      %v1626 = vld [vmem:[%s500 + $0x22] sm:$0xff]
      %v1627 = vld [vmem:[%s500 + $0x32] sm:$0xff]
      %v1628 = vld [vmem:[%s500 + $0x3a] sm:$0xff]
      %v1629 = vld [vmem:[%s500 + $0x4a] sm:$0xff]
      %v1630 = vld [vmem:[%s500 + $0x52] sm:$0xff]
      %v1631 = vld [vmem:[%s500 + $0x62] sm:$0xff]
      %v1632 = vld [vmem:[%s500 + $0x6a] sm:$0xff]
      %v1633 = vld [vmem:[%s500 + $0x7a] sm:$0xff]
      %v1634 = vld [vmem:[%s500 + $0x82] sm:$0xff]
      %v1635 = vld [vmem:[%s500 + $0x92] sm:$0xff]
      %v1636 = vld [vmem:[%s500 + $0x9a] sm:$0xff]
      %v1637 = vld [vmem:[%s500 + $0xaa] sm:$0xff]
      %v1638 = vld [vmem:[%s500 + $0xb2] sm:$0xff]
      %v1639 = vld [vmem:[%s500 + $0xc2] sm:$0xff]
      %v1640 = vld [vmem:[%s500 + $0xca] sm:$0xff]
      %v1641 = vld [vmem:[%s500 + $0xda] sm:$0xff]
      %v1642 = vld [vmem:[%s500 + $0xe2] sm:$0xff]
      %v1643 = vld [vmem:[%s500 + $0xf2] sm:$0xff]
      %v1644 = vld [vmem:[%s500 + $0xfa] sm:$0xff]
      %v1645 = vld [vmem:[%s500 + $0x10a] sm:$0xff]
      %v1646 = vld [vmem:[%s500 + $0x112] sm:$0xff]
      %v1647 = vld [vmem:[%s500 + $0x122] sm:$0xff]
      %v1648 = vld [vmem:[%s500 + $0x12a] sm:$0xff]
      %v1649 = vld [vmem:[%s500 + $0x13a] sm:$0xff]
      %v1650 = vld [vmem:[%s500 + $0x142] sm:$0xff]
      %v1651 = vld [vmem:[%s500 + $0x152] sm:$0xff]
      %v1652 = vld [vmem:[%s500 + $0x15a] sm:$0xff]
      %v1653 = vld [vmem:[%s500 + $0x16a] sm:$0xff]
      %v1654 = vld [vmem:[%s500 + $0x172] sm:$0xff]
      %v1655 = vpack.c.bf16 %v1624, %v1623
      %v1656 = vpack.c.bf16 %v1626, %v1625
      %v1657 = vpack.c.bf16 %v1628, %v1627
      %v1658 = vpack.c.bf16 %v1630, %v1629
      %v1659 = vpack.c.bf16 %v1632, %v1631
      %v1660 = vpack.c.bf16 %v1634, %v1633
      %v1661 = vpack.c.bf16 %v1636, %v1635
      %v1662 = vpack.c.bf16 %v1638, %v1637
      %v1663 = vpack.c.bf16 %v1640, %v1639
      %v1664 = vpack.c.bf16 %v1642, %v1641
      %v1665 = vpack.c.bf16 %v1644, %v1643
      %v1666 = vpack.c.bf16 %v1646, %v1645
      %v1667 = vpack.c.bf16 %v1648, %v1647
      %v1668 = vpack.c.bf16 %v1650, %v1649
      %v1669 = vpack.c.bf16 %v1652, %v1651
      %v1670 = vpack.c.bf16 %v1654, %v1653
      %v1687 = vunpack.c.l.b16 %v1655
      %v1688 = vunpack.c.h.b16 %v1655
      %v1689 = vunpack.c.l.b16 %v1656
      %v1690 = vunpack.c.h.b16 %v1656
      %v1691 = vunpack.c.l.b16 %v1657
      %v1692 = vunpack.c.h.b16 %v1657
      %v1693 = vunpack.c.l.b16 %v1658
      %v1694 = vunpack.c.h.b16 %v1658
      %v1695 = vunpack.c.l.b16 %v1659
      %v1696 = vunpack.c.h.b16 %v1659
      %v1697 = vunpack.c.l.b16 %v1660
      %v1698 = vunpack.c.h.b16 %v1660
      %v1699 = vunpack.c.l.b16 %v1661
      %v1700 = vunpack.c.h.b16 %v1661
      %v1701 = vunpack.c.l.b16 %v1662
      %v1702 = vunpack.c.h.b16 %v1662
      %v1703 = vunpack.c.l.b16 %v1663
      %v1704 = vunpack.c.h.b16 %v1663
      %v1705 = vunpack.c.l.b16 %v1664
      %v1706 = vunpack.c.h.b16 %v1664
      %v1707 = vunpack.c.l.b16 %v1665
      %v1708 = vunpack.c.h.b16 %v1665
      %v1709 = vunpack.c.l.b16 %v1666
      %v1710 = vunpack.c.h.b16 %v1666
      %v1711 = vunpack.c.l.b16 %v1667
      %v1712 = vunpack.c.h.b16 %v1667
      %v1713 = vunpack.c.l.b16 %v1668
      %v1714 = vunpack.c.h.b16 %v1668
      %v1715 = vunpack.c.l.b16 %v1669
      %v1716 = vunpack.c.h.b16 %v1669
      %v1717 = vunpack.c.l.b16 %v1670
      %v1718 = vunpack.c.h.b16 %v1670
      %v1719 = vpack.c.b16 %v1687, %v1687
      %v1720 = vpack.c.b16 %v1688, %v1688
      %v1721 = vpack.c.b16 %v1689, %v1689
      %v1722 = vpack.c.b16 %v1690, %v1690
      %v1723 = vpack.c.b16 %v1691, %v1691
      %v1724 = vpack.c.b16 %v1692, %v1692
      %v1725 = vpack.c.b16 %v1693, %v1693
      %v1726 = vpack.c.b16 %v1694, %v1694
      %v1727 = vpack.c.b16 %v1695, %v1695
      %v1728 = vpack.c.b16 %v1696, %v1696
      %v1729 = vpack.c.b16 %v1697, %v1697
      %v1730 = vpack.c.b16 %v1698, %v1698
      %v1731 = vpack.c.b16 %v1699, %v1699
      %v1732 = vpack.c.b16 %v1700, %v1700
      %v1733 = vpack.c.b16 %v1701, %v1701
      %v1734 = vpack.c.b16 %v1702, %v1702
      %v1735 = vpack.c.b16 %v1703, %v1703
      %v1736 = vpack.c.b16 %v1704, %v1704
      %v1737 = vpack.c.b16 %v1705, %v1705
      %v1738 = vpack.c.b16 %v1706, %v1706
      %v1739 = vpack.c.b16 %v1707, %v1707
      %v1740 = vpack.c.b16 %v1708, %v1708
      %v1741 = vpack.c.b16 %v1709, %v1709
      %v1742 = vpack.c.b16 %v1710, %v1710
      %v1743 = vpack.c.b16 %v1711, %v1711
      %v1744 = vpack.c.b16 %v1712, %v1712
      %v1745 = vpack.c.b16 %v1713, %v1713
      %v1746 = vpack.c.b16 %v1714, %v1714
      %v1747 = vpack.c.b16 %v1715, %v1715
      %v1748 = vpack.c.b16 %v1716, %v1716
      %v1749 = vpack.c.b16 %v1717, %v1717
      %v1750 = vpack.c.b16 %v1718, %v1718
      %1751 = vrot.lane.b32.xlu0 %v1719, 64
      %v1752 = vpop.permute.xlu0 %1751
      %1753 = vrot.lane.b32.xlu0 %v1720, 64
      %v1754 = vpop.permute.xlu0 %1753
      %1755 = vrot.lane.b32.xlu0 %v1721, 64
      %v1756 = vpop.permute.xlu0 %1755
      %1757 = vrot.lane.b32.xlu0 %v1722, 64
      %v1758 = vpop.permute.xlu0 %1757
      %1759 = vrot.lane.b32.xlu0 %v1723, 64
      %v1760 = vpop.permute.xlu0 %1759
      %1761 = vrot.lane.b32.xlu0 %v1724, 64
      %v1762 = vpop.permute.xlu0 %1761
      %1763 = vrot.lane.b32.xlu0 %v1725, 64
      %v1764 = vpop.permute.xlu0 %1763
      %1765 = vrot.lane.b32.xlu0 %v1726, 64
      %v1766 = vpop.permute.xlu0 %1765
      %1767 = vrot.lane.b32.xlu0 %v1727, 64
      %v1768 = vpop.permute.xlu0 %1767
      %1769 = vrot.lane.b32.xlu0 %v1728, 64
      %v1770 = vpop.permute.xlu0 %1769
      %1771 = vrot.lane.b32.xlu0 %v1729, 64
      %v1772 = vpop.permute.xlu0 %1771
      %1773 = vrot.lane.b32.xlu0 %v1730, 64
      %v1774 = vpop.permute.xlu0 %1773
      %1775 = vrot.lane.b32.xlu0 %v1731, 64
      %v1776 = vpop.permute.xlu0 %1775
      %1777 = vrot.lane.b32.xlu0 %v1732, 64
      %v1778 = vpop.permute.xlu0 %1777
      %1779 = vrot.lane.b32.xlu0 %v1733, 64
      %v1780 = vpop.permute.xlu0 %1779
      %1781 = vrot.lane.b32.xlu0 %v1734, 64
      %v1782 = vpop.permute.xlu0 %1781
      %1783 = vrot.lane.b32.xlu0 %v1735, 64
      %v1784 = vpop.permute.xlu0 %1783
      %1785 = vrot.lane.b32.xlu0 %v1736, 64
      %v1786 = vpop.permute.xlu0 %1785
      %1787 = vrot.lane.b32.xlu0 %v1737, 64
      %v1788 = vpop.permute.xlu0 %1787
      %1789 = vrot.lane.b32.xlu0 %v1738, 64
      %v1790 = vpop.permute.xlu0 %1789
      %1791 = vrot.lane.b32.xlu0 %v1739, 64
      %v1792 = vpop.permute.xlu0 %1791
      %1793 = vrot.lane.b32.xlu0 %v1740, 64
      %v1794 = vpop.permute.xlu0 %1793
      %1795 = vrot.lane.b32.xlu0 %v1741, 64
      %v1796 = vpop.permute.xlu0 %1795
      %1797 = vrot.lane.b32.xlu0 %v1742, 64
      %v1798 = vpop.permute.xlu0 %1797
      %1799 = vrot.lane.b32.xlu0 %v1743, 64
      %v1800 = vpop.permute.xlu0 %1799
      %1801 = vrot.lane.b32.xlu0 %v1744, 64
      %v1802 = vpop.permute.xlu0 %1801
      %1803 = vrot.lane.b32.xlu0 %v1745, 64
      %v1804 = vpop.permute.xlu0 %1803
      %1805 = vrot.lane.b32.xlu0 %v1746, 64
      %v1806 = vpop.permute.xlu0 %1805
      %1807 = vrot.lane.b32.xlu0 %v1747, 64
      %v1808 = vpop.permute.xlu0 %1807
      %1809 = vrot.lane.b32.xlu0 %v1748, 64
      %v1810 = vpop.permute.xlu0 %1809
      %1811 = vrot.lane.b32.xlu0 %v1749, 64
      %v1812 = vpop.permute.xlu0 %1811
      %1813 = vrot.lane.b32.xlu0 %v1750, 64
      %v1814 = vpop.permute.xlu0 %1813
      %1847 = vst.msk [vmem:[#allocation3 + $0x8] sm:$0xf] %vm950, %v1752
      %1848 = vst.msk [vmem:[#allocation3 + $0x1c] sm:$0xf] %vm950, %v1754
      %1849 = vst.msk [vmem:[#allocation3 + $0x30] sm:$0xf] %vm950, %v1756
      %1850 = vst.msk [vmem:[#allocation3 + $0x44] sm:$0xf] %vm950, %v1758
      %1851 = vst.msk [vmem:[#allocation3 + $0x58] sm:$0xf] %vm950, %v1760
      %1852 = vst.msk [vmem:[#allocation3 + $0x6c] sm:$0xf] %vm950, %v1762
      %1853 = vst.msk [vmem:[#allocation3 + $0x80] sm:$0xf] %vm950, %v1764
      %1854 = vst.msk [vmem:[#allocation3 + $0x94] sm:$0xf] %vm950, %v1766
      %1855 = vst.msk [vmem:[#allocation3 + $0xa8] sm:$0xf] %vm950, %v1768
      %1856 = vst.msk [vmem:[#allocation3 + $0xbc] sm:$0xf] %vm950, %v1770
      %1857 = vst.msk [vmem:[#allocation3 + $0xd0] sm:$0xf] %vm950, %v1772
      %1858 = vst.msk [vmem:[#allocation3 + $0xe4] sm:$0xf] %vm950, %v1774
      %1859 = vst.msk [vmem:[#allocation3 + $0xf8] sm:$0xf] %vm950, %v1776
      %1860 = vst.msk [vmem:[#allocation3 + $0x10c] sm:$0xf] %vm950, %v1778
      %1861 = vst.msk [vmem:[#allocation3 + $0x120] sm:$0xf] %vm950, %v1780
      %1862 = vst.msk [vmem:[#allocation3 + $0x134] sm:$0xf] %vm950, %v1782
      %1863 = vst.msk [vmem:[#allocation3 + $0x148] sm:$0xf] %vm950, %v1784
      %1864 = vst.msk [vmem:[#allocation3 + $0x15c] sm:$0xf] %vm950, %v1786
      %1865 = vst.msk [vmem:[#allocation3 + $0x170] sm:$0xf] %vm950, %v1788
      %1866 = vst.msk [vmem:[#allocation3 + $0x184] sm:$0xf] %vm950, %v1790
      %1867 = vst.msk [vmem:[#allocation3 + $0x198] sm:$0xf] %vm950, %v1792
      %1868 = vst.msk [vmem:[#allocation3 + $0x1ac] sm:$0xf] %vm950, %v1794
      %1869 = vst.msk [vmem:[#allocation3 + $0x1c0] sm:$0xf] %vm950, %v1796
      %1870 = vst.msk [vmem:[#allocation3 + $0x1d4] sm:$0xf] %vm950, %v1798
      %1871 = vst.msk [vmem:[#allocation3 + $0x1e8] sm:$0xf] %vm950, %v1800
      %1872 = vst.msk [vmem:[#allocation3 + $0x1fc] sm:$0xf] %vm950, %v1802
      %1873 = vst.msk [vmem:[#allocation3 + $0x210] sm:$0xf] %vm950, %v1804
      %1874 = vst.msk [vmem:[#allocation3 + $0x224] sm:$0xf] %vm950, %v1806
      %1875 = vst.msk [vmem:[#allocation3 + $0x238] sm:$0xf] %vm950, %v1808
      %1876 = vst.msk [vmem:[#allocation3 + $0x24c] sm:$0xf] %vm950, %v1810
      %1877 = vst.msk [vmem:[#allocation3 + $0x260] sm:$0xf] %vm950, %v1812
      %1878 = vst.msk [vmem:[#allocation3 + $0x274] sm:$0xf] %vm950, %v1814
      %s1879 = scalar_lea.vmem [#allocation2], 48
      %v1880 = vld [vmem:[%s1879] sm:$0xff]
      %v1881 = vld [vmem:[%s1879 + $0x8] sm:$0xff]
      %v1882 = vld [vmem:[%s1879 + $0x18] sm:$0xff]
      %v1883 = vld [vmem:[%s1879 + $0x20] sm:$0xff]
      %v1884 = vld [vmem:[%s1879 + $0x30] sm:$0xff]
      %v1885 = vld [vmem:[%s1879 + $0x38] sm:$0xff]
      %v1886 = vld [vmem:[%s1879 + $0x48] sm:$0xff]
      %v1887 = vld [vmem:[%s1879 + $0x50] sm:$0xff]
      %v1888 = vld [vmem:[%s1879 + $0x60] sm:$0xff]
      %v1889 = vld [vmem:[%s1879 + $0x68] sm:$0xff]
      %v1890 = vld [vmem:[%s1879 + $0x78] sm:$0xff]
      %v1891 = vld [vmem:[%s1879 + $0x80] sm:$0xff]
      %v1892 = vld [vmem:[%s1879 + $0x90] sm:$0xff]
      %v1893 = vld [vmem:[%s1879 + $0x98] sm:$0xff]
      %v1894 = vld [vmem:[%s1879 + $0xa8] sm:$0xff]
      %v1895 = vld [vmem:[%s1879 + $0xb0] sm:$0xff]
      %v1896 = vld [vmem:[%s1879 + $0xc0] sm:$0xff]
      %v1897 = vld [vmem:[%s1879 + $0xc8] sm:$0xff]
      %v1898 = vld [vmem:[%s1879 + $0xd8] sm:$0xff]
      %v1899 = vld [vmem:[%s1879 + $0xe0] sm:$0xff]
      %v1900 = vld [vmem:[%s1879 + $0xf0] sm:$0xff]
      %v1901 = vld [vmem:[%s1879 + $0xf8] sm:$0xff]
      %v1902 = vld [vmem:[%s1879 + $0x108] sm:$0xff]
      %v1903 = vld [vmem:[%s1879 + $0x110] sm:$0xff]
      %v1904 = vld [vmem:[%s1879 + $0x120] sm:$0xff]
      %v1905 = vld [vmem:[%s1879 + $0x128] sm:$0xff]
      %v1906 = vld [vmem:[%s1879 + $0x138] sm:$0xff]
      %v1907 = vld [vmem:[%s1879 + $0x140] sm:$0xff]
      %v1908 = vld [vmem:[%s1879 + $0x150] sm:$0xff]
      %v1909 = vld [vmem:[%s1879 + $0x158] sm:$0xff]
      %v1910 = vld [vmem:[%s1879 + $0x168] sm:$0xff]
      %v1911 = vld [vmem:[%s1879 + $0x170] sm:$0xff]
      %v1912 = vpack.c.bf16 %v1881, %v1880
      %v1913 = vpack.c.bf16 %v1883, %v1882
      %v1914 = vpack.c.bf16 %v1885, %v1884
      %v1915 = vpack.c.bf16 %v1887, %v1886
      %v1916 = vpack.c.bf16 %v1889, %v1888
      %v1917 = vpack.c.bf16 %v1891, %v1890
      %v1918 = vpack.c.bf16 %v1893, %v1892
      %v1919 = vpack.c.bf16 %v1895, %v1894
      %v1920 = vpack.c.bf16 %v1897, %v1896
      %v1921 = vpack.c.bf16 %v1899, %v1898
      %v1922 = vpack.c.bf16 %v1901, %v1900
      %v1923 = vpack.c.bf16 %v1903, %v1902
      %v1924 = vpack.c.bf16 %v1905, %v1904
      %v1925 = vpack.c.bf16 %v1907, %v1906
      %v1926 = vpack.c.bf16 %v1909, %v1908
      %v1927 = vpack.c.bf16 %v1911, %v1910
      %v1944 = vunpack.c.l.b16 %v1912
      %v1945 = vunpack.c.h.b16 %v1912
      %v1946 = vunpack.c.l.b16 %v1913
      %v1947 = vunpack.c.h.b16 %v1913
      %v1948 = vunpack.c.l.b16 %v1914
      %v1949 = vunpack.c.h.b16 %v1914
      %v1950 = vunpack.c.l.b16 %v1915
      %v1951 = vunpack.c.h.b16 %v1915
      %v1952 = vunpack.c.l.b16 %v1916
      %v1953 = vunpack.c.h.b16 %v1916
      %v1954 = vunpack.c.l.b16 %v1917
      %v1955 = vunpack.c.h.b16 %v1917
      %v1956 = vunpack.c.l.b16 %v1918
      %v1957 = vunpack.c.h.b16 %v1918
      %v1958 = vunpack.c.l.b16 %v1919
      %v1959 = vunpack.c.h.b16 %v1919
      %v1960 = vunpack.c.l.b16 %v1920
      %v1961 = vunpack.c.h.b16 %v1920
      %v1962 = vunpack.c.l.b16 %v1921
      %v1963 = vunpack.c.h.b16 %v1921
      %v1964 = vunpack.c.l.b16 %v1922
      %v1965 = vunpack.c.h.b16 %v1922
      %v1966 = vunpack.c.l.b16 %v1923
      %v1967 = vunpack.c.h.b16 %v1923
      %v1968 = vunpack.c.l.b16 %v1924
      %v1969 = vunpack.c.h.b16 %v1924
      %v1970 = vunpack.c.l.b16 %v1925
      %v1971 = vunpack.c.h.b16 %v1925
      %v1972 = vunpack.c.l.b16 %v1926
      %v1973 = vunpack.c.h.b16 %v1926
      %v1974 = vunpack.c.l.b16 %v1927
      %v1975 = vunpack.c.h.b16 %v1927
      %v1976 = vpack.c.b16 %v1944, %v1944
      %v1977 = vpack.c.b16 %v1945, %v1945
      %v1978 = vpack.c.b16 %v1946, %v1946
      %v1979 = vpack.c.b16 %v1947, %v1947
      %v1980 = vpack.c.b16 %v1948, %v1948
      %v1981 = vpack.c.b16 %v1949, %v1949
      %v1982 = vpack.c.b16 %v1950, %v1950
      %v1983 = vpack.c.b16 %v1951, %v1951
      %v1984 = vpack.c.b16 %v1952, %v1952
      %v1985 = vpack.c.b16 %v1953, %v1953
      %v1986 = vpack.c.b16 %v1954, %v1954
      %v1987 = vpack.c.b16 %v1955, %v1955
      %v1988 = vpack.c.b16 %v1956, %v1956
      %v1989 = vpack.c.b16 %v1957, %v1957
      %v1990 = vpack.c.b16 %v1958, %v1958
      %v1991 = vpack.c.b16 %v1959, %v1959
      %v1992 = vpack.c.b16 %v1960, %v1960
      %v1993 = vpack.c.b16 %v1961, %v1961
      %v1994 = vpack.c.b16 %v1962, %v1962
      %v1995 = vpack.c.b16 %v1963, %v1963
      %v1996 = vpack.c.b16 %v1964, %v1964
      %v1997 = vpack.c.b16 %v1965, %v1965
      %v1998 = vpack.c.b16 %v1966, %v1966
      %v1999 = vpack.c.b16 %v1967, %v1967
      %v2000 = vpack.c.b16 %v1968, %v1968
      %v2001 = vpack.c.b16 %v1969, %v1969
      %v2002 = vpack.c.b16 %v1970, %v1970
      %v2003 = vpack.c.b16 %v1971, %v1971
      %v2004 = vpack.c.b16 %v1972, %v1972
      %v2005 = vpack.c.b16 %v1973, %v1973
      %v2006 = vpack.c.b16 %v1974, %v1974
      %v2007 = vpack.c.b16 %v1975, %v1975
      %2040 = vst.msk [vmem:[#allocation3 + $0xc] sm:$0xf] %vm693, %v1976
      %2041 = vst.msk [vmem:[#allocation3 + $0x20] sm:$0xf] %vm693, %v1977
      %2042 = vst.msk [vmem:[#allocation3 + $0x34] sm:$0xf] %vm693, %v1978
      %2043 = vst.msk [vmem:[#allocation3 + $0x48] sm:$0xf] %vm693, %v1979
      %2044 = vst.msk [vmem:[#allocation3 + $0x5c] sm:$0xf] %vm693, %v1980
      %2045 = vst.msk [vmem:[#allocation3 + $0x70] sm:$0xf] %vm693, %v1981
      %2046 = vst.msk [vmem:[#allocation3 + $0x84] sm:$0xf] %vm693, %v1982
      %2047 = vst.msk [vmem:[#allocation3 + $0x98] sm:$0xf] %vm693, %v1983
      %2048 = vst.msk [vmem:[#allocation3 + $0xac] sm:$0xf] %vm693, %v1984
      %2049 = vst.msk [vmem:[#allocation3 + $0xc0] sm:$0xf] %vm693, %v1985
      %2050 = vst.msk [vmem:[#allocation3 + $0xd4] sm:$0xf] %vm693, %v1986
      %2051 = vst.msk [vmem:[#allocation3 + $0xe8] sm:$0xf] %vm693, %v1987
      %2052 = vst.msk [vmem:[#allocation3 + $0xfc] sm:$0xf] %vm693, %v1988
      %2053 = vst.msk [vmem:[#allocation3 + $0x110] sm:$0xf] %vm693, %v1989
      %2054 = vst.msk [vmem:[#allocation3 + $0x124] sm:$0xf] %vm693, %v1990
      %2055 = vst.msk [vmem:[#allocation3 + $0x138] sm:$0xf] %vm693, %v1991
      %2056 = vst.msk [vmem:[#allocation3 + $0x14c] sm:$0xf] %vm693, %v1992
      %2057 = vst.msk [vmem:[#allocation3 + $0x160] sm:$0xf] %vm693, %v1993
      %2058 = vst.msk [vmem:[#allocation3 + $0x174] sm:$0xf] %vm693, %v1994
      %2059 = vst.msk [vmem:[#allocation3 + $0x188] sm:$0xf] %vm693, %v1995
      %2060 = vst.msk [vmem:[#allocation3 + $0x19c] sm:$0xf] %vm693, %v1996
      %2061 = vst.msk [vmem:[#allocation3 + $0x1b0] sm:$0xf] %vm693, %v1997
      %2062 = vst.msk [vmem:[#allocation3 + $0x1c4] sm:$0xf] %vm693, %v1998
      %2063 = vst.msk [vmem:[#allocation3 + $0x1d8] sm:$0xf] %vm693, %v1999
      %2064 = vst.msk [vmem:[#allocation3 + $0x1ec] sm:$0xf] %vm693, %v2000
      %2065 = vst.msk [vmem:[#allocation3 + $0x200] sm:$0xf] %vm693, %v2001
      %2066 = vst.msk [vmem:[#allocation3 + $0x214] sm:$0xf] %vm693, %v2002
      %2067 = vst.msk [vmem:[#allocation3 + $0x228] sm:$0xf] %vm693, %v2003
      %2068 = vst.msk [vmem:[#allocation3 + $0x23c] sm:$0xf] %vm693, %v2004
      %2069 = vst.msk [vmem:[#allocation3 + $0x250] sm:$0xf] %vm693, %v2005
      %2070 = vst.msk [vmem:[#allocation3 + $0x264] sm:$0xf] %vm693, %v2006
      %2071 = vst.msk [vmem:[#allocation3 + $0x278] sm:$0xf] %vm693, %v2007
      %v2072 = vld [vmem:[%s1879 + $0x1] sm:$0xff]
      %v2073 = vld [vmem:[%s1879 + $0x9] sm:$0xff]
      %v2074 = vld [vmem:[%s1879 + $0x19] sm:$0xff]
      %v2075 = vld [vmem:[%s1879 + $0x21] sm:$0xff]
      %v2076 = vld [vmem:[%s1879 + $0x31] sm:$0xff]
      %v2077 = vld [vmem:[%s1879 + $0x39] sm:$0xff]
      %v2078 = vld [vmem:[%s1879 + $0x49] sm:$0xff]
      %v2079 = vld [vmem:[%s1879 + $0x51] sm:$0xff]
      %v2080 = vld [vmem:[%s1879 + $0x61] sm:$0xff]
      %v2081 = vld [vmem:[%s1879 + $0x69] sm:$0xff]
      %v2082 = vld [vmem:[%s1879 + $0x79] sm:$0xff]
      %v2083 = vld [vmem:[%s1879 + $0x81] sm:$0xff]
      %v2084 = vld [vmem:[%s1879 + $0x91] sm:$0xff]
      %v2085 = vld [vmem:[%s1879 + $0x99] sm:$0xff]
      %v2086 = vld [vmem:[%s1879 + $0xa9] sm:$0xff]
      %v2087 = vld [vmem:[%s1879 + $0xb1] sm:$0xff]
      %v2088 = vld [vmem:[%s1879 + $0xc1] sm:$0xff]
      %v2089 = vld [vmem:[%s1879 + $0xc9] sm:$0xff]
      %v2090 = vld [vmem:[%s1879 + $0xd9] sm:$0xff]
      %v2091 = vld [vmem:[%s1879 + $0xe1] sm:$0xff]
      %v2092 = vld [vmem:[%s1879 + $0xf1] sm:$0xff]
      %v2093 = vld [vmem:[%s1879 + $0xf9] sm:$0xff]
      %v2094 = vld [vmem:[%s1879 + $0x109] sm:$0xff]
      %v2095 = vld [vmem:[%s1879 + $0x111] sm:$0xff]
      %v2096 = vld [vmem:[%s1879 + $0x121] sm:$0xff]
      %v2097 = vld [vmem:[%s1879 + $0x129] sm:$0xff]
      %v2098 = vld [vmem:[%s1879 + $0x139] sm:$0xff]
      %v2099 = vld [vmem:[%s1879 + $0x141] sm:$0xff]
      %v2100 = vld [vmem:[%s1879 + $0x151] sm:$0xff]
      %v2101 = vld [vmem:[%s1879 + $0x159] sm:$0xff]
      %v2102 = vld [vmem:[%s1879 + $0x169] sm:$0xff]
      %v2103 = vld [vmem:[%s1879 + $0x171] sm:$0xff]
      %v2104 = vpack.c.bf16 %v2073, %v2072
      %v2105 = vpack.c.bf16 %v2075, %v2074
      %v2106 = vpack.c.bf16 %v2077, %v2076
      %v2107 = vpack.c.bf16 %v2079, %v2078
      %v2108 = vpack.c.bf16 %v2081, %v2080
      %v2109 = vpack.c.bf16 %v2083, %v2082
      %v2110 = vpack.c.bf16 %v2085, %v2084
      %v2111 = vpack.c.bf16 %v2087, %v2086
      %v2112 = vpack.c.bf16 %v2089, %v2088
      %v2113 = vpack.c.bf16 %v2091, %v2090
      %v2114 = vpack.c.bf16 %v2093, %v2092
      %v2115 = vpack.c.bf16 %v2095, %v2094
      %v2116 = vpack.c.bf16 %v2097, %v2096
      %v2117 = vpack.c.bf16 %v2099, %v2098
      %v2118 = vpack.c.bf16 %v2101, %v2100
      %v2119 = vpack.c.bf16 %v2103, %v2102
      %v2136 = vunpack.c.l.b16 %v2104
      %v2137 = vunpack.c.h.b16 %v2104
      %v2138 = vunpack.c.l.b16 %v2105
      %v2139 = vunpack.c.h.b16 %v2105
      %v2140 = vunpack.c.l.b16 %v2106
      %v2141 = vunpack.c.h.b16 %v2106
      %v2142 = vunpack.c.l.b16 %v2107
      %v2143 = vunpack.c.h.b16 %v2107
      %v2144 = vunpack.c.l.b16 %v2108
      %v2145 = vunpack.c.h.b16 %v2108
      %v2146 = vunpack.c.l.b16 %v2109
      %v2147 = vunpack.c.h.b16 %v2109
      %v2148 = vunpack.c.l.b16 %v2110
      %v2149 = vunpack.c.h.b16 %v2110
      %v2150 = vunpack.c.l.b16 %v2111
      %v2151 = vunpack.c.h.b16 %v2111
      %v2152 = vunpack.c.l.b16 %v2112
      %v2153 = vunpack.c.h.b16 %v2112
      %v2154 = vunpack.c.l.b16 %v2113
      %v2155 = vunpack.c.h.b16 %v2113
      %v2156 = vunpack.c.l.b16 %v2114
      %v2157 = vunpack.c.h.b16 %v2114
      %v2158 = vunpack.c.l.b16 %v2115
      %v2159 = vunpack.c.h.b16 %v2115
      %v2160 = vunpack.c.l.b16 %v2116
      %v2161 = vunpack.c.h.b16 %v2116
      %v2162 = vunpack.c.l.b16 %v2117
      %v2163 = vunpack.c.h.b16 %v2117
      %v2164 = vunpack.c.l.b16 %v2118
      %v2165 = vunpack.c.h.b16 %v2118
      %v2166 = vunpack.c.l.b16 %v2119
      %v2167 = vunpack.c.h.b16 %v2119
      %v2168 = vpack.c.b16 %v2136, %v2136
      %v2169 = vpack.c.b16 %v2137, %v2137
      %v2170 = vpack.c.b16 %v2138, %v2138
      %v2171 = vpack.c.b16 %v2139, %v2139
      %v2172 = vpack.c.b16 %v2140, %v2140
      %v2173 = vpack.c.b16 %v2141, %v2141
      %v2174 = vpack.c.b16 %v2142, %v2142
      %v2175 = vpack.c.b16 %v2143, %v2143
      %v2176 = vpack.c.b16 %v2144, %v2144
      %v2177 = vpack.c.b16 %v2145, %v2145
      %v2178 = vpack.c.b16 %v2146, %v2146
      %v2179 = vpack.c.b16 %v2147, %v2147
      %v2180 = vpack.c.b16 %v2148, %v2148
      %v2181 = vpack.c.b16 %v2149, %v2149
      %v2182 = vpack.c.b16 %v2150, %v2150
      %v2183 = vpack.c.b16 %v2151, %v2151
      %v2184 = vpack.c.b16 %v2152, %v2152
      %v2185 = vpack.c.b16 %v2153, %v2153
      %v2186 = vpack.c.b16 %v2154, %v2154
      %v2187 = vpack.c.b16 %v2155, %v2155
      %v2188 = vpack.c.b16 %v2156, %v2156
      %v2189 = vpack.c.b16 %v2157, %v2157
      %v2190 = vpack.c.b16 %v2158, %v2158
      %v2191 = vpack.c.b16 %v2159, %v2159
      %v2192 = vpack.c.b16 %v2160, %v2160
      %v2193 = vpack.c.b16 %v2161, %v2161
      %v2194 = vpack.c.b16 %v2162, %v2162
      %v2195 = vpack.c.b16 %v2163, %v2163
      %v2196 = vpack.c.b16 %v2164, %v2164
      %v2197 = vpack.c.b16 %v2165, %v2165
      %v2198 = vpack.c.b16 %v2166, %v2166
      %v2199 = vpack.c.b16 %v2167, %v2167
      %2200 = vrot.lane.b32.xlu0 %v2168, 64
      %v2201 = vpop.permute.xlu0 %2200
      %2202 = vrot.lane.b32.xlu0 %v2169, 64
      %v2203 = vpop.permute.xlu0 %2202
      %2204 = vrot.lane.b32.xlu0 %v2170, 64
      %v2205 = vpop.permute.xlu0 %2204
      %2206 = vrot.lane.b32.xlu0 %v2171, 64
      %v2207 = vpop.permute.xlu0 %2206
      %2208 = vrot.lane.b32.xlu0 %v2172, 64
      %v2209 = vpop.permute.xlu0 %2208
      %2210 = vrot.lane.b32.xlu0 %v2173, 64
      %v2211 = vpop.permute.xlu0 %2210
      %2212 = vrot.lane.b32.xlu0 %v2174, 64
      %v2213 = vpop.permute.xlu0 %2212
      %2214 = vrot.lane.b32.xlu0 %v2175, 64
      %v2215 = vpop.permute.xlu0 %2214
      %2216 = vrot.lane.b32.xlu0 %v2176, 64
      %v2217 = vpop.permute.xlu0 %2216
      %2218 = vrot.lane.b32.xlu0 %v2177, 64
      %v2219 = vpop.permute.xlu0 %2218
      %2220 = vrot.lane.b32.xlu0 %v2178, 64
      %v2221 = vpop.permute.xlu0 %2220
      %2222 = vrot.lane.b32.xlu0 %v2179, 64
      %v2223 = vpop.permute.xlu0 %2222
      %2224 = vrot.lane.b32.xlu0 %v2180, 64
      %v2225 = vpop.permute.xlu0 %2224
      %2226 = vrot.lane.b32.xlu0 %v2181, 64
      %v2227 = vpop.permute.xlu0 %2226
      %2228 = vrot.lane.b32.xlu0 %v2182, 64
      %v2229 = vpop.permute.xlu0 %2228
      %2230 = vrot.lane.b32.xlu0 %v2183, 64
      %v2231 = vpop.permute.xlu0 %2230
      %2232 = vrot.lane.b32.xlu0 %v2184, 64
      %v2233 = vpop.permute.xlu0 %2232
      %2234 = vrot.lane.b32.xlu0 %v2185, 64
      %v2235 = vpop.permute.xlu0 %2234
      %2236 = vrot.lane.b32.xlu0 %v2186, 64
      %v2237 = vpop.permute.xlu0 %2236
      %2238 = vrot.lane.b32.xlu0 %v2187, 64
      %v2239 = vpop.permute.xlu0 %2238
      %2240 = vrot.lane.b32.xlu0 %v2188, 64
      %v2241 = vpop.permute.xlu0 %2240
      %2242 = vrot.lane.b32.xlu0 %v2189, 64
      %v2243 = vpop.permute.xlu0 %2242
      %2244 = vrot.lane.b32.xlu0 %v2190, 64
      %v2245 = vpop.permute.xlu0 %2244
      %2246 = vrot.lane.b32.xlu0 %v2191, 64
      %v2247 = vpop.permute.xlu0 %2246
      %2248 = vrot.lane.b32.xlu0 %v2192, 64
      %v2249 = vpop.permute.xlu0 %2248
      %2250 = vrot.lane.b32.xlu0 %v2193, 64
      %v2251 = vpop.permute.xlu0 %2250
      %2252 = vrot.lane.b32.xlu0 %v2194, 64
      %v2253 = vpop.permute.xlu0 %2252
      %2254 = vrot.lane.b32.xlu0 %v2195, 64
      %v2255 = vpop.permute.xlu0 %2254
      %2256 = vrot.lane.b32.xlu0 %v2196, 64
      %v2257 = vpop.permute.xlu0 %2256
      %2258 = vrot.lane.b32.xlu0 %v2197, 64
      %v2259 = vpop.permute.xlu0 %2258
      %2260 = vrot.lane.b32.xlu0 %v2198, 64
      %v2261 = vpop.permute.xlu0 %2260
      %2262 = vrot.lane.b32.xlu0 %v2199, 64
      %v2263 = vpop.permute.xlu0 %2262
      %2296 = vst.msk [vmem:[#allocation3 + $0xc] sm:$0xf] %vm950, %v2201
      %2297 = vst.msk [vmem:[#allocation3 + $0x20] sm:$0xf] %vm950, %v2203
      %2298 = vst.msk [vmem:[#allocation3 + $0x34] sm:$0xf] %vm950, %v2205
      %2299 = vst.msk [vmem:[#allocation3 + $0x48] sm:$0xf] %vm950, %v2207
      %2300 = vst.msk [vmem:[#allocation3 + $0x5c] sm:$0xf] %vm950, %v2209
      %2301 = vst.msk [vmem:[#allocation3 + $0x70] sm:$0xf] %vm950, %v2211
      %2302 = vst.msk [vmem:[#allocation3 + $0x84] sm:$0xf] %vm950, %v2213
      %2303 = vst.msk [vmem:[#allocation3 + $0x98] sm:$0xf] %vm950, %v2215
      %2304 = vst.msk [vmem:[#allocation3 + $0xac] sm:$0xf] %vm950, %v2217
      %2305 = vst.msk [vmem:[#allocation3 + $0xc0] sm:$0xf] %vm950, %v2219
      %2306 = vst.msk [vmem:[#allocation3 + $0xd4] sm:$0xf] %vm950, %v2221
      %2307 = vst.msk [vmem:[#allocation3 + $0xe8] sm:$0xf] %vm950, %v2223
      %2308 = vst.msk [vmem:[#allocation3 + $0xfc] sm:$0xf] %vm950, %v2225
      %2309 = vst.msk [vmem:[#allocation3 + $0x110] sm:$0xf] %vm950, %v2227
      %2310 = vst.msk [vmem:[#allocation3 + $0x124] sm:$0xf] %vm950, %v2229
      %2311 = vst.msk [vmem:[#allocation3 + $0x138] sm:$0xf] %vm950, %v2231
      %2312 = vst.msk [vmem:[#allocation3 + $0x14c] sm:$0xf] %vm950, %v2233
      %2313 = vst.msk [vmem:[#allocation3 + $0x160] sm:$0xf] %vm950, %v2235
      %2314 = vst.msk [vmem:[#allocation3 + $0x174] sm:$0xf] %vm950, %v2237
      %2315 = vst.msk [vmem:[#allocation3 + $0x188] sm:$0xf] %vm950, %v2239
      %2316 = vst.msk [vmem:[#allocation3 + $0x19c] sm:$0xf] %vm950, %v2241
      %2317 = vst.msk [vmem:[#allocation3 + $0x1b0] sm:$0xf] %vm950, %v2243
      %2318 = vst.msk [vmem:[#allocation3 + $0x1c4] sm:$0xf] %vm950, %v2245
      %2319 = vst.msk [vmem:[#allocation3 + $0x1d8] sm:$0xf] %vm950, %v2247
      %2320 = vst.msk [vmem:[#allocation3 + $0x1ec] sm:$0xf] %vm950, %v2249
      %2321 = vst.msk [vmem:[#allocation3 + $0x200] sm:$0xf] %vm950, %v2251
      %2322 = vst.msk [vmem:[#allocation3 + $0x214] sm:$0xf] %vm950, %v2253
      %2323 = vst.msk [vmem:[#allocation3 + $0x228] sm:$0xf] %vm950, %v2255
      %2324 = vst.msk [vmem:[#allocation3 + $0x23c] sm:$0xf] %vm950, %v2257
      %2325 = vst.msk [vmem:[#allocation3 + $0x250] sm:$0xf] %vm950, %v2259
      %2326 = vst.msk [vmem:[#allocation3 + $0x264] sm:$0xf] %vm950, %v2261
      %2327 = vst.msk [vmem:[#allocation3 + $0x278] sm:$0xf] %vm950, %v2263
      %v2328 = vld [vmem:[%s1879 + $0x2] sm:$0xff]
      %v2329 = vld [vmem:[%s1879 + $0xa] sm:$0xff]
      %v2330 = vld [vmem:[%s1879 + $0x1a] sm:$0xff]
      %v2331 = vld [vmem:[%s1879 + $0x22] sm:$0xff]
      %v2332 = vld [vmem:[%s1879 + $0x32] sm:$0xff]
      %v2333 = vld [vmem:[%s1879 + $0x3a] sm:$0xff]
      %v2334 = vld [vmem:[%s1879 + $0x4a] sm:$0xff]
      %v2335 = vld [vmem:[%s1879 + $0x52] sm:$0xff]
      %v2336 = vld [vmem:[%s1879 + $0x62] sm:$0xff]
      %v2337 = vld [vmem:[%s1879 + $0x6a] sm:$0xff]
      %v2338 = vld [vmem:[%s1879 + $0x7a] sm:$0xff]
      %v2339 = vld [vmem:[%s1879 + $0x82] sm:$0xff]
      %v2340 = vld [vmem:[%s1879 + $0x92] sm:$0xff]
      %v2341 = vld [vmem:[%s1879 + $0x9a] sm:$0xff]
      %v2342 = vld [vmem:[%s1879 + $0xaa] sm:$0xff]
      %v2343 = vld [vmem:[%s1879 + $0xb2] sm:$0xff]
      %v2344 = vld [vmem:[%s1879 + $0xc2] sm:$0xff]
      %v2345 = vld [vmem:[%s1879 + $0xca] sm:$0xff]
      %v2346 = vld [vmem:[%s1879 + $0xda] sm:$0xff]
      %v2347 = vld [vmem:[%s1879 + $0xe2] sm:$0xff]
      %v2348 = vld [vmem:[%s1879 + $0xf2] sm:$0xff]
      %v2349 = vld [vmem:[%s1879 + $0xfa] sm:$0xff]
      %v2350 = vld [vmem:[%s1879 + $0x10a] sm:$0xff]
      %v2351 = vld [vmem:[%s1879 + $0x112] sm:$0xff]
      %v2352 = vld [vmem:[%s1879 + $0x122] sm:$0xff]
      %v2353 = vld [vmem:[%s1879 + $0x12a] sm:$0xff]
      %v2354 = vld [vmem:[%s1879 + $0x13a] sm:$0xff]
      %v2355 = vld [vmem:[%s1879 + $0x142] sm:$0xff]
      %v2356 = vld [vmem:[%s1879 + $0x152] sm:$0xff]
      %v2357 = vld [vmem:[%s1879 + $0x15a] sm:$0xff]
      %v2358 = vld [vmem:[%s1879 + $0x16a] sm:$0xff]
      %v2359 = vld [vmem:[%s1879 + $0x172] sm:$0xff]
      %v2360 = vpack.c.bf16 %v2329, %v2328
      %v2361 = vpack.c.bf16 %v2331, %v2330
      %v2362 = vpack.c.bf16 %v2333, %v2332
      %v2363 = vpack.c.bf16 %v2335, %v2334
      %v2364 = vpack.c.bf16 %v2337, %v2336
      %v2365 = vpack.c.bf16 %v2339, %v2338
      %v2366 = vpack.c.bf16 %v2341, %v2340
      %v2367 = vpack.c.bf16 %v2343, %v2342
      %v2368 = vpack.c.bf16 %v2345, %v2344
      %v2369 = vpack.c.bf16 %v2347, %v2346
      %v2370 = vpack.c.bf16 %v2349, %v2348
      %v2371 = vpack.c.bf16 %v2351, %v2350
      %v2372 = vpack.c.bf16 %v2353, %v2352
      %v2373 = vpack.c.bf16 %v2355, %v2354
      %v2374 = vpack.c.bf16 %v2357, %v2356
      %v2375 = vpack.c.bf16 %v2359, %v2358
      %v2392 = vunpack.c.l.b16 %v2360
      %v2393 = vunpack.c.h.b16 %v2360
      %v2394 = vunpack.c.l.b16 %v2361
      %v2395 = vunpack.c.h.b16 %v2361
      %v2396 = vunpack.c.l.b16 %v2362
      %v2397 = vunpack.c.h.b16 %v2362
      %v2398 = vunpack.c.l.b16 %v2363
      %v2399 = vunpack.c.h.b16 %v2363
      %v2400 = vunpack.c.l.b16 %v2364
      %v2401 = vunpack.c.h.b16 %v2364
      %v2402 = vunpack.c.l.b16 %v2365
      %v2403 = vunpack.c.h.b16 %v2365
      %v2404 = vunpack.c.l.b16 %v2366
      %v2405 = vunpack.c.h.b16 %v2366
      %v2406 = vunpack.c.l.b16 %v2367
      %v2407 = vunpack.c.h.b16 %v2367
      %v2408 = vunpack.c.l.b16 %v2368
      %v2409 = vunpack.c.h.b16 %v2368
      %v2410 = vunpack.c.l.b16 %v2369
      %v2411 = vunpack.c.h.b16 %v2369
      %v2412 = vunpack.c.l.b16 %v2370
      %v2413 = vunpack.c.h.b16 %v2370
      %v2414 = vunpack.c.l.b16 %v2371
      %v2415 = vunpack.c.h.b16 %v2371
      %v2416 = vunpack.c.l.b16 %v2372
      %v2417 = vunpack.c.h.b16 %v2372
      %v2418 = vunpack.c.l.b16 %v2373
      %v2419 = vunpack.c.h.b16 %v2373
      %v2420 = vunpack.c.l.b16 %v2374
      %v2421 = vunpack.c.h.b16 %v2374
      %v2422 = vunpack.c.l.b16 %v2375
      %v2423 = vunpack.c.h.b16 %v2375
      %v2424 = vpack.c.b16 %v2392, %v2392
      %v2425 = vpack.c.b16 %v2393, %v2393
      %v2426 = vpack.c.b16 %v2394, %v2394
      %v2427 = vpack.c.b16 %v2395, %v2395
      %v2428 = vpack.c.b16 %v2396, %v2396
      %v2429 = vpack.c.b16 %v2397, %v2397
      %v2430 = vpack.c.b16 %v2398, %v2398
      %v2431 = vpack.c.b16 %v2399, %v2399
      %v2432 = vpack.c.b16 %v2400, %v2400
      %v2433 = vpack.c.b16 %v2401, %v2401
      %v2434 = vpack.c.b16 %v2402, %v2402
      %v2435 = vpack.c.b16 %v2403, %v2403
      %v2436 = vpack.c.b16 %v2404, %v2404
      %v2437 = vpack.c.b16 %v2405, %v2405
      %v2438 = vpack.c.b16 %v2406, %v2406
      %v2439 = vpack.c.b16 %v2407, %v2407
      %v2440 = vpack.c.b16 %v2408, %v2408
      %v2441 = vpack.c.b16 %v2409, %v2409
      %v2442 = vpack.c.b16 %v2410, %v2410
      %v2443 = vpack.c.b16 %v2411, %v2411
      %v2444 = vpack.c.b16 %v2412, %v2412
      %v2445 = vpack.c.b16 %v2413, %v2413
      %v2446 = vpack.c.b16 %v2414, %v2414
      %v2447 = vpack.c.b16 %v2415, %v2415
      %v2448 = vpack.c.b16 %v2416, %v2416
      %v2449 = vpack.c.b16 %v2417, %v2417
      %v2450 = vpack.c.b16 %v2418, %v2418
      %v2451 = vpack.c.b16 %v2419, %v2419
      %v2452 = vpack.c.b16 %v2420, %v2420
      %v2453 = vpack.c.b16 %v2421, %v2421
      %v2454 = vpack.c.b16 %v2422, %v2422
      %v2455 = vpack.c.b16 %v2423, %v2423
      %2488 = vst.msk [vmem:[#allocation3 + $0x10] sm:$0xf] %vm693, %v2424
      %2489 = vst.msk [vmem:[#allocation3 + $0x24] sm:$0xf] %vm693, %v2425
      %2490 = vst.msk [vmem:[#allocation3 + $0x38] sm:$0xf] %vm693, %v2426
      %2491 = vst.msk [vmem:[#allocation3 + $0x4c] sm:$0xf] %vm693, %v2427
      %2492 = vst.msk [vmem:[#allocation3 + $0x60] sm:$0xf] %vm693, %v2428
      %2493 = vst.msk [vmem:[#allocation3 + $0x74] sm:$0xf] %vm693, %v2429
      %2494 = vst.msk [vmem:[#allocation3 + $0x88] sm:$0xf] %vm693, %v2430
      %2495 = vst.msk [vmem:[#allocation3 + $0x9c] sm:$0xf] %vm693, %v2431
      %2496 = vst.msk [vmem:[#allocation3 + $0xb0] sm:$0xf] %vm693, %v2432
      %2497 = vst.msk [vmem:[#allocation3 + $0xc4] sm:$0xf] %vm693, %v2433
      %2498 = vst.msk [vmem:[#allocation3 + $0xd8] sm:$0xf] %vm693, %v2434
      %2499 = vst.msk [vmem:[#allocation3 + $0xec] sm:$0xf] %vm693, %v2435
      %2500 = vst.msk [vmem:[#allocation3 + $0x100] sm:$0xf] %vm693, %v2436
      %2501 = vst.msk [vmem:[#allocation3 + $0x114] sm:$0xf] %vm693, %v2437
      %2502 = vst.msk [vmem:[#allocation3 + $0x128] sm:$0xf] %vm693, %v2438
      %2503 = vst.msk [vmem:[#allocation3 + $0x13c] sm:$0xf] %vm693, %v2439
      %2504 = vst.msk [vmem:[#allocation3 + $0x150] sm:$0xf] %vm693, %v2440
      %2505 = vst.msk [vmem:[#allocation3 + $0x164] sm:$0xf] %vm693, %v2441
      %2506 = vst.msk [vmem:[#allocation3 + $0x178] sm:$0xf] %vm693, %v2442
      %2507 = vst.msk [vmem:[#allocation3 + $0x18c] sm:$0xf] %vm693, %v2443
      %2508 = vst.msk [vmem:[#allocation3 + $0x1a0] sm:$0xf] %vm693, %v2444
      %2509 = vst.msk [vmem:[#allocation3 + $0x1b4] sm:$0xf] %vm693, %v2445
      %2510 = vst.msk [vmem:[#allocation3 + $0x1c8] sm:$0xf] %vm693, %v2446
      %2511 = vst.msk [vmem:[#allocation3 + $0x1dc] sm:$0xf] %vm693, %v2447
      %2512 = vst.msk [vmem:[#allocation3 + $0x1f0] sm:$0xf] %vm693, %v2448
      %2513 = vst.msk [vmem:[#allocation3 + $0x204] sm:$0xf] %vm693, %v2449
      %2514 = vst.msk [vmem:[#allocation3 + $0x218] sm:$0xf] %vm693, %v2450
      %2515 = vst.msk [vmem:[#allocation3 + $0x22c] sm:$0xf] %vm693, %v2451
      %2516 = vst.msk [vmem:[#allocation3 + $0x240] sm:$0xf] %vm693, %v2452
      %2517 = vst.msk [vmem:[#allocation3 + $0x254] sm:$0xf] %vm693, %v2453
      %2518 = vst.msk [vmem:[#allocation3 + $0x268] sm:$0xf] %vm693, %v2454
      %2519 = vst.msk [vmem:[#allocation3 + $0x27c] sm:$0xf] %vm693, %v2455
      %v2520 = vld [vmem:[#allocation3] sm:$0xff]
      %v2521 = vld [vmem:[#allocation3 + $0x8] sm:$0xff]
      %v2522 = vld [vmem:[#allocation3 + $0x10] sm:$0xf]
      %v2523 = vld [vmem:[#allocation3 + $0x14] sm:$0xff]
      %v2524 = vld [vmem:[#allocation3 + $0x1c] sm:$0xff]
      %v2525 = vld [vmem:[#allocation3 + $0x24] sm:$0xf]
      %v2526 = vld [vmem:[#allocation3 + $0x28] sm:$0xff]
      %v2527 = vld [vmem:[#allocation3 + $0x30] sm:$0xff]
      %v2528 = vld [vmem:[#allocation3 + $0x38] sm:$0xf]
      %v2529 = vld [vmem:[#allocation3 + $0x3c] sm:$0xff]
      %v2530 = vld [vmem:[#allocation3 + $0x44] sm:$0xff]
      %v2531 = vld [vmem:[#allocation3 + $0x4c] sm:$0xf]
      %v2532 = vld [vmem:[#allocation3 + $0x50] sm:$0xff]
      %v2533 = vld [vmem:[#allocation3 + $0x58] sm:$0xff]
      %v2534 = vld [vmem:[#allocation3 + $0x60] sm:$0xf]
      %v2535 = vld [vmem:[#allocation3 + $0x64] sm:$0xff]
      %v2536 = vld [vmem:[#allocation3 + $0x6c] sm:$0xff]
      %v2537 = vld [vmem:[#allocation3 + $0x74] sm:$0xf]
      %v2538 = vld [vmem:[#allocation3 + $0x78] sm:$0xff]
      %v2539 = vld [vmem:[#allocation3 + $0x80] sm:$0xff]
      %v2540 = vld [vmem:[#allocation3 + $0x88] sm:$0xf]
      %v2541 = vld [vmem:[#allocation3 + $0x8c] sm:$0xff]
      %v2542 = vld [vmem:[#allocation3 + $0x94] sm:$0xff]
      %v2543 = vld [vmem:[#allocation3 + $0x9c] sm:$0xf]
      %v2544 = vld [vmem:[#allocation3 + $0xa0] sm:$0xff]
      %v2545 = vld [vmem:[#allocation3 + $0xa8] sm:$0xff]
      %v2546 = vld [vmem:[#allocation3 + $0xb0] sm:$0xf]
      %v2547 = vld [vmem:[#allocation3 + $0xb4] sm:$0xff]
      %v2548 = vld [vmem:[#allocation3 + $0xbc] sm:$0xff]
      %v2549 = vld [vmem:[#allocation3 + $0xc4] sm:$0xf]
      %v2550 = vld [vmem:[#allocation3 + $0xc8] sm:$0xff]
      %v2551 = vld [vmem:[#allocation3 + $0xd0] sm:$0xff]
      %v2552 = vld [vmem:[#allocation3 + $0xd8] sm:$0xf]
      %v2553 = vld [vmem:[#allocation3 + $0xdc] sm:$0xff]
      %v2554 = vld [vmem:[#allocation3 + $0xe4] sm:$0xff]
      %v2555 = vld [vmem:[#allocation3 + $0xec] sm:$0xf]
      %v2556 = vld [vmem:[#allocation3 + $0xf0] sm:$0xff]
      %v2557 = vld [vmem:[#allocation3 + $0xf8] sm:$0xff]
      %v2558 = vld [vmem:[#allocation3 + $0x100] sm:$0xf]
      %v2559 = vld [vmem:[#allocation3 + $0x104] sm:$0xff]
      %v2560 = vld [vmem:[#allocation3 + $0x10c] sm:$0xff]
      %v2561 = vld [vmem:[#allocation3 + $0x114] sm:$0xf]
      %v2562 = vld [vmem:[#allocation3 + $0x118] sm:$0xff]
      %v2563 = vld [vmem:[#allocation3 + $0x120] sm:$0xff]
      %v2564 = vld [vmem:[#allocation3 + $0x128] sm:$0xf]
      %v2565 = vld [vmem:[#allocation3 + $0x12c] sm:$0xff]
      %v2566 = vld [vmem:[#allocation3 + $0x134] sm:$0xff]
      %v2567 = vld [vmem:[#allocation3 + $0x13c] sm:$0xf]
      %v2568 = vld [vmem:[#allocation3 + $0x140] sm:$0xff]
      %v2569 = vld [vmem:[#allocation3 + $0x148] sm:$0xff]
      %v2570 = vld [vmem:[#allocation3 + $0x150] sm:$0xf]
      %v2571 = vld [vmem:[#allocation3 + $0x154] sm:$0xff]
      %v2572 = vld [vmem:[#allocation3 + $0x15c] sm:$0xff]
      %v2573 = vld [vmem:[#allocation3 + $0x164] sm:$0xf]
      %v2574 = vld [vmem:[#allocation3 + $0x168] sm:$0xff]
      %v2575 = vld [vmem:[#allocation3 + $0x170] sm:$0xff]
      %v2576 = vld [vmem:[#allocation3 + $0x178] sm:$0xf]
      %v2577 = vld [vmem:[#allocation3 + $0x17c] sm:$0xff]
      %v2578 = vld [vmem:[#allocation3 + $0x184] sm:$0xff]
      %v2579 = vld [vmem:[#allocation3 + $0x18c] sm:$0xf]
      %v2580 = vld [vmem:[#allocation3 + $0x190] sm:$0xff]
      %v2581 = vld [vmem:[#allocation3 + $0x198] sm:$0xff]
      %v2582 = vld [vmem:[#allocation3 + $0x1a0] sm:$0xf]
      %v2583 = vld [vmem:[#allocation3 + $0x1a4] sm:$0xff]
      %v2584 = vld [vmem:[#allocation3 + $0x1ac] sm:$0xff]
      %v2585 = vld [vmem:[#allocation3 + $0x1b4] sm:$0xf]
      %v2586 = vld [vmem:[#allocation3 + $0x1b8] sm:$0xff]
      %v2587 = vld [vmem:[#allocation3 + $0x1c0] sm:$0xff]
      %v2588 = vld [vmem:[#allocation3 + $0x1c8] sm:$0xf]
      %v2589 = vld [vmem:[#allocation3 + $0x1cc] sm:$0xff]
      %v2590 = vld [vmem:[#allocation3 + $0x1d4] sm:$0xff]
      %v2591 = vld [vmem:[#allocation3 + $0x1dc] sm:$0xf]
      %v2592 = vld [vmem:[#allocation3 + $0x1e0] sm:$0xff]
      %v2593 = vld [vmem:[#allocation3 + $0x1e8] sm:$0xff]
      %v2594 = vld [vmem:[#allocation3 + $0x1f0] sm:$0xf]
      %v2595 = vld [vmem:[#allocation3 + $0x1f4] sm:$0xff]
      %v2596 = vld [vmem:[#allocation3 + $0x1fc] sm:$0xff]
      %v2597 = vld [vmem:[#allocation3 + $0x204] sm:$0xf]
      %v2598 = vld [vmem:[#allocation3 + $0x208] sm:$0xff]
      %v2599 = vld [vmem:[#allocation3 + $0x210] sm:$0xff]
      %v2600 = vld [vmem:[#allocation3 + $0x218] sm:$0xf]
      %v2601 = vld [vmem:[#allocation3 + $0x21c] sm:$0xff]
      %v2602 = vld [vmem:[#allocation3 + $0x224] sm:$0xff]
      %v2603 = vld [vmem:[#allocation3 + $0x22c] sm:$0xf]
      %v2604 = vld [vmem:[#allocation3 + $0x230] sm:$0xff]
      %v2605 = vld [vmem:[#allocation3 + $0x238] sm:$0xff]
      %v2606 = vld [vmem:[#allocation3 + $0x240] sm:$0xf]
      %v2607 = vld [vmem:[#allocation3 + $0x244] sm:$0xff]
      %v2608 = vld [vmem:[#allocation3 + $0x24c] sm:$0xff]
      %v2609 = vld [vmem:[#allocation3 + $0x254] sm:$0xf]
      %v2610 = vld [vmem:[#allocation3 + $0x258] sm:$0xff]
      %v2611 = vld [vmem:[#allocation3 + $0x260] sm:$0xff]
      %v2612 = vld [vmem:[#allocation3 + $0x268] sm:$0xf]
      %v2613 = vld [vmem:[#allocation3 + $0x26c] sm:$0xff]
      %v2614 = vld [vmem:[#allocation3 + $0x274] sm:$0xff]
      %v2615 = vld [vmem:[#allocation3 + $0x27c] sm:$0xf]
      %v2616 = vld [vmem:[%s3] sm:$0xf]
      %v2617 = vld [vmem:[%s3 + $0x4] sm:$0xf]
      %v2618 = vld [vmem:[%s3 + $0x8] sm:$0xf]
      %v2619 = vld [vmem:[%s3 + $0xc] sm:$0xf]
      %v2620 = vld [vmem:[%s3 + $0x10] sm:$0xf]
      %v2621 = vld [vmem:[%s3 + $0x14] sm:$0xf]
      %v2622 = vld [vmem:[%s3 + $0x18] sm:$0xf]
      %v2623 = vld [vmem:[%s3 + $0x1c] sm:$0xf]
      %v2624 = vld [vmem:[%s3 + $0x20] sm:$0xf]
      %v2625 = vld [vmem:[%s3 + $0x24] sm:$0xf]
      %v2626 = vld [vmem:[%s3 + $0x28] sm:$0xf]
      %v2627 = vld [vmem:[%s3 + $0x2c] sm:$0xf]
      %v2628 = vld [vmem:[%s3 + $0x30] sm:$0xf]
      %v2629 = vld [vmem:[%s3 + $0x34] sm:$0xf]
      %v2630 = vld [vmem:[%s3 + $0x38] sm:$0xf]
      %v2631 = vld [vmem:[%s3 + $0x3c] sm:$0xf]
      %v2632 = vld [vmem:[%s3 + $0x40] sm:$0xf]
      %v2633 = vld [vmem:[%s3 + $0x44] sm:$0xf]
      %v2634 = vld [vmem:[%s3 + $0x48] sm:$0xf]
      %v2635 = vld [vmem:[%s3 + $0x4c] sm:$0xf]
      %v2636 = vld [vmem:[%s3 + $0x50] sm:$0xf]
      %v2637 = vld [vmem:[%s3 + $0x54] sm:$0xf]
      %v2638 = vld [vmem:[%s3 + $0x58] sm:$0xf]
      %v2639 = vld [vmem:[%s3 + $0x5c] sm:$0xf]
      %v2640 = vld [vmem:[%s3 + $0x60] sm:$0xf]
      %v2641 = vld [vmem:[%s3 + $0x64] sm:$0xf]
      %v2642 = vld [vmem:[%s3 + $0x68] sm:$0xf]
      %v2643 = vld [vmem:[%s3 + $0x6c] sm:$0xf]
      %v2644 = vld [vmem:[%s3 + $0x70] sm:$0xf]
      %v2645 = vld [vmem:[%s3 + $0x74] sm:$0xf]
      %v2646 = vld [vmem:[%s3 + $0x78] sm:$0xf]
      %v2647 = vld [vmem:[%s3 + $0x7c] sm:$0xf]
      %v2648 = vld [vmem:[%s3 + $0x80] sm:$0xf]
      %v2649 = vld [vmem:[%s3 + $0x84] sm:$0xf]
      %v2650 = vld [vmem:[%s3 + $0x88] sm:$0xf]
      %v2651 = vld [vmem:[%s3 + $0x8c] sm:$0xf]
      %v2652 = vld [vmem:[%s3 + $0x90] sm:$0xf]
      %v2653 = vld [vmem:[%s3 + $0x94] sm:$0xf]
      %v2654 = vld [vmem:[%s3 + $0x98] sm:$0xf]
      %v2655 = vld [vmem:[%s3 + $0x9c] sm:$0xf]
      %v2656 = vld [vmem:[%s3 + $0xa0] sm:$0xf]
      %v2657 = vld [vmem:[%s3 + $0xa4] sm:$0xf]
      %v2658 = vld [vmem:[%s3 + $0xa8] sm:$0xf]
      %v2659 = vld [vmem:[%s3 + $0xac] sm:$0xf]
      %v2660 = vld [vmem:[%s3 + $0xb0] sm:$0xf]
      %v2661 = vld [vmem:[%s3 + $0xb4] sm:$0xf]
      %v2662 = vld [vmem:[%s3 + $0xb8] sm:$0xf]
      %v2663 = vld [vmem:[%s3 + $0xbc] sm:$0xf]
      %v2664 = vld [vmem:[%s3 + $0xc0] sm:$0xf]
      %v2665 = vld [vmem:[%s3 + $0xc4] sm:$0xf]
      %v2666 = vld [vmem:[%s3 + $0xc8] sm:$0xf]
      %v2667 = vld [vmem:[%s3 + $0xcc] sm:$0xf]
      %v2668 = vld [vmem:[%s3 + $0xd0] sm:$0xf]
      %v2669 = vld [vmem:[%s3 + $0xd4] sm:$0xf]
      %v2670 = vld [vmem:[%s3 + $0xd8] sm:$0xf]
      %v2671 = vld [vmem:[%s3 + $0xdc] sm:$0xf]
      %v2672 = vld [vmem:[%s3 + $0xe0] sm:$0xf]
      %v2673 = vld [vmem:[%s3 + $0xe4] sm:$0xf]
      %v2674 = vld [vmem:[%s3 + $0xe8] sm:$0xf]
      %v2675 = vld [vmem:[%s3 + $0xec] sm:$0xf]
      %v2676 = vld [vmem:[%s3 + $0xf0] sm:$0xf]
      %v2677 = vld [vmem:[%s3 + $0xf4] sm:$0xf]
      %v2678 = vld [vmem:[%s3 + $0xf8] sm:$0xf]
      %v2679 = vld [vmem:[%s3 + $0xfc] sm:$0xf]
      %v2680 = vld [vmem:[%s3 + $0x100] sm:$0xf]
      %v2681 = vld [vmem:[%s3 + $0x104] sm:$0xf]
      %v2682 = vld [vmem:[%s3 + $0x108] sm:$0xf]
      %v2683 = vld [vmem:[%s3 + $0x10c] sm:$0xf]
      %v2684 = vld [vmem:[%s3 + $0x110] sm:$0xf]
      %v2685 = vld [vmem:[%s3 + $0x114] sm:$0xf]
      %v2686 = vld [vmem:[%s3 + $0x118] sm:$0xf]
      %v2687 = vld [vmem:[%s3 + $0x11c] sm:$0xf]
      %v2784 = vunpack.c.l.b16 %v2520
      %v2785 = vunpack.c.h.b16 %v2520
      %v2786 = vunpack.c.l.b16 %v2521
      %v2787 = vunpack.c.h.b16 %v2521
      %v2788 = vunpack.c.l.b16 %v2522
      %v2789 = vunpack.c.l.b16 %v2523
      %v2790 = vunpack.c.h.b16 %v2523
      %v2791 = vunpack.c.l.b16 %v2524
      %v2792 = vunpack.c.h.b16 %v2524
      %v2793 = vunpack.c.l.b16 %v2525
      %v2794 = vunpack.c.l.b16 %v2526
      %v2795 = vunpack.c.h.b16 %v2526
      %v2796 = vunpack.c.l.b16 %v2527
      %v2797 = vunpack.c.h.b16 %v2527
      %v2798 = vunpack.c.l.b16 %v2528
      %v2799 = vunpack.c.l.b16 %v2529
      %v2800 = vunpack.c.h.b16 %v2529
      %v2801 = vunpack.c.l.b16 %v2530
      %v2802 = vunpack.c.h.b16 %v2530
      %v2803 = vunpack.c.l.b16 %v2531
      %v2804 = vunpack.c.l.b16 %v2532
      %v2805 = vunpack.c.h.b16 %v2532
      %v2806 = vunpack.c.l.b16 %v2533
      %v2807 = vunpack.c.h.b16 %v2533
      %v2808 = vunpack.c.l.b16 %v2534
      %v2809 = vunpack.c.l.b16 %v2535
      %v2810 = vunpack.c.h.b16 %v2535
      %v2811 = vunpack.c.l.b16 %v2536
      %v2812 = vunpack.c.h.b16 %v2536
      %v2813 = vunpack.c.l.b16 %v2537
      %v2814 = vunpack.c.l.b16 %v2538
      %v2815 = vunpack.c.h.b16 %v2538
      %v2816 = vunpack.c.l.b16 %v2539
      %v2817 = vunpack.c.h.b16 %v2539
      %v2818 = vunpack.c.l.b16 %v2540
      %v2819 = vunpack.c.l.b16 %v2541
      %v2820 = vunpack.c.h.b16 %v2541
      %v2821 = vunpack.c.l.b16 %v2542
      %v2822 = vunpack.c.h.b16 %v2542
      %v2823 = vunpack.c.l.b16 %v2543
      %v2824 = vunpack.c.l.b16 %v2544
      %v2825 = vunpack.c.h.b16 %v2544
      %v2826 = vunpack.c.l.b16 %v2545
      %v2827 = vunpack.c.h.b16 %v2545
      %v2828 = vunpack.c.l.b16 %v2546
      %v2829 = vunpack.c.l.b16 %v2547
      %v2830 = vunpack.c.h.b16 %v2547
      %v2831 = vunpack.c.l.b16 %v2548
      %v2832 = vunpack.c.h.b16 %v2548
      %v2833 = vunpack.c.l.b16 %v2549
      %v2834 = vunpack.c.l.b16 %v2550
      %v2835 = vunpack.c.h.b16 %v2550
      %v2836 = vunpack.c.l.b16 %v2551
      %v2837 = vunpack.c.h.b16 %v2551
      %v2838 = vunpack.c.l.b16 %v2552
      %v2839 = vunpack.c.l.b16 %v2553
      %v2840 = vunpack.c.h.b16 %v2553
      %v2841 = vunpack.c.l.b16 %v2554
      %v2842 = vunpack.c.h.b16 %v2554
      %v2843 = vunpack.c.l.b16 %v2555
      %v2844 = vunpack.c.l.b16 %v2556
      %v2845 = vunpack.c.h.b16 %v2556
      %v2846 = vunpack.c.l.b16 %v2557
      %v2847 = vunpack.c.h.b16 %v2557
      %v2848 = vunpack.c.l.b16 %v2558
      %v2849 = vunpack.c.l.b16 %v2559
      %v2850 = vunpack.c.h.b16 %v2559
      %v2851 = vunpack.c.l.b16 %v2560
      %v2852 = vunpack.c.h.b16 %v2560
      %v2853 = vunpack.c.l.b16 %v2561
      %v2854 = vunpack.c.l.b16 %v2562
      %v2855 = vunpack.c.h.b16 %v2562
      %v2856 = vunpack.c.l.b16 %v2563
      %v2857 = vunpack.c.h.b16 %v2563
      %v2858 = vunpack.c.l.b16 %v2564
      %v2859 = vunpack.c.l.b16 %v2565
      %v2860 = vunpack.c.h.b16 %v2565
      %v2861 = vunpack.c.l.b16 %v2566
      %v2862 = vunpack.c.h.b16 %v2566
      %v2863 = vunpack.c.l.b16 %v2567
      %v2864 = vunpack.c.l.b16 %v2568
      %v2865 = vunpack.c.h.b16 %v2568
      %v2866 = vunpack.c.l.b16 %v2569
      %v2867 = vunpack.c.h.b16 %v2569
      %v2868 = vunpack.c.l.b16 %v2570
      %v2869 = vunpack.c.l.b16 %v2571
      %v2870 = vunpack.c.h.b16 %v2571
      %v2871 = vunpack.c.l.b16 %v2572
      %v2872 = vunpack.c.h.b16 %v2572
      %v2873 = vunpack.c.l.b16 %v2573
      %v2874 = vunpack.c.l.b16 %v2574
      %v2875 = vunpack.c.h.b16 %v2574
      %v2876 = vunpack.c.l.b16 %v2575
      %v2877 = vunpack.c.h.b16 %v2575
      %v2878 = vunpack.c.l.b16 %v2576
      %v2879 = vunpack.c.l.b16 %v2577
      %v2880 = vunpack.c.h.b16 %v2577
      %v2881 = vunpack.c.l.b16 %v2578
      %v2882 = vunpack.c.h.b16 %v2578
      %v2883 = vunpack.c.l.b16 %v2579
      %v2884 = vunpack.c.l.b16 %v2580
      %v2885 = vunpack.c.h.b16 %v2580
      %v2886 = vunpack.c.l.b16 %v2581
      %v2887 = vunpack.c.h.b16 %v2581
      %v2888 = vunpack.c.l.b16 %v2582
      %v2889 = vunpack.c.l.b16 %v2583
      %v2890 = vunpack.c.h.b16 %v2583
      %v2891 = vunpack.c.l.b16 %v2584
      %v2892 = vunpack.c.h.b16 %v2584
      %v2893 = vunpack.c.l.b16 %v2585
      %v2894 = vunpack.c.l.b16 %v2586
      %v2895 = vunpack.c.h.b16 %v2586
      %v2896 = vunpack.c.l.b16 %v2587
      %v2897 = vunpack.c.h.b16 %v2587
      %v2898 = vunpack.c.l.b16 %v2588
      %v2899 = vunpack.c.l.b16 %v2589
      %v2900 = vunpack.c.h.b16 %v2589
      %v2901 = vunpack.c.l.b16 %v2590
      %v2902 = vunpack.c.h.b16 %v2590
      %v2903 = vunpack.c.l.b16 %v2591
      %v2904 = vunpack.c.l.b16 %v2592
      %v2905 = vunpack.c.h.b16 %v2592
      %v2906 = vunpack.c.l.b16 %v2593
      %v2907 = vunpack.c.h.b16 %v2593
      %v2908 = vunpack.c.l.b16 %v2594
      %v2909 = vunpack.c.l.b16 %v2595
      %v2910 = vunpack.c.h.b16 %v2595
      %v2911 = vunpack.c.l.b16 %v2596
      %v2912 = vunpack.c.h.b16 %v2596
      %v2913 = vunpack.c.l.b16 %v2597
      %v2914 = vunpack.c.l.b16 %v2598
      %v2915 = vunpack.c.h.b16 %v2598
      %v2916 = vunpack.c.l.b16 %v2599
      %v2917 = vunpack.c.h.b16 %v2599
      %v2918 = vunpack.c.l.b16 %v2600
      %v2919 = vunpack.c.l.b16 %v2601
      %v2920 = vunpack.c.h.b16 %v2601
      %v2921 = vunpack.c.l.b16 %v2602
      %v2922 = vunpack.c.h.b16 %v2602
      %v2923 = vunpack.c.l.b16 %v2603
      %v2924 = vunpack.c.l.b16 %v2604
      %v2925 = vunpack.c.h.b16 %v2604
      %v2926 = vunpack.c.l.b16 %v2605
      %v2927 = vunpack.c.h.b16 %v2605
      %v2928 = vunpack.c.l.b16 %v2606
      %v2929 = vunpack.c.l.b16 %v2607
      %v2930 = vunpack.c.h.b16 %v2607
      %v2931 = vunpack.c.l.b16 %v2608
      %v2932 = vunpack.c.h.b16 %v2608
      %v2933 = vunpack.c.l.b16 %v2609
      %v2934 = vunpack.c.l.b16 %v2610
      %v2935 = vunpack.c.h.b16 %v2610
      %v2936 = vunpack.c.l.b16 %v2611
      %v2937 = vunpack.c.h.b16 %v2611
      %v2938 = vunpack.c.l.b16 %v2612
      %v2939 = vunpack.c.l.b16 %v2613
      %v2940 = vunpack.c.h.b16 %v2613
      %v2941 = vunpack.c.l.b16 %v2614
      %v2942 = vunpack.c.h.b16 %v2614
      %v2943 = vunpack.c.l.b16 %v2615
      %v2944 = vpack.c.b16 %v2789, %v2784
      %v2945 = vpack.c.b16 %v2790, %v2785
      %v2946 = vpack.c.b16 %v2791, %v2786
      %v2947 = vpack.c.b16 %v2792, %v2787
      %v2948 = vpack.c.b16 %v2793, %v2788
      %v2949 = vpack.c.b16 %v2799, %v2794
      %v2950 = vpack.c.b16 %v2800, %v2795
      %v2951 = vpack.c.b16 %v2801, %v2796
      %v2952 = vpack.c.b16 %v2802, %v2797
      %v2953 = vpack.c.b16 %v2803, %v2798
      %v2954 = vpack.c.b16 %v2809, %v2804
      %v2955 = vpack.c.b16 %v2810, %v2805
      %v2956 = vpack.c.b16 %v2811, %v2806
      %v2957 = vpack.c.b16 %v2812, %v2807
      %v2958 = vpack.c.b16 %v2813, %v2808
      %v2959 = vpack.c.b16 %v2819, %v2814
      %v2960 = vpack.c.b16 %v2820, %v2815
      %v2961 = vpack.c.b16 %v2821, %v2816
      %v2962 = vpack.c.b16 %v2822, %v2817
      %v2963 = vpack.c.b16 %v2823, %v2818
      %v2964 = vpack.c.b16 %v2829, %v2824
      %v2965 = vpack.c.b16 %v2830, %v2825
      %v2966 = vpack.c.b16 %v2831, %v2826
      %v2967 = vpack.c.b16 %v2832, %v2827
      %v2968 = vpack.c.b16 %v2833, %v2828
      %v2969 = vpack.c.b16 %v2839, %v2834
      %v2970 = vpack.c.b16 %v2840, %v2835
      %v2971 = vpack.c.b16 %v2841, %v2836
      %v2972 = vpack.c.b16 %v2842, %v2837
      %v2973 = vpack.c.b16 %v2843, %v2838
      %v2974 = vpack.c.b16 %v2849, %v2844
      %v2975 = vpack.c.b16 %v2850, %v2845
      %v2976 = vpack.c.b16 %v2851, %v2846
      %v2977 = vpack.c.b16 %v2852, %v2847
      %v2978 = vpack.c.b16 %v2853, %v2848
      %v2979 = vpack.c.b16 %v2859, %v2854
      %v2980 = vpack.c.b16 %v2860, %v2855
      %v2981 = vpack.c.b16 %v2861, %v2856
      %v2982 = vpack.c.b16 %v2862, %v2857
      %v2983 = vpack.c.b16 %v2863, %v2858
      %v2984 = vpack.c.b16 %v2869, %v2864
      %v2985 = vpack.c.b16 %v2870, %v2865
      %v2986 = vpack.c.b16 %v2871, %v2866
      %v2987 = vpack.c.b16 %v2872, %v2867
      %v2988 = vpack.c.b16 %v2873, %v2868
      %v2989 = vpack.c.b16 %v2879, %v2874
      %v2990 = vpack.c.b16 %v2880, %v2875
      %v2991 = vpack.c.b16 %v2881, %v2876
      %v2992 = vpack.c.b16 %v2882, %v2877
      %v2993 = vpack.c.b16 %v2883, %v2878
      %v2994 = vpack.c.b16 %v2889, %v2884
      %v2995 = vpack.c.b16 %v2890, %v2885
      %v2996 = vpack.c.b16 %v2891, %v2886
      %v2997 = vpack.c.b16 %v2892, %v2887
      %v2998 = vpack.c.b16 %v2893, %v2888
      %v2999 = vpack.c.b16 %v2899, %v2894
      %v3000 = vpack.c.b16 %v2900, %v2895
      %v3001 = vpack.c.b16 %v2901, %v2896
      %v3002 = vpack.c.b16 %v2902, %v2897
      %v3003 = vpack.c.b16 %v2903, %v2898
      %v3004 = vpack.c.b16 %v2909, %v2904
      %v3005 = vpack.c.b16 %v2910, %v2905
      %v3006 = vpack.c.b16 %v2911, %v2906
      %v3007 = vpack.c.b16 %v2912, %v2907
      %v3008 = vpack.c.b16 %v2913, %v2908
      %v3009 = vpack.c.b16 %v2919, %v2914
      %v3010 = vpack.c.b16 %v2920, %v2915
      %v3011 = vpack.c.b16 %v2921, %v2916
      %v3012 = vpack.c.b16 %v2922, %v2917
      %v3013 = vpack.c.b16 %v2923, %v2918
      %v3014 = vpack.c.b16 %v2929, %v2924
      %v3015 = vpack.c.b16 %v2930, %v2925
      %v3016 = vpack.c.b16 %v2931, %v2926
      %v3017 = vpack.c.b16 %v2932, %v2927
      %v3018 = vpack.c.b16 %v2933, %v2928
      %v3019 = vpack.c.b16 %v2939, %v2934
      %v3020 = vpack.c.b16 %v2940, %v2935
      %v3021 = vpack.c.b16 %v2941, %v2936
      %v3022 = vpack.c.b16 %v2942, %v2937
      %v3023 = vpack.c.b16 %v2943, %v2938
      %v3160 = vunpack.c.l.b16 %v2616
      %v3161 = vunpack.c.l.b16 %v2617
      %v3162 = vunpack.c.l.b16 %v2618
      %v3163 = vunpack.c.l.b16 %v2619
      %v3164 = vunpack.c.l.b16 %v2620
      %v3165 = vunpack.c.l.b16 %v2621
      %v3166 = vunpack.c.l.b16 %v2622
      %v3167 = vunpack.c.l.b16 %v2623
      %v3168 = vunpack.c.l.b16 %v2624
      %v3169 = vunpack.c.l.b16 %v2625
      %v3170 = vunpack.c.l.b16 %v2626
      %v3171 = vunpack.c.l.b16 %v2627
      %v3172 = vunpack.c.l.b16 %v2628
      %v3173 = vunpack.c.l.b16 %v2629
      %v3174 = vunpack.c.l.b16 %v2630
      %v3175 = vunpack.c.l.b16 %v2631
      %v3176 = vunpack.c.l.b16 %v2632
      %v3177 = vunpack.c.l.b16 %v2633
      %v3178 = vunpack.c.l.b16 %v2634
      %v3179 = vunpack.c.l.b16 %v2635
      %v3180 = vunpack.c.l.b16 %v2636
      %v3181 = vunpack.c.l.b16 %v2637
      %v3182 = vunpack.c.l.b16 %v2638
      %v3183 = vunpack.c.l.b16 %v2639
      %v3184 = vunpack.c.l.b16 %v2640
      %v3185 = vunpack.c.l.b16 %v2641
      %v3186 = vunpack.c.l.b16 %v2642
      %v3187 = vunpack.c.l.b16 %v2643
      %v3188 = vunpack.c.l.b16 %v2644
      %v3189 = vunpack.c.l.b16 %v2645
      %v3190 = vunpack.c.l.b16 %v2646
      %v3191 = vunpack.c.l.b16 %v2647
      %v3192 = vunpack.c.l.b16 %v2648
      %v3193 = vunpack.c.l.b16 %v2649
      %v3194 = vunpack.c.l.b16 %v2650
      %v3195 = vunpack.c.l.b16 %v2651
      %v3196 = vunpack.c.l.b16 %v2652
      %v3197 = vunpack.c.l.b16 %v2653
      %v3198 = vunpack.c.l.b16 %v2654
      %v3199 = vunpack.c.l.b16 %v2655
      %v3200 = vunpack.c.l.b16 %v2656
      %v3201 = vunpack.c.l.b16 %v2657
      %v3202 = vunpack.c.l.b16 %v2658
      %v3203 = vunpack.c.l.b16 %v2659
      %v3204 = vunpack.c.l.b16 %v2660
      %v3205 = vunpack.c.l.b16 %v2661
      %v3206 = vunpack.c.l.b16 %v2662
      %v3207 = vunpack.c.l.b16 %v2663
      %v3208 = vunpack.c.l.b16 %v2664
      %v3209 = vunpack.c.l.b16 %v2665
      %v3210 = vunpack.c.l.b16 %v2666
      %v3211 = vunpack.c.l.b16 %v2667
      %v3212 = vunpack.c.l.b16 %v2668
      %v3213 = vunpack.c.l.b16 %v2669
      %v3214 = vunpack.c.l.b16 %v2670
      %v3215 = vunpack.c.l.b16 %v2671
      %v3216 = vunpack.c.l.b16 %v2672
      %v3217 = vunpack.c.l.b16 %v2673
      %v3218 = vunpack.c.l.b16 %v2674
      %v3219 = vunpack.c.l.b16 %v2675
      %v3220 = vunpack.c.l.b16 %v2676
      %v3221 = vunpack.c.l.b16 %v2677
      %v3222 = vunpack.c.l.b16 %v2678
      %v3223 = vunpack.c.l.b16 %v2679
      %v3224 = vunpack.c.l.b16 %v2680
      %v3225 = vunpack.c.l.b16 %v2681
      %v3226 = vunpack.c.l.b16 %v2682
      %v3227 = vunpack.c.l.b16 %v2683
      %v3228 = vunpack.c.l.b16 %v2684
      %v3229 = vunpack.c.l.b16 %v2685
      %v3230 = vunpack.c.l.b16 %v2686
      %v3231 = vunpack.c.l.b16 %v2687
      %v3232 = vpack.c.b16 %v3161, %v3160
      %v3233 = vpack.c.b16 %v3163, %v3162
      %v3234 = vpack.c.b16 %v3165, %v3164
      %v3235 = vpack.c.b16 %v3167, %v3166
      %v3236 = vpack.c.b16 %v3169, %v3168
      %v3237 = vpack.c.b16 %v3171, %v3170
      %v3238 = vpack.c.b16 %v3173, %v3172
      %v3239 = vpack.c.b16 %v3175, %v3174
      %v3240 = vpack.c.b16 %v3177, %v3176
      %v3241 = vpack.c.b16 %v3179, %v3178
      %v3242 = vpack.c.b16 %v3181, %v3180
      %v3243 = vpack.c.b16 %v3183, %v3182
      %v3244 = vpack.c.b16 %v3185, %v3184
      %v3245 = vpack.c.b16 %v3187, %v3186
      %v3246 = vpack.c.b16 %v3189, %v3188
      %v3247 = vpack.c.b16 %v3191, %v3190
      %v3248 = vpack.c.b16 %v3193, %v3192
      %v3249 = vpack.c.b16 %v3195, %v3194
      %v3250 = vpack.c.b16 %v3197, %v3196
      %v3251 = vpack.c.b16 %v3199, %v3198
      %v3252 = vpack.c.b16 %v3201, %v3200
      %v3253 = vpack.c.b16 %v3203, %v3202
      %v3254 = vpack.c.b16 %v3205, %v3204
      %v3255 = vpack.c.b16 %v3207, %v3206
      %v3256 = vpack.c.b16 %v3209, %v3208
      %v3257 = vpack.c.b16 %v3211, %v3210
      %v3258 = vpack.c.b16 %v3213, %v3212
      %v3259 = vpack.c.b16 %v3215, %v3214
      %v3260 = vpack.c.b16 %v3217, %v3216
      %v3261 = vpack.c.b16 %v3219, %v3218
      %v3262 = vpack.c.b16 %v3221, %v3220
      %v3263 = vpack.c.b16 %v3223, %v3222
      %v3264 = vpack.c.b16 %v3225, %v3224
      %v3265 = vpack.c.b16 %v3227, %v3226
      %v3266 = vpack.c.b16 %v3229, %v3228
      %v3267 = vpack.c.b16 %v3231, %v3230
      %v3305 = vsel %vm270, %v2948, 0
      %v3308 = vsel %vm270, %v2953, 0
      %v3311 = vsel %vm270, %v2958, 0
      %v3314 = vsel %vm270, %v2963, 0
      %v3317 = vsel %vm270, %v2968, 0
      %v3320 = vsel %vm270, %v2973, 0
      %v3323 = vsel %vm270, %v2978, 0
      %v3326 = vsel %vm270, %v2983, 0
      %v3329 = vsel %vm270, %v2988, 0
      %v3332 = vsel %vm270, %v2993, 0
      %v3335 = vsel %vm270, %v2998, 0
      %v3338 = vsel %vm270, %v3003, 0
      %v3341 = vsel %vm270, %v3008, 0
      %v3344 = vsel %vm270, %v3013, 0
      %v3347 = vsel %vm270, %v3018, 0
      %v3350 = vsel %vm270, %v3023, 0
      %3352 = vmatprep.subr.bf16.mxu0 0
      %3353 = vmatpush1.bf16.msra.mxu0 %v3239
      %3354 = vmatprep.subr.bf16.mxu0 0
      %3355 = vmatpush1.bf16.msra.mxu0 %v3238
      %3356 = vmatprep.subr.bf16.mxu0 0
      %3357 = vmatpush1.bf16.msra.mxu0 %v3237
      %3358 = vmatprep.subr.bf16.mxu0 0
      %3359 = vmatpush1.bf16.msra.mxu0 %v3236
      %3360 = vmatprep.subr.bf16.mxu0 0
      %3361 = vmatpush1.bf16.msra.mxu0 %v3235
      %3362 = vmatprep.subr.bf16.mxu0 0
      %3363 = vmatpush1.bf16.msra.mxu0 %v3234
      %3364 = vmatprep.subr.bf16.mxu0 0
      %3365 = vmatpush1.bf16.msra.mxu0 %v3233
      %3366 = vmatprep.subr.bf16.mxu0 0
      %3367 = vmatpush1.bf16.msra.mxu0 %v3232
      %3368 = vmatprep.subr.bf16.mxu0 0
      %3369 = vmatpush2.bf16.msra.mxu0 %v3247
      %3370 = vmatprep.subr.bf16.mxu0 0
      %3371 = vmatpush2.bf16.msra.mxu0 %v3246
      %3372 = vmatprep.subr.bf16.mxu0 0
      %3373 = vmatpush2.bf16.msra.mxu0 %v3245
      %3374 = vmatprep.subr.bf16.mxu0 0
      %3375 = vmatpush2.bf16.msra.mxu0 %v3244
      %3376 = vmatprep.subr.bf16.mxu0 0
      %3377 = vmatpush2.bf16.msra.mxu0 %v3243
      %3378 = vmatprep.subr.bf16.mxu0 0
      %3379 = vmatpush2.bf16.msra.mxu0 %v3242
      %3380 = vmatprep.subr.bf16.mxu0 0
      %3381 = vmatpush2.bf16.msra.mxu0 %v3241
      %3382 = vmatprep.subr.bf16.mxu0 0
      %3383 = vmatpush2.bf16.msra.mxu0 %v3240
      %3384 = vmatprep.mubr.bf16.mxu0 %v2945
      %3385 = vmatmul.mubr.bf16.gmra.mxu0 %v2944
      %v3386 = vpop.f32.mrf.mxu0
      %v3387 = vadd.f32 0.0, %v3386
      %v3388 = vpop.f32.mrf.mxu0
      %v3389 = vpop.f32.mrf.mxu0
      %v3390 = vadd.f32 0.0, %v3389
      %v3391 = vpop.f32.mrf.mxu0
      %3392 = vmatprep.mubr.bf16.mxu0 %v2950
      %3393 = vmatmul.mubr.bf16.gmra.mxu0 %v2949
      %v3394 = vpop.f32.mrf.mxu0
      %v3395 = vadd.f32 0.0, %v3394
      %v3396 = vpop.f32.mrf.mxu0
      %v3397 = vpop.f32.mrf.mxu0
      %v3398 = vadd.f32 0.0, %v3397
      %v3399 = vpop.f32.mrf.mxu0
      %3400 = vmatprep.mubr.bf16.mxu0 %v2955
      %3401 = vmatmul.mubr.bf16.gmra.mxu0 %v2954
      %v3402 = vpop.f32.mrf.mxu0
      %v3403 = vadd.f32 0.0, %v3402
      %v3404 = vpop.f32.mrf.mxu0
      %v3405 = vpop.f32.mrf.mxu0
      %v3406 = vadd.f32 0.0, %v3405
      %v3407 = vpop.f32.mrf.mxu0
      %3408 = vmatprep.mubr.bf16.mxu0 %v2960
      %3409 = vmatmul.mubr.bf16.gmra.mxu0 %v2959
      %v3410 = vpop.f32.mrf.mxu0
      %v3411 = vadd.f32 0.0, %v3410
      %v3412 = vpop.f32.mrf.mxu0
      %v3413 = vpop.f32.mrf.mxu0
      %v3414 = vadd.f32 0.0, %v3413
      %v3415 = vpop.f32.mrf.mxu0
      %3416 = vmatprep.mubr.bf16.mxu0 %v2965
      %3417 = vmatmul.mubr.bf16.gmra.mxu0 %v2964
      %v3418 = vpop.f32.mrf.mxu0
      %v3419 = vadd.f32 0.0, %v3418
      %v3420 = vpop.f32.mrf.mxu0
      %v3421 = vpop.f32.mrf.mxu0
      %v3422 = vadd.f32 0.0, %v3421
      %v3423 = vpop.f32.mrf.mxu0
      %3424 = vmatprep.mubr.bf16.mxu0 %v2970
      %3425 = vmatmul.mubr.bf16.gmra.mxu0 %v2969
      %v3426 = vpop.f32.mrf.mxu0
      %v3427 = vadd.f32 0.0, %v3426
      %v3428 = vpop.f32.mrf.mxu0
      %v3429 = vpop.f32.mrf.mxu0
      %v3430 = vadd.f32 0.0, %v3429
      %v3431 = vpop.f32.mrf.mxu0
      %3432 = vmatprep.mubr.bf16.mxu0 %v2975
      %3433 = vmatmul.mubr.bf16.gmra.mxu0 %v2974
      %v3434 = vpop.f32.mrf.mxu0
      %v3435 = vadd.f32 0.0, %v3434
      %v3436 = vpop.f32.mrf.mxu0
      %v3437 = vpop.f32.mrf.mxu0
      %v3438 = vadd.f32 0.0, %v3437
      %v3439 = vpop.f32.mrf.mxu0
      %3440 = vmatprep.mubr.bf16.mxu0 %v2980
      %3441 = vmatmul.mubr.bf16.gmra.mxu0 %v2979
      %v3442 = vpop.f32.mrf.mxu0
      %v3443 = vadd.f32 0.0, %v3442
      %v3444 = vpop.f32.mrf.mxu0
      %v3445 = vpop.f32.mrf.mxu0
      %v3446 = vadd.f32 0.0, %v3445
      %v3447 = vpop.f32.mrf.mxu0
      %3448 = vmatprep.mubr.bf16.mxu0 %v2985
      %3449 = vmatmul.mubr.bf16.gmra.mxu0 %v2984
      %v3450 = vpop.f32.mrf.mxu0
      %v3451 = vadd.f32 0.0, %v3450
      %v3452 = vpop.f32.mrf.mxu0
      %v3453 = vpop.f32.mrf.mxu0
      %v3454 = vadd.f32 0.0, %v3453
      %v3455 = vpop.f32.mrf.mxu0
      %3456 = vmatprep.mubr.bf16.mxu0 %v2990
      %3457 = vmatmul.mubr.bf16.gmra.mxu0 %v2989
      %v3458 = vpop.f32.mrf.mxu0
      %v3459 = vadd.f32 0.0, %v3458
      %v3460 = vpop.f32.mrf.mxu0
      %v3461 = vpop.f32.mrf.mxu0
      %v3462 = vadd.f32 0.0, %v3461
      %v3463 = vpop.f32.mrf.mxu0
      %3464 = vmatprep.mubr.bf16.mxu0 %v2995
      %3465 = vmatmul.mubr.bf16.gmra.mxu0 %v2994
      %v3466 = vpop.f32.mrf.mxu0
      %v3467 = vadd.f32 0.0, %v3466
      %v3468 = vpop.f32.mrf.mxu0
      %v3469 = vpop.f32.mrf.mxu0
      %v3470 = vadd.f32 0.0, %v3469
      %v3471 = vpop.f32.mrf.mxu0
      %3472 = vmatprep.mubr.bf16.mxu0 %v3000
      %3473 = vmatmul.mubr.bf16.gmra.mxu0 %v2999
      %v3474 = vpop.f32.mrf.mxu0
      %v3475 = vadd.f32 0.0, %v3474
      %v3476 = vpop.f32.mrf.mxu0
      %v3477 = vpop.f32.mrf.mxu0
      %v3478 = vadd.f32 0.0, %v3477
      %v3479 = vpop.f32.mrf.mxu0
      %3480 = vmatprep.mubr.bf16.mxu0 %v3005
      %3481 = vmatmul.mubr.bf16.gmra.mxu0 %v3004
      %v3482 = vpop.f32.mrf.mxu0
      %v3483 = vadd.f32 0.0, %v3482
      %v3484 = vpop.f32.mrf.mxu0
      %v3485 = vpop.f32.mrf.mxu0
      %v3486 = vadd.f32 0.0, %v3485
      %v3487 = vpop.f32.mrf.mxu0
      %3488 = vmatprep.mubr.bf16.mxu0 %v3010
      %3489 = vmatmul.mubr.bf16.gmra.mxu0 %v3009
      %v3490 = vpop.f32.mrf.mxu0
      %v3491 = vadd.f32 0.0, %v3490
      %v3492 = vpop.f32.mrf.mxu0
      %v3493 = vpop.f32.mrf.mxu0
      %v3494 = vadd.f32 0.0, %v3493
      %v3495 = vpop.f32.mrf.mxu0
      %3496 = vmatprep.mubr.bf16.mxu0 %v3015
      %3497 = vmatmul.mubr.bf16.gmra.mxu0 %v3014
      %v3498 = vpop.f32.mrf.mxu0
      %v3499 = vadd.f32 0.0, %v3498
      %v3500 = vpop.f32.mrf.mxu0
      %v3501 = vpop.f32.mrf.mxu0
      %v3502 = vadd.f32 0.0, %v3501
      %v3503 = vpop.f32.mrf.mxu0
      %3504 = vmatprep.mubr.bf16.mxu0 %v3020
      %3505 = vmatmul.mubr.bf16.gmra.mxu0 %v3019
      %v3506 = vpop.f32.mrf.mxu0
      %v3507 = vadd.f32 0.0, %v3506
      %v3508 = vpop.f32.mrf.mxu0
      %v3509 = vpop.f32.mrf.mxu0
      %v3510 = vadd.f32 0.0, %v3509
      %v3511 = vpop.f32.mrf.mxu0
      %3512 = vdwg.mxu0
      %3513 = vmatprep.subr.bf16.mxu0 0
      %3514 = vmatpush1.bf16.msra.mxu0 %v3255
      %3515 = vmatprep.subr.bf16.mxu0 0
      %3516 = vmatpush1.bf16.msra.mxu0 %v3254
      %3517 = vmatprep.subr.bf16.mxu0 0
      %3518 = vmatpush1.bf16.msra.mxu0 %v3253
      %3519 = vmatprep.subr.bf16.mxu0 0
      %3520 = vmatpush1.bf16.msra.mxu0 %v3252
      %3521 = vmatprep.subr.bf16.mxu0 0
      %3522 = vmatpush1.bf16.msra.mxu0 %v3251
      %3523 = vmatprep.subr.bf16.mxu0 0
      %3524 = vmatpush1.bf16.msra.mxu0 %v3250
      %3525 = vmatprep.subr.bf16.mxu0 0
      %3526 = vmatpush1.bf16.msra.mxu0 %v3249
      %3527 = vmatprep.subr.bf16.mxu0 0
      %3528 = vmatpush1.bf16.msra.mxu0 %v3248
      %3529 = vmatprep.subr.bf16.mxu0 0
      %3530 = vmatpush2.bf16.msra.mxu0 %v3263
      %3531 = vmatprep.subr.bf16.mxu0 0
      %3532 = vmatpush2.bf16.msra.mxu0 %v3262
      %3533 = vmatprep.subr.bf16.mxu0 0
      %3534 = vmatpush2.bf16.msra.mxu0 %v3261
      %3535 = vmatprep.subr.bf16.mxu0 0
      %3536 = vmatpush2.bf16.msra.mxu0 %v3260
      %3537 = vmatprep.subr.bf16.mxu0 0
      %3538 = vmatpush2.bf16.msra.mxu0 %v3259
      %3539 = vmatprep.subr.bf16.mxu0 0
      %3540 = vmatpush2.bf16.msra.mxu0 %v3258
      %3541 = vmatprep.subr.bf16.mxu0 0
      %3542 = vmatpush2.bf16.msra.mxu0 %v3257
      %3543 = vmatprep.subr.bf16.mxu0 0
      %3544 = vmatpush2.bf16.msra.mxu0 %v3256
      %3545 = vmatprep.mubr.bf16.mxu0 %v2947
      %3546 = vmatmul.mubr.bf16.gmra.mxu0 %v2946
      %v3547 = vpop.f32.mrf.mxu0
      %v3548 = vadd.f32 %v3387, %v3547
      %v3549 = vpop.f32.mrf.mxu0
      %v3550 = vpop.f32.mrf.mxu0
      %v3551 = vadd.f32 %v3390, %v3550
      %v3552 = vpop.f32.mrf.mxu0
      %3553 = vmatprep.mubr.bf16.mxu0 %v2952
      %3554 = vmatmul.mubr.bf16.gmra.mxu0 %v2951
      %v3555 = vpop.f32.mrf.mxu0
      %v3556 = vadd.f32 %v3395, %v3555
      %v3557 = vpop.f32.mrf.mxu0
      %v3558 = vpop.f32.mrf.mxu0
      %v3559 = vadd.f32 %v3398, %v3558
      %v3560 = vpop.f32.mrf.mxu0
      %3561 = vmatprep.mubr.bf16.mxu0 %v2957
      %3562 = vmatmul.mubr.bf16.gmra.mxu0 %v2956
      %v3563 = vpop.f32.mrf.mxu0
      %v3564 = vadd.f32 %v3403, %v3563
      %v3565 = vpop.f32.mrf.mxu0
      %v3566 = vpop.f32.mrf.mxu0
      %v3567 = vadd.f32 %v3406, %v3566
      %v3568 = vpop.f32.mrf.mxu0
      %3569 = vmatprep.mubr.bf16.mxu0 %v2962
      %3570 = vmatmul.mubr.bf16.gmra.mxu0 %v2961
      %v3571 = vpop.f32.mrf.mxu0
      %v3572 = vadd.f32 %v3411, %v3571
      %v3573 = vpop.f32.mrf.mxu0
      %v3574 = vpop.f32.mrf.mxu0
      %v3575 = vadd.f32 %v3414, %v3574
      %v3576 = vpop.f32.mrf.mxu0
      %3577 = vmatprep.mubr.bf16.mxu0 %v2967
      %3578 = vmatmul.mubr.bf16.gmra.mxu0 %v2966
      %v3579 = vpop.f32.mrf.mxu0
      %v3580 = vadd.f32 %v3419, %v3579
      %v3581 = vpop.f32.mrf.mxu0
      %v3582 = vpop.f32.mrf.mxu0
      %v3583 = vadd.f32 %v3422, %v3582
      %v3584 = vpop.f32.mrf.mxu0
      %3585 = vmatprep.mubr.bf16.mxu0 %v2972
      %3586 = vmatmul.mubr.bf16.gmra.mxu0 %v2971
      %v3587 = vpop.f32.mrf.mxu0
      %v3588 = vadd.f32 %v3427, %v3587
      %v3589 = vpop.f32.mrf.mxu0
      %v3590 = vpop.f32.mrf.mxu0
      %v3591 = vadd.f32 %v3430, %v3590
      %v3592 = vpop.f32.mrf.mxu0
      %3593 = vmatprep.mubr.bf16.mxu0 %v2977
      %3594 = vmatmul.mubr.bf16.gmra.mxu0 %v2976
      %v3595 = vpop.f32.mrf.mxu0
      %v3596 = vadd.f32 %v3435, %v3595
      %v3597 = vpop.f32.mrf.mxu0
      %v3598 = vpop.f32.mrf.mxu0
      %v3599 = vadd.f32 %v3438, %v3598
      %v3600 = vpop.f32.mrf.mxu0
      %3601 = vmatprep.mubr.bf16.mxu0 %v2982
      %3602 = vmatmul.mubr.bf16.gmra.mxu0 %v2981
      %v3603 = vpop.f32.mrf.mxu0
      %v3604 = vadd.f32 %v3443, %v3603
      %v3605 = vpop.f32.mrf.mxu0
      %v3606 = vpop.f32.mrf.mxu0
      %v3607 = vadd.f32 %v3446, %v3606
      %v3608 = vpop.f32.mrf.mxu0
      %3609 = vmatprep.mubr.bf16.mxu0 %v2987
      %3610 = vmatmul.mubr.bf16.gmra.mxu0 %v2986
      %v3611 = vpop.f32.mrf.mxu0
      %v3612 = vadd.f32 %v3451, %v3611
      %v3613 = vpop.f32.mrf.mxu0
      %v3614 = vpop.f32.mrf.mxu0
      %v3615 = vadd.f32 %v3454, %v3614
      %v3616 = vpop.f32.mrf.mxu0
      %3617 = vmatprep.mubr.bf16.mxu0 %v2992
      %3618 = vmatmul.mubr.bf16.gmra.mxu0 %v2991
      %v3619 = vpop.f32.mrf.mxu0
      %v3620 = vadd.f32 %v3459, %v3619
      %v3621 = vpop.f32.mrf.mxu0
      %v3622 = vpop.f32.mrf.mxu0
      %v3623 = vadd.f32 %v3462, %v3622
      %v3624 = vpop.f32.mrf.mxu0
      %3625 = vmatprep.mubr.bf16.mxu0 %v2997
      %3626 = vmatmul.mubr.bf16.gmra.mxu0 %v2996
      %v3627 = vpop.f32.mrf.mxu0
      %v3628 = vadd.f32 %v3467, %v3627
      %v3629 = vpop.f32.mrf.mxu0
      %v3630 = vpop.f32.mrf.mxu0
      %v3631 = vadd.f32 %v3470, %v3630
      %v3632 = vpop.f32.mrf.mxu0
      %3633 = vmatprep.mubr.bf16.mxu0 %v3002
      %3634 = vmatmul.mubr.bf16.gmra.mxu0 %v3001
      %v3635 = vpop.f32.mrf.mxu0
      %v3636 = vadd.f32 %v3475, %v3635
      %v3637 = vpop.f32.mrf.mxu0
      %v3638 = vpop.f32.mrf.mxu0
      %v3639 = vadd.f32 %v3478, %v3638
      %v3640 = vpop.f32.mrf.mxu0
      %3641 = vmatprep.mubr.bf16.mxu0 %v3007
      %3642 = vmatmul.mubr.bf16.gmra.mxu0 %v3006
      %v3643 = vpop.f32.mrf.mxu0
      %v3644 = vadd.f32 %v3483, %v3643
      %v3645 = vpop.f32.mrf.mxu0
      %v3646 = vpop.f32.mrf.mxu0
      %v3647 = vadd.f32 %v3486, %v3646
      %v3648 = vpop.f32.mrf.mxu0
      %3649 = vmatprep.mubr.bf16.mxu0 %v3012
      %3650 = vmatmul.mubr.bf16.gmra.mxu0 %v3011
      %v3651 = vpop.f32.mrf.mxu0
      %v3652 = vadd.f32 %v3491, %v3651
      %v3653 = vpop.f32.mrf.mxu0
      %v3654 = vpop.f32.mrf.mxu0
      %v3655 = vadd.f32 %v3494, %v3654
      %v3656 = vpop.f32.mrf.mxu0
      %3657 = vmatprep.mubr.bf16.mxu0 %v3017
      %3658 = vmatmul.mubr.bf16.gmra.mxu0 %v3016
      %v3659 = vpop.f32.mrf.mxu0
      %v3660 = vadd.f32 %v3499, %v3659
      %v3661 = vpop.f32.mrf.mxu0
      %v3662 = vpop.f32.mrf.mxu0
      %v3663 = vadd.f32 %v3502, %v3662
      %v3664 = vpop.f32.mrf.mxu0
      %3665 = vmatprep.mubr.bf16.mxu0 %v3022
      %3666 = vmatmul.mubr.bf16.gmra.mxu0 %v3021
      %v3667 = vpop.f32.mrf.mxu0
      %v3668 = vadd.f32 %v3507, %v3667
      %v3669 = vpop.f32.mrf.mxu0
      %v3670 = vpop.f32.mrf.mxu0
      %v3671 = vadd.f32 %v3510, %v3670
      %v3672 = vpop.f32.mrf.mxu0
      %3673 = vdwg.mxu0
      %3674 = vmatprep.subr.bf16.mxu0 0
      %3675 = vmatpush1.bf16.msra.mxu0 0
      %3676 = vmatprep.subr.bf16.mxu0 0
      %3677 = vmatpush1.bf16.msra.mxu0 0
      %3678 = vmatprep.subr.bf16.mxu0 0
      %3679 = vmatpush1.bf16.msra.mxu0 0
      %3680 = vmatprep.subr.bf16.mxu0 0
      %3681 = vmatpush1.bf16.msra.mxu0 0
      %3682 = vmatprep.subr.bf16.mxu0 0
      %3683 = vmatpush1.bf16.msra.mxu0 %v3267
      %3684 = vmatprep.subr.bf16.mxu0 0
      %3685 = vmatpush1.bf16.msra.mxu0 %v3266
      %3686 = vmatprep.subr.bf16.mxu0 0
      %3687 = vmatpush1.bf16.msra.mxu0 %v3265
      %3688 = vmatprep.subr.bf16.mxu0 0
      %3689 = vmatpush1.bf16.msra.mxu0 %v3264
      %3690 = vmatprep.subr.bf16.mxu0 0
      %3691 = vmatpush2.bf16.msra.mxu0 0
      %3692 = vmatprep.subr.bf16.mxu0 0
      %3693 = vmatpush2.bf16.msra.mxu0 0
      %3694 = vmatprep.subr.bf16.mxu0 0
      %3695 = vmatpush2.bf16.msra.mxu0 0
      %3696 = vmatprep.subr.bf16.mxu0 0
      %3697 = vmatpush2.bf16.msra.mxu0 0
      %3698 = vmatprep.subr.bf16.mxu0 0
      %3699 = vmatpush2.bf16.msra.mxu0 0
      %3700 = vmatprep.subr.bf16.mxu0 0
      %3701 = vmatpush2.bf16.msra.mxu0 0
      %3702 = vmatprep.subr.bf16.mxu0 0
      %3703 = vmatpush2.bf16.msra.mxu0 0
      %3704 = vmatprep.subr.bf16.mxu0 0
      %3705 = vmatpush2.bf16.msra.mxu0 0
      %3706 = vmatprep.mubr.bf16.mxu0 0
      %3707 = vmatmul.mubr.bf16.gmra.mxu0 %v3305
      %v3708 = vpop.f32.mrf.mxu0
      %v3709 = vadd.f32 %v3548, %v3708
      %v3710 = vpop.f32.mrf.mxu0
      %v3711 = vpop.f32.mrf.mxu0
      %v3712 = vadd.f32 %v3551, %v3711
      %v3713 = vpop.f32.mrf.mxu0
      %3714 = vmatprep.mubr.bf16.mxu0 0
      %3715 = vmatmul.mubr.bf16.gmra.mxu0 %v3308
      %v3716 = vpop.f32.mrf.mxu0
      %v3717 = vadd.f32 %v3556, %v3716
      %v3718 = vpop.f32.mrf.mxu0
      %v3719 = vpop.f32.mrf.mxu0
      %v3720 = vadd.f32 %v3559, %v3719
      %v3721 = vpop.f32.mrf.mxu0
      %3722 = vmatprep.mubr.bf16.mxu0 0
      %3723 = vmatmul.mubr.bf16.gmra.mxu0 %v3311
      %v3724 = vpop.f32.mrf.mxu0
      %v3725 = vadd.f32 %v3564, %v3724
      %v3726 = vpop.f32.mrf.mxu0
      %v3727 = vpop.f32.mrf.mxu0
      %v3728 = vadd.f32 %v3567, %v3727
      %v3729 = vpop.f32.mrf.mxu0
      %3730 = vmatprep.mubr.bf16.mxu0 0
      %3731 = vmatmul.mubr.bf16.gmra.mxu0 %v3314
      %v3732 = vpop.f32.mrf.mxu0
      %v3733 = vadd.f32 %v3572, %v3732
      %v3734 = vpop.f32.mrf.mxu0
      %v3735 = vpop.f32.mrf.mxu0
      %v3736 = vadd.f32 %v3575, %v3735
      %v3737 = vpop.f32.mrf.mxu0
      %3738 = vmatprep.mubr.bf16.mxu0 0
      %3739 = vmatmul.mubr.bf16.gmra.mxu0 %v3317
      %v3740 = vpop.f32.mrf.mxu0
      %v3741 = vadd.f32 %v3580, %v3740
      %v3742 = vpop.f32.mrf.mxu0
      %v3743 = vpop.f32.mrf.mxu0
      %v3744 = vadd.f32 %v3583, %v3743
      %v3745 = vpop.f32.mrf.mxu0
      %3746 = vmatprep.mubr.bf16.mxu0 0
      %3747 = vmatmul.mubr.bf16.gmra.mxu0 %v3320
      %v3748 = vpop.f32.mrf.mxu0
      %v3749 = vadd.f32 %v3588, %v3748
      %v3750 = vpop.f32.mrf.mxu0
      %v3751 = vpop.f32.mrf.mxu0
      %v3752 = vadd.f32 %v3591, %v3751
      %v3753 = vpop.f32.mrf.mxu0
      %3754 = vmatprep.mubr.bf16.mxu0 0
      %3755 = vmatmul.mubr.bf16.gmra.mxu0 %v3323
      %v3756 = vpop.f32.mrf.mxu0
      %v3757 = vadd.f32 %v3596, %v3756
      %v3758 = vpop.f32.mrf.mxu0
      %v3759 = vpop.f32.mrf.mxu0
      %v3760 = vadd.f32 %v3599, %v3759
      %v3761 = vpop.f32.mrf.mxu0
      %3762 = vmatprep.mubr.bf16.mxu0 0
      %3763 = vmatmul.mubr.bf16.gmra.mxu0 %v3326
      %v3764 = vpop.f32.mrf.mxu0
      %v3765 = vadd.f32 %v3604, %v3764
      %v3766 = vpop.f32.mrf.mxu0
      %v3767 = vpop.f32.mrf.mxu0
      %v3768 = vadd.f32 %v3607, %v3767
      %v3769 = vpop.f32.mrf.mxu0
      %3770 = vmatprep.mubr.bf16.mxu0 0
      %3771 = vmatmul.mubr.bf16.gmra.mxu0 %v3329
      %v3772 = vpop.f32.mrf.mxu0
      %v3773 = vadd.f32 %v3612, %v3772
      %v3774 = vpop.f32.mrf.mxu0
      %v3775 = vpop.f32.mrf.mxu0
      %v3776 = vadd.f32 %v3615, %v3775
      %v3777 = vpop.f32.mrf.mxu0
      %3778 = vmatprep.mubr.bf16.mxu0 0
      %3779 = vmatmul.mubr.bf16.gmra.mxu0 %v3332
      %v3780 = vpop.f32.mrf.mxu0
      %v3781 = vadd.f32 %v3620, %v3780
      %v3782 = vpop.f32.mrf.mxu0
      %v3783 = vpop.f32.mrf.mxu0
      %v3784 = vadd.f32 %v3623, %v3783
      %v3785 = vpop.f32.mrf.mxu0
      %3786 = vmatprep.mubr.bf16.mxu0 0
      %3787 = vmatmul.mubr.bf16.gmra.mxu0 %v3335
      %v3788 = vpop.f32.mrf.mxu0
      %v3789 = vadd.f32 %v3628, %v3788
      %v3790 = vpop.f32.mrf.mxu0
      %v3791 = vpop.f32.mrf.mxu0
      %v3792 = vadd.f32 %v3631, %v3791
      %v3793 = vpop.f32.mrf.mxu0
      %3794 = vmatprep.mubr.bf16.mxu0 0
      %3795 = vmatmul.mubr.bf16.gmra.mxu0 %v3338
      %v3796 = vpop.f32.mrf.mxu0
      %v3797 = vadd.f32 %v3636, %v3796
      %v3798 = vpop.f32.mrf.mxu0
      %v3799 = vpop.f32.mrf.mxu0
      %v3800 = vadd.f32 %v3639, %v3799
      %v3801 = vpop.f32.mrf.mxu0
      %3802 = vmatprep.mubr.bf16.mxu0 0
      %3803 = vmatmul.mubr.bf16.gmra.mxu0 %v3341
      %v3804 = vpop.f32.mrf.mxu0
      %v3805 = vadd.f32 %v3644, %v3804
      %v3806 = vpop.f32.mrf.mxu0
      %v3807 = vpop.f32.mrf.mxu0
      %v3808 = vadd.f32 %v3647, %v3807
      %v3809 = vpop.f32.mrf.mxu0
      %3810 = vmatprep.mubr.bf16.mxu0 0
      %3811 = vmatmul.mubr.bf16.gmra.mxu0 %v3344
      %v3812 = vpop.f32.mrf.mxu0
      %v3813 = vadd.f32 %v3652, %v3812
      %v3814 = vpop.f32.mrf.mxu0
      %v3815 = vpop.f32.mrf.mxu0
      %v3816 = vadd.f32 %v3655, %v3815
      %v3817 = vpop.f32.mrf.mxu0
      %3818 = vmatprep.mubr.bf16.mxu0 0
      %3819 = vmatmul.mubr.bf16.gmra.mxu0 %v3347
      %v3820 = vpop.f32.mrf.mxu0
      %v3821 = vadd.f32 %v3660, %v3820
      %v3822 = vpop.f32.mrf.mxu0
      %v3823 = vpop.f32.mrf.mxu0
      %v3824 = vadd.f32 %v3663, %v3823
      %v3825 = vpop.f32.mrf.mxu0
      %3826 = vmatprep.mubr.bf16.mxu0 0
      %3827 = vmatmul.mubr.bf16.gmra.mxu0 %v3350
      %v3828 = vpop.f32.mrf.mxu0
      %v3829 = vadd.f32 %v3668, %v3828
      %v3830 = vpop.f32.mrf.mxu0
      %v3831 = vpop.f32.mrf.mxu0
      %v3832 = vadd.f32 %v3671, %v3831
      %v3833 = vpop.f32.mrf.mxu0
      %3834 = vdwg.mxu0
      %v3835 = vpack.c.bf16 %v3712, %v3709
      %v3836 = vpack.c.bf16 %v3720, %v3717
      %v3837 = vpack.c.bf16 %v3728, %v3725
      %v3838 = vpack.c.bf16 %v3736, %v3733
      %v3839 = vpack.c.bf16 %v3744, %v3741
      %v3840 = vpack.c.bf16 %v3752, %v3749
      %v3841 = vpack.c.bf16 %v3760, %v3757
      %v3842 = vpack.c.bf16 %v3768, %v3765
      %v3843 = vpack.c.bf16 %v3776, %v3773
      %v3844 = vpack.c.bf16 %v3784, %v3781
      %v3845 = vpack.c.bf16 %v3792, %v3789
      %v3846 = vpack.c.bf16 %v3800, %v3797
      %v3847 = vpack.c.bf16 %v3808, %v3805
      %v3848 = vpack.c.bf16 %v3816, %v3813
      %v3849 = vpack.c.bf16 %v3824, %v3821
      %v3850 = vpack.c.bf16 %v3832, %v3829
      %v3867 = vunpack.c.l.b16 %v3835
      %v3868 = vunpack.c.h.b16 %v3835
      %v3869 = vunpack.c.l.b16 %v3836
      %v3870 = vunpack.c.h.b16 %v3836
      %v3871 = vunpack.c.l.b16 %v3837
      %v3872 = vunpack.c.h.b16 %v3837
      %v3873 = vunpack.c.l.b16 %v3838
      %v3874 = vunpack.c.h.b16 %v3838
      %v3875 = vunpack.c.l.b16 %v3839
      %v3876 = vunpack.c.h.b16 %v3839
      %v3877 = vunpack.c.l.b16 %v3840
      %v3878 = vunpack.c.h.b16 %v3840
      %v3879 = vunpack.c.l.b16 %v3841
      %v3880 = vunpack.c.h.b16 %v3841
      %v3881 = vunpack.c.l.b16 %v3842
      %v3882 = vunpack.c.h.b16 %v3842
      %v3883 = vunpack.c.l.b16 %v3843
      %v3884 = vunpack.c.h.b16 %v3843
      %v3885 = vunpack.c.l.b16 %v3844
      %v3886 = vunpack.c.h.b16 %v3844
      %v3887 = vunpack.c.l.b16 %v3845
      %v3888 = vunpack.c.h.b16 %v3845
      %v3889 = vunpack.c.l.b16 %v3846
      %v3890 = vunpack.c.h.b16 %v3846
      %v3891 = vunpack.c.l.b16 %v3847
      %v3892 = vunpack.c.h.b16 %v3847
      %v3893 = vunpack.c.l.b16 %v3848
      %v3894 = vunpack.c.h.b16 %v3848
      %v3895 = vunpack.c.l.b16 %v3849
      %v3896 = vunpack.c.h.b16 %v3849
      %v3897 = vunpack.c.l.b16 %v3850
      %v3898 = vunpack.c.h.b16 %v3850
      %v3899 = vpack.c.b16 %v3867, %v3867
      %v3900 = vpack.c.b16 %v3868, %v3868
      %v3901 = vpack.c.b16 %v3869, %v3869
      %v3902 = vpack.c.b16 %v3870, %v3870
      %v3903 = vpack.c.b16 %v3871, %v3871
      %v3904 = vpack.c.b16 %v3872, %v3872
      %v3905 = vpack.c.b16 %v3873, %v3873
      %v3906 = vpack.c.b16 %v3874, %v3874
      %v3907 = vpack.c.b16 %v3875, %v3875
      %v3908 = vpack.c.b16 %v3876, %v3876
      %v3909 = vpack.c.b16 %v3877, %v3877
      %v3910 = vpack.c.b16 %v3878, %v3878
      %v3911 = vpack.c.b16 %v3879, %v3879
      %v3912 = vpack.c.b16 %v3880, %v3880
      %v3913 = vpack.c.b16 %v3881, %v3881
      %v3914 = vpack.c.b16 %v3882, %v3882
      %v3915 = vpack.c.b16 %v3883, %v3883
      %v3916 = vpack.c.b16 %v3884, %v3884
      %v3917 = vpack.c.b16 %v3885, %v3885
      %v3918 = vpack.c.b16 %v3886, %v3886
      %v3919 = vpack.c.b16 %v3887, %v3887
      %v3920 = vpack.c.b16 %v3888, %v3888
      %v3921 = vpack.c.b16 %v3889, %v3889
      %v3922 = vpack.c.b16 %v3890, %v3890
      %v3923 = vpack.c.b16 %v3891, %v3891
      %v3924 = vpack.c.b16 %v3892, %v3892
      %v3925 = vpack.c.b16 %v3893, %v3893
      %v3926 = vpack.c.b16 %v3894, %v3894
      %v3927 = vpack.c.b16 %v3895, %v3895
      %v3928 = vpack.c.b16 %v3896, %v3896
      %v3929 = vpack.c.b16 %v3897, %v3897
      %v3930 = vpack.c.b16 %v3898, %v3898
      %3963 = vst.msk [vmem:[%s262] sm:$0xf] %vm693, %v3899
      %3964 = vst.msk [vmem:[%s262 + $0x4] sm:$0xf] %vm693, %v3900
      %3965 = vst.msk [vmem:[%s262 + $0x8] sm:$0xf] %vm693, %v3901
      %3966 = vst.msk [vmem:[%s262 + $0xc] sm:$0xf] %vm693, %v3902
      %3967 = vst.msk [vmem:[%s262 + $0x10] sm:$0xf] %vm693, %v3903
      %3968 = vst.msk [vmem:[%s262 + $0x14] sm:$0xf] %vm693, %v3904
      %3969 = vst.msk [vmem:[%s262 + $0x18] sm:$0xf] %vm693, %v3905
      %3970 = vst.msk [vmem:[%s262 + $0x1c] sm:$0xf] %vm693, %v3906
      %3971 = vst.msk [vmem:[%s262 + $0x20] sm:$0xf] %vm693, %v3907
      %3972 = vst.msk [vmem:[%s262 + $0x24] sm:$0xf] %vm693, %v3908
      %3973 = vst.msk [vmem:[%s262 + $0x28] sm:$0xf] %vm693, %v3909
      %3974 = vst.msk [vmem:[%s262 + $0x2c] sm:$0xf] %vm693, %v3910
      %3975 = vst.msk [vmem:[%s262 + $0x30] sm:$0xf] %vm693, %v3911
      %3976 = vst.msk [vmem:[%s262 + $0x34] sm:$0xf] %vm693, %v3912
      %3977 = vst.msk [vmem:[%s262 + $0x38] sm:$0xf] %vm693, %v3913
      %3978 = vst.msk [vmem:[%s262 + $0x3c] sm:$0xf] %vm693, %v3914
      %3979 = vst.msk [vmem:[%s262 + $0x40] sm:$0xf] %vm693, %v3915
      %3980 = vst.msk [vmem:[%s262 + $0x44] sm:$0xf] %vm693, %v3916
      %3981 = vst.msk [vmem:[%s262 + $0x48] sm:$0xf] %vm693, %v3917
      %3982 = vst.msk [vmem:[%s262 + $0x4c] sm:$0xf] %vm693, %v3918
      %3983 = vst.msk [vmem:[%s262 + $0x50] sm:$0xf] %vm693, %v3919
      %3984 = vst.msk [vmem:[%s262 + $0x54] sm:$0xf] %vm693, %v3920
      %3985 = vst.msk [vmem:[%s262 + $0x58] sm:$0xf] %vm693, %v3921
      %3986 = vst.msk [vmem:[%s262 + $0x5c] sm:$0xf] %vm693, %v3922
      %3987 = vst.msk [vmem:[%s262 + $0x60] sm:$0xf] %vm693, %v3923
      %3988 = vst.msk [vmem:[%s262 + $0x64] sm:$0xf] %vm693, %v3924
      %3989 = vst.msk [vmem:[%s262 + $0x68] sm:$0xf] %vm693, %v3925
      %3990 = vst.msk [vmem:[%s262 + $0x6c] sm:$0xf] %vm693, %v3926
      %3991 = vst.msk [vmem:[%s262 + $0x70] sm:$0xf] %vm693, %v3927
      %3992 = vst.msk [vmem:[%s262 + $0x74] sm:$0xf] %vm693, %v3928
      %3993 = vst.msk [vmem:[%s262 + $0x78] sm:$0xf] %vm693, %v3929
      %3994 = vst.msk [vmem:[%s262 + $0x7c] sm:$0xf] %vm693, %v3930
      %v3995 = vsel %vm270, %v3709, 0.0
      %v3996 = vsel %vm270, %v3712, 0.0
      %v3997 = vadd.f32 %v3995, %v3996
      %v3998 = vsel %vm270, %v3717, 0.0
      %v3999 = vadd.f32 %v3997, %v3998
      %v4000 = vsel %vm270, %v3720, 0.0
      %v4001 = vadd.f32 %v3999, %v4000
      %v4002 = vsel %vm270, %v3725, 0.0
      %v4003 = vadd.f32 %v4001, %v4002
      %v4004 = vsel %vm270, %v3728, 0.0
      %v4005 = vadd.f32 %v4003, %v4004
      %v4006 = vsel %vm270, %v3733, 0.0
      %v4007 = vadd.f32 %v4005, %v4006
      %v4008 = vsel %vm270, %v3736, 0.0
      %v4009 = vadd.f32 %v4007, %v4008
      %v4010 = vsel %vm270, %v3741, 0.0
      %v4011 = vadd.f32 %v4009, %v4010
      %v4012 = vsel %vm270, %v3744, 0.0
      %v4013 = vadd.f32 %v4011, %v4012
      %v4014 = vsel %vm270, %v3749, 0.0
      %v4015 = vadd.f32 %v4013, %v4014
      %v4016 = vsel %vm270, %v3752, 0.0
      %v4017 = vadd.f32 %v4015, %v4016
      %v4018 = vsel %vm270, %v3757, 0.0
      %v4019 = vadd.f32 %v4017, %v4018
      %v4020 = vsel %vm270, %v3760, 0.0
      %v4021 = vadd.f32 %v4019, %v4020
      %v4022 = vsel %vm270, %v3765, 0.0
      %v4023 = vadd.f32 %v4021, %v4022
      %v4024 = vsel %vm270, %v3768, 0.0
      %v4025 = vadd.f32 %v4023, %v4024
      %v4026 = vsel %vm270, %v3773, 0.0
      %v4027 = vadd.f32 %v4025, %v4026
      %v4028 = vsel %vm270, %v3776, 0.0
      %v4029 = vadd.f32 %v4027, %v4028
      %v4030 = vsel %vm270, %v3781, 0.0
      %v4031 = vadd.f32 %v4029, %v4030
      %v4032 = vsel %vm270, %v3784, 0.0
      %v4033 = vadd.f32 %v4031, %v4032
      %v4034 = vsel %vm270, %v3789, 0.0
      %v4035 = vadd.f32 %v4033, %v4034
      %v4036 = vsel %vm270, %v3792, 0.0
      %v4037 = vadd.f32 %v4035, %v4036
      %v4038 = vsel %vm270, %v3797, 0.0
      %v4039 = vadd.f32 %v4037, %v4038
      %v4040 = vsel %vm270, %v3800, 0.0
      %v4041 = vadd.f32 %v4039, %v4040
      %v4042 = vsel %vm270, %v3805, 0.0
      %v4043 = vadd.f32 %v4041, %v4042
      %v4044 = vsel %vm270, %v3808, 0.0
      %v4045 = vadd.f32 %v4043, %v4044
      %v4046 = vsel %vm270, %v3813, 0.0
      %v4047 = vadd.f32 %v4045, %v4046
      %v4048 = vsel %vm270, %v3816, 0.0
      %v4049 = vadd.f32 %v4047, %v4048
      %v4050 = vsel %vm270, %v3821, 0.0
      %v4051 = vadd.f32 %v4049, %v4050
      %v4052 = vsel %vm270, %v3824, 0.0
      %v4053 = vadd.f32 %v4051, %v4052
      %v4054 = vsel %vm270, %v3829, 0.0
      %v4055 = vadd.f32 %v4053, %v4054
      %v4056 = vsel %vm270, %v3832, 0.0
      %v4057 = vadd.f32 %v4055, %v4056
      %v4058 = vrot.slane %v4057, 4
      %v4059 = vadd.f32 %v4057, %v4058
      %v4060 = vrot.slane %v4059, 2
      %v4061 = vadd.f32 %v4059, %v4060
      %v4062 = vrot.slane %v4061, 1
      %v4063 = vadd.f32 %v4061, %v4062
      %vm4064 = vcmask 516096
      %4065 = vst.msk [vmem:[%s265] sm:$0x1] %vm4064, %v4063
      %v4066 = vmul.f32 %v3709, %v3709
      %v4067 = vmul.f32 %v3712, %v3712
      %v4068 = vmul.f32 %v3717, %v3717
      %v4069 = vmul.f32 %v3720, %v3720
      %v4070 = vmul.f32 %v3725, %v3725
      %v4071 = vmul.f32 %v3728, %v3728
      %v4072 = vmul.f32 %v3733, %v3733
      %v4073 = vmul.f32 %v3736, %v3736
      %v4074 = vmul.f32 %v3741, %v3741
      %v4075 = vmul.f32 %v3744, %v3744
      %v4076 = vmul.f32 %v3749, %v3749
      %v4077 = vmul.f32 %v3752, %v3752
      %v4078 = vmul.f32 %v3757, %v3757
      %v4079 = vmul.f32 %v3760, %v3760
      %v4080 = vmul.f32 %v3765, %v3765
      %v4081 = vmul.f32 %v3768, %v3768
      %v4082 = vmul.f32 %v3773, %v3773
      %v4083 = vmul.f32 %v3776, %v3776
      %v4084 = vmul.f32 %v3781, %v3781
      %v4085 = vmul.f32 %v3784, %v3784
      %v4086 = vmul.f32 %v3789, %v3789
      %v4087 = vmul.f32 %v3792, %v3792
      %v4088 = vmul.f32 %v3797, %v3797
      %v4089 = vmul.f32 %v3800, %v3800
      %v4090 = vmul.f32 %v3805, %v3805
      %v4091 = vmul.f32 %v3808, %v3808
      %v4092 = vmul.f32 %v3813, %v3813
      %v4093 = vmul.f32 %v3816, %v3816
      %v4094 = vmul.f32 %v3821, %v3821
      %v4095 = vmul.f32 %v3824, %v3824
      %v4096 = vmul.f32 %v3829, %v3829
      %v4097 = vmul.f32 %v3832, %v3832
      %v4098 = vsel %vm270, %v4066, 0.0
      %v4099 = vsel %vm270, %v4067, 0.0
      %v4100 = vadd.f32 %v4098, %v4099
      %v4101 = vsel %vm270, %v4068, 0.0
      %v4102 = vadd.f32 %v4100, %v4101
      %v4103 = vsel %vm270, %v4069, 0.0
      %v4104 = vadd.f32 %v4102, %v4103
      %v4105 = vsel %vm270, %v4070, 0.0
      %v4106 = vadd.f32 %v4104, %v4105
      %v4107 = vsel %vm270, %v4071, 0.0
      %v4108 = vadd.f32 %v4106, %v4107
      %v4109 = vsel %vm270, %v4072, 0.0
      %v4110 = vadd.f32 %v4108, %v4109
      %v4111 = vsel %vm270, %v4073, 0.0
      %v4112 = vadd.f32 %v4110, %v4111
      %v4113 = vsel %vm270, %v4074, 0.0
      %v4114 = vadd.f32 %v4112, %v4113
      %v4115 = vsel %vm270, %v4075, 0.0
      %v4116 = vadd.f32 %v4114, %v4115
      %v4117 = vsel %vm270, %v4076, 0.0
      %v4118 = vadd.f32 %v4116, %v4117
      %v4119 = vsel %vm270, %v4077, 0.0
      %v4120 = vadd.f32 %v4118, %v4119
      %v4121 = vsel %vm270, %v4078, 0.0
      %v4122 = vadd.f32 %v4120, %v4121
      %v4123 = vsel %vm270, %v4079, 0.0
      %v4124 = vadd.f32 %v4122, %v4123
      %v4125 = vsel %vm270, %v4080, 0.0
      %v4126 = vadd.f32 %v4124, %v4125
      %v4127 = vsel %vm270, %v4081, 0.0
      %v4128 = vadd.f32 %v4126, %v4127
      %v4129 = vsel %vm270, %v4082, 0.0
      %v4130 = vadd.f32 %v4128, %v4129
      %v4131 = vsel %vm270, %v4083, 0.0
      %v4132 = vadd.f32 %v4130, %v4131
      %v4133 = vsel %vm270, %v4084, 0.0
      %v4134 = vadd.f32 %v4132, %v4133
      %v4135 = vsel %vm270, %v4085, 0.0
      %v4136 = vadd.f32 %v4134, %v4135
      %v4137 = vsel %vm270, %v4086, 0.0
      %v4138 = vadd.f32 %v4136, %v4137
      %v4139 = vsel %vm270, %v4087, 0.0
      %v4140 = vadd.f32 %v4138, %v4139
      %v4141 = vsel %vm270, %v4088, 0.0
      %v4142 = vadd.f32 %v4140, %v4141
      %v4143 = vsel %vm270, %v4089, 0.0
      %v4144 = vadd.f32 %v4142, %v4143
      %v4145 = vsel %vm270, %v4090, 0.0
      %v4146 = vadd.f32 %v4144, %v4145
      %v4147 = vsel %vm270, %v4091, 0.0
      %v4148 = vadd.f32 %v4146, %v4147
      %v4149 = vsel %vm270, %v4092, 0.0
      %v4150 = vadd.f32 %v4148, %v4149
      %v4151 = vsel %vm270, %v4093, 0.0
      %v4152 = vadd.f32 %v4150, %v4151
      %v4153 = vsel %vm270, %v4094, 0.0
      %v4154 = vadd.f32 %v4152, %v4153
      %v4155 = vsel %vm270, %v4095, 0.0
      %v4156 = vadd.f32 %v4154, %v4155
      %v4157 = vsel %vm270, %v4096, 0.0
      %v4158 = vadd.f32 %v4156, %v4157
      %v4159 = vsel %vm270, %v4097, 0.0
      %v4160 = vadd.f32 %v4158, %v4159
      %v4161 = vrot.slane %v4160, 4
      %v4162 = vadd.f32 %v4160, %v4161
      %v4163 = vrot.slane %v4162, 2
      %v4164 = vadd.f32 %v4162, %v4163
      %v4165 = vrot.slane %v4164, 1
      %v4166 = vadd.f32 %v4164, %v4165
      %4167 = vst.msk [vmem:[%s268] sm:$0x1] %vm4064, %v4166
      %p4168 = scmp.lt.s32.totalorder %s18, 1
      %s4169 = scalar_select %p4168, %s18, 1
      %s4170 = smul.addr %s4169, 32
      %s4171 = smul.addr %s4170, 4
      %s4172 = scalar_lea.vmem %s4, %s4171
      %p4173 = scmp.lt.s32.totalorder %s18, 1
      %s4174 = scalar_select %p4173, %s18, 1
      %s4175 = scalar_lea.vmem %s5, %s4174
      %p4176 = scmp.lt.s32.totalorder %s18, 1
      %s4177 = scalar_select %p4176, %s18, 1
      %s4178 = scalar_lea.vmem %s6, %s4177
      // Predicated region
      $region37: #{basic_block_forward.4} parent=35 // pred_check
        %p4179 = pneg %p125
      $region38: #{basic_block_forward.4} parent=35 // pred_check_branch
        %4181 = sbr.rel (%p4179) target = $region40
      $region39: #{basic_block_forward.4} parent=35 // pred_region
        _
      $region40: #{basic_block_forward.4} parent=35 // pred_fallthru
        _
      // Predicated region
      $region41: #{basic_block_forward.4} parent=35 // pred_check
        %p4182 = pneg %p151
      $region42: #{basic_block_forward.4} parent=35 // pred_check_branch
        %4184 = sbr.rel (%p4182) target = $region44
      $region43: #{basic_block_forward.4} parent=35 // pred_region
        _
      $region44: #{basic_block_forward.4} parent=35 // pred_fallthru
        _
      // Predicated region
      $region45: #{basic_block_forward.4} parent=35 // pred_check
        %p4185 = pneg %p177
      $region46: #{basic_block_forward.4} parent=35 // pred_check_branch
        %4187 = sbr.rel (%p4185) target = $region48
      $region47: #{basic_block_forward.4} parent=35 // pred_region
        _
      $region48: #{basic_block_forward.4} parent=35 // pred_fallthru
        _
    $region36: #{basic_block_forward.4} parent=5 // pred_fallthru
      _
    %p4188 = scmp.le.s32.totalorder 2, %s13
    // Predicated region
    $region49: #{basic_block_forward.4} parent=5 // pred_check
      %p4189 = pneg %p4188
    $region50: #{basic_block_forward.4} parent=5 // pred_check_branch
      %4191 = sbr.rel (%p4189) target = $region52
    $region51: #{basic_block_forward.4} parent=5 // pred_region
      %s4192 = ssub.s32 %s13, 2
      // Predicated region
      $region53: #{basic_block_forward.4} parent=51 // pred_check
        %p4193 = pneg %p131
      $region54: #{basic_block_forward.4} parent=51 // pred_check_branch
        %4195 = sbr.rel (%p4193) target = $region56
      $region55: #{basic_block_forward.4} parent=51 // pred_region
        %p4196 = scmp.lt.s32.totalorder %s19, 1
        %s4197 = scalar_select %p4196, %s19, 1
        %s4198 = smul.addr %s4197, 32
        %s4199 = smul.addr %s4198, 4
        %s4200 = scalar_lea.vmem %s4, %s4199
      $region56: #{basic_block_forward.4} parent=51 // pred_fallthru
        _
      // Predicated region
      $region57: #{basic_block_forward.4} parent=51 // pred_check
        %p4201 = pneg %p157
      $region58: #{basic_block_forward.4} parent=51 // pred_check_branch
        %4203 = sbr.rel (%p4201) target = $region60
      $region59: #{basic_block_forward.4} parent=51 // pred_region
        %p4204 = scmp.lt.s32.totalorder %s19, 1
        %s4205 = scalar_select %p4204, %s19, 1
        %s4206 = scalar_lea.vmem %s5, %s4205
      $region60: #{basic_block_forward.4} parent=51 // pred_fallthru
        _
      // Predicated region
      $region61: #{basic_block_forward.4} parent=51 // pred_check
        %p4207 = pneg %p183
      $region62: #{basic_block_forward.4} parent=51 // pred_check_branch
        %4209 = sbr.rel (%p4207) target = $region64
      $region63: #{basic_block_forward.4} parent=51 // pred_region
        %p4210 = scmp.lt.s32.totalorder %s19, 1
        %s4211 = scalar_select %p4210, %s19, 1
        %s4212 = scalar_lea.vmem %s6, %s4211
      $region64: #{basic_block_forward.4} parent=51 // pred_fallthru
        _
    $region52: #{basic_block_forward.4} parent=5 // pred_fallthru
      _
  $region6: #{basic_block_forward.4} parent=0 // loop_footer
    %s17 = sadd.s32 1, %s13
  $region7: #{basic_block_forward.4} parent=0 // loop_footer_branch
    %12 = sbr.rel target = $region3
  $region8: #{basic_block_forward.4} parent=0 // loop_exit
    _

</llo_original>
